<compile_context>
chip_gen: v6e
topology: v6e:2x2x1
jax: 0.10.0
libtpu: 0.0.40
codegen_flags: <defaults>
</compile_context>

<pallas_src>
import numpy as np
import jax
import jax.numpy as jnp
from jax.experimental import pallas as pl
from jax.experimental.pallas import tpu as pltpu

# ----------------------------- model / shape config --------------------------
N_BATCH = 2
D_IN = 2
ND = N_BATCH * D_IN            # per-channel row multiplicity; row order = (c, d, n)
IN_PLANES = 1
OUT_PLANES = 1
FILTERS = (8, 16)
LATENT = 32
BN_EPS = 1e-5

H0 = W0 = 18                   # network input spatial size
H1 = W1 = 16                   # conv1 output (valid 3x3)
HP1 = WP1 = 8                  # pool1 output
H2 = W2 = 6                    # conv2 output
HP2 = WP2 = 3                  # pool2 output
HW2 = HP2 * WP2                # 9
NUM_NEURONS = FILTERS[1] * D_IN * HW2       # 288

# Conv outputs are kept "wide": they reuse the input's row stride, with junk
# columns (x >= W_out) that are simply never selected by downstream one-hot maps.
L_C1 = (H1 - 1) * W0 + W1                   # 286  conv1 out, stride 18
L_C2 = (H2 - 1) * WP1 + W2                  # 46   conv2 out, stride 8
PW1 = WP1 + 2                               # 10   deconv1 padded-input stride
L_D1 = (HP1 - 1) * PW1 + WP1                # 78   deconv1 out, stride 10
PW2 = W1 + 4                                # 20   deconv2 padded-input stride
L_D2 = (H0 - 1) * PW2 + W0                  # 358  deconv2 out, stride 20

VM1 = L_C1 - 1 - W0                         # 267  pool1 shifted-max width
VM2 = L_C2 - 1 - WP1                        # 37   pool2 shifted-max width

OFFS_C1 = tuple(dy * W0 + dx for dy in range(3) for dx in range(3))
OFFS_C2 = tuple(dy * WP1 + dx for dy in range(3) for dx in range(3))
OFFS_D1 = tuple(dy * PW1 + dx for dy in range(3) for dx in range(3))
OFFS_D2 = tuple(dy * PW2 + dx for dy in range(3) for dx in range(3))


# --------------------- constant structural matrices (numpy) ------------------
def _pool_select_matrix(side_out, stride_in, len_in, len_out):
    """One-hot map from the shifted-max buffer to the compact pooled image."""
    m = np.zeros((len_in, len_out), np.float32)
    for py in range(side_out):
        for px in range(side_out):
            m[2 * py * stride_in + 2 * px, py * side_out + px] = 1.0
    return m


def _lerp_matrix(n_in, n_out):
    """1-D linear interpolation weights, align_corners=True (n_out x n_in)."""
    m = np.zeros((n_out, n_in), np.float32)
    for o in range(n_out):
        s = o * (n_in - 1) / (n_out - 1)
        i0 = min(int(np.floor(s)), n_in - 2)
        f = s - i0
        m[o, i0] += 1.0 - f
        m[o, i0 + 1] += f
    return m


def _upsample_matrix(side_in, stride_in, side_out, stride_out, len_in, len_out):
    """Bilinear (trilinear w/ depth scale 1) 2x upsample as a (len_in, len_out) map."""
    wv = _lerp_matrix(side_in, side_out)
    m = np.zeros((len_in, len_out), np.float32)
    for y in range(side_out):
        for x in range(side_out):
            for hi in range(side_in):
                for wi in range(side_in):
                    v = wv[y, hi] * wv[x, wi]
                    if v != 0.0:
                        m[hi * stride_in + wi, y * stride_out + x] += v
    return m


def _onehot_map(side, stride_in, stride_out, off, len_in, len_out):
    """One-hot lane scatter: (y,x) at stride_in  ->  (y+off, x+off) at stride_out."""
    m = np.zeros((len_in, len_out), np.float32)
    for y in range(side):
        for x in range(side):
            m[y * stride_in + x, (y + off) * stride_out + (x + off)] = 1.0
    return m


def _conv_weight_matrix(w_eff):
    """(Cout, Cin, 3, 3) conv kernel -> (Cout*ND, 9*Cin*ND) block matrix for B @ im2col."""
    cout, cin = w_eff.shape[0], w_eff.shape[1]
    b = np.zeros((cout * ND, 9 * cin * ND), np.float32)
    for co in range(cout):
        for ci in range(cin):
            for t in range(9):
                dy, dx = t // 3, t % 3
                for r in range(ND):
                    b[co * ND + r, (t * cin + ci) * ND + r] = w_eff[co, ci, dy, dx]
    return b


def _bias_col(bias):
    return np.repeat(np.asarray(bias, np.float32), ND).reshape(-1, 1)


# ----------------------------- parameter init --------------------------------
def init_params(key):
    """Deterministic synthetic parameters, pre-processed into kernel-ready matrices."""
    keys = iter(jax.random.split(key, 20))
    down = [IN_PLANES] + list(FILTERS)           # [1, 8, 16]
    up = list(FILTERS[::-1]) + [OUT_PLANES]      # [16, 8, 1]
    p = {}

    # encoder conv3dBlock: Conv3d(1,3,3) -> BatchNorm(eval) -> ELU; BN folded.
    enc = []
    for i in range(2):
        cin, cout = down[i], down[i + 1]
        w = np.asarray(jax.random.normal(next(keys), (cout, cin, 1, 3, 3), jnp.float32)) \
            * np.sqrt(2.0 / (cin * 9))
        b = 0.01 * np.asarray(jax.random.normal(next(keys), (cout,), jnp.float32))
        gamma = 1.0 + 0.1 * np.asarray(jax.random.normal(next(keys), (cout,), jnp.float32))
        beta = 0.1 * np.asarray(jax.random.normal(next(keys), (cout,), jnp.float32))
        run_mean = np.zeros((cout,), np.float32)
        run_var = np.ones((cout,), np.float32)
        scale = gamma / np.sqrt(run_var + BN_EPS)
        w_eff = w[:, :, 0] * scale[:, None, None, None]           # (cout, cin, 3, 3)
        s_eff = scale * (b - run_mean) + beta
        enc.append((w_eff.astype(np.float32), s_eff.astype(np.float32)))

    p["b1"] = jnp.asarray(_conv_weight_matrix(enc[0][0]))         # (32, 36)
    p["s1"] = jnp.asarray(_bias_col(enc[0][1]))                   # (32, 1)
    p["b2"] = jnp.asarray(_conv_weight_matrix(enc[1][0]))         # (64, 288)
    p["s2"] = jnp.asarray(_bias_col(enc[1][1]))                   # (64, 1)

    # bottleneck Linears (no activation between them) -> composed offline.
    # PyTorch flatten order (c, d, h, w) matches the native (c,d)-row/(h,w)-lane order.
    w1 = np.asarray(jax.random.normal(next(keys), (LATENT, NUM_NEURONS), jnp.float32)) \
        / np.sqrt(NUM_NEURONS)
    b1 = 0.01 * np.asarray(jax.random.normal(next(keys), (LATENT,), jnp.float32))
    w2 = np.asarray(jax.random.normal(next(keys), (NUM_NEURONS, LATENT), jnp.float32)) \
        / np.sqrt(LATENT)
    b2 = 0.01 * np.asarray(jax.random.normal(next(keys), (NUM_NEURONS,), jnp.float32))
    p["wc"] = jnp.asarray((w2 @ w1).T.astype(np.float32))                       # (288, 288)
    p["bc"] = jnp.asarray((b1 @ w2.T + b2).reshape(1, NUM_NEURONS).astype(np.float32))

    # decoder ConvTranspose3d(1,3,3): pre-flip + channel-swap -> direct conv on padded input.
    dec = []
    for i in range(2):
        cin, cout = up[i], up[i + 1]
        w = np.asarray(jax.random.normal(next(keys), (cin, cout, 1, 3, 3), jnp.float32)) \
            * np.sqrt(2.0 / (cin * 9))
        b = 0.01 * np.asarray(jax.random.normal(next(keys), (cout,), jnp.float32))
        w_conv = np.flip(np.transpose(w, (1, 0, 2, 3, 4)), axis=(3, 4))[:, :, 0]  # (cout,cin,3,3)
        dec.append((w_conv.astype(np.float32), b.astype(np.float32)))

    p["bd1"] = jnp.asarray(_conv_weight_matrix(dec[0][0]))        # (32, 576)
    p["bdb1"] = jnp.asarray(_bias_col(dec[0][1]))                 # (32, 1)
    p["bd2"] = jnp.asarray(_conv_weight_matrix(dec[1][0]))        # (4, 288)
    p["bdb2"] = jnp.asarray(_bias_col(dec[1][1]))                 # (4, 1)

    # constant structural (data-independent) matrices
    p["pc1"] = jnp.asarray(_pool_select_matrix(HP1, W0, VM1, HP1 * WP1))      # (267, 64)
    p["pc2"] = jnp.asarray(_pool_select_matrix(HP2, WP1, VM2, HW2))           # (37, 9)
    p["u1m"] = jnp.asarray(_upsample_matrix(HP2, WP2, H2, WP1, HW2, L_C2))    # (9, 46)
    p["u2m"] = jnp.asarray(_upsample_matrix(HP1, PW1, H1, W0, L_D1, L_C1))    # (78, 286)
    p["pad1"] = jnp.asarray(_onehot_map(H2, WP1, PW1, 2, L_C2, PW1 * PW1))    # (46, 100)
    p["pad2"] = jnp.asarray(_onehot_map(H1, W0, PW2, 2, L_C1, PW2 * PW2))     # (286, 400)
    p["cmpo"] = jnp.asarray(_onehot_map(H0, PW2, W0, 0, L_D2, H0 * W0))       # (358, 324)
    return p


# --------------------------- in-kernel helpers -------------------------------
def _conv_mm(src, col_ref, w_ref, bias_ref, offsets, length, apply_elu):
    """Valid (1,3,3) conv as: stack 9 lane-shifted slabs -> one MXU matmul.

    `src` is (rows, S_in) with rows = (cin, d, n) and lanes = row-major spatial
    at the input stride.  Output is (Cout*ND, length), same stride as the input
    (junk columns at x >= W_out, ignored downstream).
    """
    rows_in = src.shape[0]
    for t, off in enumerate(offsets):
        col_ref[t * rows_in:(t + 1) * rows_in, :] = src[:, off:off + length]
    y = jnp.dot(w_ref[...], col_ref[...], preferred_element_type=jnp.float32)
    y = y + bias_ref[...]                                    # per-(cout,d,n) row bias
    if apply_elu:
        y = jnp.where(y > 0.0, y, jnp.exp(jnp.minimum(y, 0.0)) - 1.0)
    return y


def _maxpool_mm(src, sel_ref, stride):
    """MaxPool3d((1,2,2)): two shifted maxima + one one-hot compaction matmul."""
    w = src.shape[1]
    hm = jnp.maximum(src[:, :w - 1], src[:, 1:])
    vm = jnp.maximum(hm[:, :w - 1 - stride], hm[:, stride:])
    return jnp.dot(vm, sel_ref[...], preferred_element_type=jnp.float32)


# ------------------------------- the kernel ----------------------------------
def _autoencoder_kernel(
    x_ref,                                               # (4, 324)
    b1_ref, s1_ref, pc1_ref,                             # conv1 / pool1
    b2_ref, s2_ref, pc2_ref,                             # conv2 / pool2
    wc_ref, bc_ref,                                      # composed bottleneck Linear
    u1m_ref, pad1_ref, bd1_ref, bdb1_ref,                # up1 / pad1 / deconv1
    u2m_ref, pad2_ref, bd2_ref, bdb2_ref,                # up2 / pad2 / deconv2
    cmpo_ref,                                            # final crop/compaction
    out_ref,                                             # (4, 324)
    col1_ref, col2_ref, cold1_ref, cold2_ref,            # im2col scratch
    flat_ref, zc_ref,                                    # bottleneck scratch
):
    x = x_ref[...]                                       # rows (d, n), lanes 18x18

    # ------------------------------ encoder ----------------------------------
    u0 = _conv_mm(x, col1_ref, b1_ref, s1_ref, OFFS_C1, L_C1, True)    # (32, 286) stride 18
    p1 = _maxpool_mm(u0, pc1_ref, W0)                                  # (32, 64)  stride 8
    u1 = _conv_mm(p1, col2_ref, b2_ref, s2_ref, OFFS_C2, L_C2, True)   # (64, 46)  stride 8
    p2 = _maxpool_mm(u1, pc2_ref, WP1)                                 # (64, 9)   stride 3

    # -------------------- bottleneck: composed Linear -------------------------
    # (c, d, n)-rows x (h, w)-lanes  ->  (n)-rows x (c, d, h, w)-lanes (= PyTorch order)
    for k in range(FILTERS[1] * D_IN):
        flat_ref[:, HW2 * k:HW2 * (k + 1)] = p2[N_BATCH * k:N_BATCH * (k + 1), :]
    z = jnp.dot(flat_ref[...], wc_ref[...],
                preferred_element_type=jnp.float32) + bc_ref[...]      # (2, 288)
    for k in range(FILTERS[1] * D_IN):
        zc_ref[N_BATCH * k:N_BATCH * (k + 1), :] = z[:, HW2 * k:HW2 * (k + 1)]

    # ---------------------- decoder stage 1 (16 -> 8) -------------------------
    up1 = jnp.dot(zc_ref[...], u1m_ref[...], preferred_element_type=jnp.float32)  # (64, 46)
    pd1 = jnp.dot(u1 + up1, pad1_ref[...], preferred_element_type=jnp.float32)    # (64, 100)
    d1 = _conv_mm(pd1, cold1_ref, bd1_ref, bdb1_ref, OFFS_D1, L_D1, False)        # (32, 78)

    # ---------------------- decoder stage 2 (8 -> 1) --------------------------
    up2 = jnp.dot(d1, u2m_ref[...], preferred_element_type=jnp.float32)           # (32, 286)
    pd2 = jnp.dot(u0 + up2, pad2_ref[...], preferred_element_type=jnp.float32)    # (32, 400)
    o = _conv_mm(pd2, cold2_ref, bd2_ref, bdb2_ref, OFFS_D2, L_D2, False)         # (4, 358)
    out_ref[...] = jnp.dot(o, cmpo_ref[...], preferred_element_type=jnp.float32)  # (4, 324)


# ------------------------------ forward pass ---------------------------------
def _vspec(shape):
    zeros = (0,) * len(shape)
    return pl.BlockSpec(tuple(shape), lambda i, _z=zeros: _z)


@jax.jit
def deep_autoencoder_forward(x, params):
    # (N, C, D, H, W) -> rows (c, d, n), lanes (h*w): free metadata reshape in XLA
    x2 = x.transpose(1, 2, 0, 3, 4).reshape(IN_PLANES * D_IN * N_BATCH, H0 * W0)

    inputs = (
        x2,
        params["b1"], params["s1"], params["pc1"],
        params["b2"], params["s2"], params["pc2"],
        params["wc"], params["bc"],
        params["u1m"], params["pad1"], params["bd1"], params["bdb1"],
        params["u2m"], params["pad2"], params["bd2"], params["bdb2"],
        params["cmpo"],
    )

    out2 = pl.pallas_call(
        _autoencoder_kernel,
        out_shape=jax.ShapeDtypeStruct((OUT_PLANES * ND, H0 * W0), jnp.float32),
        grid=(1,),
        in_specs=[_vspec(a.shape) for a in inputs],
        out_specs=_vspec((OUT_PLANES * ND, H0 * W0)),
        scratch_shapes=[
            pltpu.VMEM((9 * IN_PLANES * ND, L_C1), jnp.float32),     # col1  (36, 286)
            pltpu.VMEM((9 * FILTERS[0] * ND, L_C2), jnp.float32),    # col2  (288, 46)
            pltpu.VMEM((9 * FILTERS[1] * ND, L_D1), jnp.float32),    # cold1 (576, 78)
            pltpu.VMEM((9 * FILTERS[0] * ND, L_D2), jnp.float32),    # cold2 (288, 358)
            pltpu.VMEM((N_BATCH, NUM_NEURONS), jnp.float32),         # flat  (2, 288)
            pltpu.VMEM((FILTERS[1] * D_IN * N_BATCH, HW2), jnp.float32),  # zc (64, 9)
        ],
        compiler_params=pltpu.CompilerParams(
            dimension_semantics=("arbitrary",),
            vmem_limit_bytes=32 * 1024 * 1024,
        ),
    )(*inputs)

    # rows (c_out, d, n) -> (N, C_out, D, H, W)
    return out2.reshape(OUT_PLANES, D_IN, N_BATCH, H0, W0).transpose(2, 0, 1, 3, 4)


# ---------------------------------- main --------------------------------------
if __name__ == "__main__":
    key = jax.random.PRNGKey(0)
    kx, kp = jax.random.split(key)
    x = jax.random.normal(kx, (N_BATCH, IN_PLANES, D_IN, H0, W0), dtype=jnp.float32)
    params = init_params(kp)

    y = deep_autoencoder_forward(x, params)
    y = jax.block_until_ready(y)

    assert y.shape == (N_BATCH, OUT_PLANES, D_IN, H0, W0), y.shape
    assert bool(jnp.all(jnp.isfinite(y)))
    print("KERNEL_OK")
</pallas_src>

<mosaic_0001>
module attributes {stable_mosaic.version = 11 : i64} {
  func.func @_autoencoder_kernel(%arg0: i32, %arg1: memref<4x324xf32, #tpu.memory_space<vmem>>, %arg2: memref<32x36xf32, #tpu.memory_space<vmem>>, %arg3: memref<32x1xf32, #tpu.memory_space<vmem>>, %arg4: memref<267x64xf32, #tpu.memory_space<vmem>>, %arg5: memref<64x288xf32, #tpu.memory_space<vmem>>, %arg6: memref<64x1xf32, #tpu.memory_space<vmem>>, %arg7: memref<37x9xf32, #tpu.memory_space<vmem>>, %arg8: memref<288x288xf32, #tpu.memory_space<vmem>>, %arg9: memref<1x288xf32, #tpu.memory_space<vmem>>, %arg10: memref<9x46xf32, #tpu.memory_space<vmem>>, %arg11: memref<46x100xf32, #tpu.memory_space<vmem>>, %arg12: memref<32x576xf32, #tpu.memory_space<vmem>>, %arg13: memref<32x1xf32, #tpu.memory_space<vmem>>, %arg14: memref<78x286xf32, #tpu.memory_space<vmem>>, %arg15: memref<286x400xf32, #tpu.memory_space<vmem>>, %arg16: memref<4x288xf32, #tpu.memory_space<vmem>>, %arg17: memref<4x1xf32, #tpu.memory_space<vmem>>, %arg18: memref<358x324xf32, #tpu.memory_space<vmem>>, %arg19: memref<4x324xf32, #tpu.memory_space<vmem>>, %arg20: memref<36x286xf32, #tpu.memory_space<vmem>>, %arg21: memref<288x46xf32, #tpu.memory_space<vmem>>, %arg22: memref<576x78xf32, #tpu.memory_space<vmem>>, %arg23: memref<288x358xf32, #tpu.memory_space<vmem>>, %arg24: memref<2x288xf32, #tpu.memory_space<vmem>>, %arg25: memref<64x9xf32, #tpu.memory_space<vmem>>) attributes {dimension_semantics = [#tpu.dimension_semantics<arbitrary>], iteration_bounds = array<i64: 1>, scalar_prefetch = 0 : i64, scratch_operands = 6 : i64, tpu.core_type = #tpu.core_type<tc>, window_params = [{pipeline_mode = #tpu.pipeline_mode<synchronous>, transform_indices = @transform_0, window_bounds = array<i64: 4, 324>}, {pipeline_mode = #tpu.pipeline_mode<synchronous>, transform_indices = @transform_1, window_bounds = array<i64: 32, 36>}, {pipeline_mode = #tpu.pipeline_mode<synchronous>, transform_indices = @transform_2, window_bounds = array<i64: 32, 1>}, {pipeline_mode = #tpu.pipeline_mode<synchronous>, transform_indices = @transform_3, window_bounds = array<i64: 267, 64>}, {pipeline_mode = #tpu.pipeline_mode<synchronous>, transform_indices = @transform_4, window_bounds = array<i64: 64, 288>}, {pipeline_mode = #tpu.pipeline_mode<synchronous>, transform_indices = @transform_5, window_bounds = array<i64: 64, 1>}, {pipeline_mode = #tpu.pipeline_mode<synchronous>, transform_indices = @transform_6, window_bounds = array<i64: 37, 9>}, {pipeline_mode = #tpu.pipeline_mode<synchronous>, transform_indices = @transform_7, window_bounds = array<i64: 288, 288>}, {pipeline_mode = #tpu.pipeline_mode<synchronous>, transform_indices = @transform_8, window_bounds = array<i64: 1, 288>}, {pipeline_mode = #tpu.pipeline_mode<synchronous>, transform_indices = @transform_9, window_bounds = array<i64: 9, 46>}, {pipeline_mode = #tpu.pipeline_mode<synchronous>, transform_indices = @transform_10, window_bounds = array<i64: 46, 100>}, {pipeline_mode = #tpu.pipeline_mode<synchronous>, transform_indices = @transform_11, window_bounds = array<i64: 32, 576>}, {pipeline_mode = #tpu.pipeline_mode<synchronous>, transform_indices = @transform_12, window_bounds = array<i64: 32, 1>}, {pipeline_mode = #tpu.pipeline_mode<synchronous>, transform_indices = @transform_13, window_bounds = array<i64: 78, 286>}, {pipeline_mode = #tpu.pipeline_mode<synchronous>, transform_indices = @transform_14, window_bounds = array<i64: 286, 400>}, {pipeline_mode = #tpu.pipeline_mode<synchronous>, transform_indices = @transform_15, window_bounds = array<i64: 4, 288>}, {pipeline_mode = #tpu.pipeline_mode<synchronous>, transform_indices = @transform_16, window_bounds = array<i64: 4, 1>}, {pipeline_mode = #tpu.pipeline_mode<synchronous>, transform_indices = @transform_17, window_bounds = array<i64: 358, 324>}, {pipeline_mode = #tpu.pipeline_mode<synchronous>, transform_indices = @transform_18, window_bounds = array<i64: 4, 324>}]} {
    %c0 = arith.constant 0 : index
    %c0_0 = arith.constant 0 : index
    %0 = vector.load %arg1[%c0, %c0_0] : memref<4x324xf32, #tpu.memory_space<vmem>>, vector<4x324xf32>
    %1 = vector.extract_strided_slice %0 {offsets = [0, 0], sizes = [4, 286], strides = [1, 1]} : vector<4x324xf32> to vector<4x286xf32>
    %c0_1 = arith.constant 0 : index
    %c0_2 = arith.constant 0 : index
    %2 = vector.load %arg20[%c0_1, %c0_2] : memref<36x286xf32, #tpu.memory_space<vmem>>, vector<4x286xf32>
    tpu.vector_store %arg20[%c0_1, %c0_2], %1 {strides = array<i32>} : memref<36x286xf32, #tpu.memory_space<vmem>>, vector<4x286xf32>,
    %3 = vector.extract_strided_slice %0 {offsets = [0, 1], sizes = [4, 286], strides = [1, 1]} : vector<4x324xf32> to vector<4x286xf32>
    %c4 = arith.constant 4 : index
    %c0_3 = arith.constant 0 : index
    %4 = vector.load %arg20[%c4, %c0_3] : memref<36x286xf32, #tpu.memory_space<vmem>>, vector<4x286xf32>
    tpu.vector_store %arg20[%c4, %c0_3], %3 {strides = array<i32>} : memref<36x286xf32, #tpu.memory_space<vmem>>, vector<4x286xf32>,
    %5 = vector.extract_strided_slice %0 {offsets = [0, 2], sizes = [4, 286], strides = [1, 1]} : vector<4x324xf32> to vector<4x286xf32>
    %c8 = arith.constant 8 : index
    %c0_4 = arith.constant 0 : index
    %6 = vector.load %arg20[%c8, %c0_4] : memref<36x286xf32, #tpu.memory_space<vmem>>, vector<4x286xf32>
    tpu.vector_store %arg20[%c8, %c0_4], %5 {strides = array<i32>} : memref<36x286xf32, #tpu.memory_space<vmem>>, vector<4x286xf32>,
    %7 = vector.extract_strided_slice %0 {offsets = [0, 18], sizes = [4, 286], strides = [1, 1]} : vector<4x324xf32> to vector<4x286xf32>
    %c12 = arith.constant 12 : index
    %c0_5 = arith.constant 0 : index
    %8 = vector.load %arg20[%c12, %c0_5] : memref<36x286xf32, #tpu.memory_space<vmem>>, vector<4x286xf32>
    tpu.vector_store %arg20[%c12, %c0_5], %7 {strides = array<i32>} : memref<36x286xf32, #tpu.memory_space<vmem>>, vector<4x286xf32>,
    %9 = vector.extract_strided_slice %0 {offsets = [0, 19], sizes = [4, 286], strides = [1, 1]} : vector<4x324xf32> to vector<4x286xf32>
    %c16 = arith.constant 16 : index
    %c0_6 = arith.constant 0 : index
    %10 = vector.load %arg20[%c16, %c0_6] : memref<36x286xf32, #tpu.memory_space<vmem>>, vector<4x286xf32>
    tpu.vector_store %arg20[%c16, %c0_6], %9 {strides = array<i32>} : memref<36x286xf32, #tpu.memory_space<vmem>>, vector<4x286xf32>,
    %11 = vector.extract_strided_slice %0 {offsets = [0, 20], sizes = [4, 286], strides = [1, 1]} : vector<4x324xf32> to vector<4x286xf32>
    %c20 = arith.constant 20 : index
    %c0_7 = arith.constant 0 : index
    %12 = vector.load %arg20[%c20, %c0_7] : memref<36x286xf32, #tpu.memory_space<vmem>>, vector<4x286xf32>
    tpu.vector_store %arg20[%c20, %c0_7], %11 {strides = array<i32>} : memref<36x286xf32, #tpu.memory_space<vmem>>, vector<4x286xf32>,
    %13 = vector.extract_strided_slice %0 {offsets = [0, 36], sizes = [4, 286], strides = [1, 1]} : vector<4x324xf32> to vector<4x286xf32>
    %c24 = arith.constant 24 : index
    %c0_8 = arith.constant 0 : index
    %14 = vector.load %arg20[%c24, %c0_8] : memref<36x286xf32, #tpu.memory_space<vmem>>, vector<4x286xf32>
    tpu.vector_store %arg20[%c24, %c0_8], %13 {strides = array<i32>} : memref<36x286xf32, #tpu.memory_space<vmem>>, vector<4x286xf32>,
    %15 = vector.extract_strided_slice %0 {offsets = [0, 37], sizes = [4, 286], strides = [1, 1]} : vector<4x324xf32> to vector<4x286xf32>
    %c28 = arith.constant 28 : index
    %c0_9 = arith.constant 0 : index
    %16 = vector.load %arg20[%c28, %c0_9] : memref<36x286xf32, #tpu.memory_space<vmem>>, vector<4x286xf32>
    tpu.vector_store %arg20[%c28, %c0_9], %15 {strides = array<i32>} : memref<36x286xf32, #tpu.memory_space<vmem>>, vector<4x286xf32>,
    %17 = vector.extract_strided_slice %0 {offsets = [0, 38], sizes = [4, 286], strides = [1, 1]} : vector<4x324xf32> to vector<4x286xf32>
    %c32 = arith.constant 32 : index
    %c0_10 = arith.constant 0 : index
    %18 = vector.load %arg20[%c32, %c0_10] : memref<36x286xf32, #tpu.memory_space<vmem>>, vector<4x286xf32>
    tpu.vector_store %arg20[%c32, %c0_10], %17 {strides = array<i32>} : memref<36x286xf32, #tpu.memory_space<vmem>>, vector<4x286xf32>,
    %c0_11 = arith.constant 0 : index
    %c0_12 = arith.constant 0 : index
    %19 = vector.load %arg2[%c0_11, %c0_12] : memref<32x36xf32, #tpu.memory_space<vmem>>, vector<32x36xf32>
    %c0_13 = arith.constant 0 : index
    %c0_14 = arith.constant 0 : index
    %20 = vector.load %arg20[%c0_13, %c0_14] : memref<36x286xf32, #tpu.memory_space<vmem>>, vector<36x286xf32>
    %cst = arith.constant dense<0.000000e+00> : vector<32x286xf32>
    %21 = tpu.matmul %19, %20, %cst {dimension_numbers = #tpu.dot_dimension_numbers<[1], [0], [0], [1], [0, 0, 1, 1], [], []>} : vector<32x36xf32>, vector<36x286xf32>, vector<32x286xf32> -> vector<32x286xf32>
    %c0_15 = arith.constant 0 : index
    %c0_16 = arith.constant 0 : index
    %22 = vector.load %arg3[%c0_15, %c0_16] : memref<32x1xf32, #tpu.memory_space<vmem>>, vector<32x1xf32>
    %23 = vector.broadcast %22 : vector<32x1xf32> to vector<32x286xf32>
    %24 = arith.addf %21, %23 : vector<32x286xf32>
    %cst_17 = arith.constant 0.000000e+00 : f32
    %25 = vector.broadcast %cst_17 : f32 to vector<32x286xf32>
    %26 = arith.cmpf ogt, %24, %25 : vector<32x286xf32>
    %cst_18 = arith.constant 0.000000e+00 : f32
    %27 = vector.broadcast %cst_18 : f32 to vector<32x286xf32>
    %28 = arith.minimumf %24, %27 : vector<32x286xf32>
    %29 = math.exp %28 : vector<32x286xf32>
    %cst_19 = arith.constant 1.000000e+00 : f32
    %30 = vector.broadcast %cst_19 : f32 to vector<32x286xf32>
    %31 = arith.subf %29, %30 : vector<32x286xf32>
    %32 = arith.select %26, %24, %31 : vector<32x286xi1>, vector<32x286xf32>
    %33 = vector.extract_strided_slice %32 {offsets = [0, 0], sizes = [32, 285], strides = [1, 1]} : vector<32x286xf32> to vector<32x285xf32>
    %34 = vector.extract_strided_slice %32 {offsets = [0, 1], sizes = [32, 285], strides = [1, 1]} : vector<32x286xf32> to vector<32x285xf32>
    %35 = arith.maximumf %33, %34 : vector<32x285xf32>
    %36 = vector.extract_strided_slice %35 {offsets = [0, 0], sizes = [32, 267], strides = [1, 1]} : vector<32x285xf32> to vector<32x267xf32>
    %37 = vector.extract_strided_slice %35 {offsets = [0, 18], sizes = [32, 267], strides = [1, 1]} : vector<32x285xf32> to vector<32x267xf32>
    %38 = arith.maximumf %36, %37 : vector<32x267xf32>
    %c0_20 = arith.constant 0 : index
    %c0_21 = arith.constant 0 : index
    %39 = vector.load %arg4[%c0_20, %c0_21] : memref<267x64xf32, #tpu.memory_space<vmem>>, vector<267x64xf32>
    %cst_22 = arith.constant dense<0.000000e+00> : vector<32x64xf32>
    %40 = tpu.matmul %38, %39, %cst_22 {dimension_numbers = #tpu.dot_dimension_numbers<[1], [0], [0], [1], [0, 0, 1, 1], [], []>} : vector<32x267xf32>, vector<267x64xf32>, vector<32x64xf32> -> vector<32x64xf32>
    %41 = vector.extract_strided_slice %40 {offsets = [0, 0], sizes = [32, 46], strides = [1, 1]} : vector<32x64xf32> to vector<32x46xf32>
    %c0_23 = arith.constant 0 : index
    %c0_24 = arith.constant 0 : index
    %42 = vector.load %arg21[%c0_23, %c0_24] : memref<288x46xf32, #tpu.memory_space<vmem>>, vector<32x46xf32>
    tpu.vector_store %arg21[%c0_23, %c0_24], %41 {strides = array<i32>} : memref<288x46xf32, #tpu.memory_space<vmem>>, vector<32x46xf32>,
    %43 = vector.extract_strided_slice %40 {offsets = [0, 1], sizes = [32, 46], strides = [1, 1]} : vector<32x64xf32> to vector<32x46xf32>
    %c32_25 = arith.constant 32 : index
    %c0_26 = arith.constant 0 : index
    %44 = vector.load %arg21[%c32_25, %c0_26] : memref<288x46xf32, #tpu.memory_space<vmem>>, vector<32x46xf32>
    tpu.vector_store %arg21[%c32_25, %c0_26], %43 {strides = array<i32>} : memref<288x46xf32, #tpu.memory_space<vmem>>, vector<32x46xf32>,
    %45 = vector.extract_strided_slice %40 {offsets = [0, 2], sizes = [32, 46], strides = [1, 1]} : vector<32x64xf32> to vector<32x46xf32>
    %c64 = arith.constant 64 : index
    %c0_27 = arith.constant 0 : index
    %46 = vector.load %arg21[%c64, %c0_27] : memref<288x46xf32, #tpu.memory_space<vmem>>, vector<32x46xf32>
    tpu.vector_store %arg21[%c64, %c0_27], %45 {strides = array<i32>} : memref<288x46xf32, #tpu.memory_space<vmem>>, vector<32x46xf32>,
    %47 = vector.extract_strided_slice %40 {offsets = [0, 8], sizes = [32, 46], strides = [1, 1]} : vector<32x64xf32> to vector<32x46xf32>
    %c96 = arith.constant 96 : index
    %c0_28 = arith.constant 0 : index
    %48 = vector.load %arg21[%c96, %c0_28] : memref<288x46xf32, #tpu.memory_space<vmem>>, vector<32x46xf32>
    tpu.vector_store %arg21[%c96, %c0_28], %47 {strides = array<i32>} : memref<288x46xf32, #tpu.memory_space<vmem>>, vector<32x46xf32>,
    %49 = vector.extract_strided_slice %40 {offsets = [0, 9], sizes = [32, 46], strides = [1, 1]} : vector<32x64xf32> to vector<32x46xf32>
    %c128 = arith.constant 128 : index
    %c0_29 = arith.constant 0 : index
    %50 = vector.load %arg21[%c128, %c0_29] : memref<288x46xf32, #tpu.memory_space<vmem>>, vector<32x46xf32>
    tpu.vector_store %arg21[%c128, %c0_29], %49 {strides = array<i32>} : memref<288x46xf32, #tpu.memory_space<vmem>>, vector<32x46xf32>,
    %51 = vector.extract_strided_slice %40 {offsets = [0, 10], sizes = [32, 46], strides = [1, 1]} : vector<32x64xf32> to vector<32x46xf32>
    %c160 = arith.constant 160 : index
    %c0_30 = arith.constant 0 : index
    %52 = vector.load %arg21[%c160, %c0_30] : memref<288x46xf32, #tpu.memory_space<vmem>>, vector<32x46xf32>
    tpu.vector_store %arg21[%c160, %c0_30], %51 {strides = array<i32>} : memref<288x46xf32, #tpu.memory_space<vmem>>, vector<32x46xf32>,
    %53 = vector.extract_strided_slice %40 {offsets = [0, 16], sizes = [32, 46], strides = [1, 1]} : vector<32x64xf32> to vector<32x46xf32>
    %c192 = arith.constant 192 : index
    %c0_31 = arith.constant 0 : index
    %54 = vector.load %arg21[%c192, %c0_31] : memref<288x46xf32, #tpu.memory_space<vmem>>, vector<32x46xf32>
    tpu.vector_store %arg21[%c192, %c0_31], %53 {strides = array<i32>} : memref<288x46xf32, #tpu.memory_space<vmem>>, vector<32x46xf32>,
    %55 = vector.extract_strided_slice %40 {offsets = [0, 17], sizes = [32, 46], strides = [1, 1]} : vector<32x64xf32> to vector<32x46xf32>
    %c224 = arith.constant 224 : index
    %c0_32 = arith.constant 0 : index
    %56 = vector.load %arg21[%c224, %c0_32] : memref<288x46xf32, #tpu.memory_space<vmem>>, vector<32x46xf32>
    tpu.vector_store %arg21[%c224, %c0_32], %55 {strides = array<i32>} : memref<288x46xf32, #tpu.memory_space<vmem>>, vector<32x46xf32>,
    %57 = vector.extract_strided_slice %40 {offsets = [0, 18], sizes = [32, 46], strides = [1, 1]} : vector<32x64xf32> to vector<32x46xf32>
    %c256 = arith.constant 256 : index
    %c0_33 = arith.constant 0 : index
    %58 = vector.load %arg21[%c256, %c0_33] : memref<288x46xf32, #tpu.memory_space<vmem>>, vector<32x46xf32>
    tpu.vector_store %arg21[%c256, %c0_33], %57 {strides = array<i32>} : memref<288x46xf32, #tpu.memory_space<vmem>>, vector<32x46xf32>,
    %c0_34 = arith.constant 0 : index
    %c0_35 = arith.constant 0 : index
    %59 = vector.load %arg5[%c0_34, %c0_35] : memref<64x288xf32, #tpu.memory_space<vmem>>, vector<64x288xf32>
    %c0_36 = arith.constant 0 : index
    %c0_37 = arith.constant 0 : index
    %60 = vector.load %arg21[%c0_36, %c0_37] : memref<288x46xf32, #tpu.memory_space<vmem>>, vector<288x46xf32>
    %cst_38 = arith.constant dense<0.000000e+00> : vector<64x46xf32>
    %61 = tpu.matmul %59, %60, %cst_38 {dimension_numbers = #tpu.dot_dimension_numbers<[1], [0], [0], [1], [0, 0, 1, 1], [], []>} : vector<64x288xf32>, vector<288x46xf32>, vector<64x46xf32> -> vector<64x46xf32>
    %c0_39 = arith.constant 0 : index
    %c0_40 = arith.constant 0 : index
    %62 = vector.load %arg6[%c0_39, %c0_40] : memref<64x1xf32, #tpu.memory_space<vmem>>, vector<64x1xf32>
    %63 = vector.broadcast %62 : vector<64x1xf32> to vector<64x46xf32>
    %64 = arith.addf %61, %63 : vector<64x46xf32>
    %cst_41 = arith.constant 0.000000e+00 : f32
    %65 = vector.broadcast %cst_41 : f32 to vector<64x46xf32>
    %66 = arith.cmpf ogt, %64, %65 : vector<64x46xf32>
    %cst_42 = arith.constant 0.000000e+00 : f32
    %67 = vector.broadcast %cst_42 : f32 to vector<64x46xf32>
    %68 = arith.minimumf %64, %67 : vector<64x46xf32>
    %69 = math.exp %68 : vector<64x46xf32>
    %cst_43 = arith.constant 1.000000e+00 : f32
    %70 = vector.broadcast %cst_43 : f32 to vector<64x46xf32>
    %71 = arith.subf %69, %70 : vector<64x46xf32>
    %72 = arith.select %66, %64, %71 : vector<64x46xi1>, vector<64x46xf32>
    %73 = vector.extract_strided_slice %72 {offsets = [0, 0], sizes = [64, 45], strides = [1, 1]} : vector<64x46xf32> to vector<64x45xf32>
    %74 = vector.extract_strided_slice %72 {offsets = [0, 1], sizes = [64, 45], strides = [1, 1]} : vector<64x46xf32> to vector<64x45xf32>
    %75 = arith.maximumf %73, %74 : vector<64x45xf32>
    %76 = vector.extract_strided_slice %75 {offsets = [0, 0], sizes = [64, 37], strides = [1, 1]} : vector<64x45xf32> to vector<64x37xf32>
    %77 = vector.extract_strided_slice %75 {offsets = [0, 8], sizes = [64, 37], strides = [1, 1]} : vector<64x45xf32> to vector<64x37xf32>
    %78 = arith.maximumf %76, %77 : vector<64x37xf32>
    %c0_44 = arith.constant 0 : index
    %c0_45 = arith.constant 0 : index
    %79 = vector.load %arg7[%c0_44, %c0_45] : memref<37x9xf32, #tpu.memory_space<vmem>>, vector<37x9xf32>
    %cst_46 = arith.constant dense<0.000000e+00> : vector<64x9xf32>
    %80 = tpu.matmul %78, %79, %cst_46 {dimension_numbers = #tpu.dot_dimension_numbers<[1], [0], [0], [1], [0, 0, 1, 1], [], []>} : vector<64x37xf32>, vector<37x9xf32>, vector<64x9xf32> -> vector<64x9xf32>
    %81 = vector.extract_strided_slice %80 {offsets = [0, 0], sizes = [2, 9], strides = [1, 1]} : vector<64x9xf32> to vector<2x9xf32>
    %c0_47 = arith.constant 0 : index
    %c0_48 = arith.constant 0 : index
    %82 = vector.load %arg24[%c0_47, %c0_48] : memref<2x288xf32, #tpu.memory_space<vmem>>, vector<2x9xf32>
    tpu.vector_store %arg24[%c0_47, %c0_48], %81 {strides = array<i32>} : memref<2x288xf32, #tpu.memory_space<vmem>>, vector<2x9xf32>,
    %83 = vector.extract_strided_slice %80 {offsets = [2, 0], sizes = [2, 9], strides = [1, 1]} : vector<64x9xf32> to vector<2x9xf32>
    %c0_49 = arith.constant 0 : index
    %c9 = arith.constant 9 : index
    %84 = vector.load %arg24[%c0_49, %c9] : memref<2x288xf32, #tpu.memory_space<vmem>>, vector<2x9xf32>
    tpu.vector_store %arg24[%c0_49, %c9], %83 {strides = array<i32>} : memref<2x288xf32, #tpu.memory_space<vmem>>, vector<2x9xf32>,
    %85 = vector.extract_strided_slice %80 {offsets = [4, 0], sizes = [2, 9], strides = [1, 1]} : vector<64x9xf32> to vector<2x9xf32>
    %c0_50 = arith.constant 0 : index
    %c18 = arith.constant 18 : index
    %86 = vector.load %arg24[%c0_50, %c18] : memref<2x288xf32, #tpu.memory_space<vmem>>, vector<2x9xf32>
    tpu.vector_store %arg24[%c0_50, %c18], %85 {strides = array<i32>} : memref<2x288xf32, #tpu.memory_space<vmem>>, vector<2x9xf32>,
    %87 = vector.extract_strided_slice %80 {offsets = [6, 0], sizes = [2, 9], strides = [1, 1]} : vector<64x9xf32> to vector<2x9xf32>
    %c0_51 = arith.constant 0 : index
    %c27 = arith.constant 27 : index
    %88 = vector.load %arg24[%c0_51, %c27] : memref<2x288xf32, #tpu.memory_space<vmem>>, vector<2x9xf32>
    tpu.vector_store %arg24[%c0_51, %c27], %87 {strides = array<i32>} : memref<2x288xf32, #tpu.memory_space<vmem>>, vector<2x9xf32>,
    %89 = vector.extract_strided_slice %80 {offsets = [8, 0], sizes = [2, 9], strides = [1, 1]} : vector<64x9xf32> to vector<2x9xf32>
    %c0_52 = arith.constant 0 : index
    %c36 = arith.constant 36 : index
    %90 = vector.load %arg24[%c0_52, %c36] : memref<2x288xf32, #tpu.memory_space<vmem>>, vector<2x9xf32>
    tpu.vector_store %arg24[%c0_52, %c36], %89 {strides = array<i32>} : memref<2x288xf32, #tpu.memory_space<vmem>>, vector<2x9xf32>,
    %91 = vector.extract_strided_slice %80 {offsets = [10, 0], sizes = [2, 9], strides = [1, 1]} : vector<64x9xf32> to vector<2x9xf32>
    %c0_53 = arith.constant 0 : index
    %c45 = arith.constant 45 : index
    %92 = vector.load %arg24[%c0_53, %c45] : memref<2x288xf32, #tpu.memory_space<vmem>>, vector<2x9xf32>
    tpu.vector_store %arg24[%c0_53, %c45], %91 {strides = array<i32>} : memref<2x288xf32, #tpu.memory_space<vmem>>, vector<2x9xf32>,
    %93 = vector.extract_strided_slice %80 {offsets = [12, 0], sizes = [2, 9], strides = [1, 1]} : vector<64x9xf32> to vector<2x9xf32>
    %c0_54 = arith.constant 0 : index
    %c54 = arith.constant 54 : index
    %94 = vector.load %arg24[%c0_54, %c54] : memref<2x288xf32, #tpu.memory_space<vmem>>, vector<2x9xf32>
    tpu.vector_store %arg24[%c0_54, %c54], %93 {strides = array<i32>} : memref<2x288xf32, #tpu.memory_space<vmem>>, vector<2x9xf32>,
    %95 = vector.extract_strided_slice %80 {offsets = [14, 0], sizes = [2, 9], strides = [1, 1]} : vector<64x9xf32> to vector<2x9xf32>
    %c0_55 = arith.constant 0 : index
    %c63 = arith.constant 63 : index
    %96 = vector.load %arg24[%c0_55, %c63] : memref<2x288xf32, #tpu.memory_space<vmem>>, vector<2x9xf32>
    tpu.vector_store %arg24[%c0_55, %c63], %95 {strides = array<i32>} : memref<2x288xf32, #tpu.memory_space<vmem>>, vector<2x9xf32>,
    %97 = vector.extract_strided_slice %80 {offsets = [16, 0], sizes = [2, 9], strides = [1, 1]} : vector<64x9xf32> to vector<2x9xf32>
    %c0_56 = arith.constant 0 : index
    %c72 = arith.constant 72 : index
    %98 = vector.load %arg24[%c0_56, %c72] : memref<2x288xf32, #tpu.memory_space<vmem>>, vector<2x9xf32>
    tpu.vector_store %arg24[%c0_56, %c72], %97 {strides = array<i32>} : memref<2x288xf32, #tpu.memory_space<vmem>>, vector<2x9xf32>,
    %99 = vector.extract_strided_slice %80 {offsets = [18, 0], sizes = [2, 9], strides = [1, 1]} : vector<64x9xf32> to vector<2x9xf32>
    %c0_57 = arith.constant 0 : index
    %c81 = arith.constant 81 : index
    %100 = vector.load %arg24[%c0_57, %c81] : memref<2x288xf32, #tpu.memory_space<vmem>>, vector<2x9xf32>
    tpu.vector_store %arg24[%c0_57, %c81], %99 {strides = array<i32>} : memref<2x288xf32, #tpu.memory_space<vmem>>, vector<2x9xf32>,
    %101 = vector.extract_strided_slice %80 {offsets = [20, 0], sizes = [2, 9], strides = [1, 1]} : vector<64x9xf32> to vector<2x9xf32>
    %c0_58 = arith.constant 0 : index
    %c90 = arith.constant 90 : index
    %102 = vector.load %arg24[%c0_58, %c90] : memref<2x288xf32, #tpu.memory_space<vmem>>, vector<2x9xf32>
    tpu.vector_store %arg24[%c0_58, %c90], %101 {strides = array<i32>} : memref<2x288xf32, #tpu.memory_space<vmem>>, vector<2x9xf32>,
    %103 = vector.extract_strided_slice %80 {offsets = [22, 0], sizes = [2, 9], strides = [1, 1]} : vector<64x9xf32> to vector<2x9xf32>
    %c0_59 = arith.constant 0 : index
    %c99 = arith.constant 99 : index
    %104 = vector.load %arg24[%c0_59, %c99] : memref<2x288xf32, #tpu.memory_space<vmem>>, vector<2x9xf32>
    tpu.vector_store %arg24[%c0_59, %c99], %103 {strides = array<i32>} : memref<2x288xf32, #tpu.memory_space<vmem>>, vector<2x9xf32>,
    %105 = vector.extract_strided_slice %80 {offsets = [24, 0], sizes = [2, 9], strides = [1, 1]} : vector<64x9xf32> to vector<2x9xf32>
    %c0_60 = arith.constant 0 : index
    %c108 = arith.constant 108 : index
    %106 = vector.load %arg24[%c0_60, %c108] : memref<2x288xf32, #tpu.memory_space<vmem>>, vector<2x9xf32>
    tpu.vector_store %arg24[%c0_60, %c108], %105 {strides = array<i32>} : memref<2x288xf32, #tpu.memory_space<vmem>>, vector<2x9xf32>,
    %107 = vector.extract_strided_slice %80 {offsets = [26, 0], sizes = [2, 9], strides = [1, 1]} : vector<64x9xf32> to vector<2x9xf32>
    %c0_61 = arith.constant 0 : index
    %c117 = arith.constant 117 : index
    %108 = vector.load %arg24[%c0_61, %c117] : memref<2x288xf32, #tpu.memory_space<vmem>>, vector<2x9xf32>
    tpu.vector_store %arg24[%c0_61, %c117], %107 {strides = array<i32>} : memref<2x288xf32, #tpu.memory_space<vmem>>, vector<2x9xf32>,
    %109 = vector.extract_strided_slice %80 {offsets = [28, 0], sizes = [2, 9], strides = [1, 1]} : vector<64x9xf32> to vector<2x9xf32>
    %c0_62 = arith.constant 0 : index
    %c126 = arith.constant 126 : index
    %110 = vector.load %arg24[%c0_62, %c126] : memref<2x288xf32, #tpu.memory_space<vmem>>, vector<2x9xf32>
    tpu.vector_store %arg24[%c0_62, %c126], %109 {strides = array<i32>} : memref<2x288xf32, #tpu.memory_space<vmem>>, vector<2x9xf32>,
    %111 = vector.extract_strided_slice %80 {offsets = [30, 0], sizes = [2, 9], strides = [1, 1]} : vector<64x9xf32> to vector<2x9xf32>
    %c0_63 = arith.constant 0 : index
    %c135 = arith.constant 135 : index
    %112 = vector.load %arg24[%c0_63, %c135] : memref<2x288xf32, #tpu.memory_space<vmem>>, vector<2x9xf32>
    tpu.vector_store %arg24[%c0_63, %c135], %111 {strides = array<i32>} : memref<2x288xf32, #tpu.memory_space<vmem>>, vector<2x9xf32>,
    %113 = vector.extract_strided_slice %80 {offsets = [32, 0], sizes = [2, 9], strides = [1, 1]} : vector<64x9xf32> to vector<2x9xf32>
    %c0_64 = arith.constant 0 : index
    %c144 = arith.constant 144 : index
    %114 = vector.load %arg24[%c0_64, %c144] : memref<2x288xf32, #tpu.memory_space<vmem>>, vector<2x9xf32>
    tpu.vector_store %arg24[%c0_64, %c144], %113 {strides = array<i32>} : memref<2x288xf32, #tpu.memory_space<vmem>>, vector<2x9xf32>,
    %115 = vector.extract_strided_slice %80 {offsets = [34, 0], sizes = [2, 9], strides = [1, 1]} : vector<64x9xf32> to vector<2x9xf32>
    %c0_65 = arith.constant 0 : index
    %c153 = arith.constant 153 : index
    %116 = vector.load %arg24[%c0_65, %c153] : memref<2x288xf32, #tpu.memory_space<vmem>>, vector<2x9xf32>
    tpu.vector_store %arg24[%c0_65, %c153], %115 {strides = array<i32>} : memref<2x288xf32, #tpu.memory_space<vmem>>, vector<2x9xf32>,
    %117 = vector.extract_strided_slice %80 {offsets = [36, 0], sizes = [2, 9], strides = [1, 1]} : vector<64x9xf32> to vector<2x9xf32>
    %c0_66 = arith.constant 0 : index
    %c162 = arith.constant 162 : index
    %118 = vector.load %arg24[%c0_66, %c162] : memref<2x288xf32, #tpu.memory_space<vmem>>, vector<2x9xf32>
    tpu.vector_store %arg24[%c0_66, %c162], %117 {strides = array<i32>} : memref<2x288xf32, #tpu.memory_space<vmem>>, vector<2x9xf32>,
    %119 = vector.extract_strided_slice %80 {offsets = [38, 0], sizes = [2, 9], strides = [1, 1]} : vector<64x9xf32> to vector<2x9xf32>
    %c0_67 = arith.constant 0 : index
    %c171 = arith.constant 171 : index
    %120 = vector.load %arg24[%c0_67, %c171] : memref<2x288xf32, #tpu.memory_space<vmem>>, vector<2x9xf32>
    tpu.vector_store %arg24[%c0_67, %c171], %119 {strides = array<i32>} : memref<2x288xf32, #tpu.memory_space<vmem>>, vector<2x9xf32>,
    %121 = vector.extract_strided_slice %80 {offsets = [40, 0], sizes = [2, 9], strides = [1, 1]} : vector<64x9xf32> to vector<2x9xf32>
    %c0_68 = arith.constant 0 : index
    %c180 = arith.constant 180 : index
    %122 = vector.load %arg24[%c0_68, %c180] : memref<2x288xf32, #tpu.memory_space<vmem>>, vector<2x9xf32>
    tpu.vector_store %arg24[%c0_68, %c180], %121 {strides = array<i32>} : memref<2x288xf32, #tpu.memory_space<vmem>>, vector<2x9xf32>,
    %123 = vector.extract_strided_slice %80 {offsets = [42, 0], sizes = [2, 9], strides = [1, 1]} : vector<64x9xf32> to vector<2x9xf32>
    %c0_69 = arith.constant 0 : index
    %c189 = arith.constant 189 : index
    %124 = vector.load %arg24[%c0_69, %c189] : memref<2x288xf32, #tpu.memory_space<vmem>>, vector<2x9xf32>
    tpu.vector_store %arg24[%c0_69, %c189], %123 {strides = array<i32>} : memref<2x288xf32, #tpu.memory_space<vmem>>, vector<2x9xf32>,
    %125 = vector.extract_strided_slice %80 {offsets = [44, 0], sizes = [2, 9], strides = [1, 1]} : vector<64x9xf32> to vector<2x9xf32>
    %c0_70 = arith.constant 0 : index
    %c198 = arith.constant 198 : index
    %126 = vector.load %arg24[%c0_70, %c198] : memref<2x288xf32, #tpu.memory_space<vmem>>, vector<2x9xf32>
    tpu.vector_store %arg24[%c0_70, %c198], %125 {strides = array<i32>} : memref<2x288xf32, #tpu.memory_space<vmem>>, vector<2x9xf32>,
    %127 = vector.extract_strided_slice %80 {offsets = [46, 0], sizes = [2, 9], strides = [1, 1]} : vector<64x9xf32> to vector<2x9xf32>
    %c0_71 = arith.constant 0 : index
    %c207 = arith.constant 207 : index
    %128 = vector.load %arg24[%c0_71, %c207] : memref<2x288xf32, #tpu.memory_space<vmem>>, vector<2x9xf32>
    tpu.vector_store %arg24[%c0_71, %c207], %127 {strides = array<i32>} : memref<2x288xf32, #tpu.memory_space<vmem>>, vector<2x9xf32>,
    %129 = vector.extract_strided_slice %80 {offsets = [48, 0], sizes = [2, 9], strides = [1, 1]} : vector<64x9xf32> to vector<2x9xf32>
    %c0_72 = arith.constant 0 : index
    %c216 = arith.constant 216 : index
    %130 = vector.load %arg24[%c0_72, %c216] : memref<2x288xf32, #tpu.memory_space<vmem>>, vector<2x9xf32>
    tpu.vector_store %arg24[%c0_72, %c216], %129 {strides = array<i32>} : memref<2x288xf32, #tpu.memory_space<vmem>>, vector<2x9xf32>,
    %131 = vector.extract_strided_slice %80 {offsets = [50, 0], sizes = [2, 9], strides = [1, 1]} : vector<64x9xf32> to vector<2x9xf32>
    %c0_73 = arith.constant 0 : index
    %c225 = arith.constant 225 : index
    %132 = vector.load %arg24[%c0_73, %c225] : memref<2x288xf32, #tpu.memory_space<vmem>>, vector<2x9xf32>
    tpu.vector_store %arg24[%c0_73, %c225], %131 {strides = array<i32>} : memref<2x288xf32, #tpu.memory_space<vmem>>, vector<2x9xf32>,
    %133 = vector.extract_strided_slice %80 {offsets = [52, 0], sizes = [2, 9], strides = [1, 1]} : vector<64x9xf32> to vector<2x9xf32>
    %c0_74 = arith.constant 0 : index
    %c234 = arith.constant 234 : index
    %134 = vector.load %arg24[%c0_74, %c234] : memref<2x288xf32, #tpu.memory_space<vmem>>, vector<2x9xf32>
    tpu.vector_store %arg24[%c0_74, %c234], %133 {strides = array<i32>} : memref<2x288xf32, #tpu.memory_space<vmem>>, vector<2x9xf32>,
    %135 = vector.extract_strided_slice %80 {offsets = [54, 0], sizes = [2, 9], strides = [1, 1]} : vector<64x9xf32> to vector<2x9xf32>
    %c0_75 = arith.constant 0 : index
    %c243 = arith.constant 243 : index
    %136 = vector.load %arg24[%c0_75, %c243] : memref<2x288xf32, #tpu.memory_space<vmem>>, vector<2x9xf32>
    tpu.vector_store %arg24[%c0_75, %c243], %135 {strides = array<i32>} : memref<2x288xf32, #tpu.memory_space<vmem>>, vector<2x9xf32>,
    %137 = vector.extract_strided_slice %80 {offsets = [56, 0], sizes = [2, 9], strides = [1, 1]} : vector<64x9xf32> to vector<2x9xf32>
    %c0_76 = arith.constant 0 : index
    %c252 = arith.constant 252 : index
    %138 = vector.load %arg24[%c0_76, %c252] : memref<2x288xf32, #tpu.memory_space<vmem>>, vector<2x9xf32>
    tpu.vector_store %arg24[%c0_76, %c252], %137 {strides = array<i32>} : memref<2x288xf32, #tpu.memory_space<vmem>>, vector<2x9xf32>,
    %139 = vector.extract_strided_slice %80 {offsets = [58, 0], sizes = [2, 9], strides = [1, 1]} : vector<64x9xf32> to vector<2x9xf32>
    %c0_77 = arith.constant 0 : index
    %c261 = arith.constant 261 : index
    %140 = vector.load %arg24[%c0_77, %c261] : memref<2x288xf32, #tpu.memory_space<vmem>>, vector<2x9xf32>
    tpu.vector_store %arg24[%c0_77, %c261], %139 {strides = array<i32>} : memref<2x288xf32, #tpu.memory_space<vmem>>, vector<2x9xf32>,
    %141 = vector.extract_strided_slice %80 {offsets = [60, 0], sizes = [2, 9], strides = [1, 1]} : vector<64x9xf32> to vector<2x9xf32>
    %c0_78 = arith.constant 0 : index
    %c270 = arith.constant 270 : index
    %142 = vector.load %arg24[%c0_78, %c270] : memref<2x288xf32, #tpu.memory_space<vmem>>, vector<2x9xf32>
    tpu.vector_store %arg24[%c0_78, %c270], %141 {strides = array<i32>} : memref<2x288xf32, #tpu.memory_space<vmem>>, vector<2x9xf32>,
    %143 = vector.extract_strided_slice %80 {offsets = [62, 0], sizes = [2, 9], strides = [1, 1]} : vector<64x9xf32> to vector<2x9xf32>
    %c0_79 = arith.constant 0 : index
    %c279 = arith.constant 279 : index
    %144 = vector.load %arg24[%c0_79, %c279] : memref<2x288xf32, #tpu.memory_space<vmem>>, vector<2x9xf32>
    tpu.vector_store %arg24[%c0_79, %c279], %143 {strides = array<i32>} : memref<2x288xf32, #tpu.memory_space<vmem>>, vector<2x9xf32>,
    %c0_80 = arith.constant 0 : index
    %c0_81 = arith.constant 0 : index
    %145 = vector.load %arg24[%c0_80, %c0_81] : memref<2x288xf32, #tpu.memory_space<vmem>>, vector<2x288xf32>
    %c0_82 = arith.constant 0 : index
    %c0_83 = arith.constant 0 : index
    %146 = vector.load %arg8[%c0_82, %c0_83] : memref<288x288xf32, #tpu.memory_space<vmem>>, vector<288x288xf32>
    %cst_84 = arith.constant dense<0.000000e+00> : vector<2x288xf32>
    %147 = tpu.matmul %145, %146, %cst_84 {dimension_numbers = #tpu.dot_dimension_numbers<[1], [0], [0], [1], [0, 0, 1, 1], [], []>} : vector<2x288xf32>, vector<288x288xf32>, vector<2x288xf32> -> vector<2x288xf32>
    %c0_85 = arith.constant 0 : index
    %c0_86 = arith.constant 0 : index
    %148 = vector.load %arg9[%c0_85, %c0_86] : memref<1x288xf32, #tpu.memory_space<vmem>>, vector<1x288xf32>
    %149 = vector.broadcast %148 : vector<1x288xf32> to vector<2x288xf32>
    %150 = arith.addf %147, %149 : vector<2x288xf32>
    %151 = vector.extract_strided_slice %150 {offsets = [0, 0], sizes = [2, 9], strides = [1, 1]} : vector<2x288xf32> to vector<2x9xf32>
    %c0_87 = arith.constant 0 : index
    %c0_88 = arith.constant 0 : index
    %152 = vector.load %arg25[%c0_87, %c0_88] : memref<64x9xf32, #tpu.memory_space<vmem>>, vector<2x9xf32>
    tpu.vector_store %arg25[%c0_87, %c0_88], %151 {strides = array<i32>} : memref<64x9xf32, #tpu.memory_space<vmem>>, vector<2x9xf32>,
    %153 = vector.extract_strided_slice %150 {offsets = [0, 9], sizes = [2, 9], strides = [1, 1]} : vector<2x288xf32> to vector<2x9xf32>
    %c2 = arith.constant 2 : index
    %c0_89 = arith.constant 0 : index
    %154 = vector.load %arg25[%c2, %c0_89] : memref<64x9xf32, #tpu.memory_space<vmem>>, vector<2x9xf32>
    tpu.vector_store %arg25[%c2, %c0_89], %153 {strides = array<i32>} : memref<64x9xf32, #tpu.memory_space<vmem>>, vector<2x9xf32>,
    %155 = vector.extract_strided_slice %150 {offsets = [0, 18], sizes = [2, 9], strides = [1, 1]} : vector<2x288xf32> to vector<2x9xf32>
    %c4_90 = arith.constant 4 : index
    %c0_91 = arith.constant 0 : index
    %156 = vector.load %arg25[%c4_90, %c0_91] : memref<64x9xf32, #tpu.memory_space<vmem>>, vector<2x9xf32>
    tpu.vector_store %arg25[%c4_90, %c0_91], %155 {strides = array<i32>} : memref<64x9xf32, #tpu.memory_space<vmem>>, vector<2x9xf32>,
    %157 = vector.extract_strided_slice %150 {offsets = [0, 27], sizes = [2, 9], strides = [1, 1]} : vector<2x288xf32> to vector<2x9xf32>
    %c6 = arith.constant 6 : index
    %c0_92 = arith.constant 0 : index
    %158 = vector.load %arg25[%c6, %c0_92] : memref<64x9xf32, #tpu.memory_space<vmem>>, vector<2x9xf32>
    tpu.vector_store %arg25[%c6, %c0_92], %157 {strides = array<i32>} : memref<64x9xf32, #tpu.memory_space<vmem>>, vector<2x9xf32>,
    %159 = vector.extract_strided_slice %150 {offsets = [0, 36], sizes = [2, 9], strides = [1, 1]} : vector<2x288xf32> to vector<2x9xf32>
    %c8_93 = arith.constant 8 : index
    %c0_94 = arith.constant 0 : index
    %160 = vector.load %arg25[%c8_93, %c0_94] : memref<64x9xf32, #tpu.memory_space<vmem>>, vector<2x9xf32>
    tpu.vector_store %arg25[%c8_93, %c0_94], %159 {strides = array<i32>} : memref<64x9xf32, #tpu.memory_space<vmem>>, vector<2x9xf32>,
    %161 = vector.extract_strided_slice %150 {offsets = [0, 45], sizes = [2, 9], strides = [1, 1]} : vector<2x288xf32> to vector<2x9xf32>
    %c10 = arith.constant 10 : index
    %c0_95 = arith.constant 0 : index
    %162 = vector.load %arg25[%c10, %c0_95] : memref<64x9xf32, #tpu.memory_space<vmem>>, vector<2x9xf32>
    tpu.vector_store %arg25[%c10, %c0_95], %161 {strides = array<i32>} : memref<64x9xf32, #tpu.memory_space<vmem>>, vector<2x9xf32>,
    %163 = vector.extract_strided_slice %150 {offsets = [0, 54], sizes = [2, 9], strides = [1, 1]} : vector<2x288xf32> to vector<2x9xf32>
    %c12_96 = arith.constant 12 : index
    %c0_97 = arith.constant 0 : index
    %164 = vector.load %arg25[%c12_96, %c0_97] : memref<64x9xf32, #tpu.memory_space<vmem>>, vector<2x9xf32>
    tpu.vector_store %arg25[%c12_96, %c0_97], %163 {strides = array<i32>} : memref<64x9xf32, #tpu.memory_space<vmem>>, vector<2x9xf32>,
    %165 = vector.extract_strided_slice %150 {offsets = [0, 63], sizes = [2, 9], strides = [1, 1]} : vector<2x288xf32> to vector<2x9xf32>
    %c14 = arith.constant 14 : index
    %c0_98 = arith.constant 0 : index
    %166 = vector.load %arg25[%c14, %c0_98] : memref<64x9xf32, #tpu.memory_space<vmem>>, vector<2x9xf32>
    tpu.vector_store %arg25[%c14, %c0_98], %165 {strides = array<i32>} : memref<64x9xf32, #tpu.memory_space<vmem>>, vector<2x9xf32>,
    %167 = vector.extract_strided_slice %150 {offsets = [0, 72], sizes = [2, 9], strides = [1, 1]} : vector<2x288xf32> to vector<2x9xf32>
    %c16_99 = arith.constant 16 : index
    %c0_100 = arith.constant 0 : index
    %168 = vector.load %arg25[%c16_99, %c0_100] : memref<64x9xf32, #tpu.memory_space<vmem>>, vector<2x9xf32>
    tpu.vector_store %arg25[%c16_99, %c0_100], %167 {strides = array<i32>} : memref<64x9xf32, #tpu.memory_space<vmem>>, vector<2x9xf32>,
    %169 = vector.extract_strided_slice %150 {offsets = [0, 81], sizes = [2, 9], strides = [1, 1]} : vector<2x288xf32> to vector<2x9xf32>
    %c18_101 = arith.constant 18 : index
    %c0_102 = arith.constant 0 : index
    %170 = vector.load %arg25[%c18_101, %c0_102] : memref<64x9xf32, #tpu.memory_space<vmem>>, vector<2x9xf32>
    tpu.vector_store %arg25[%c18_101, %c0_102], %169 {strides = array<i32>} : memref<64x9xf32, #tpu.memory_space<vmem>>, vector<2x9xf32>,
    %171 = vector.extract_strided_slice %150 {offsets = [0, 90], sizes = [2, 9], strides = [1, 1]} : vector<2x288xf32> to vector<2x9xf32>
    %c20_103 = arith.constant 20 : index
    %c0_104 = arith.constant 0 : index
    %172 = vector.load %arg25[%c20_103, %c0_104] : memref<64x9xf32, #tpu.memory_space<vmem>>, vector<2x9xf32>
    tpu.vector_store %arg25[%c20_103, %c0_104], %171 {strides = array<i32>} : memref<64x9xf32, #tpu.memory_space<vmem>>, vector<2x9xf32>,
    %173 = vector.extract_strided_slice %150 {offsets = [0, 99], sizes = [2, 9], strides = [1, 1]} : vector<2x288xf32> to vector<2x9xf32>
    %c22 = arith.constant 22 : index
    %c0_105 = arith.constant 0 : index
    %174 = vector.load %arg25[%c22, %c0_105] : memref<64x9xf32, #tpu.memory_space<vmem>>, vector<2x9xf32>
    tpu.vector_store %arg25[%c22, %c0_105], %173 {strides = array<i32>} : memref<64x9xf32, #tpu.memory_space<vmem>>, vector<2x9xf32>,
    %175 = vector.extract_strided_slice %150 {offsets = [0, 108], sizes = [2, 9], strides = [1, 1]} : vector<2x288xf32> to vector<2x9xf32>
    %c24_106 = arith.constant 24 : index
    %c0_107 = arith.constant 0 : index
    %176 = vector.load %arg25[%c24_106, %c0_107] : memref<64x9xf32, #tpu.memory_space<vmem>>, vector<2x9xf32>
    tpu.vector_store %arg25[%c24_106, %c0_107], %175 {strides = array<i32>} : memref<64x9xf32, #tpu.memory_space<vmem>>, vector<2x9xf32>,
    %177 = vector.extract_strided_slice %150 {offsets = [0, 117], sizes = [2, 9], strides = [1, 1]} : vector<2x288xf32> to vector<2x9xf32>
    %c26 = arith.constant 26 : index
    %c0_108 = arith.constant 0 : index
    %178 = vector.load %arg25[%c26, %c0_108] : memref<64x9xf32, #tpu.memory_space<vmem>>, vector<2x9xf32>
    tpu.vector_store %arg25[%c26, %c0_108], %177 {strides = array<i32>} : memref<64x9xf32, #tpu.memory_space<vmem>>, vector<2x9xf32>,
    %179 = vector.extract_strided_slice %150 {offsets = [0, 126], sizes = [2, 9], strides = [1, 1]} : vector<2x288xf32> to vector<2x9xf32>
    %c28_109 = arith.constant 28 : index
    %c0_110 = arith.constant 0 : index
    %180 = vector.load %arg25[%c28_109, %c0_110] : memref<64x9xf32, #tpu.memory_space<vmem>>, vector<2x9xf32>
    tpu.vector_store %arg25[%c28_109, %c0_110], %179 {strides = array<i32>} : memref<64x9xf32, #tpu.memory_space<vmem>>, vector<2x9xf32>,
    %181 = vector.extract_strided_slice %150 {offsets = [0, 135], sizes = [2, 9], strides = [1, 1]} : vector<2x288xf32> to vector<2x9xf32>
    %c30 = arith.constant 30 : index
    %c0_111 = arith.constant 0 : index
    %182 = vector.load %arg25[%c30, %c0_111] : memref<64x9xf32, #tpu.memory_space<vmem>>, vector<2x9xf32>
    tpu.vector_store %arg25[%c30, %c0_111], %181 {strides = array<i32>} : memref<64x9xf32, #tpu.memory_space<vmem>>, vector<2x9xf32>,
    %183 = vector.extract_strided_slice %150 {offsets = [0, 144], sizes = [2, 9], strides = [1, 1]} : vector<2x288xf32> to vector<2x9xf32>
    %c32_112 = arith.constant 32 : index
    %c0_113 = arith.constant 0 : index
    %184 = vector.load %arg25[%c32_112, %c0_113] : memref<64x9xf32, #tpu.memory_space<vmem>>, vector<2x9xf32>
    tpu.vector_store %arg25[%c32_112, %c0_113], %183 {strides = array<i32>} : memref<64x9xf32, #tpu.memory_space<vmem>>, vector<2x9xf32>,
    %185 = vector.extract_strided_slice %150 {offsets = [0, 153], sizes = [2, 9], strides = [1, 1]} : vector<2x288xf32> to vector<2x9xf32>
    %c34 = arith.constant 34 : index
    %c0_114 = arith.constant 0 : index
    %186 = vector.load %arg25[%c34, %c0_114] : memref<64x9xf32, #tpu.memory_space<vmem>>, vector<2x9xf32>
    tpu.vector_store %arg25[%c34, %c0_114], %185 {strides = array<i32>} : memref<64x9xf32, #tpu.memory_space<vmem>>, vector<2x9xf32>,
    %187 = vector.extract_strided_slice %150 {offsets = [0, 162], sizes = [2, 9], strides = [1, 1]} : vector<2x288xf32> to vector<2x9xf32>
    %c36_115 = arith.constant 36 : index
    %c0_116 = arith.constant 0 : index
    %188 = vector.load %arg25[%c36_115, %c0_116] : memref<64x9xf32, #tpu.memory_space<vmem>>, vector<2x9xf32>
    tpu.vector_store %arg25[%c36_115, %c0_116], %187 {strides = array<i32>} : memref<64x9xf32, #tpu.memory_space<vmem>>, vector<2x9xf32>,
    %189 = vector.extract_strided_slice %150 {offsets = [0, 171], sizes = [2, 9], strides = [1, 1]} : vector<2x288xf32> to vector<2x9xf32>
    %c38 = arith.constant 38 : index
    %c0_117 = arith.constant 0 : index
    %190 = vector.load %arg25[%c38, %c0_117] : memref<64x9xf32, #tpu.memory_space<vmem>>, vector<2x9xf32>
    tpu.vector_store %arg25[%c38, %c0_117], %189 {strides = array<i32>} : memref<64x9xf32, #tpu.memory_space<vmem>>, vector<2x9xf32>,
    %191 = vector.extract_strided_slice %150 {offsets = [0, 180], sizes = [2, 9], strides = [1, 1]} : vector<2x288xf32> to vector<2x9xf32>
    %c40 = arith.constant 40 : index
    %c0_118 = arith.constant 0 : index
    %192 = vector.load %arg25[%c40, %c0_118] : memref<64x9xf32, #tpu.memory_space<vmem>>, vector<2x9xf32>
    tpu.vector_store %arg25[%c40, %c0_118], %191 {strides = array<i32>} : memref<64x9xf32, #tpu.memory_space<vmem>>, vector<2x9xf32>,
    %193 = vector.extract_strided_slice %150 {offsets = [0, 189], sizes = [2, 9], strides = [1, 1]} : vector<2x288xf32> to vector<2x9xf32>
    %c42 = arith.constant 42 : index
    %c0_119 = arith.constant 0 : index
    %194 = vector.load %arg25[%c42, %c0_119] : memref<64x9xf32, #tpu.memory_space<vmem>>, vector<2x9xf32>
    tpu.vector_store %arg25[%c42, %c0_119], %193 {strides = array<i32>} : memref<64x9xf32, #tpu.memory_space<vmem>>, vector<2x9xf32>,
    %195 = vector.extract_strided_slice %150 {offsets = [0, 198], sizes = [2, 9], strides = [1, 1]} : vector<2x288xf32> to vector<2x9xf32>
    %c44 = arith.constant 44 : index
    %c0_120 = arith.constant 0 : index
    %196 = vector.load %arg25[%c44, %c0_120] : memref<64x9xf32, #tpu.memory_space<vmem>>, vector<2x9xf32>
    tpu.vector_store %arg25[%c44, %c0_120], %195 {strides = array<i32>} : memref<64x9xf32, #tpu.memory_space<vmem>>, vector<2x9xf32>,
    %197 = vector.extract_strided_slice %150 {offsets = [0, 207], sizes = [2, 9], strides = [1, 1]} : vector<2x288xf32> to vector<2x9xf32>
    %c46 = arith.constant 46 : index
    %c0_121 = arith.constant 0 : index
    %198 = vector.load %arg25[%c46, %c0_121] : memref<64x9xf32, #tpu.memory_space<vmem>>, vector<2x9xf32>
    tpu.vector_store %arg25[%c46, %c0_121], %197 {strides = array<i32>} : memref<64x9xf32, #tpu.memory_space<vmem>>, vector<2x9xf32>,
    %199 = vector.extract_strided_slice %150 {offsets = [0, 216], sizes = [2, 9], strides = [1, 1]} : vector<2x288xf32> to vector<2x9xf32>
    %c48 = arith.constant 48 : index
    %c0_122 = arith.constant 0 : index
    %200 = vector.load %arg25[%c48, %c0_122] : memref<64x9xf32, #tpu.memory_space<vmem>>, vector<2x9xf32>
    tpu.vector_store %arg25[%c48, %c0_122], %199 {strides = array<i32>} : memref<64x9xf32, #tpu.memory_space<vmem>>, vector<2x9xf32>,
    %201 = vector.extract_strided_slice %150 {offsets = [0, 225], sizes = [2, 9], strides = [1, 1]} : vector<2x288xf32> to vector<2x9xf32>
    %c50 = arith.constant 50 : index
    %c0_123 = arith.constant 0 : index
    %202 = vector.load %arg25[%c50, %c0_123] : memref<64x9xf32, #tpu.memory_space<vmem>>, vector<2x9xf32>
    tpu.vector_store %arg25[%c50, %c0_123], %201 {strides = array<i32>} : memref<64x9xf32, #tpu.memory_space<vmem>>, vector<2x9xf32>,
    %203 = vector.extract_strided_slice %150 {offsets = [0, 234], sizes = [2, 9], strides = [1, 1]} : vector<2x288xf32> to vector<2x9xf32>
    %c52 = arith.constant 52 : index
    %c0_124 = arith.constant 0 : index
    %204 = vector.load %arg25[%c52, %c0_124] : memref<64x9xf32, #tpu.memory_space<vmem>>, vector<2x9xf32>
    tpu.vector_store %arg25[%c52, %c0_124], %203 {strides = array<i32>} : memref<64x9xf32, #tpu.memory_space<vmem>>, vector<2x9xf32>,
    %205 = vector.extract_strided_slice %150 {offsets = [0, 243], sizes = [2, 9], strides = [1, 1]} : vector<2x288xf32> to vector<2x9xf32>
    %c54_125 = arith.constant 54 : index
    %c0_126 = arith.constant 0 : index
    %206 = vector.load %arg25[%c54_125, %c0_126] : memref<64x9xf32, #tpu.memory_space<vmem>>, vector<2x9xf32>
    tpu.vector_store %arg25[%c54_125, %c0_126], %205 {strides = array<i32>} : memref<64x9xf32, #tpu.memory_space<vmem>>, vector<2x9xf32>,
    %207 = vector.extract_strided_slice %150 {offsets = [0, 252], sizes = [2, 9], strides = [1, 1]} : vector<2x288xf32> to vector<2x9xf32>
    %c56 = arith.constant 56 : index
    %c0_127 = arith.constant 0 : index
    %208 = vector.load %arg25[%c56, %c0_127] : memref<64x9xf32, #tpu.memory_space<vmem>>, vector<2x9xf32>
    tpu.vector_store %arg25[%c56, %c0_127], %207 {strides = array<i32>} : memref<64x9xf32, #tpu.memory_space<vmem>>, vector<2x9xf32>,
    %209 = vector.extract_strided_slice %150 {offsets = [0, 261], sizes = [2, 9], strides = [1, 1]} : vector<2x288xf32> to vector<2x9xf32>
    %c58 = arith.constant 58 : index
    %c0_128 = arith.constant 0 : index
    %210 = vector.load %arg25[%c58, %c0_128] : memref<64x9xf32, #tpu.memory_space<vmem>>, vector<2x9xf32>
    tpu.vector_store %arg25[%c58, %c0_128], %209 {strides = array<i32>} : memref<64x9xf32, #tpu.memory_space<vmem>>, vector<2x9xf32>,
    %211 = vector.extract_strided_slice %150 {offsets = [0, 270], sizes = [2, 9], strides = [1, 1]} : vector<2x288xf32> to vector<2x9xf32>
    %c60 = arith.constant 60 : index
    %c0_129 = arith.constant 0 : index
    %212 = vector.load %arg25[%c60, %c0_129] : memref<64x9xf32, #tpu.memory_space<vmem>>, vector<2x9xf32>
    tpu.vector_store %arg25[%c60, %c0_129], %211 {strides = array<i32>} : memref<64x9xf32, #tpu.memory_space<vmem>>, vector<2x9xf32>,
    %213 = vector.extract_strided_slice %150 {offsets = [0, 279], sizes = [2, 9], strides = [1, 1]} : vector<2x288xf32> to vector<2x9xf32>
    %c62 = arith.constant 62 : index
    %c0_130 = arith.constant 0 : index
    %214 = vector.load %arg25[%c62, %c0_130] : memref<64x9xf32, #tpu.memory_space<vmem>>, vector<2x9xf32>
    tpu.vector_store %arg25[%c62, %c0_130], %213 {strides = array<i32>} : memref<64x9xf32, #tpu.memory_space<vmem>>, vector<2x9xf32>,
    %c0_131 = arith.constant 0 : index
    %c0_132 = arith.constant 0 : index
    %215 = vector.load %arg25[%c0_131, %c0_132] : memref<64x9xf32, #tpu.memory_space<vmem>>, vector<64x9xf32>
    %c0_133 = arith.constant 0 : index
    %c0_134 = arith.constant 0 : index
    %216 = vector.load %arg10[%c0_133, %c0_134] : memref<9x46xf32, #tpu.memory_space<vmem>>, vector<9x46xf32>
    %cst_135 = arith.constant dense<0.000000e+00> : vector<64x46xf32>
    %217 = tpu.matmul %215, %216, %cst_135 {dimension_numbers = #tpu.dot_dimension_numbers<[1], [0], [0], [1], [0, 0, 1, 1], [], []>} : vector<64x9xf32>, vector<9x46xf32>, vector<64x46xf32> -> vector<64x46xf32>
    %218 = arith.addf %72, %217 : vector<64x46xf32>
    %c0_136 = arith.constant 0 : index
    %c0_137 = arith.constant 0 : index
    %219 = vector.load %arg11[%c0_136, %c0_137] : memref<46x100xf32, #tpu.memory_space<vmem>>, vector<46x100xf32>
    %cst_138 = arith.constant dense<0.000000e+00> : vector<64x100xf32>
    %220 = tpu.matmul %218, %219, %cst_138 {dimension_numbers = #tpu.dot_dimension_numbers<[1], [0], [0], [1], [0, 0, 1, 1], [], []>} : vector<64x46xf32>, vector<46x100xf32>, vector<64x100xf32> -> vector<64x100xf32>
    %221 = vector.extract_strided_slice %220 {offsets = [0, 0], sizes = [64, 78], strides = [1, 1]} : vector<64x100xf32> to vector<64x78xf32>
    %c0_139 = arith.constant 0 : index
    %c0_140 = arith.constant 0 : index
    %222 = vector.load %arg22[%c0_139, %c0_140] : memref<576x78xf32, #tpu.memory_space<vmem>>, vector<64x78xf32>
    tpu.vector_store %arg22[%c0_139, %c0_140], %221 {strides = array<i32>} : memref<576x78xf32, #tpu.memory_space<vmem>>, vector<64x78xf32>,
    %223 = vector.extract_strided_slice %220 {offsets = [0, 1], sizes = [64, 78], strides = [1, 1]} : vector<64x100xf32> to vector<64x78xf32>
    %c64_141 = arith.constant 64 : index
    %c0_142 = arith.constant 0 : index
    %224 = vector.load %arg22[%c64_141, %c0_142] : memref<576x78xf32, #tpu.memory_space<vmem>>, vector<64x78xf32>
    tpu.vector_store %arg22[%c64_141, %c0_142], %223 {strides = array<i32>} : memref<576x78xf32, #tpu.memory_space<vmem>>, vector<64x78xf32>,
    %225 = vector.extract_strided_slice %220 {offsets = [0, 2], sizes = [64, 78], strides = [1, 1]} : vector<64x100xf32> to vector<64x78xf32>
    %c128_143 = arith.constant 128 : index
    %c0_144 = arith.constant 0 : index
    %226 = vector.load %arg22[%c128_143, %c0_144] : memref<576x78xf32, #tpu.memory_space<vmem>>, vector<64x78xf32>
    tpu.vector_store %arg22[%c128_143, %c0_144], %225 {strides = array<i32>} : memref<576x78xf32, #tpu.memory_space<vmem>>, vector<64x78xf32>,
    %227 = vector.extract_strided_slice %220 {offsets = [0, 10], sizes = [64, 78], strides = [1, 1]} : vector<64x100xf32> to vector<64x78xf32>
    %c192_145 = arith.constant 192 : index
    %c0_146 = arith.constant 0 : index
    %228 = vector.load %arg22[%c192_145, %c0_146] : memref<576x78xf32, #tpu.memory_space<vmem>>, vector<64x78xf32>
    tpu.vector_store %arg22[%c192_145, %c0_146], %227 {strides = array<i32>} : memref<576x78xf32, #tpu.memory_space<vmem>>, vector<64x78xf32>,
    %229 = vector.extract_strided_slice %220 {offsets = [0, 11], sizes = [64, 78], strides = [1, 1]} : vector<64x100xf32> to vector<64x78xf32>
    %c256_147 = arith.constant 256 : index
    %c0_148 = arith.constant 0 : index
    %230 = vector.load %arg22[%c256_147, %c0_148] : memref<576x78xf32, #tpu.memory_space<vmem>>, vector<64x78xf32>
    tpu.vector_store %arg22[%c256_147, %c0_148], %229 {strides = array<i32>} : memref<576x78xf32, #tpu.memory_space<vmem>>, vector<64x78xf32>,
    %231 = vector.extract_strided_slice %220 {offsets = [0, 12], sizes = [64, 78], strides = [1, 1]} : vector<64x100xf32> to vector<64x78xf32>
    %c320 = arith.constant 320 : index
    %c0_149 = arith.constant 0 : index
    %232 = vector.load %arg22[%c320, %c0_149] : memref<576x78xf32, #tpu.memory_space<vmem>>, vector<64x78xf32>
    tpu.vector_store %arg22[%c320, %c0_149], %231 {strides = array<i32>} : memref<576x78xf32, #tpu.memory_space<vmem>>, vector<64x78xf32>,
    %233 = vector.extract_strided_slice %220 {offsets = [0, 20], sizes = [64, 78], strides = [1, 1]} : vector<64x100xf32> to vector<64x78xf32>
    %c384 = arith.constant 384 : index
    %c0_150 = arith.constant 0 : index
    %234 = vector.load %arg22[%c384, %c0_150] : memref<576x78xf32, #tpu.memory_space<vmem>>, vector<64x78xf32>
    tpu.vector_store %arg22[%c384, %c0_150], %233 {strides = array<i32>} : memref<576x78xf32, #tpu.memory_space<vmem>>, vector<64x78xf32>,
    %235 = vector.extract_strided_slice %220 {offsets = [0, 21], sizes = [64, 78], strides = [1, 1]} : vector<64x100xf32> to vector<64x78xf32>
    %c448 = arith.constant 448 : index
    %c0_151 = arith.constant 0 : index
    %236 = vector.load %arg22[%c448, %c0_151] : memref<576x78xf32, #tpu.memory_space<vmem>>, vector<64x78xf32>
    tpu.vector_store %arg22[%c448, %c0_151], %235 {strides = array<i32>} : memref<576x78xf32, #tpu.memory_space<vmem>>, vector<64x78xf32>,
    %237 = vector.extract_strided_slice %220 {offsets = [0, 22], sizes = [64, 78], strides = [1, 1]} : vector<64x100xf32> to vector<64x78xf32>
    %c512 = arith.constant 512 : index
    %c0_152 = arith.constant 0 : index
    %238 = vector.load %arg22[%c512, %c0_152] : memref<576x78xf32, #tpu.memory_space<vmem>>, vector<64x78xf32>
    tpu.vector_store %arg22[%c512, %c0_152], %237 {strides = array<i32>} : memref<576x78xf32, #tpu.memory_space<vmem>>, vector<64x78xf32>,
    %c0_153 = arith.constant 0 : index
    %c0_154 = arith.constant 0 : index
    %239 = vector.load %arg12[%c0_153, %c0_154] : memref<32x576xf32, #tpu.memory_space<vmem>>, vector<32x576xf32>
    %c0_155 = arith.constant 0 : index
    %c0_156 = arith.constant 0 : index
    %240 = vector.load %arg22[%c0_155, %c0_156] : memref<576x78xf32, #tpu.memory_space<vmem>>, vector<576x78xf32>
    %cst_157 = arith.constant dense<0.000000e+00> : vector<32x78xf32>
    %241 = tpu.matmul %239, %240, %cst_157 {dimension_numbers = #tpu.dot_dimension_numbers<[1], [0], [0], [1], [0, 0, 1, 1], [], []>} : vector<32x576xf32>, vector<576x78xf32>, vector<32x78xf32> -> vector<32x78xf32>
    %c0_158 = arith.constant 0 : index
    %c0_159 = arith.constant 0 : index
    %242 = vector.load %arg13[%c0_158, %c0_159] : memref<32x1xf32, #tpu.memory_space<vmem>>, vector<32x1xf32>
    %243 = vector.broadcast %242 : vector<32x1xf32> to vector<32x78xf32>
    %244 = arith.addf %241, %243 : vector<32x78xf32>
    %c0_160 = arith.constant 0 : index
    %c0_161 = arith.constant 0 : index
    %245 = vector.load %arg14[%c0_160, %c0_161] : memref<78x286xf32, #tpu.memory_space<vmem>>, vector<78x286xf32>
    %cst_162 = arith.constant dense<0.000000e+00> : vector<32x286xf32>
    %246 = tpu.matmul %244, %245, %cst_162 {dimension_numbers = #tpu.dot_dimension_numbers<[1], [0], [0], [1], [0, 0, 1, 1], [], []>} : vector<32x78xf32>, vector<78x286xf32>, vector<32x286xf32> -> vector<32x286xf32>
    %247 = arith.addf %32, %246 : vector<32x286xf32>
    %c0_163 = arith.constant 0 : index
    %c0_164 = arith.constant 0 : index
    %248 = vector.load %arg15[%c0_163, %c0_164] : memref<286x400xf32, #tpu.memory_space<vmem>>, vector<286x400xf32>
    %cst_165 = arith.constant dense<0.000000e+00> : vector<32x400xf32>
    %249 = tpu.matmul %247, %248, %cst_165 {dimension_numbers = #tpu.dot_dimension_numbers<[1], [0], [0], [1], [0, 0, 1, 1], [], []>} : vector<32x286xf32>, vector<286x400xf32>, vector<32x400xf32> -> vector<32x400xf32>
    %250 = vector.extract_strided_slice %249 {offsets = [0, 0], sizes = [32, 358], strides = [1, 1]} : vector<32x400xf32> to vector<32x358xf32>
    %c0_166 = arith.constant 0 : index
    %c0_167 = arith.constant 0 : index
    %251 = vector.load %arg23[%c0_166, %c0_167] : memref<288x358xf32, #tpu.memory_space<vmem>>, vector<32x358xf32>
    tpu.vector_store %arg23[%c0_166, %c0_167], %250 {strides = array<i32>} : memref<288x358xf32, #tpu.memory_space<vmem>>, vector<32x358xf32>,
    %252 = vector.extract_strided_slice %249 {offsets = [0, 1], sizes = [32, 358], strides = [1, 1]} : vector<32x400xf32> to vector<32x358xf32>
    %c32_168 = arith.constant 32 : index
    %c0_169 = arith.constant 0 : index
    %253 = vector.load %arg23[%c32_168, %c0_169] : memref<288x358xf32, #tpu.memory_space<vmem>>, vector<32x358xf32>
    tpu.vector_store %arg23[%c32_168, %c0_169], %252 {strides = array<i32>} : memref<288x358xf32, #tpu.memory_space<vmem>>, vector<32x358xf32>,
    %254 = vector.extract_strided_slice %249 {offsets = [0, 2], sizes = [32, 358], strides = [1, 1]} : vector<32x400xf32> to vector<32x358xf32>
    %c64_170 = arith.constant 64 : index
    %c0_171 = arith.constant 0 : index
    %255 = vector.load %arg23[%c64_170, %c0_171] : memref<288x358xf32, #tpu.memory_space<vmem>>, vector<32x358xf32>
    tpu.vector_store %arg23[%c64_170, %c0_171], %254 {strides = array<i32>} : memref<288x358xf32, #tpu.memory_space<vmem>>, vector<32x358xf32>,
    %256 = vector.extract_strided_slice %249 {offsets = [0, 20], sizes = [32, 358], strides = [1, 1]} : vector<32x400xf32> to vector<32x358xf32>
    %c96_172 = arith.constant 96 : index
    %c0_173 = arith.constant 0 : index
    %257 = vector.load %arg23[%c96_172, %c0_173] : memref<288x358xf32, #tpu.memory_space<vmem>>, vector<32x358xf32>
    tpu.vector_store %arg23[%c96_172, %c0_173], %256 {strides = array<i32>} : memref<288x358xf32, #tpu.memory_space<vmem>>, vector<32x358xf32>,
    %258 = vector.extract_strided_slice %249 {offsets = [0, 21], sizes = [32, 358], strides = [1, 1]} : vector<32x400xf32> to vector<32x358xf32>
    %c128_174 = arith.constant 128 : index
    %c0_175 = arith.constant 0 : index
    %259 = vector.load %arg23[%c128_174, %c0_175] : memref<288x358xf32, #tpu.memory_space<vmem>>, vector<32x358xf32>
    tpu.vector_store %arg23[%c128_174, %c0_175], %258 {strides = array<i32>} : memref<288x358xf32, #tpu.memory_space<vmem>>, vector<32x358xf32>,
    %260 = vector.extract_strided_slice %249 {offsets = [0, 22], sizes = [32, 358], strides = [1, 1]} : vector<32x400xf32> to vector<32x358xf32>
    %c160_176 = arith.constant 160 : index
    %c0_177 = arith.constant 0 : index
    %261 = vector.load %arg23[%c160_176, %c0_177] : memref<288x358xf32, #tpu.memory_space<vmem>>, vector<32x358xf32>
    tpu.vector_store %arg23[%c160_176, %c0_177], %260 {strides = array<i32>} : memref<288x358xf32, #tpu.memory_space<vmem>>, vector<32x358xf32>,
    %262 = vector.extract_strided_slice %249 {offsets = [0, 40], sizes = [32, 358], strides = [1, 1]} : vector<32x400xf32> to vector<32x358xf32>
    %c192_178 = arith.constant 192 : index
    %c0_179 = arith.constant 0 : index
    %263 = vector.load %arg23[%c192_178, %c0_179] : memref<288x358xf32, #tpu.memory_space<vmem>>, vector<32x358xf32>
    tpu.vector_store %arg23[%c192_178, %c0_179], %262 {strides = array<i32>} : memref<288x358xf32, #tpu.memory_space<vmem>>, vector<32x358xf32>,
    %264 = vector.extract_strided_slice %249 {offsets = [0, 41], sizes = [32, 358], strides = [1, 1]} : vector<32x400xf32> to vector<32x358xf32>
    %c224_180 = arith.constant 224 : index
    %c0_181 = arith.constant 0 : index
    %265 = vector.load %arg23[%c224_180, %c0_181] : memref<288x358xf32, #tpu.memory_space<vmem>>, vector<32x358xf32>
    tpu.vector_store %arg23[%c224_180, %c0_181], %264 {strides = array<i32>} : memref<288x358xf32, #tpu.memory_space<vmem>>, vector<32x358xf32>,
    %266 = vector.extract_strided_slice %249 {offsets = [0, 42], sizes = [32, 358], strides = [1, 1]} : vector<32x400xf32> to vector<32x358xf32>
    %c256_182 = arith.constant 256 : index
    %c0_183 = arith.constant 0 : index
    %267 = vector.load %arg23[%c256_182, %c0_183] : memref<288x358xf32, #tpu.memory_space<vmem>>, vector<32x358xf32>
    tpu.vector_store %arg23[%c256_182, %c0_183], %266 {strides = array<i32>} : memref<288x358xf32, #tpu.memory_space<vmem>>, vector<32x358xf32>,
    %c0_184 = arith.constant 0 : index
    %c0_185 = arith.constant 0 : index
    %268 = vector.load %arg16[%c0_184, %c0_185] : memref<4x288xf32, #tpu.memory_space<vmem>>, vector<4x288xf32>
    %c0_186 = arith.constant 0 : index
    %c0_187 = arith.constant 0 : index
    %269 = vector.load %arg23[%c0_186, %c0_187] : memref<288x358xf32, #tpu.memory_space<vmem>>, vector<288x358xf32>
    %cst_188 = arith.constant dense<0.000000e+00> : vector<4x358xf32>
    %270 = tpu.matmul %268, %269, %cst_188 {dimension_numbers = #tpu.dot_dimension_numbers<[1], [0], [0], [1], [0, 0, 1, 1], [], []>} : vector<4x288xf32>, vector<288x358xf32>, vector<4x358xf32> -> vector<4x358xf32>
    %c0_189 = arith.constant 0 : index
    %c0_190 = arith.constant 0 : index
    %271 = vector.load %arg17[%c0_189, %c0_190] : memref<4x1xf32, #tpu.memory_space<vmem>>, vector<4x1xf32>
    %272 = vector.broadcast %271 : vector<4x1xf32> to vector<4x358xf32>
    %273 = arith.addf %270, %272 : vector<4x358xf32>
    %c0_191 = arith.constant 0 : index
    %c0_192 = arith.constant 0 : index
    %274 = vector.load %arg18[%c0_191, %c0_192] : memref<358x324xf32, #tpu.memory_space<vmem>>, vector<358x324xf32>
    %cst_193 = arith.constant dense<0.000000e+00> : vector<4x324xf32>
    %275 = tpu.matmul %273, %274, %cst_193 {dimension_numbers = #tpu.dot_dimension_numbers<[1], [0], [0], [1], [0, 0, 1, 1], [], []>} : vector<4x358xf32>, vector<358x324xf32>, vector<4x324xf32> -> vector<4x324xf32>
    %c0_194 = arith.constant 0 : index
    %c0_195 = arith.constant 0 : index
    %276 = vector.load %arg19[%c0_194, %c0_195] : memref<4x324xf32, #tpu.memory_space<vmem>>, vector<4x324xf32>
    tpu.vector_store %arg19[%c0_194, %c0_195], %275 {strides = array<i32>} : memref<4x324xf32, #tpu.memory_space<vmem>>, vector<4x324xf32>,
    return
  }
  func.func @transform_0(%arg0: i32) -> (i32, i32) {
    %c0_i32 = arith.constant 0 : i32
    %c0_i32_0 = arith.constant 0 : i32
    %c0_i32_1 = arith.constant 0 : i32
    return %c0_i32, %c0_i32_0 : i32, i32
  }
  func.func @transform_1(%arg0: i32) -> (i32, i32) {
    %c0_i32 = arith.constant 0 : i32
    %c0_i32_0 = arith.constant 0 : i32
    %c0_i32_1 = arith.constant 0 : i32
    return %c0_i32, %c0_i32_0 : i32, i32
  }
  func.func @transform_2(%arg0: i32) -> (i32, i32) {
    %c0_i32 = arith.constant 0 : i32
    %c0_i32_0 = arith.constant 0 : i32
    %c0_i32_1 = arith.constant 0 : i32
    return %c0_i32, %c0_i32_0 : i32, i32
  }
  func.func @transform_3(%arg0: i32) -> (i32, i32) {
    %c0_i32 = arith.constant 0 : i32
    %c0_i32_0 = arith.constant 0 : i32
    %c0_i32_1 = arith.constant 0 : i32
    return %c0_i32, %c0_i32_0 : i32, i32
  }
  func.func @transform_4(%arg0: i32) -> (i32, i32) {
    %c0_i32 = arith.constant 0 : i32
    %c0_i32_0 = arith.constant 0 : i32
    %c0_i32_1 = arith.constant 0 : i32
    return %c0_i32, %c0_i32_0 : i32, i32
  }
  func.func @transform_5(%arg0: i32) -> (i32, i32) {
    %c0_i32 = arith.constant 0 : i32
    %c0_i32_0 = arith.constant 0 : i32
    %c0_i32_1 = arith.constant 0 : i32
    return %c0_i32, %c0_i32_0 : i32, i32
  }
  func.func @transform_6(%arg0: i32) -> (i32, i32) {
    %c0_i32 = arith.constant 0 : i32
    %c0_i32_0 = arith.constant 0 : i32
    %c0_i32_1 = arith.constant 0 : i32
    return %c0_i32, %c0_i32_0 : i32, i32
  }
  func.func @transform_7(%arg0: i32) -> (i32, i32) {
    %c0_i32 = arith.constant 0 : i32
    %c0_i32_0 = arith.constant 0 : i32
    %c0_i32_1 = arith.constant 0 : i32
    return %c0_i32, %c0_i32_0 : i32, i32
  }
  func.func @transform_8(%arg0: i32) -> (i32, i32) {
    %c0_i32 = arith.constant 0 : i32
    %c0_i32_0 = arith.constant 0 : i32
    %c0_i32_1 = arith.constant 0 : i32
    return %c0_i32, %c0_i32_0 : i32, i32
  }
  func.func @transform_9(%arg0: i32) -> (i32, i32) {
    %c0_i32 = arith.constant 0 : i32
    %c0_i32_0 = arith.constant 0 : i32
    %c0_i32_1 = arith.constant 0 : i32
    return %c0_i32, %c0_i32_0 : i32, i32
  }
  func.func @transform_10(%arg0: i32) -> (i32, i32) {
    %c0_i32 = arith.constant 0 : i32
    %c0_i32_0 = arith.constant 0 : i32
    %c0_i32_1 = arith.constant 0 : i32
    return %c0_i32, %c0_i32_0 : i32, i32
  }
  func.func @transform_11(%arg0: i32) -> (i32, i32) {
    %c0_i32 = arith.constant 0 : i32
    %c0_i32_0 = arith.constant 0 : i32
    %c0_i32_1 = arith.constant 0 : i32
    return %c0_i32, %c0_i32_0 : i32, i32
  }
  func.func @transform_12(%arg0: i32) -> (i32, i32) {
    %c0_i32 = arith.constant 0 : i32
    %c0_i32_0 = arith.constant 0 : i32
    %c0_i32_1 = arith.constant 0 : i32
    return %c0_i32, %c0_i32_0 : i32, i32
  }
  func.func @transform_13(%arg0: i32) -> (i32, i32) {
    %c0_i32 = arith.constant 0 : i32
    %c0_i32_0 = arith.constant 0 : i32
    %c0_i32_1 = arith.constant 0 : i32
    return %c0_i32, %c0_i32_0 : i32, i32
  }
  func.func @transform_14(%arg0: i32) -> (i32, i32) {
    %c0_i32 = arith.constant 0 : i32
    %c0_i32_0 = arith.constant 0 : i32
    %c0_i32_1 = arith.constant 0 : i32
    return %c0_i32, %c0_i32_0 : i32, i32
  }
  func.func @transform_15(%arg0: i32) -> (i32, i32) {
    %c0_i32 = arith.constant 0 : i32
    %c0_i32_0 = arith.constant 0 : i32
    %c0_i32_1 = arith.constant 0 : i32
    return %c0_i32, %c0_i32_0 : i32, i32
  }
  func.func @transform_16(%arg0: i32) -> (i32, i32) {
    %c0_i32 = arith.constant 0 : i32
    %c0_i32_0 = arith.constant 0 : i32
    %c0_i32_1 = arith.constant 0 : i32
    return %c0_i32, %c0_i32_0 : i32, i32
  }
  func.func @transform_17(%arg0: i32) -> (i32, i32) {
    %c0_i32 = arith.constant 0 : i32
    %c0_i32_0 = arith.constant 0 : i32
    %c0_i32_1 = arith.constant 0 : i32
    return %c0_i32, %c0_i32_0 : i32, i32
  }
  func.func @transform_18(%arg0: i32) -> (i32, i32) {
    %c0_i32 = arith.constant 0 : i32
    %c0_i32_0 = arith.constant 0 : i32
    %c0_i32_1 = arith.constant 0 : i32
    return %c0_i32, %c0_i32_0 : i32, i32
  }
}

</mosaic_0001>

<llo_original>
// kernel: deep_autoencoder_forward.1
$region0: #{deep_autoencoder_forward.1}
  #allocation0 [shape = 'u32[]', space=smem, size = 0x4, offset = 0x4, fixed_abs, tag = 'smem constant byte address 0x4 - core index']
  #allocation1 [shape = 'u32[144,128]{1,0:T(1,128)}', space=vmem, size = 0x12000, scoped, tag = 'internal scratch']
  #allocation2 [shape = 'f32[36,286]{1,0:T(8,128)}', space=vmem, size = 0xf000, scoped, tag = 'scratch operand']
  #allocation3 [shape = 'f32[288,46]{1,0:T(8,128)}', space=vmem, size = 0x24000, scoped, tag = 'scratch operand']
  #allocation4 [shape = 'f32[576,78]{1,0:T(8,128)}', space=vmem, size = 0x48000, scoped, tag = 'scratch operand']
  #allocation5 [shape = 'f32[288,358]{1,0:T(8,128)}', space=vmem, size = 0x6c000, scoped, tag = 'scratch operand']
  #allocation6 [shape = 'f32[2,288]{1,0:T(2,128)}', space=vmem, size = 0xc00, scoped, tag = 'scratch operand']
  #allocation7 [shape = 'f32[64,9]{1,0:T(8,128)}', space=vmem, size = 0x8000, scoped, tag = 'scratch operand']
  %s0 = inlined_call_operand.vmem [shape: f32[4,324], index: 0, kind: input, shape index: {}]
  %s1 = inlined_call_operand.vmem [shape: f32[32,36], index: 1, kind: input, shape index: {}]
  %s2 = inlined_call_operand.vmem [shape: f32[32,1], index: 2, kind: input, shape index: {}]
  %s3 = inlined_call_operand.vmem [shape: f32[267,64], index: 3, kind: input, shape index: {}]
  %s4 = inlined_call_operand.vmem [shape: f32[64,288], index: 4, kind: input, shape index: {}]
  %s5 = inlined_call_operand.vmem [shape: f32[64,1], index: 5, kind: input, shape index: {}]
  %s6 = inlined_call_operand.vmem [shape: f32[37,9], index: 6, kind: input, shape index: {}]
  %s7 = inlined_call_operand.vmem [shape: f32[288,288], index: 7, kind: input, shape index: {}]
  %s8 = inlined_call_operand.vmem [shape: f32[1,288], index: 8, kind: input, shape index: {}]
  %s9 = inlined_call_operand.vmem [shape: f32[9,46], index: 9, kind: input, shape index: {}]
  %s10 = inlined_call_operand.vmem [shape: f32[46,100], index: 10, kind: input, shape index: {}]
  %s11 = inlined_call_operand.vmem [shape: f32[32,576], index: 11, kind: input, shape index: {}]
  %s12 = inlined_call_operand.vmem [shape: f32[32,1], index: 12, kind: input, shape index: {}]
  %s13 = inlined_call_operand.vmem [shape: f32[78,286], index: 13, kind: input, shape index: {}]
  %s14 = inlined_call_operand.vmem [shape: f32[286,400], index: 14, kind: input, shape index: {}]
  %s15 = inlined_call_operand.hbm [shape: f32[4,288], index: 15, kind: input, shape index: {}]
  %s16 = inlined_call_operand.vmem [shape: f32[4,1], index: 16, kind: input, shape index: {}]
  %s17 = inlined_call_operand.vmem [shape: f32[358,324], index: 17, kind: input, shape index: {}]
  %s18 = inlined_call_operand.vmem [shape: f32[4,324], index: 18, kind: output, shape index: {}]
  %s19 = sld [smem:[#allocation0]]
  $region86: #{deep_autoencoder_forward.1} parent=0
    _
  %s21 = ssub.s32 1, %s19
  %s22 = scalar_select 0, %s21, %s19
  $region1: #{deep_autoencoder_forward.1} parent=0
    #allocation8 [shape = 'u8[6144]{0}', space=vmem, size = 0x1800, scoped, tag = 'input window, operand 15, single buffered']
    #allocation9 [shape = 's32[1]{0}', space=sflag, size = 0x4, scoped, tag = 'scoped memory for deep_autoencoder_forward.1']
    %23 = vsyncpa [#allocation9], 0
    // Predicated region
    $region2: #{deep_autoencoder_forward.1} parent=1 // pred_check
      _
    $region3: #{deep_autoencoder_forward.1} parent=1 // pred_check_branch
      %25 = sbr.rel (0) target = $region5
    $region4: #{deep_autoencoder_forward.1} parent=1 // pred_region
      _
    $region5: #{deep_autoencoder_forward.1} parent=1 // pred_fallthru
      _
    // Predicated region
    $region6: #{deep_autoencoder_forward.1} parent=1 // pred_check
      _
    $region7: #{deep_autoencoder_forward.1} parent=1 // pred_check_branch
      %27 = sbr.rel (0) target = $region9
    $region8: #{deep_autoencoder_forward.1} parent=1 // pred_region
      _
    $region9: #{deep_autoencoder_forward.1} parent=1 // pred_fallthru
      _
    // Predicated region
    $region10: #{deep_autoencoder_forward.1} parent=1 // pred_check
      _
    $region11: #{deep_autoencoder_forward.1} parent=1 // pred_check_branch
      %29 = sbr.rel (0) target = $region13
    $region12: #{deep_autoencoder_forward.1} parent=1 // pred_region
      _
    $region13: #{deep_autoencoder_forward.1} parent=1 // pred_fallthru
      _
    // Predicated region
    $region14: #{deep_autoencoder_forward.1} parent=1 // pred_check
      _
    $region15: #{deep_autoencoder_forward.1} parent=1 // pred_check_branch
      %31 = sbr.rel (0) target = $region17
    $region16: #{deep_autoencoder_forward.1} parent=1 // pred_region
      _
    $region17: #{deep_autoencoder_forward.1} parent=1 // pred_fallthru
      _
    // Predicated region
    $region18: #{deep_autoencoder_forward.1} parent=1 // pred_check
      _
    $region19: #{deep_autoencoder_forward.1} parent=1 // pred_check_branch
      %33 = sbr.rel (0) target = $region21
    $region20: #{deep_autoencoder_forward.1} parent=1 // pred_region
      _
    $region21: #{deep_autoencoder_forward.1} parent=1 // pred_fallthru
      _
    // Predicated region
    $region22: #{deep_autoencoder_forward.1} parent=1 // pred_check
      _
    $region23: #{deep_autoencoder_forward.1} parent=1 // pred_check_branch
      %35 = sbr.rel (0) target = $region25
    $region24: #{deep_autoencoder_forward.1} parent=1 // pred_region
      _
    $region25: #{deep_autoencoder_forward.1} parent=1 // pred_fallthru
      _
    // Predicated region
    $region26: #{deep_autoencoder_forward.1} parent=1 // pred_check
      _
    $region27: #{deep_autoencoder_forward.1} parent=1 // pred_check_branch
      %37 = sbr.rel (0) target = $region29
    $region28: #{deep_autoencoder_forward.1} parent=1 // pred_region
      _
    $region29: #{deep_autoencoder_forward.1} parent=1 // pred_fallthru
      _
    // Predicated region
    $region30: #{deep_autoencoder_forward.1} parent=1 // pred_check
      _
    $region31: #{deep_autoencoder_forward.1} parent=1 // pred_check_branch
      %39 = sbr.rel (0) target = $region33
    $region32: #{deep_autoencoder_forward.1} parent=1 // pred_region
      _
    $region33: #{deep_autoencoder_forward.1} parent=1 // pred_fallthru
      _
    // Predicated region
    $region34: #{deep_autoencoder_forward.1} parent=1 // pred_check
      _
    $region35: #{deep_autoencoder_forward.1} parent=1 // pred_check_branch
      %41 = sbr.rel (0) target = $region37
    $region36: #{deep_autoencoder_forward.1} parent=1 // pred_region
      _
    $region37: #{deep_autoencoder_forward.1} parent=1 // pred_fallthru
      _
    // Predicated region
    $region38: #{deep_autoencoder_forward.1} parent=1 // pred_check
      _
    $region39: #{deep_autoencoder_forward.1} parent=1 // pred_check_branch
      %43 = sbr.rel (0) target = $region41
    $region40: #{deep_autoencoder_forward.1} parent=1 // pred_region
      _
    $region41: #{deep_autoencoder_forward.1} parent=1 // pred_fallthru
      _
    // Predicated region
    $region42: #{deep_autoencoder_forward.1} parent=1 // pred_check
      _
    $region43: #{deep_autoencoder_forward.1} parent=1 // pred_check_branch
      %45 = sbr.rel (0) target = $region45
    $region44: #{deep_autoencoder_forward.1} parent=1 // pred_region
      _
    $region45: #{deep_autoencoder_forward.1} parent=1 // pred_fallthru
      _
    // Predicated region
    $region46: #{deep_autoencoder_forward.1} parent=1 // pred_check
      _
    $region47: #{deep_autoencoder_forward.1} parent=1 // pred_check_branch
      %47 = sbr.rel (0) target = $region49
    $region48: #{deep_autoencoder_forward.1} parent=1 // pred_region
      _
    $region49: #{deep_autoencoder_forward.1} parent=1 // pred_fallthru
      _
    // Predicated region
    $region50: #{deep_autoencoder_forward.1} parent=1 // pred_check
      _
    $region51: #{deep_autoencoder_forward.1} parent=1 // pred_check_branch
      %49 = sbr.rel (0) target = $region53
    $region52: #{deep_autoencoder_forward.1} parent=1 // pred_region
      _
    $region53: #{deep_autoencoder_forward.1} parent=1 // pred_fallthru
      _
    // Predicated region
    $region54: #{deep_autoencoder_forward.1} parent=1 // pred_check
      _
    $region55: #{deep_autoencoder_forward.1} parent=1 // pred_check_branch
      %51 = sbr.rel (0) target = $region57
    $region56: #{deep_autoencoder_forward.1} parent=1 // pred_region
      _
    $region57: #{deep_autoencoder_forward.1} parent=1 // pred_fallthru
      _
    // Predicated region
    $region58: #{deep_autoencoder_forward.1} parent=1 // pred_check
      _
    $region59: #{deep_autoencoder_forward.1} parent=1 // pred_check_branch
      %53 = sbr.rel (0) target = $region61
    $region60: #{deep_autoencoder_forward.1} parent=1 // pred_region
      _
    $region61: #{deep_autoencoder_forward.1} parent=1 // pred_fallthru
      _
    // Predicated region
    $region62: #{deep_autoencoder_forward.1} parent=1 // pred_check
      _
    $region63: #{deep_autoencoder_forward.1} parent=1 // pred_check_branch
      %55 = sbr.rel (0) target = $region65
    $region64: #{deep_autoencoder_forward.1} parent=1 // pred_region
      %s57 = ssub.s32 192, 192
      %58 = vsyncadd [#allocation9], %s57
      %s60 = sshll.u32 [#allocation8], 4
      %s61 = int_to_ptr.vmem [resolvable:$true] %s60
      %63 = dma.hbm_to_vmem [thread:$0]  %s15, 192, %s61, [#allocation9]
    $region65: #{deep_autoencoder_forward.1} parent=1 // pred_fallthru
      _
    // Predicated region
    $region66: #{deep_autoencoder_forward.1} parent=1 // pred_check
      _
    $region67: #{deep_autoencoder_forward.1} parent=1 // pred_check_branch
      %65 = sbr.rel (0) target = $region69
    $region68: #{deep_autoencoder_forward.1} parent=1 // pred_region
      _
    $region69: #{deep_autoencoder_forward.1} parent=1 // pred_fallthru
      _
    // Predicated region
    $region70: #{deep_autoencoder_forward.1} parent=1 // pred_check
      _
    $region71: #{deep_autoencoder_forward.1} parent=1 // pred_check_branch
      %67 = sbr.rel (0) target = $region73
    $region72: #{deep_autoencoder_forward.1} parent=1 // pred_region
      _
    $region73: #{deep_autoencoder_forward.1} parent=1 // pred_fallthru
      _
    // Predicated region
    $region74: #{deep_autoencoder_forward.1} parent=1 // pred_check
      _
    $region75: #{deep_autoencoder_forward.1} parent=1 // pred_check_branch
      %69 = sbr.rel (0) target = $region77
    $region76: #{deep_autoencoder_forward.1} parent=1 // pred_region
      %70 = dma.done [#allocation9], 192
    $region77: #{deep_autoencoder_forward.1} parent=1 // pred_fallthru
      _
    %v71 = vld [vmem:[%s0] sm:$0xff]
    %v72 = vld [vmem:[%s0 + $0x8] sm:$0xf]
    %v75 = vcombine.high %v71, %v71
    %77 = vst [vmem:[#allocation2] sm:$0xf] %v71
    %78 = vst [vmem:[#allocation2 + $0x8] sm:$0xf] %v75
    %vm79 = vcmask 240640
    %80 = vst.msk [vmem:[#allocation2 + $0x10] sm:$0xf] %vm79, %v72
    %v81 = vcombine.low %v71, %v71
    %v82 = vcombine.low %v72, %v72
    %83 = vrot.lane.b32.xlu0 %v81, 127
    %v84 = vpop.permute.xlu0 %83
    %85 = vrot.lane.b32.xlu0 %v71, 127
    %v86 = vpop.permute.xlu0 %85
    %87 = vrot.lane.b32.xlu0 %v82, 127
    %v88 = vpop.permute.xlu0 %87
    %vm89 = vcmask 1039360
    %v90 = vsel %vm89, %v84, %v86
    %v91 = vsel %vm89, %v86, %v88
    %95 = vst [vmem:[#allocation2] sm:$0xf0] %v90
    %96 = vst [vmem:[#allocation2 + $0x8] sm:$0xf0] %v91
    %vm97 = vcmask 244740
    %98 = vst.msk [vmem:[#allocation2 + $0x10] sm:$0xf0] %vm97, %v88
    %99 = vrot.lane.b32.xlu0 %v71, 126
    %v100 = vpop.permute.xlu0 %99
    %101 = vrot.lane.b32.xlu0 %v75, 126
    %v102 = vpop.permute.xlu0 %101
    %103 = vrot.lane.b32.xlu0 %v72, 126
    %v104 = vpop.permute.xlu0 %103
    %vm105 = vcmask 1031168
    %v106 = vsel %vm105, %v100, %v102
    %v107 = vsel %vm105, %v102, %v104
    %111 = vst [vmem:[#allocation2 + $0x18] sm:$0xf] %v106
    %112 = vst [vmem:[#allocation2 + $0x20] sm:$0xf] %v107
    %113 = vst.msk [vmem:[#allocation2 + $0x28] sm:$0xf] %vm79, %v104
    %114 = vrot.lane.b32.xlu0 %v81, 110
    %v115 = vpop.permute.xlu0 %114
    %116 = vrot.lane.b32.xlu0 %v71, 110
    %v117 = vpop.permute.xlu0 %116
    %118 = vrot.lane.b32.xlu0 %v82, 110
    %v119 = vpop.permute.xlu0 %118
    %vm120 = vcmask 900096
    %v121 = vsel %vm120, %v115, %v117
    %v122 = vsel %vm120, %v117, %v119
    %126 = vst [vmem:[#allocation2 + $0x18] sm:$0xf0] %v121
    %127 = vst [vmem:[#allocation2 + $0x20] sm:$0xf0] %v122
    %128 = vst.msk [vmem:[#allocation2 + $0x28] sm:$0xf0] %vm97, %v119
    %129 = vrot.lane.b32.xlu0 %v71, 109
    %v130 = vpop.permute.xlu0 %129
    %131 = vrot.lane.b32.xlu0 %v75, 109
    %v132 = vpop.permute.xlu0 %131
    %133 = vrot.lane.b32.xlu0 %v72, 109
    %v134 = vpop.permute.xlu0 %133
    %vm135 = vcmask 891904
    %v136 = vsel %vm135, %v130, %v132
    %v137 = vsel %vm135, %v132, %v134
    %141 = vst [vmem:[#allocation2 + $0x30] sm:$0xf] %v136
    %142 = vst [vmem:[#allocation2 + $0x38] sm:$0xf] %v137
    %143 = vst.msk [vmem:[#allocation2 + $0x40] sm:$0xf] %vm79, %v134
    %144 = vrot.lane.b32.xlu0 %v81, 108
    %v145 = vpop.permute.xlu0 %144
    %146 = vrot.lane.b32.xlu0 %v71, 108
    %v147 = vpop.permute.xlu0 %146
    %148 = vrot.lane.b32.xlu0 %v82, 108
    %v149 = vpop.permute.xlu0 %148
    %vm150 = vcmask 883712
    %v151 = vsel %vm150, %v145, %v147
    %v152 = vsel %vm150, %v147, %v149
    %156 = vst [vmem:[#allocation2 + $0x30] sm:$0xf0] %v151
    %157 = vst [vmem:[#allocation2 + $0x38] sm:$0xf0] %v152
    %158 = vst.msk [vmem:[#allocation2 + $0x40] sm:$0xf0] %vm97, %v149
    %159 = vrot.lane.b32.xlu0 %v71, 92
    %v160 = vpop.permute.xlu0 %159
    %161 = vrot.lane.b32.xlu0 %v75, 92
    %v162 = vpop.permute.xlu0 %161
    %163 = vrot.lane.b32.xlu0 %v72, 92
    %v164 = vpop.permute.xlu0 %163
    %vm165 = vcmask 752640
    %v166 = vsel %vm165, %v160, %v162
    %v167 = vsel %vm165, %v162, %v164
    %171 = vst [vmem:[#allocation2 + $0x48] sm:$0xf] %v166
    %172 = vst [vmem:[#allocation2 + $0x50] sm:$0xf] %v167
    %173 = vst.msk [vmem:[#allocation2 + $0x58] sm:$0xf] %vm79, %v164
    %174 = vrot.lane.b32.xlu0 %v81, 91
    %v175 = vpop.permute.xlu0 %174
    %176 = vrot.lane.b32.xlu0 %v71, 91
    %v177 = vpop.permute.xlu0 %176
    %178 = vrot.lane.b32.xlu0 %v82, 91
    %v179 = vpop.permute.xlu0 %178
    %vm180 = vcmask 744448
    %v181 = vsel %vm180, %v175, %v177
    %v182 = vsel %vm180, %v177, %v179
    %186 = vst [vmem:[#allocation2 + $0x48] sm:$0xf0] %v181
    %187 = vst [vmem:[#allocation2 + $0x50] sm:$0xf0] %v182
    %188 = vst.msk [vmem:[#allocation2 + $0x58] sm:$0xf0] %vm97, %v179
    %189 = vrot.lane.b32.xlu0 %v71, 90
    %v190 = vpop.permute.xlu0 %189
    %191 = vrot.lane.b32.xlu0 %v75, 90
    %v192 = vpop.permute.xlu0 %191
    %193 = vrot.lane.b32.xlu0 %v72, 90
    %v194 = vpop.permute.xlu0 %193
    %vm195 = vcmask 736256
    %v196 = vsel %vm195, %v190, %v192
    %v197 = vsel %vm195, %v192, %v194
    %201 = vst [vmem:[#allocation2 + $0x60] sm:$0xf] %v196
    %202 = vst [vmem:[#allocation2 + $0x68] sm:$0xf] %v197
    %203 = vst.msk [vmem:[#allocation2 + $0x70] sm:$0xf] %vm79, %v194
    %v204 = vld [vmem:[%s1] sm:$0xff]
    %v205 = vld [vmem:[%s1 + $0x8] sm:$0xff]
    %v206 = vld [vmem:[%s1 + $0x10] sm:$0xff]
    %v207 = vld [vmem:[%s1 + $0x18] sm:$0xff]
    %v208 = vld [vmem:[#allocation2] sm:$0xff]
    %v209 = vld [vmem:[#allocation2 + $0x8] sm:$0xff]
    %v210 = vld [vmem:[#allocation2 + $0x10] sm:$0xff]
    %v211 = vld [vmem:[#allocation2 + $0x18] sm:$0xff]
    %v212 = vld [vmem:[#allocation2 + $0x20] sm:$0xff]
    %v213 = vld [vmem:[#allocation2 + $0x28] sm:$0xff]
    %v214 = vld [vmem:[#allocation2 + $0x30] sm:$0xff]
    %v215 = vld [vmem:[#allocation2 + $0x38] sm:$0xff]
    %v216 = vld [vmem:[#allocation2 + $0x40] sm:$0xff]
    %v217 = vld [vmem:[#allocation2 + $0x48] sm:$0xff]
    %v218 = vld [vmem:[#allocation2 + $0x50] sm:$0xff]
    %v219 = vld [vmem:[#allocation2 + $0x58] sm:$0xff]
    %v220 = vld [vmem:[#allocation2 + $0x60] sm:$0xf]
    %v221 = vld [vmem:[#allocation2 + $0x68] sm:$0xf]
    %v222 = vld [vmem:[#allocation2 + $0x70] sm:$0xf]
    %v223 = vld [vmem:[%s2] sm:$0xff]
    %v224 = vld [vmem:[%s2 + $0x8] sm:$0xff]
    %v225 = vld [vmem:[%s2 + $0x10] sm:$0xff]
    %v226 = vld [vmem:[%s2 + $0x18] sm:$0xff]
    %228 = vset.pattern.permute.xlu0 0
    %229 = vperm.xlu0 %228, %v223
    %v230 = vpop.permute.xlu0 %229
    %233 = vset.pattern.permute.xlu0 0
    %234 = vperm.xlu0 %233, %v224
    %v235 = vpop.permute.xlu0 %234
    %238 = vset.pattern.permute.xlu0 0
    %239 = vperm.xlu0 %238, %v225
    %v240 = vpop.permute.xlu0 %239
    %243 = vset.pattern.permute.xlu0 0
    %244 = vperm.xlu0 %243, %v226
    %v245 = vpop.permute.xlu0 %244
    %vm247 = vcmask 293888
    %v249 = vsel %vm247, %v204, 0
    %v252 = vsel %vm247, %v205, 0
    %v255 = vsel %vm247, %v206, 0
    %v258 = vsel %vm247, %v207, 0
    %vm260 = vcmask 1043456
    %v262 = vsel %vm260, %v220, 0
    %v265 = vsel %vm260, %v221, 0
    %v268 = vsel %vm260, %v222, 0
    %270 = vmatprep.subr.mxu0 0.0
    %271 = vmatpush1.msra.mxu0 0.0
    %272 = vmatprep.subr.mxu0 0.0
    %273 = vmatpush1.msra.mxu0 0.0
    %274 = vmatprep.subr.mxu0 0.0
    %275 = vmatpush1.msra.mxu0 0.0
    %276 = vmatprep.subr.mxu0 0.0
    %277 = vmatpush1.msra.mxu0 0.0
    %278 = vmatprep.subr.mxu0 0.0
    %279 = vmatpush1.msra.mxu0 0.0
    %280 = vmatprep.subr.mxu0 0.0
    %281 = vmatpush1.msra.mxu0 0.0
    %282 = vmatprep.subr.mxu0 0.0
    %283 = vmatpush1.msra.mxu0 0.0
    %284 = vmatprep.subr.mxu0 0.0
    %285 = vmatpush1.msra.mxu0 0.0
    %286 = vmatprep.subr.mxu0 0.0
    %287 = vmatpush1.msra.mxu0 0.0
    %288 = vmatprep.subr.mxu0 0.0
    %289 = vmatpush1.msra.mxu0 0.0
    %290 = vmatprep.subr.mxu0 0.0
    %291 = vmatpush1.msra.mxu0 0.0
    %292 = vmatprep.subr.mxu0 %v265
    %293 = vmatpush1.msra.mxu0 %v262
    %294 = vmatprep.subr.mxu0 %v218
    %295 = vmatpush1.msra.mxu0 %v217
    %296 = vmatprep.subr.mxu0 %v215
    %297 = vmatpush1.msra.mxu0 %v214
    %298 = vmatprep.subr.mxu0 %v212
    %299 = vmatpush1.msra.mxu0 %v211
    %300 = vmatprep.subr.mxu0 %v209
    %301 = vmatpush1.msra.mxu0 %v208
    %302 = vmatprep.subr.mxu0 0.0
    %303 = vmatpush2.msra.mxu0 0.0
    %304 = vmatprep.subr.mxu0 0.0
    %305 = vmatpush2.msra.mxu0 0.0
    %306 = vmatprep.subr.mxu0 0.0
    %307 = vmatpush2.msra.mxu0 0.0
    %308 = vmatprep.subr.mxu0 0.0
    %309 = vmatpush2.msra.mxu0 0.0
    %310 = vmatprep.subr.mxu0 0.0
    %311 = vmatpush2.msra.mxu0 0.0
    %312 = vmatprep.subr.mxu0 0.0
    %313 = vmatpush2.msra.mxu0 0.0
    %314 = vmatprep.subr.mxu0 0.0
    %315 = vmatpush2.msra.mxu0 0.0
    %316 = vmatprep.subr.mxu0 0.0
    %317 = vmatpush2.msra.mxu0 0.0
    %318 = vmatprep.subr.mxu0 0.0
    %319 = vmatpush2.msra.mxu0 0.0
    %320 = vmatprep.subr.mxu0 0.0
    %321 = vmatpush2.msra.mxu0 0.0
    %322 = vmatprep.subr.mxu0 0.0
    %323 = vmatpush2.msra.mxu0 0.0
    %324 = vmatprep.subr.mxu0 0.0
    %325 = vmatpush2.msra.mxu0 0.0
    %326 = vmatprep.subr.mxu0 0.0
    %327 = vmatpush2.msra.mxu0 0.0
    %328 = vmatprep.subr.mxu0 0.0
    %329 = vmatpush2.msra.mxu0 0.0
    %330 = vmatprep.subr.mxu0 0.0
    %331 = vmatpush2.msra.mxu0 0.0
    %332 = vmatprep.subr.mxu0 0.0
    %333 = vmatpush2.msra.mxu0 0.0
    %334 = vmatprep.mubr.f32.mxu0 0.0
    %335 = vmatmul.mubr.f32.gmra.mxu0 %v249
    %v336 = vpop.f32.mrf.mxu0
    %v337 = vadd.f32 %v230, %v336
    %v338 = vpop.f32.mrf.mxu0
    %v339 = vadd.f32 %v230, %v338
    %340 = vmatprep.mubr.f32.mxu0 0.0
    %341 = vmatmul.mubr.f32.gmra.mxu0 %v252
    %v342 = vpop.f32.mrf.mxu0
    %v343 = vadd.f32 %v235, %v342
    %v344 = vpop.f32.mrf.mxu0
    %v345 = vadd.f32 %v235, %v344
    %346 = vmatprep.mubr.f32.mxu0 0.0
    %347 = vmatmul.mubr.f32.gmra.mxu0 %v255
    %v348 = vpop.f32.mrf.mxu0
    %v349 = vadd.f32 %v240, %v348
    %v350 = vpop.f32.mrf.mxu0
    %v351 = vadd.f32 %v240, %v350
    %352 = vmatprep.mubr.f32.mxu0 0.0
    %353 = vmatmul.mubr.f32.gmra.mxu0 %v258
    %v354 = vpop.f32.mrf.mxu0
    %v355 = vadd.f32 %v245, %v354
    %v356 = vpop.f32.mrf.mxu0
    %v357 = vadd.f32 %v245, %v356
    %358 = vdwg.mxu0
    %359 = vmatprep.subr.mxu0 0.0
    %360 = vmatpush1.msra.mxu0 0.0
    %361 = vmatprep.subr.mxu0 0.0
    %362 = vmatpush1.msra.mxu0 0.0
    %363 = vmatprep.subr.mxu0 0.0
    %364 = vmatpush1.msra.mxu0 0.0
    %365 = vmatprep.subr.mxu0 0.0
    %366 = vmatpush1.msra.mxu0 0.0
    %367 = vmatprep.subr.mxu0 0.0
    %368 = vmatpush1.msra.mxu0 0.0
    %369 = vmatprep.subr.mxu0 0.0
    %370 = vmatpush1.msra.mxu0 0.0
    %371 = vmatprep.subr.mxu0 0.0
    %372 = vmatpush1.msra.mxu0 0.0
    %373 = vmatprep.subr.mxu0 0.0
    %374 = vmatpush1.msra.mxu0 0.0
    %375 = vmatprep.subr.mxu0 0.0
    %376 = vmatpush1.msra.mxu0 0.0
    %377 = vmatprep.subr.mxu0 0.0
    %378 = vmatpush1.msra.mxu0 0.0
    %379 = vmatprep.subr.mxu0 0.0
    %380 = vmatpush1.msra.mxu0 0.0
    %381 = vmatprep.subr.mxu0 0.0
    %382 = vmatpush1.msra.mxu0 %v268
    %383 = vmatprep.subr.mxu0 0.0
    %384 = vmatpush1.msra.mxu0 %v219
    %385 = vmatprep.subr.mxu0 0.0
    %386 = vmatpush1.msra.mxu0 %v216
    %387 = vmatprep.subr.mxu0 0.0
    %388 = vmatpush1.msra.mxu0 %v213
    %389 = vmatprep.subr.mxu0 0.0
    %390 = vmatpush1.msra.mxu0 %v210
    %391 = vmatprep.subr.mxu0 0.0
    %392 = vmatpush2.msra.mxu0 0.0
    %393 = vmatprep.subr.mxu0 0.0
    %394 = vmatpush2.msra.mxu0 0.0
    %395 = vmatprep.subr.mxu0 0.0
    %396 = vmatpush2.msra.mxu0 0.0
    %397 = vmatprep.subr.mxu0 0.0
    %398 = vmatpush2.msra.mxu0 0.0
    %399 = vmatprep.subr.mxu0 0.0
    %400 = vmatpush2.msra.mxu0 0.0
    %401 = vmatprep.subr.mxu0 0.0
    %402 = vmatpush2.msra.mxu0 0.0
    %403 = vmatprep.subr.mxu0 0.0
    %404 = vmatpush2.msra.mxu0 0.0
    %405 = vmatprep.subr.mxu0 0.0
    %406 = vmatpush2.msra.mxu0 0.0
    %407 = vmatprep.subr.mxu0 0.0
    %408 = vmatpush2.msra.mxu0 0.0
    %409 = vmatprep.subr.mxu0 0.0
    %410 = vmatpush2.msra.mxu0 0.0
    %411 = vmatprep.subr.mxu0 0.0
    %412 = vmatpush2.msra.mxu0 0.0
    %413 = vmatprep.subr.mxu0 0.0
    %414 = vmatpush2.msra.mxu0 0.0
    %415 = vmatprep.subr.mxu0 0.0
    %416 = vmatpush2.msra.mxu0 0.0
    %417 = vmatprep.subr.mxu0 0.0
    %418 = vmatpush2.msra.mxu0 0.0
    %419 = vmatprep.subr.mxu0 0.0
    %420 = vmatpush2.msra.mxu0 0.0
    %421 = vmatprep.subr.mxu0 0.0
    %422 = vmatpush2.msra.mxu0 0.0
    %423 = vmatprep.mubr.f32.mxu0 0.0
    %424 = vmatmul.mubr.f32.gmra.mxu0 %v249
    %v425 = vpop.f32.mrf.mxu0
    %v426 = vadd.f32 %v230, %v425
    %v427 = vpop.f32.mrf.mxu0
    %428 = vmatprep.mubr.f32.mxu0 0.0
    %429 = vmatmul.mubr.f32.gmra.mxu0 %v252
    %v430 = vpop.f32.mrf.mxu0
    %v431 = vadd.f32 %v235, %v430
    %v432 = vpop.f32.mrf.mxu0
    %433 = vmatprep.mubr.f32.mxu0 0.0
    %434 = vmatmul.mubr.f32.gmra.mxu0 %v255
    %v435 = vpop.f32.mrf.mxu0
    %v436 = vadd.f32 %v240, %v435
    %v437 = vpop.f32.mrf.mxu0
    %438 = vmatprep.mubr.f32.mxu0 0.0
    %439 = vmatmul.mubr.f32.gmra.mxu0 %v258
    %v440 = vpop.f32.mrf.mxu0
    %v441 = vadd.f32 %v245, %v440
    %v442 = vpop.f32.mrf.mxu0
    %443 = vdwg.mxu0
    %vm444 = vcmp.gt.f32.partialorder %v337, 0.0
    %vm445 = vcmp.gt.f32.partialorder %v339, 0.0
    %vm446 = vcmp.gt.f32.partialorder %v426, 0.0
    %vm447 = vcmp.gt.f32.partialorder %v343, 0.0
    %vm448 = vcmp.gt.f32.partialorder %v345, 0.0
    %vm449 = vcmp.gt.f32.partialorder %v431, 0.0
    %vm450 = vcmp.gt.f32.partialorder %v349, 0.0
    %vm451 = vcmp.gt.f32.partialorder %v351, 0.0
    %vm452 = vcmp.gt.f32.partialorder %v436, 0.0
    %vm453 = vcmp.gt.f32.partialorder %v355, 0.0
    %vm454 = vcmp.gt.f32.partialorder %v357, 0.0
    %vm455 = vcmp.gt.f32.partialorder %v441, 0.0
    %v456 = vmin.f32 %v337, 0.0
    %v457 = vmin.f32 %v339, 0.0
    %v458 = vmin.f32 %v426, 0.0
    %v459 = vmin.f32 %v343, 0.0
    %v460 = vmin.f32 %v345, 0.0
    %v461 = vmin.f32 %v431, 0.0
    %v462 = vmin.f32 %v349, 0.0
    %v463 = vmin.f32 %v351, 0.0
    %v464 = vmin.f32 %v436, 0.0
    %v465 = vmin.f32 %v355, 0.0
    %v466 = vmin.f32 %v357, 0.0
    %v467 = vmin.f32 %v441, 0.0
    %v468 = vmul.f32 %v456, 1.442695
    %v469 = vpow.pop %v468
    %v470 = vmul.f32 %v457, 1.442695
    %v471 = vpow.pop %v470
    %v472 = vmul.f32 %v458, 1.442695
    %v473 = vpow.pop %v472
    %v474 = vmul.f32 %v459, 1.442695
    %v475 = vpow.pop %v474
    %v476 = vmul.f32 %v460, 1.442695
    %v477 = vpow.pop %v476
    %v478 = vmul.f32 %v461, 1.442695
    %v479 = vpow.pop %v478
    %v480 = vmul.f32 %v462, 1.442695
    %v481 = vpow.pop %v480
    %v482 = vmul.f32 %v463, 1.442695
    %v483 = vpow.pop %v482
    %v484 = vmul.f32 %v464, 1.442695
    %v485 = vpow.pop %v484
    %v486 = vmul.f32 %v465, 1.442695
    %v487 = vpow.pop %v486
    %v488 = vmul.f32 %v466, 1.442695
    %v489 = vpow.pop %v488
    %v490 = vmul.f32 %v467, 1.442695
    %v491 = vpow.pop %v490
    %v492 = vsub.f32 %v469, 1.0
    %v493 = vsub.f32 %v471, 1.0
    %v494 = vsub.f32 %v473, 1.0
    %v495 = vsub.f32 %v475, 1.0
    %v496 = vsub.f32 %v477, 1.0
    %v497 = vsub.f32 %v479, 1.0
    %v498 = vsub.f32 %v481, 1.0
    %v499 = vsub.f32 %v483, 1.0
    %v500 = vsub.f32 %v485, 1.0
    %v501 = vsub.f32 %v487, 1.0
    %v502 = vsub.f32 %v489, 1.0
    %v503 = vsub.f32 %v491, 1.0
    %v504 = vsel %vm444, %v337, %v492
    %v505 = vsel %vm445, %v339, %v493
    %v506 = vsel %vm446, %v426, %v494
    %v507 = vsel %vm447, %v343, %v495
    %v508 = vsel %vm448, %v345, %v496
    %v509 = vsel %vm449, %v431, %v497
    %v510 = vsel %vm450, %v349, %v498
    %v511 = vsel %vm451, %v351, %v499
    %v512 = vsel %vm452, %v436, %v500
    %v513 = vsel %vm453, %v355, %v501
    %v514 = vsel %vm454, %v357, %v502
    %v515 = vsel %vm455, %v441, %v503
    %528 = vrot.lane.b32.xlu0 %v504, 127
    %v529 = vpop.permute.xlu0 %528
    %530 = vrot.lane.b32.xlu0 %v505, 127
    %v531 = vpop.permute.xlu0 %530
    %532 = vrot.lane.b32.xlu0 %v506, 127
    %v533 = vpop.permute.xlu0 %532
    %534 = vrot.lane.b32.xlu0 %v507, 127
    %v535 = vpop.permute.xlu0 %534
    %536 = vrot.lane.b32.xlu0 %v508, 127
    %v537 = vpop.permute.xlu0 %536
    %538 = vrot.lane.b32.xlu0 %v509, 127
    %v539 = vpop.permute.xlu0 %538
    %540 = vrot.lane.b32.xlu0 %v510, 127
    %v541 = vpop.permute.xlu0 %540
    %542 = vrot.lane.b32.xlu0 %v511, 127
    %v543 = vpop.permute.xlu0 %542
    %544 = vrot.lane.b32.xlu0 %v512, 127
    %v545 = vpop.permute.xlu0 %544
    %546 = vrot.lane.b32.xlu0 %v513, 127
    %v547 = vpop.permute.xlu0 %546
    %548 = vrot.lane.b32.xlu0 %v514, 127
    %v549 = vpop.permute.xlu0 %548
    %550 = vrot.lane.b32.xlu0 %v515, 127
    %v551 = vpop.permute.xlu0 %550
    %v552 = vsel %vm89, %v529, %v531
    %v553 = vsel %vm89, %v531, %v533
    %v554 = vsel %vm89, %v535, %v537
    %v555 = vsel %vm89, %v537, %v539
    %v556 = vsel %vm89, %v541, %v543
    %v557 = vsel %vm89, %v543, %v545
    %v558 = vsel %vm89, %v547, %v549
    %v559 = vsel %vm89, %v549, %v551
    %v572 = vmax.f32 %v504, %v552
    %v573 = vmax.f32 %v505, %v553
    %v574 = vmax.f32 %v506, %v533
    %v575 = vmax.f32 %v507, %v554
    %v576 = vmax.f32 %v508, %v555
    %v577 = vmax.f32 %v509, %v539
    %v578 = vmax.f32 %v510, %v556
    %v579 = vmax.f32 %v511, %v557
    %v580 = vmax.f32 %v512, %v545
    %v581 = vmax.f32 %v513, %v558
    %v582 = vmax.f32 %v514, %v559
    %v583 = vmax.f32 %v515, %v551
    %596 = vrot.lane.b32.xlu0 %v572, 110
    %v597 = vpop.permute.xlu0 %596
    %598 = vrot.lane.b32.xlu0 %v573, 110
    %v599 = vpop.permute.xlu0 %598
    %600 = vrot.lane.b32.xlu0 %v574, 110
    %v601 = vpop.permute.xlu0 %600
    %602 = vrot.lane.b32.xlu0 %v575, 110
    %v603 = vpop.permute.xlu0 %602
    %604 = vrot.lane.b32.xlu0 %v576, 110
    %v605 = vpop.permute.xlu0 %604
    %606 = vrot.lane.b32.xlu0 %v577, 110
    %v607 = vpop.permute.xlu0 %606
    %608 = vrot.lane.b32.xlu0 %v578, 110
    %v609 = vpop.permute.xlu0 %608
    %610 = vrot.lane.b32.xlu0 %v579, 110
    %v611 = vpop.permute.xlu0 %610
    %612 = vrot.lane.b32.xlu0 %v580, 110
    %v613 = vpop.permute.xlu0 %612
    %614 = vrot.lane.b32.xlu0 %v581, 110
    %v615 = vpop.permute.xlu0 %614
    %616 = vrot.lane.b32.xlu0 %v582, 110
    %v617 = vpop.permute.xlu0 %616
    %618 = vrot.lane.b32.xlu0 %v583, 110
    %v619 = vpop.permute.xlu0 %618
    %v620 = vsel %vm120, %v597, %v599
    %v621 = vsel %vm120, %v599, %v601
    %v622 = vsel %vm120, %v603, %v605
    %v623 = vsel %vm120, %v605, %v607
    %v624 = vsel %vm120, %v609, %v611
    %v625 = vsel %vm120, %v611, %v613
    %v626 = vsel %vm120, %v615, %v617
    %v627 = vsel %vm120, %v617, %v619
    %v640 = vmax.f32 %v572, %v620
    %v641 = vmax.f32 %v573, %v621
    %v642 = vmax.f32 %v574, %v601
    %v643 = vmax.f32 %v575, %v622
    %v644 = vmax.f32 %v576, %v623
    %v645 = vmax.f32 %v577, %v607
    %v646 = vmax.f32 %v578, %v624
    %v647 = vmax.f32 %v579, %v625
    %v648 = vmax.f32 %v580, %v613
    %v649 = vmax.f32 %v581, %v626
    %v650 = vmax.f32 %v582, %v627
    %v651 = vmax.f32 %v583, %v619
    %v652 = vld [vmem:[%s3] sm:$0xff]
    %v653 = vld [vmem:[%s3 + $0x8] sm:$0xff]
    %v654 = vld [vmem:[%s3 + $0x10] sm:$0xff]
    %v655 = vld [vmem:[%s3 + $0x18] sm:$0xff]
    %v656 = vld [vmem:[%s3 + $0x20] sm:$0xff]
    %v657 = vld [vmem:[%s3 + $0x28] sm:$0xff]
    %v658 = vld [vmem:[%s3 + $0x30] sm:$0xff]
    %v659 = vld [vmem:[%s3 + $0x38] sm:$0xff]
    %v660 = vld [vmem:[%s3 + $0x40] sm:$0xff]
    %v661 = vld [vmem:[%s3 + $0x48] sm:$0xff]
    %v662 = vld [vmem:[%s3 + $0x50] sm:$0xff]
    %v663 = vld [vmem:[%s3 + $0x58] sm:$0xff]
    %v664 = vld [vmem:[%s3 + $0x60] sm:$0xff]
    %v665 = vld [vmem:[%s3 + $0x68] sm:$0xff]
    %v666 = vld [vmem:[%s3 + $0x70] sm:$0xff]
    %v667 = vld [vmem:[%s3 + $0x78] sm:$0xff]
    %v668 = vld [vmem:[%s3 + $0x80] sm:$0xff]
    %v669 = vld [vmem:[%s3 + $0x88] sm:$0xff]
    %v670 = vld [vmem:[%s3 + $0x90] sm:$0xff]
    %v671 = vld [vmem:[%s3 + $0x98] sm:$0xff]
    %v672 = vld [vmem:[%s3 + $0xa0] sm:$0xff]
    %v673 = vld [vmem:[%s3 + $0xa8] sm:$0xff]
    %v674 = vld [vmem:[%s3 + $0xb0] sm:$0xff]
    %v675 = vld [vmem:[%s3 + $0xb8] sm:$0xff]
    %v676 = vld [vmem:[%s3 + $0xc0] sm:$0xff]
    %v677 = vld [vmem:[%s3 + $0xc8] sm:$0xff]
    %v678 = vld [vmem:[%s3 + $0xd0] sm:$0xff]
    %v679 = vld [vmem:[%s3 + $0xd8] sm:$0xff]
    %v680 = vld [vmem:[%s3 + $0xe0] sm:$0xff]
    %v681 = vld [vmem:[%s3 + $0xe8] sm:$0xff]
    %v682 = vld [vmem:[%s3 + $0xf0] sm:$0xff]
    %v683 = vld [vmem:[%s3 + $0xf8] sm:$0xff]
    %v684 = vld [vmem:[%s3 + $0x100] sm:$0xff]
    %v685 = vld [vmem:[%s3 + $0x108] sm:$0x7]
    %vm686 = vcmask 89088
    %v688 = vsel %vm686, %v642, 0
    %v691 = vsel %vm686, %v645, 0
    %v694 = vsel %vm686, %v648, 0
    %v697 = vsel %vm686, %v651, 0
    %vm699 = vcmask 1042432
    %v701 = vsel %vm699, %v685, 0
    %703 = vmatprep.subr.mxu0 0.0
    %704 = vmatpush1.msra.mxu0 %v667
    %705 = vmatprep.subr.mxu0 0.0
    %706 = vmatpush1.msra.mxu0 %v666
    %707 = vmatprep.subr.mxu0 0.0
    %708 = vmatpush1.msra.mxu0 %v665
    %709 = vmatprep.subr.mxu0 0.0
    %710 = vmatpush1.msra.mxu0 %v664
    %711 = vmatprep.subr.mxu0 0.0
    %712 = vmatpush1.msra.mxu0 %v663
    %713 = vmatprep.subr.mxu0 0.0
    %714 = vmatpush1.msra.mxu0 %v662
    %715 = vmatprep.subr.mxu0 0.0
    %716 = vmatpush1.msra.mxu0 %v661
    %717 = vmatprep.subr.mxu0 0.0
    %718 = vmatpush1.msra.mxu0 %v660
    %719 = vmatprep.subr.mxu0 0.0
    %720 = vmatpush1.msra.mxu0 %v659
    %721 = vmatprep.subr.mxu0 0.0
    %722 = vmatpush1.msra.mxu0 %v658
    %723 = vmatprep.subr.mxu0 0.0
    %724 = vmatpush1.msra.mxu0 %v657
    %725 = vmatprep.subr.mxu0 0.0
    %726 = vmatpush1.msra.mxu0 %v656
    %727 = vmatprep.subr.mxu0 0.0
    %728 = vmatpush1.msra.mxu0 %v655
    %729 = vmatprep.subr.mxu0 0.0
    %730 = vmatpush1.msra.mxu0 %v654
    %731 = vmatprep.subr.mxu0 0.0
    %732 = vmatpush1.msra.mxu0 %v653
    %733 = vmatprep.subr.mxu0 0.0
    %734 = vmatpush1.msra.mxu0 %v652
    %735 = vmatprep.subr.mxu0 0.0
    %736 = vmatpush2.msra.mxu0 %v683
    %737 = vmatprep.subr.mxu0 0.0
    %738 = vmatpush2.msra.mxu0 %v682
    %739 = vmatprep.subr.mxu0 0.0
    %740 = vmatpush2.msra.mxu0 %v681
    %741 = vmatprep.subr.mxu0 0.0
    %742 = vmatpush2.msra.mxu0 %v680
    %743 = vmatprep.subr.mxu0 0.0
    %744 = vmatpush2.msra.mxu0 %v679
    %745 = vmatprep.subr.mxu0 0.0
    %746 = vmatpush2.msra.mxu0 %v678
    %747 = vmatprep.subr.mxu0 0.0
    %748 = vmatpush2.msra.mxu0 %v677
    %749 = vmatprep.subr.mxu0 0.0
    %750 = vmatpush2.msra.mxu0 %v676
    %751 = vmatprep.subr.mxu0 0.0
    %752 = vmatpush2.msra.mxu0 %v675
    %753 = vmatprep.subr.mxu0 0.0
    %754 = vmatpush2.msra.mxu0 %v674
    %755 = vmatprep.subr.mxu0 0.0
    %756 = vmatpush2.msra.mxu0 %v673
    %757 = vmatprep.subr.mxu0 0.0
    %758 = vmatpush2.msra.mxu0 %v672
    %759 = vmatprep.subr.mxu0 0.0
    %760 = vmatpush2.msra.mxu0 %v671
    %761 = vmatprep.subr.mxu0 0.0
    %762 = vmatpush2.msra.mxu0 %v670
    %763 = vmatprep.subr.mxu0 0.0
    %764 = vmatpush2.msra.mxu0 %v669
    %765 = vmatprep.subr.mxu0 0.0
    %766 = vmatpush2.msra.mxu0 %v668
    %767 = vmatprep.mubr.f32.mxu0 %v641
    %768 = vmatmul.mubr.f32.gmra.mxu0 %v640
    %v769 = vpop.f32.mrf.mxu0
    %v770 = vadd.f32 0.0, %v769
    %v771 = vpop.f32.mrf.mxu0
    %772 = vmatprep.mubr.f32.mxu0 %v644
    %773 = vmatmul.mubr.f32.gmra.mxu0 %v643
    %v774 = vpop.f32.mrf.mxu0
    %v775 = vadd.f32 0.0, %v774
    %v776 = vpop.f32.mrf.mxu0
    %777 = vmatprep.mubr.f32.mxu0 %v647
    %778 = vmatmul.mubr.f32.gmra.mxu0 %v646
    %v779 = vpop.f32.mrf.mxu0
    %v780 = vadd.f32 0.0, %v779
    %v781 = vpop.f32.mrf.mxu0
    %782 = vmatprep.mubr.f32.mxu0 %v650
    %783 = vmatmul.mubr.f32.gmra.mxu0 %v649
    %v784 = vpop.f32.mrf.mxu0
    %v785 = vadd.f32 0.0, %v784
    %v786 = vpop.f32.mrf.mxu0
    %787 = vdwg.mxu0
    %788 = vmatprep.subr.mxu0 0.0
    %789 = vmatpush1.msra.mxu0 0.0
    %790 = vmatprep.subr.mxu0 0.0
    %791 = vmatpush1.msra.mxu0 0.0
    %792 = vmatprep.subr.mxu0 0.0
    %793 = vmatpush1.msra.mxu0 0.0
    %794 = vmatprep.subr.mxu0 0.0
    %795 = vmatpush1.msra.mxu0 0.0
    %796 = vmatprep.subr.mxu0 0.0
    %797 = vmatpush1.msra.mxu0 0.0
    %798 = vmatprep.subr.mxu0 0.0
    %799 = vmatpush1.msra.mxu0 0.0
    %800 = vmatprep.subr.mxu0 0.0
    %801 = vmatpush1.msra.mxu0 0.0
    %802 = vmatprep.subr.mxu0 0.0
    %803 = vmatpush1.msra.mxu0 0.0
    %804 = vmatprep.subr.mxu0 0.0
    %805 = vmatpush1.msra.mxu0 0.0
    %806 = vmatprep.subr.mxu0 0.0
    %807 = vmatpush1.msra.mxu0 0.0
    %808 = vmatprep.subr.mxu0 0.0
    %809 = vmatpush1.msra.mxu0 0.0
    %810 = vmatprep.subr.mxu0 0.0
    %811 = vmatpush1.msra.mxu0 0.0
    %812 = vmatprep.subr.mxu0 0.0
    %813 = vmatpush1.msra.mxu0 0.0
    %814 = vmatprep.subr.mxu0 0.0
    %815 = vmatpush1.msra.mxu0 0.0
    %816 = vmatprep.subr.mxu0 0.0
    %817 = vmatpush1.msra.mxu0 %v701
    %818 = vmatprep.subr.mxu0 0.0
    %819 = vmatpush1.msra.mxu0 %v684
    %820 = vmatprep.subr.mxu0 0.0
    %821 = vmatpush2.msra.mxu0 0.0
    %822 = vmatprep.subr.mxu0 0.0
    %823 = vmatpush2.msra.mxu0 0.0
    %824 = vmatprep.subr.mxu0 0.0
    %825 = vmatpush2.msra.mxu0 0.0
    %826 = vmatprep.subr.mxu0 0.0
    %827 = vmatpush2.msra.mxu0 0.0
    %828 = vmatprep.subr.mxu0 0.0
    %829 = vmatpush2.msra.mxu0 0.0
    %830 = vmatprep.subr.mxu0 0.0
    %831 = vmatpush2.msra.mxu0 0.0
    %832 = vmatprep.subr.mxu0 0.0
    %833 = vmatpush2.msra.mxu0 0.0
    %834 = vmatprep.subr.mxu0 0.0
    %835 = vmatpush2.msra.mxu0 0.0
    %836 = vmatprep.subr.mxu0 0.0
    %837 = vmatpush2.msra.mxu0 0.0
    %838 = vmatprep.subr.mxu0 0.0
    %839 = vmatpush2.msra.mxu0 0.0
    %840 = vmatprep.subr.mxu0 0.0
    %841 = vmatpush2.msra.mxu0 0.0
    %842 = vmatprep.subr.mxu0 0.0
    %843 = vmatpush2.msra.mxu0 0.0
    %844 = vmatprep.subr.mxu0 0.0
    %845 = vmatpush2.msra.mxu0 0.0
    %846 = vmatprep.subr.mxu0 0.0
    %847 = vmatpush2.msra.mxu0 0.0
    %848 = vmatprep.subr.mxu0 0.0
    %849 = vmatpush2.msra.mxu0 0.0
    %850 = vmatprep.subr.mxu0 0.0
    %851 = vmatpush2.msra.mxu0 0.0
    %852 = vmatprep.mubr.f32.mxu0 0.0
    %853 = vmatmul.mubr.f32.gmra.mxu0 %v688
    %v854 = vpop.f32.mrf.mxu0
    %v855 = vadd.f32 %v770, %v854
    %v856 = vpop.f32.mrf.mxu0
    %857 = vmatprep.mubr.f32.mxu0 0.0
    %858 = vmatmul.mubr.f32.gmra.mxu0 %v691
    %v859 = vpop.f32.mrf.mxu0
    %v860 = vadd.f32 %v775, %v859
    %v861 = vpop.f32.mrf.mxu0
    %862 = vmatprep.mubr.f32.mxu0 0.0
    %863 = vmatmul.mubr.f32.gmra.mxu0 %v694
    %v864 = vpop.f32.mrf.mxu0
    %v865 = vadd.f32 %v780, %v864
    %v866 = vpop.f32.mrf.mxu0
    %867 = vmatprep.mubr.f32.mxu0 0.0
    %868 = vmatmul.mubr.f32.gmra.mxu0 %v697
    %v869 = vpop.f32.mrf.mxu0
    %v870 = vadd.f32 %v785, %v869
    %v871 = vpop.f32.mrf.mxu0
    %872 = vdwg.mxu0
    %vm873 = vcmask 375808
    %874 = vst.msk [vmem:[#allocation3] sm:$0xff] %vm873, %v855
    %875 = vst.msk [vmem:[#allocation3 + $0x8] sm:$0xff] %vm873, %v860
    %876 = vst.msk [vmem:[#allocation3 + $0x10] sm:$0xff] %vm873, %v865
    %877 = vst.msk [vmem:[#allocation3 + $0x18] sm:$0xff] %vm873, %v870
    %882 = vrot.lane.b32.xlu0 %v855, 127
    %v883 = vpop.permute.xlu0 %882
    %884 = vrot.lane.b32.xlu0 %v860, 127
    %v885 = vpop.permute.xlu0 %884
    %886 = vrot.lane.b32.xlu0 %v865, 127
    %v887 = vpop.permute.xlu0 %886
    %888 = vrot.lane.b32.xlu0 %v870, 127
    %v889 = vpop.permute.xlu0 %888
    %894 = vst.msk [vmem:[#allocation3 + $0x20] sm:$0xff] %vm873, %v883
    %895 = vst.msk [vmem:[#allocation3 + $0x28] sm:$0xff] %vm873, %v885
    %896 = vst.msk [vmem:[#allocation3 + $0x30] sm:$0xff] %vm873, %v887
    %897 = vst.msk [vmem:[#allocation3 + $0x38] sm:$0xff] %vm873, %v889
    %898 = vrot.lane.b32.xlu0 %v855, 126
    %v899 = vpop.permute.xlu0 %898
    %900 = vrot.lane.b32.xlu0 %v860, 126
    %v901 = vpop.permute.xlu0 %900
    %902 = vrot.lane.b32.xlu0 %v865, 126
    %v903 = vpop.permute.xlu0 %902
    %904 = vrot.lane.b32.xlu0 %v870, 126
    %v905 = vpop.permute.xlu0 %904
    %910 = vst.msk [vmem:[#allocation3 + $0x40] sm:$0xff] %vm873, %v899
    %911 = vst.msk [vmem:[#allocation3 + $0x48] sm:$0xff] %vm873, %v901
    %912 = vst.msk [vmem:[#allocation3 + $0x50] sm:$0xff] %vm873, %v903
    %913 = vst.msk [vmem:[#allocation3 + $0x58] sm:$0xff] %vm873, %v905
    %914 = vrot.lane.b32.xlu0 %v855, 120
    %v915 = vpop.permute.xlu0 %914
    %916 = vrot.lane.b32.xlu0 %v860, 120
    %v917 = vpop.permute.xlu0 %916
    %918 = vrot.lane.b32.xlu0 %v865, 120
    %v919 = vpop.permute.xlu0 %918
    %920 = vrot.lane.b32.xlu0 %v870, 120
    %v921 = vpop.permute.xlu0 %920
    %926 = vst.msk [vmem:[#allocation3 + $0x60] sm:$0xff] %vm873, %v915
    %927 = vst.msk [vmem:[#allocation3 + $0x68] sm:$0xff] %vm873, %v917
    %928 = vst.msk [vmem:[#allocation3 + $0x70] sm:$0xff] %vm873, %v919
    %929 = vst.msk [vmem:[#allocation3 + $0x78] sm:$0xff] %vm873, %v921
    %930 = vrot.lane.b32.xlu0 %v855, 119
    %v931 = vpop.permute.xlu0 %930
    %932 = vrot.lane.b32.xlu0 %v860, 119
    %v933 = vpop.permute.xlu0 %932
    %934 = vrot.lane.b32.xlu0 %v865, 119
    %v935 = vpop.permute.xlu0 %934
    %936 = vrot.lane.b32.xlu0 %v870, 119
    %v937 = vpop.permute.xlu0 %936
    %942 = vst.msk [vmem:[#allocation3 + $0x80] sm:$0xff] %vm873, %v931
    %943 = vst.msk [vmem:[#allocation3 + $0x88] sm:$0xff] %vm873, %v933
    %944 = vst.msk [vmem:[#allocation3 + $0x90] sm:$0xff] %vm873, %v935
    %945 = vst.msk [vmem:[#allocation3 + $0x98] sm:$0xff] %vm873, %v937
    %946 = vrot.lane.b32.xlu0 %v855, 118
    %v947 = vpop.permute.xlu0 %946
    %948 = vrot.lane.b32.xlu0 %v860, 118
    %v949 = vpop.permute.xlu0 %948
    %950 = vrot.lane.b32.xlu0 %v865, 118
    %v951 = vpop.permute.xlu0 %950
    %952 = vrot.lane.b32.xlu0 %v870, 118
    %v953 = vpop.permute.xlu0 %952
    %958 = vst.msk [vmem:[#allocation3 + $0xa0] sm:$0xff] %vm873, %v947
    %959 = vst.msk [vmem:[#allocation3 + $0xa8] sm:$0xff] %vm873, %v949
    %960 = vst.msk [vmem:[#allocation3 + $0xb0] sm:$0xff] %vm873, %v951
    %961 = vst.msk [vmem:[#allocation3 + $0xb8] sm:$0xff] %vm873, %v953
    %962 = vrot.lane.b32.xlu0 %v855, 112
    %v963 = vpop.permute.xlu0 %962
    %964 = vrot.lane.b32.xlu0 %v860, 112
    %v965 = vpop.permute.xlu0 %964
    %966 = vrot.lane.b32.xlu0 %v865, 112
    %v967 = vpop.permute.xlu0 %966
    %968 = vrot.lane.b32.xlu0 %v870, 112
    %v969 = vpop.permute.xlu0 %968
    %974 = vst.msk [vmem:[#allocation3 + $0xc0] sm:$0xff] %vm873, %v963
    %975 = vst.msk [vmem:[#allocation3 + $0xc8] sm:$0xff] %vm873, %v965
    %976 = vst.msk [vmem:[#allocation3 + $0xd0] sm:$0xff] %vm873, %v967
    %977 = vst.msk [vmem:[#allocation3 + $0xd8] sm:$0xff] %vm873, %v969
    %978 = vrot.lane.b32.xlu0 %v855, 111
    %v979 = vpop.permute.xlu0 %978
    %980 = vrot.lane.b32.xlu0 %v860, 111
    %v981 = vpop.permute.xlu0 %980
    %982 = vrot.lane.b32.xlu0 %v865, 111
    %v983 = vpop.permute.xlu0 %982
    %984 = vrot.lane.b32.xlu0 %v870, 111
    %v985 = vpop.permute.xlu0 %984
    %990 = vst.msk [vmem:[#allocation3 + $0xe0] sm:$0xff] %vm873, %v979
    %991 = vst.msk [vmem:[#allocation3 + $0xe8] sm:$0xff] %vm873, %v981
    %992 = vst.msk [vmem:[#allocation3 + $0xf0] sm:$0xff] %vm873, %v983
    %993 = vst.msk [vmem:[#allocation3 + $0xf8] sm:$0xff] %vm873, %v985
    %994 = vrot.lane.b32.xlu0 %v855, 110
    %v995 = vpop.permute.xlu0 %994
    %996 = vrot.lane.b32.xlu0 %v860, 110
    %v997 = vpop.permute.xlu0 %996
    %998 = vrot.lane.b32.xlu0 %v865, 110
    %v999 = vpop.permute.xlu0 %998
    %1000 = vrot.lane.b32.xlu0 %v870, 110
    %v1001 = vpop.permute.xlu0 %1000
    %1006 = vst.msk [vmem:[#allocation3 + $0x100] sm:$0xff] %vm873, %v995
    %1007 = vst.msk [vmem:[#allocation3 + $0x108] sm:$0xff] %vm873, %v997
    %1008 = vst.msk [vmem:[#allocation3 + $0x110] sm:$0xff] %vm873, %v999
    %1009 = vst.msk [vmem:[#allocation3 + $0x118] sm:$0xff] %vm873, %v1001
    %v1010 = vld [vmem:[%s4] sm:$0xff]
    %v1011 = vld [vmem:[%s4 + $0x8] sm:$0xff]
    %v1012 = vld [vmem:[%s4 + $0x10] sm:$0xff]
    %v1013 = vld [vmem:[%s4 + $0x18] sm:$0xff]
    %v1014 = vld [vmem:[%s4 + $0x20] sm:$0xff]
    %v1015 = vld [vmem:[%s4 + $0x28] sm:$0xff]
    %v1016 = vld [vmem:[%s4 + $0x30] sm:$0xff]
    %v1017 = vld [vmem:[%s4 + $0x38] sm:$0xff]
    %v1018 = vld [vmem:[%s4 + $0x40] sm:$0xff]
    %v1019 = vld [vmem:[%s4 + $0x48] sm:$0xff]
    %v1020 = vld [vmem:[%s4 + $0x50] sm:$0xff]
    %v1021 = vld [vmem:[%s4 + $0x58] sm:$0xff]
    %v1022 = vld [vmem:[%s4 + $0x60] sm:$0xff]
    %v1023 = vld [vmem:[%s4 + $0x68] sm:$0xff]
    %v1024 = vld [vmem:[%s4 + $0x70] sm:$0xff]
    %v1025 = vld [vmem:[%s4 + $0x78] sm:$0xff]
    %v1026 = vld [vmem:[%s4 + $0x80] sm:$0xff]
    %v1027 = vld [vmem:[%s4 + $0x88] sm:$0xff]
    %v1028 = vld [vmem:[%s4 + $0x90] sm:$0xff]
    %v1029 = vld [vmem:[%s4 + $0x98] sm:$0xff]
    %v1030 = vld [vmem:[%s4 + $0xa0] sm:$0xff]
    %v1031 = vld [vmem:[%s4 + $0xa8] sm:$0xff]
    %v1032 = vld [vmem:[%s4 + $0xb0] sm:$0xff]
    %v1033 = vld [vmem:[%s4 + $0xb8] sm:$0xff]
    %v1034 = vld [vmem:[#allocation3] sm:$0xff]
    %v1035 = vld [vmem:[#allocation3 + $0x8] sm:$0xff]
    %v1036 = vld [vmem:[#allocation3 + $0x10] sm:$0xff]
    %v1037 = vld [vmem:[#allocation3 + $0x18] sm:$0xff]
    %v1038 = vld [vmem:[#allocation3 + $0x20] sm:$0xff]
    %v1039 = vld [vmem:[#allocation3 + $0x28] sm:$0xff]
    %v1040 = vld [vmem:[#allocation3 + $0x30] sm:$0xff]
    %v1041 = vld [vmem:[#allocation3 + $0x38] sm:$0xff]
    %v1042 = vld [vmem:[#allocation3 + $0x40] sm:$0xff]
    %v1043 = vld [vmem:[#allocation3 + $0x48] sm:$0xff]
    %v1044 = vld [vmem:[#allocation3 + $0x50] sm:$0xff]
    %v1045 = vld [vmem:[#allocation3 + $0x58] sm:$0xff]
    %v1046 = vld [vmem:[#allocation3 + $0x60] sm:$0xff]
    %v1047 = vld [vmem:[#allocation3 + $0x68] sm:$0xff]
    %v1048 = vld [vmem:[#allocation3 + $0x70] sm:$0xff]
    %v1049 = vld [vmem:[#allocation3 + $0x78] sm:$0xff]
    %v1050 = vld [vmem:[#allocation3 + $0x80] sm:$0xff]
    %v1051 = vld [vmem:[#allocation3 + $0x88] sm:$0xff]
    %v1052 = vld [vmem:[#allocation3 + $0x90] sm:$0xff]
    %v1053 = vld [vmem:[#allocation3 + $0x98] sm:$0xff]
    %v1054 = vld [vmem:[#allocation3 + $0xa0] sm:$0xff]
    %v1055 = vld [vmem:[#allocation3 + $0xa8] sm:$0xff]
    %v1056 = vld [vmem:[#allocation3 + $0xb0] sm:$0xff]
    %v1057 = vld [vmem:[#allocation3 + $0xb8] sm:$0xff]
    %v1058 = vld [vmem:[#allocation3 + $0xc0] sm:$0xff]
    %v1059 = vld [vmem:[#allocation3 + $0xc8] sm:$0xff]
    %v1060 = vld [vmem:[#allocation3 + $0xd0] sm:$0xff]
    %v1061 = vld [vmem:[#allocation3 + $0xd8] sm:$0xff]
    %v1062 = vld [vmem:[#allocation3 + $0xe0] sm:$0xff]
    %v1063 = vld [vmem:[#allocation3 + $0xe8] sm:$0xff]
    %v1064 = vld [vmem:[#allocation3 + $0xf0] sm:$0xff]
    %v1065 = vld [vmem:[#allocation3 + $0xf8] sm:$0xff]
    %v1066 = vld [vmem:[#allocation3 + $0x100] sm:$0xff]
    %v1067 = vld [vmem:[#allocation3 + $0x108] sm:$0xff]
    %v1068 = vld [vmem:[#allocation3 + $0x110] sm:$0xff]
    %v1069 = vld [vmem:[#allocation3 + $0x118] sm:$0xff]
    %v1070 = vld [vmem:[%s5] sm:$0xff]
    %v1071 = vld [vmem:[%s5 + $0x8] sm:$0xff]
    %v1072 = vld [vmem:[%s5 + $0x10] sm:$0xff]
    %v1073 = vld [vmem:[%s5 + $0x18] sm:$0xff]
    %v1074 = vld [vmem:[%s5 + $0x20] sm:$0xff]
    %v1075 = vld [vmem:[%s5 + $0x28] sm:$0xff]
    %v1076 = vld [vmem:[%s5 + $0x30] sm:$0xff]
    %v1077 = vld [vmem:[%s5 + $0x38] sm:$0xff]
    %1079 = vset.pattern.permute.xlu0 0
    %1080 = vperm.xlu0 %1079, %v1070
    %v1081 = vpop.permute.xlu0 %1080
    %1084 = vset.pattern.permute.xlu0 0
    %1085 = vperm.xlu0 %1084, %v1071
    %v1086 = vpop.permute.xlu0 %1085
    %1089 = vset.pattern.permute.xlu0 0
    %1090 = vperm.xlu0 %1089, %v1072
    %v1091 = vpop.permute.xlu0 %1090
    %1094 = vset.pattern.permute.xlu0 0
    %1095 = vperm.xlu0 %1094, %v1073
    %v1096 = vpop.permute.xlu0 %1095
    %1099 = vset.pattern.permute.xlu0 0
    %1100 = vperm.xlu0 %1099, %v1074
    %v1101 = vpop.permute.xlu0 %1100
    %1104 = vset.pattern.permute.xlu0 0
    %1105 = vperm.xlu0 %1104, %v1075
    %v1106 = vpop.permute.xlu0 %1105
    %1109 = vset.pattern.permute.xlu0 0
    %1110 = vperm.xlu0 %1109, %v1076
    %v1111 = vpop.permute.xlu0 %1110
    %1114 = vset.pattern.permute.xlu0 0
    %1115 = vperm.xlu0 %1114, %v1077
    %v1116 = vpop.permute.xlu0 %1115
    %vm1118 = vcmask 261120
    %v1120 = vsel %vm1118, %v1012, 0
    %v1123 = vsel %vm1118, %v1015, 0
    %v1126 = vsel %vm1118, %v1018, 0
    %v1129 = vsel %vm1118, %v1021, 0
    %v1132 = vsel %vm1118, %v1024, 0
    %v1135 = vsel %vm1118, %v1027, 0
    %v1138 = vsel %vm1118, %v1030, 0
    %v1141 = vsel %vm1118, %v1033, 0
    %1143 = vmatprep.subr.mxu0 0.0
    %1144 = vmatpush1.msra.mxu0 %v1049
    %1145 = vmatprep.subr.mxu0 0.0
    %1146 = vmatpush1.msra.mxu0 %v1048
    %1147 = vmatprep.subr.mxu0 0.0
    %1148 = vmatpush1.msra.mxu0 %v1047
    %1149 = vmatprep.subr.mxu0 0.0
    %1150 = vmatpush1.msra.mxu0 %v1046
    %1151 = vmatprep.subr.mxu0 0.0
    %1152 = vmatpush1.msra.mxu0 %v1045
    %1153 = vmatprep.subr.mxu0 0.0
    %1154 = vmatpush1.msra.mxu0 %v1044
    %1155 = vmatprep.subr.mxu0 0.0
    %1156 = vmatpush1.msra.mxu0 %v1043
    %1157 = vmatprep.subr.mxu0 0.0
    %1158 = vmatpush1.msra.mxu0 %v1042
    %1159 = vmatprep.subr.mxu0 0.0
    %1160 = vmatpush1.msra.mxu0 %v1041
    %1161 = vmatprep.subr.mxu0 0.0
    %1162 = vmatpush1.msra.mxu0 %v1040
    %1163 = vmatprep.subr.mxu0 0.0
    %1164 = vmatpush1.msra.mxu0 %v1039
    %1165 = vmatprep.subr.mxu0 0.0
    %1166 = vmatpush1.msra.mxu0 %v1038
    %1167 = vmatprep.subr.mxu0 0.0
    %1168 = vmatpush1.msra.mxu0 %v1037
    %1169 = vmatprep.subr.mxu0 0.0
    %1170 = vmatpush1.msra.mxu0 %v1036
    %1171 = vmatprep.subr.mxu0 0.0
    %1172 = vmatpush1.msra.mxu0 %v1035
    %1173 = vmatprep.subr.mxu0 0.0
    %1174 = vmatpush1.msra.mxu0 %v1034
    %1175 = vmatprep.subr.mxu0 0.0
    %1176 = vmatpush2.msra.mxu0 %v1065
    %1177 = vmatprep.subr.mxu0 0.0
    %1178 = vmatpush2.msra.mxu0 %v1064
    %1179 = vmatprep.subr.mxu0 0.0
    %1180 = vmatpush2.msra.mxu0 %v1063
    %1181 = vmatprep.subr.mxu0 0.0
    %1182 = vmatpush2.msra.mxu0 %v1062
    %1183 = vmatprep.subr.mxu0 0.0
    %1184 = vmatpush2.msra.mxu0 %v1061
    %1185 = vmatprep.subr.mxu0 0.0
    %1186 = vmatpush2.msra.mxu0 %v1060
    %1187 = vmatprep.subr.mxu0 0.0
    %1188 = vmatpush2.msra.mxu0 %v1059
    %1189 = vmatprep.subr.mxu0 0.0
    %1190 = vmatpush2.msra.mxu0 %v1058
    %1191 = vmatprep.subr.mxu0 0.0
    %1192 = vmatpush2.msra.mxu0 %v1057
    %1193 = vmatprep.subr.mxu0 0.0
    %1194 = vmatpush2.msra.mxu0 %v1056
    %1195 = vmatprep.subr.mxu0 0.0
    %1196 = vmatpush2.msra.mxu0 %v1055
    %1197 = vmatprep.subr.mxu0 0.0
    %1198 = vmatpush2.msra.mxu0 %v1054
    %1199 = vmatprep.subr.mxu0 0.0
    %1200 = vmatpush2.msra.mxu0 %v1053
    %1201 = vmatprep.subr.mxu0 0.0
    %1202 = vmatpush2.msra.mxu0 %v1052
    %1203 = vmatprep.subr.mxu0 0.0
    %1204 = vmatpush2.msra.mxu0 %v1051
    %1205 = vmatprep.subr.mxu0 0.0
    %1206 = vmatpush2.msra.mxu0 %v1050
    %1207 = vmatprep.mubr.f32.mxu0 %v1011
    %1208 = vmatmul.mubr.f32.gmra.mxu0 %v1010
    %v1209 = vpop.f32.mrf.mxu0
    %v1210 = vadd.f32 %v1081, %v1209
    %v1211 = vpop.f32.mrf.mxu0
    %1212 = vmatprep.mubr.f32.mxu0 %v1014
    %1213 = vmatmul.mubr.f32.gmra.mxu0 %v1013
    %v1214 = vpop.f32.mrf.mxu0
    %v1215 = vadd.f32 %v1086, %v1214
    %v1216 = vpop.f32.mrf.mxu0
    %1217 = vmatprep.mubr.f32.mxu0 %v1017
    %1218 = vmatmul.mubr.f32.gmra.mxu0 %v1016
    %v1219 = vpop.f32.mrf.mxu0
    %v1220 = vadd.f32 %v1091, %v1219
    %v1221 = vpop.f32.mrf.mxu0
    %1222 = vmatprep.mubr.f32.mxu0 %v1020
    %1223 = vmatmul.mubr.f32.gmra.mxu0 %v1019
    %v1224 = vpop.f32.mrf.mxu0
    %v1225 = vadd.f32 %v1096, %v1224
    %v1226 = vpop.f32.mrf.mxu0
    %1227 = vmatprep.mubr.f32.mxu0 %v1023
    %1228 = vmatmul.mubr.f32.gmra.mxu0 %v1022
    %v1229 = vpop.f32.mrf.mxu0
    %v1230 = vadd.f32 %v1101, %v1229
    %v1231 = vpop.f32.mrf.mxu0
    %1232 = vmatprep.mubr.f32.mxu0 %v1026
    %1233 = vmatmul.mubr.f32.gmra.mxu0 %v1025
    %v1234 = vpop.f32.mrf.mxu0
    %v1235 = vadd.f32 %v1106, %v1234
    %v1236 = vpop.f32.mrf.mxu0
    %1237 = vmatprep.mubr.f32.mxu0 %v1029
    %1238 = vmatmul.mubr.f32.gmra.mxu0 %v1028
    %v1239 = vpop.f32.mrf.mxu0
    %v1240 = vadd.f32 %v1111, %v1239
    %v1241 = vpop.f32.mrf.mxu0
    %1242 = vmatprep.mubr.f32.mxu0 %v1032
    %1243 = vmatmul.mubr.f32.gmra.mxu0 %v1031
    %v1244 = vpop.f32.mrf.mxu0
    %v1245 = vadd.f32 %v1116, %v1244
    %v1246 = vpop.f32.mrf.mxu0
    %1247 = vdwg.mxu0
    %1248 = vmatprep.subr.mxu0 0.0
    %1249 = vmatpush1.msra.mxu0 0.0
    %1250 = vmatprep.subr.mxu0 0.0
    %1251 = vmatpush1.msra.mxu0 0.0
    %1252 = vmatprep.subr.mxu0 0.0
    %1253 = vmatpush1.msra.mxu0 0.0
    %1254 = vmatprep.subr.mxu0 0.0
    %1255 = vmatpush1.msra.mxu0 0.0
    %1256 = vmatprep.subr.mxu0 0.0
    %1257 = vmatpush1.msra.mxu0 0.0
    %1258 = vmatprep.subr.mxu0 0.0
    %1259 = vmatpush1.msra.mxu0 0.0
    %1260 = vmatprep.subr.mxu0 0.0
    %1261 = vmatpush1.msra.mxu0 0.0
    %1262 = vmatprep.subr.mxu0 0.0
    %1263 = vmatpush1.msra.mxu0 0.0
    %1264 = vmatprep.subr.mxu0 0.0
    %1265 = vmatpush1.msra.mxu0 0.0
    %1266 = vmatprep.subr.mxu0 0.0
    %1267 = vmatpush1.msra.mxu0 0.0
    %1268 = vmatprep.subr.mxu0 0.0
    %1269 = vmatpush1.msra.mxu0 0.0
    %1270 = vmatprep.subr.mxu0 0.0
    %1271 = vmatpush1.msra.mxu0 0.0
    %1272 = vmatprep.subr.mxu0 0.0
    %1273 = vmatpush1.msra.mxu0 %v1069
    %1274 = vmatprep.subr.mxu0 0.0
    %1275 = vmatpush1.msra.mxu0 %v1068
    %1276 = vmatprep.subr.mxu0 0.0
    %1277 = vmatpush1.msra.mxu0 %v1067
    %1278 = vmatprep.subr.mxu0 0.0
    %1279 = vmatpush1.msra.mxu0 %v1066
    %1280 = vmatprep.subr.mxu0 0.0
    %1281 = vmatpush2.msra.mxu0 0.0
    %1282 = vmatprep.subr.mxu0 0.0
    %1283 = vmatpush2.msra.mxu0 0.0
    %1284 = vmatprep.subr.mxu0 0.0
    %1285 = vmatpush2.msra.mxu0 0.0
    %1286 = vmatprep.subr.mxu0 0.0
    %1287 = vmatpush2.msra.mxu0 0.0
    %1288 = vmatprep.subr.mxu0 0.0
    %1289 = vmatpush2.msra.mxu0 0.0
    %1290 = vmatprep.subr.mxu0 0.0
    %1291 = vmatpush2.msra.mxu0 0.0
    %1292 = vmatprep.subr.mxu0 0.0
    %1293 = vmatpush2.msra.mxu0 0.0
    %1294 = vmatprep.subr.mxu0 0.0
    %1295 = vmatpush2.msra.mxu0 0.0
    %1296 = vmatprep.subr.mxu0 0.0
    %1297 = vmatpush2.msra.mxu0 0.0
    %1298 = vmatprep.subr.mxu0 0.0
    %1299 = vmatpush2.msra.mxu0 0.0
    %1300 = vmatprep.subr.mxu0 0.0
    %1301 = vmatpush2.msra.mxu0 0.0
    %1302 = vmatprep.subr.mxu0 0.0
    %1303 = vmatpush2.msra.mxu0 0.0
    %1304 = vmatprep.subr.mxu0 0.0
    %1305 = vmatpush2.msra.mxu0 0.0
    %1306 = vmatprep.subr.mxu0 0.0
    %1307 = vmatpush2.msra.mxu0 0.0
    %1308 = vmatprep.subr.mxu0 0.0
    %1309 = vmatpush2.msra.mxu0 0.0
    %1310 = vmatprep.subr.mxu0 0.0
    %1311 = vmatpush2.msra.mxu0 0.0
    %1312 = vmatprep.mubr.f32.mxu0 0.0
    %1313 = vmatmul.mubr.f32.gmra.mxu0 %v1120
    %v1314 = vpop.f32.mrf.mxu0
    %v1315 = vadd.f32 %v1210, %v1314
    %v1316 = vpop.f32.mrf.mxu0
    %1317 = vmatprep.mubr.f32.mxu0 0.0
    %1318 = vmatmul.mubr.f32.gmra.mxu0 %v1123
    %v1319 = vpop.f32.mrf.mxu0
    %v1320 = vadd.f32 %v1215, %v1319
    %v1321 = vpop.f32.mrf.mxu0
    %1322 = vmatprep.mubr.f32.mxu0 0.0
    %1323 = vmatmul.mubr.f32.gmra.mxu0 %v1126
    %v1324 = vpop.f32.mrf.mxu0
    %v1325 = vadd.f32 %v1220, %v1324
    %v1326 = vpop.f32.mrf.mxu0
    %1327 = vmatprep.mubr.f32.mxu0 0.0
    %1328 = vmatmul.mubr.f32.gmra.mxu0 %v1129
    %v1329 = vpop.f32.mrf.mxu0
    %v1330 = vadd.f32 %v1225, %v1329
    %v1331 = vpop.f32.mrf.mxu0
    %1332 = vmatprep.mubr.f32.mxu0 0.0
    %1333 = vmatmul.mubr.f32.gmra.mxu0 %v1132
    %v1334 = vpop.f32.mrf.mxu0
    %v1335 = vadd.f32 %v1230, %v1334
    %v1336 = vpop.f32.mrf.mxu0
    %1337 = vmatprep.mubr.f32.mxu0 0.0
    %1338 = vmatmul.mubr.f32.gmra.mxu0 %v1135
    %v1339 = vpop.f32.mrf.mxu0
    %v1340 = vadd.f32 %v1235, %v1339
    %v1341 = vpop.f32.mrf.mxu0
    %1342 = vmatprep.mubr.f32.mxu0 0.0
    %1343 = vmatmul.mubr.f32.gmra.mxu0 %v1138
    %v1344 = vpop.f32.mrf.mxu0
    %v1345 = vadd.f32 %v1240, %v1344
    %v1346 = vpop.f32.mrf.mxu0
    %1347 = vmatprep.mubr.f32.mxu0 0.0
    %1348 = vmatmul.mubr.f32.gmra.mxu0 %v1141
    %v1349 = vpop.f32.mrf.mxu0
    %v1350 = vadd.f32 %v1245, %v1349
    %v1351 = vpop.f32.mrf.mxu0
    %1352 = vdwg.mxu0
    %vm1353 = vcmp.gt.f32.partialorder %v1315, 0.0
    %vm1354 = vcmp.gt.f32.partialorder %v1320, 0.0
    %vm1355 = vcmp.gt.f32.partialorder %v1325, 0.0
    %vm1356 = vcmp.gt.f32.partialorder %v1330, 0.0
    %vm1357 = vcmp.gt.f32.partialorder %v1335, 0.0
    %vm1358 = vcmp.gt.f32.partialorder %v1340, 0.0
    %vm1359 = vcmp.gt.f32.partialorder %v1345, 0.0
    %vm1360 = vcmp.gt.f32.partialorder %v1350, 0.0
    %v1361 = vmin.f32 %v1315, 0.0
    %v1362 = vmin.f32 %v1320, 0.0
    %v1363 = vmin.f32 %v1325, 0.0
    %v1364 = vmin.f32 %v1330, 0.0
    %v1365 = vmin.f32 %v1335, 0.0
    %v1366 = vmin.f32 %v1340, 0.0
    %v1367 = vmin.f32 %v1345, 0.0
    %v1368 = vmin.f32 %v1350, 0.0
    %v1369 = vmul.f32 %v1361, 1.442695
    %v1370 = vpow.pop %v1369
    %v1371 = vmul.f32 %v1362, 1.442695
    %v1372 = vpow.pop %v1371
    %v1373 = vmul.f32 %v1363, 1.442695
    %v1374 = vpow.pop %v1373
    %v1375 = vmul.f32 %v1364, 1.442695
    %v1376 = vpow.pop %v1375
    %v1377 = vmul.f32 %v1365, 1.442695
    %v1378 = vpow.pop %v1377
    %v1379 = vmul.f32 %v1366, 1.442695
    %v1380 = vpow.pop %v1379
    %v1381 = vmul.f32 %v1367, 1.442695
    %v1382 = vpow.pop %v1381
    %v1383 = vmul.f32 %v1368, 1.442695
    %v1384 = vpow.pop %v1383
    %v1385 = vsub.f32 %v1370, 1.0
    %v1386 = vsub.f32 %v1372, 1.0
    %v1387 = vsub.f32 %v1374, 1.0
    %v1388 = vsub.f32 %v1376, 1.0
    %v1389 = vsub.f32 %v1378, 1.0
    %v1390 = vsub.f32 %v1380, 1.0
    %v1391 = vsub.f32 %v1382, 1.0
    %v1392 = vsub.f32 %v1384, 1.0
    %v1393 = vsel %vm1353, %v1315, %v1385
    %v1394 = vsel %vm1354, %v1320, %v1386
    %v1395 = vsel %vm1355, %v1325, %v1387
    %v1396 = vsel %vm1356, %v1330, %v1388
    %v1397 = vsel %vm1357, %v1335, %v1389
    %v1398 = vsel %vm1358, %v1340, %v1390
    %v1399 = vsel %vm1359, %v1345, %v1391
    %v1400 = vsel %vm1360, %v1350, %v1392
    %1409 = vrot.lane.b32.xlu0 %v1393, 127
    %v1410 = vpop.permute.xlu0 %1409
    %1411 = vrot.lane.b32.xlu0 %v1394, 127
    %v1412 = vpop.permute.xlu0 %1411
    %1413 = vrot.lane.b32.xlu0 %v1395, 127
    %v1414 = vpop.permute.xlu0 %1413
    %1415 = vrot.lane.b32.xlu0 %v1396, 127
    %v1416 = vpop.permute.xlu0 %1415
    %1417 = vrot.lane.b32.xlu0 %v1397, 127
    %v1418 = vpop.permute.xlu0 %1417
    %1419 = vrot.lane.b32.xlu0 %v1398, 127
    %v1420 = vpop.permute.xlu0 %1419
    %1421 = vrot.lane.b32.xlu0 %v1399, 127
    %v1422 = vpop.permute.xlu0 %1421
    %1423 = vrot.lane.b32.xlu0 %v1400, 127
    %v1424 = vpop.permute.xlu0 %1423
    %v1433 = vmax.f32 %v1393, %v1410
    %v1434 = vmax.f32 %v1394, %v1412
    %v1435 = vmax.f32 %v1395, %v1414
    %v1436 = vmax.f32 %v1396, %v1416
    %v1437 = vmax.f32 %v1397, %v1418
    %v1438 = vmax.f32 %v1398, %v1420
    %v1439 = vmax.f32 %v1399, %v1422
    %v1440 = vmax.f32 %v1400, %v1424
    %1449 = vrot.lane.b32.xlu0 %v1433, 120
    %v1450 = vpop.permute.xlu0 %1449
    %1451 = vrot.lane.b32.xlu0 %v1434, 120
    %v1452 = vpop.permute.xlu0 %1451
    %1453 = vrot.lane.b32.xlu0 %v1435, 120
    %v1454 = vpop.permute.xlu0 %1453
    %1455 = vrot.lane.b32.xlu0 %v1436, 120
    %v1456 = vpop.permute.xlu0 %1455
    %1457 = vrot.lane.b32.xlu0 %v1437, 120
    %v1458 = vpop.permute.xlu0 %1457
    %1459 = vrot.lane.b32.xlu0 %v1438, 120
    %v1460 = vpop.permute.xlu0 %1459
    %1461 = vrot.lane.b32.xlu0 %v1439, 120
    %v1462 = vpop.permute.xlu0 %1461
    %1463 = vrot.lane.b32.xlu0 %v1440, 120
    %v1464 = vpop.permute.xlu0 %1463
    %v1473 = vmax.f32 %v1433, %v1450
    %v1474 = vmax.f32 %v1434, %v1452
    %v1475 = vmax.f32 %v1435, %v1454
    %v1476 = vmax.f32 %v1436, %v1456
    %v1477 = vmax.f32 %v1437, %v1458
    %v1478 = vmax.f32 %v1438, %v1460
    %v1479 = vmax.f32 %v1439, %v1462
    %v1480 = vmax.f32 %v1440, %v1464
    %v1481 = vld [vmem:[%s6] sm:$0xff]
    %v1482 = vld [vmem:[%s6 + $0x8] sm:$0xff]
    %v1483 = vld [vmem:[%s6 + $0x10] sm:$0xff]
    %v1484 = vld [vmem:[%s6 + $0x18] sm:$0xff]
    %v1485 = vld [vmem:[%s6 + $0x20] sm:$0x1f]
    %vm1486 = vcmask 302080
    %v1488 = vsel %vm1486, %v1473, 0
    %v1491 = vsel %vm1486, %v1474, 0
    %v1494 = vsel %vm1486, %v1475, 0
    %v1497 = vsel %vm1486, %v1476, 0
    %v1500 = vsel %vm1486, %v1477, 0
    %v1503 = vsel %vm1486, %v1478, 0
    %v1506 = vsel %vm1486, %v1479, 0
    %v1509 = vsel %vm1486, %v1480, 0
    %vm1511 = vcmask 1044480
    %v1513 = vsel %vm1511, %v1485, 0
    %1515 = vmatprep.subr.mxu0 0.0
    %1516 = vmatpush1.msra.mxu0 0.0
    %1517 = vmatprep.subr.mxu0 0.0
    %1518 = vmatpush1.msra.mxu0 0.0
    %1519 = vmatprep.subr.mxu0 0.0
    %1520 = vmatpush1.msra.mxu0 0.0
    %1521 = vmatprep.subr.mxu0 0.0
    %1522 = vmatpush1.msra.mxu0 0.0
    %1523 = vmatprep.subr.mxu0 0.0
    %1524 = vmatpush1.msra.mxu0 0.0
    %1525 = vmatprep.subr.mxu0 0.0
    %1526 = vmatpush1.msra.mxu0 0.0
    %1527 = vmatprep.subr.mxu0 0.0
    %1528 = vmatpush1.msra.mxu0 0.0
    %1529 = vmatprep.subr.mxu0 0.0
    %1530 = vmatpush1.msra.mxu0 0.0
    %1531 = vmatprep.subr.mxu0 0.0
    %1532 = vmatpush1.msra.mxu0 0.0
    %1533 = vmatprep.subr.mxu0 0.0
    %1534 = vmatpush1.msra.mxu0 0.0
    %1535 = vmatprep.subr.mxu0 0.0
    %1536 = vmatpush1.msra.mxu0 0.0
    %1537 = vmatprep.subr.mxu0 0.0
    %1538 = vmatpush1.msra.mxu0 %v1513
    %1539 = vmatprep.subr.mxu0 0.0
    %1540 = vmatpush1.msra.mxu0 %v1484
    %1541 = vmatprep.subr.mxu0 0.0
    %1542 = vmatpush1.msra.mxu0 %v1483
    %1543 = vmatprep.subr.mxu0 0.0
    %1544 = vmatpush1.msra.mxu0 %v1482
    %1545 = vmatprep.subr.mxu0 0.0
    %1546 = vmatpush1.msra.mxu0 %v1481
    %1547 = vmatprep.subr.mxu0 0.0
    %1548 = vmatpush2.msra.mxu0 0.0
    %1549 = vmatprep.subr.mxu0 0.0
    %1550 = vmatpush2.msra.mxu0 0.0
    %1551 = vmatprep.subr.mxu0 0.0
    %1552 = vmatpush2.msra.mxu0 0.0
    %1553 = vmatprep.subr.mxu0 0.0
    %1554 = vmatpush2.msra.mxu0 0.0
    %1555 = vmatprep.subr.mxu0 0.0
    %1556 = vmatpush2.msra.mxu0 0.0
    %1557 = vmatprep.subr.mxu0 0.0
    %1558 = vmatpush2.msra.mxu0 0.0
    %1559 = vmatprep.subr.mxu0 0.0
    %1560 = vmatpush2.msra.mxu0 0.0
    %1561 = vmatprep.subr.mxu0 0.0
    %1562 = vmatpush2.msra.mxu0 0.0
    %1563 = vmatprep.subr.mxu0 0.0
    %1564 = vmatpush2.msra.mxu0 0.0
    %1565 = vmatprep.subr.mxu0 0.0
    %1566 = vmatpush2.msra.mxu0 0.0
    %1567 = vmatprep.subr.mxu0 0.0
    %1568 = vmatpush2.msra.mxu0 0.0
    %1569 = vmatprep.subr.mxu0 0.0
    %1570 = vmatpush2.msra.mxu0 0.0
    %1571 = vmatprep.subr.mxu0 0.0
    %1572 = vmatpush2.msra.mxu0 0.0
    %1573 = vmatprep.subr.mxu0 0.0
    %1574 = vmatpush2.msra.mxu0 0.0
    %1575 = vmatprep.subr.mxu0 0.0
    %1576 = vmatpush2.msra.mxu0 0.0
    %1577 = vmatprep.subr.mxu0 0.0
    %1578 = vmatpush2.msra.mxu0 0.0
    %1579 = vmatprep.mubr.f32.mxu0 0.0
    %1580 = vmatmul.mubr.f32.gmra.mxu0 %v1488
    %v1581 = vpop.f32.mrf.mxu0
    %v1582 = vadd.f32 0.0, %v1581
    %v1583 = vpop.f32.mrf.mxu0
    %1584 = vmatprep.mubr.f32.mxu0 0.0
    %1585 = vmatmul.mubr.f32.gmra.mxu0 %v1491
    %v1586 = vpop.f32.mrf.mxu0
    %v1587 = vadd.f32 0.0, %v1586
    %v1588 = vpop.f32.mrf.mxu0
    %1589 = vmatprep.mubr.f32.mxu0 0.0
    %1590 = vmatmul.mubr.f32.gmra.mxu0 %v1494
    %v1591 = vpop.f32.mrf.mxu0
    %v1592 = vadd.f32 0.0, %v1591
    %v1593 = vpop.f32.mrf.mxu0
    %1594 = vmatprep.mubr.f32.mxu0 0.0
    %1595 = vmatmul.mubr.f32.gmra.mxu0 %v1497
    %v1596 = vpop.f32.mrf.mxu0
    %v1597 = vadd.f32 0.0, %v1596
    %v1598 = vpop.f32.mrf.mxu0
    %1599 = vmatprep.mubr.f32.mxu0 0.0
    %1600 = vmatmul.mubr.f32.gmra.mxu0 %v1500
    %v1601 = vpop.f32.mrf.mxu0
    %v1602 = vadd.f32 0.0, %v1601
    %v1603 = vpop.f32.mrf.mxu0
    %1604 = vmatprep.mubr.f32.mxu0 0.0
    %1605 = vmatmul.mubr.f32.gmra.mxu0 %v1503
    %v1606 = vpop.f32.mrf.mxu0
    %v1607 = vadd.f32 0.0, %v1606
    %v1608 = vpop.f32.mrf.mxu0
    %1609 = vmatprep.mubr.f32.mxu0 0.0
    %1610 = vmatmul.mubr.f32.gmra.mxu0 %v1506
    %v1611 = vpop.f32.mrf.mxu0
    %v1612 = vadd.f32 0.0, %v1611
    %v1613 = vpop.f32.mrf.mxu0
    %1614 = vmatprep.mubr.f32.mxu0 0.0
    %1615 = vmatmul.mubr.f32.gmra.mxu0 %v1509
    %v1616 = vpop.f32.mrf.mxu0
    %v1617 = vadd.f32 0.0, %v1616
    %v1618 = vpop.f32.mrf.mxu0
    %1619 = vdwg.mxu0
    %vm1620 = vcmask 66560
    %1621 = vst.msk [vmem:[#allocation6] sm:$0x3] %vm1620, %v1582
    %v1624 = vunpack.c.l.s4 1983009808
    %v1625 = vunpack.c.0.s8 %v1624
    %v1626 = vlaneseq
    %v1627 = vshrl.u32 %v1626, 7
    %v1628 = vsub.s32 %v1625, %v1627
    %v1629 = vrot.slane %v1582, %v1628
    %v1630 = vcombine.high %v1629, %v1629
    %1631 = vrot.lane.b32.xlu0 %v1630, 9
    %v1632 = vpop.permute.xlu0 %1631
    %vm1634 = vcmask 140360
    %1635 = vst.msk [vmem:[#allocation6] sm:$0x3] %vm1634, %v1632
    %v1636 = vcombine.high %v1582, %v1582
    %v1638 = vunpack.c.l.s4 1983009808
    %v1639 = vunpack.c.0.s8 %v1638
    %v1640 = vlaneseq
    %v1641 = vshrl.u32 %v1640, 7
    %v1642 = vsub.s32 %v1639, %v1641
    %v1643 = vrot.slane %v1636, %v1642
    %1644 = vrot.lane.b32.xlu0 %v1643, 18
    %v1645 = vpop.permute.xlu0 %1644
    %vm1647 = vcmask 214160
    %1648 = vst.msk [vmem:[#allocation6] sm:$0x3] %vm1647, %v1645
    %v1649 = vcombine.high %v1643, %v1643
    %1650 = vrot.lane.b32.xlu0 %v1649, 27
    %v1651 = vpop.permute.xlu0 %1650
    %vm1653 = vcmask 287960
    %1654 = vst.msk [vmem:[#allocation6] sm:$0x3] %vm1653, %v1651
    %v1657 = vunpack.c.l.s4 1983009808
    %v1658 = vunpack.c.0.s8 %v1657
    %v1659 = vlaneseq
    %v1660 = vshrl.u32 %v1659, 7
    %v1661 = vsub.s32 %v1658, %v1660
    %v1662 = vrot.slane %v1587, %v1661
    %1663 = vrot.lane.b32.xlu0 %v1662, 36
    %v1664 = vpop.permute.xlu0 %1663
    %vm1666 = vcmask 361760
    %1667 = vst.msk [vmem:[#allocation6] sm:$0x3] %vm1666, %v1664
    %v1668 = vcombine.high %v1662, %v1662
    %1669 = vrot.lane.b32.xlu0 %v1668, 45
    %v1670 = vpop.permute.xlu0 %1669
    %vm1672 = vcmask 435560
    %1673 = vst.msk [vmem:[#allocation6] sm:$0x3] %vm1672, %v1670
    %v1674 = vcombine.high %v1587, %v1587
    %v1676 = vunpack.c.l.s4 1983009808
    %v1677 = vunpack.c.0.s8 %v1676
    %v1678 = vlaneseq
    %v1679 = vshrl.u32 %v1678, 7
    %v1680 = vsub.s32 %v1677, %v1679
    %v1681 = vrot.slane %v1674, %v1680
    %1682 = vrot.lane.b32.xlu0 %v1681, 54
    %v1683 = vpop.permute.xlu0 %1682
    %vm1685 = vcmask 509360
    %1686 = vst.msk [vmem:[#allocation6] sm:$0x3] %vm1685, %v1683
    %v1687 = vcombine.high %v1681, %v1681
    %1688 = vrot.lane.b32.xlu0 %v1687, 63
    %v1689 = vpop.permute.xlu0 %1688
    %vm1691 = vcmask 583160
    %1692 = vst.msk [vmem:[#allocation6] sm:$0x3] %vm1691, %v1689
    %v1695 = vunpack.c.l.s4 1983009808
    %v1696 = vunpack.c.0.s8 %v1695
    %v1697 = vlaneseq
    %v1698 = vshrl.u32 %v1697, 7
    %v1699 = vsub.s32 %v1696, %v1698
    %v1700 = vrot.slane %v1592, %v1699
    %1701 = vrot.lane.b32.xlu0 %v1700, 72
    %v1702 = vpop.permute.xlu0 %1701
    %vm1704 = vcmask 656960
    %1705 = vst.msk [vmem:[#allocation6] sm:$0x3] %vm1704, %v1702
    %v1706 = vcombine.high %v1700, %v1700
    %1707 = vrot.lane.b32.xlu0 %v1706, 81
    %v1708 = vpop.permute.xlu0 %1707
    %vm1710 = vcmask 730760
    %1711 = vst.msk [vmem:[#allocation6] sm:$0x3] %vm1710, %v1708
    %v1712 = vcombine.high %v1592, %v1592
    %v1714 = vunpack.c.l.s4 1983009808
    %v1715 = vunpack.c.0.s8 %v1714
    %v1716 = vlaneseq
    %v1717 = vshrl.u32 %v1716, 7
    %v1718 = vsub.s32 %v1715, %v1717
    %v1719 = vrot.slane %v1712, %v1718
    %1720 = vrot.lane.b32.xlu0 %v1719, 90
    %v1721 = vpop.permute.xlu0 %1720
    %vm1723 = vcmask 804560
    %1724 = vst.msk [vmem:[#allocation6] sm:$0x3] %vm1723, %v1721
    %v1725 = vcombine.high %v1719, %v1719
    %1726 = vrot.lane.b32.xlu0 %v1725, 99
    %v1727 = vpop.permute.xlu0 %1726
    %vm1729 = vcmask 878360
    %1730 = vst.msk [vmem:[#allocation6] sm:$0x3] %vm1729, %v1727
    %v1733 = vunpack.c.l.s4 1983009808
    %v1734 = vunpack.c.0.s8 %v1733
    %v1735 = vlaneseq
    %v1736 = vshrl.u32 %v1735, 7
    %v1737 = vsub.s32 %v1734, %v1736
    %v1738 = vrot.slane %v1597, %v1737
    %1739 = vrot.lane.b32.xlu0 %v1738, 108
    %v1740 = vpop.permute.xlu0 %1739
    %vm1742 = vcmask 952160
    %1743 = vst.msk [vmem:[#allocation6] sm:$0x3] %vm1742, %v1740
    %v1744 = vcombine.high %v1738, %v1738
    %1745 = vrot.lane.b32.xlu0 %v1744, 117
    %v1746 = vpop.permute.xlu0 %1745
    %vm1748 = vcmask 1025960
    %1749 = vst.msk [vmem:[#allocation6] sm:$0x3] %vm1748, %v1746
    %v1750 = vcombine.high %v1597, %v1597
    %v1752 = vunpack.c.l.s4 1983009808
    %v1753 = vunpack.c.0.s8 %v1752
    %v1754 = vlaneseq
    %v1755 = vshrl.u32 %v1754, 7
    %v1756 = vsub.s32 %v1753, %v1755
    %v1757 = vrot.slane %v1750, %v1756
    %1758 = vrot.lane.b32.xlu0 %v1757, 126
    %v1759 = vpop.permute.xlu0 %1758
    %v1760 = vrot.slane %v1759, 6
    %v1761 = vsel %vm105, %v1760, %v1759
    %vm1763 = vcmask 1042416
    %vm1764 = vcmask 52226
    %vm1765 = vmor %vm1764, %vm1763
    %1766 = vst.msk [vmem:[#allocation6] sm:$0xf] %vm1765, %v1761
    %v1767 = vcombine.high %v1757, %v1757
    %1768 = vrot.lane.b32.xlu0 %v1767, 7
    %v1769 = vpop.permute.xlu0 %1768
    %vm1771 = vcmask 123960
    %1772 = vst.msk [vmem:[#allocation6 + $0x2] sm:$0x3] %vm1771, %v1769
    %v1775 = vunpack.c.l.s4 1983009808
    %v1776 = vunpack.c.0.s8 %v1775
    %v1777 = vlaneseq
    %v1778 = vshrl.u32 %v1777, 7
    %v1779 = vsub.s32 %v1776, %v1778
    %v1780 = vrot.slane %v1602, %v1779
    %1781 = vrot.lane.b32.xlu0 %v1780, 16
    %v1782 = vpop.permute.xlu0 %1781
    %vm1784 = vcmask 197760
    %1785 = vst.msk [vmem:[#allocation6 + $0x2] sm:$0x3] %vm1784, %v1782
    %v1786 = vcombine.high %v1780, %v1780
    %1787 = vrot.lane.b32.xlu0 %v1786, 25
    %v1788 = vpop.permute.xlu0 %1787
    %vm1790 = vcmask 271560
    %1791 = vst.msk [vmem:[#allocation6 + $0x2] sm:$0x3] %vm1790, %v1788
    %v1792 = vcombine.high %v1602, %v1602
    %v1794 = vunpack.c.l.s4 1983009808
    %v1795 = vunpack.c.0.s8 %v1794
    %v1796 = vlaneseq
    %v1797 = vshrl.u32 %v1796, 7
    %v1798 = vsub.s32 %v1795, %v1797
    %v1799 = vrot.slane %v1792, %v1798
    %1800 = vrot.lane.b32.xlu0 %v1799, 34
    %v1801 = vpop.permute.xlu0 %1800
    %vm1803 = vcmask 345360
    %1804 = vst.msk [vmem:[#allocation6 + $0x2] sm:$0x3] %vm1803, %v1801
    %v1805 = vcombine.high %v1799, %v1799
    %1806 = vrot.lane.b32.xlu0 %v1805, 43
    %v1807 = vpop.permute.xlu0 %1806
    %vm1809 = vcmask 419160
    %1810 = vst.msk [vmem:[#allocation6 + $0x2] sm:$0x3] %vm1809, %v1807
    %v1813 = vunpack.c.l.s4 1983009808
    %v1814 = vunpack.c.0.s8 %v1813
    %v1815 = vlaneseq
    %v1816 = vshrl.u32 %v1815, 7
    %v1817 = vsub.s32 %v1814, %v1816
    %v1818 = vrot.slane %v1607, %v1817
    %1819 = vrot.lane.b32.xlu0 %v1818, 52
    %v1820 = vpop.permute.xlu0 %1819
    %vm1822 = vcmask 492960
    %1823 = vst.msk [vmem:[#allocation6 + $0x2] sm:$0x3] %vm1822, %v1820
    %v1824 = vcombine.high %v1818, %v1818
    %1825 = vrot.lane.b32.xlu0 %v1824, 61
    %v1826 = vpop.permute.xlu0 %1825
    %vm1828 = vcmask 566760
    %1829 = vst.msk [vmem:[#allocation6 + $0x2] sm:$0x3] %vm1828, %v1826
    %v1830 = vcombine.high %v1607, %v1607
    %v1832 = vunpack.c.l.s4 1983009808
    %v1833 = vunpack.c.0.s8 %v1832
    %v1834 = vlaneseq
    %v1835 = vshrl.u32 %v1834, 7
    %v1836 = vsub.s32 %v1833, %v1835
    %v1837 = vrot.slane %v1830, %v1836
    %1838 = vrot.lane.b32.xlu0 %v1837, 70
    %v1839 = vpop.permute.xlu0 %1838
    %vm1841 = vcmask 640560
    %1842 = vst.msk [vmem:[#allocation6 + $0x2] sm:$0x3] %vm1841, %v1839
    %v1843 = vcombine.high %v1837, %v1837
    %1844 = vrot.lane.b32.xlu0 %v1843, 79
    %v1845 = vpop.permute.xlu0 %1844
    %vm1847 = vcmask 714360
    %1848 = vst.msk [vmem:[#allocation6 + $0x2] sm:$0x3] %vm1847, %v1845
    %v1851 = vunpack.c.l.s4 1983009808
    %v1852 = vunpack.c.0.s8 %v1851
    %v1853 = vlaneseq
    %v1854 = vshrl.u32 %v1853, 7
    %v1855 = vsub.s32 %v1852, %v1854
    %v1856 = vrot.slane %v1612, %v1855
    %1857 = vrot.lane.b32.xlu0 %v1856, 88
    %v1858 = vpop.permute.xlu0 %1857
    %vm1860 = vcmask 788160
    %1861 = vst.msk [vmem:[#allocation6 + $0x2] sm:$0x3] %vm1860, %v1858
    %v1862 = vcombine.high %v1856, %v1856
    %1863 = vrot.lane.b32.xlu0 %v1862, 97
    %v1864 = vpop.permute.xlu0 %1863
    %vm1866 = vcmask 861960
    %1867 = vst.msk [vmem:[#allocation6 + $0x2] sm:$0x3] %vm1866, %v1864
    %v1868 = vcombine.high %v1612, %v1612
    %v1870 = vunpack.c.l.s4 1983009808
    %v1871 = vunpack.c.0.s8 %v1870
    %v1872 = vlaneseq
    %v1873 = vshrl.u32 %v1872, 7
    %v1874 = vsub.s32 %v1871, %v1873
    %v1875 = vrot.slane %v1868, %v1874
    %1876 = vrot.lane.b32.xlu0 %v1875, 106
    %v1877 = vpop.permute.xlu0 %1876
    %vm1879 = vcmask 935760
    %1880 = vst.msk [vmem:[#allocation6 + $0x2] sm:$0x3] %vm1879, %v1877
    %v1881 = vcombine.high %v1875, %v1875
    %1882 = vrot.lane.b32.xlu0 %v1881, 115
    %v1883 = vpop.permute.xlu0 %1882
    %vm1885 = vcmask 1009560
    %1886 = vst.msk [vmem:[#allocation6 + $0x2] sm:$0x3] %vm1885, %v1883
    %v1889 = vunpack.c.l.s4 1983009808
    %v1890 = vunpack.c.0.s8 %v1889
    %v1891 = vlaneseq
    %v1892 = vshrl.u32 %v1891, 7
    %v1893 = vsub.s32 %v1890, %v1892
    %v1894 = vrot.slane %v1617, %v1893
    %1895 = vrot.lane.b32.xlu0 %v1894, 124
    %v1896 = vpop.permute.xlu0 %1895
    %v1897 = vrot.slane %v1896, 6
    %vm1898 = vcmask 1014784
    %v1899 = vsel %vm1898, %v1897, %v1896
    %vm1901 = vcmask 1042400
    %vm1902 = vcmask 35842
    %vm1903 = vmor %vm1902, %vm1901
    %1904 = vst.msk [vmem:[#allocation6 + $0x2] sm:$0xf] %vm1903, %v1899
    %v1905 = vcombine.high %v1894, %v1894
    %1906 = vrot.lane.b32.xlu0 %v1905, 5
    %v1907 = vpop.permute.xlu0 %1906
    %vm1909 = vcmask 107560
    %1910 = vst.msk [vmem:[#allocation6 + $0x4] sm:$0x3] %vm1909, %v1907
    %v1911 = vcombine.high %v1617, %v1617
    %v1913 = vunpack.c.l.s4 1983009808
    %v1914 = vunpack.c.0.s8 %v1913
    %v1915 = vlaneseq
    %v1916 = vshrl.u32 %v1915, 7
    %v1917 = vsub.s32 %v1914, %v1916
    %v1918 = vrot.slane %v1911, %v1917
    %1919 = vrot.lane.b32.xlu0 %v1918, 14
    %v1920 = vpop.permute.xlu0 %1919
    %vm1922 = vcmask 181360
    %1923 = vst.msk [vmem:[#allocation6 + $0x4] sm:$0x3] %vm1922, %v1920
    %v1924 = vcombine.high %v1918, %v1918
    %1925 = vrot.lane.b32.xlu0 %v1924, 23
    %v1926 = vpop.permute.xlu0 %1925
    %vm1928 = vcmask 255160
    %1929 = vst.msk [vmem:[#allocation6 + $0x4] sm:$0x3] %vm1928, %v1926
    %v1930 = vld [vmem:[#allocation6] sm:$0x3f]
    %v1931 = vld [vmem:[%s7] sm:$0xff]
    %v1932 = vld [vmem:[%s7 + $0x8] sm:$0xff]
    %v1933 = vld [vmem:[%s7 + $0x10] sm:$0xff]
    %v1934 = vld [vmem:[%s7 + $0x18] sm:$0xff]
    %v1935 = vld [vmem:[%s7 + $0x20] sm:$0xff]
    %v1936 = vld [vmem:[%s7 + $0x28] sm:$0xff]
    %v1937 = vld [vmem:[%s7 + $0x30] sm:$0xff]
    %v1938 = vld [vmem:[%s7 + $0x38] sm:$0xff]
    %v1939 = vld [vmem:[%s7 + $0x40] sm:$0xff]
    %v1940 = vld [vmem:[%s7 + $0x48] sm:$0xff]
    %v1941 = vld [vmem:[%s7 + $0x50] sm:$0xff]
    %v1942 = vld [vmem:[%s7 + $0x58] sm:$0xff]
    %v1943 = vld [vmem:[%s7 + $0x60] sm:$0xff]
    %v1944 = vld [vmem:[%s7 + $0x68] sm:$0xff]
    %v1945 = vld [vmem:[%s7 + $0x70] sm:$0xff]
    %v1946 = vld [vmem:[%s7 + $0x78] sm:$0xff]
    %v1947 = vld [vmem:[%s7 + $0x80] sm:$0xff]
    %v1948 = vld [vmem:[%s7 + $0x88] sm:$0xff]
    %v1949 = vld [vmem:[%s7 + $0x90] sm:$0xff]
    %v1950 = vld [vmem:[%s7 + $0x98] sm:$0xff]
    %v1951 = vld [vmem:[%s7 + $0xa0] sm:$0xff]
    %v1952 = vld [vmem:[%s7 + $0xa8] sm:$0xff]
    %v1953 = vld [vmem:[%s7 + $0xb0] sm:$0xff]
    %v1954 = vld [vmem:[%s7 + $0xb8] sm:$0xff]
    %v1955 = vld [vmem:[%s7 + $0xc0] sm:$0xff]
    %v1956 = vld [vmem:[%s7 + $0xc8] sm:$0xff]
    %v1957 = vld [vmem:[%s7 + $0xd0] sm:$0xff]
    %v1958 = vld [vmem:[%s7 + $0xd8] sm:$0xff]
    %v1959 = vld [vmem:[%s7 + $0xe0] sm:$0xff]
    %v1960 = vld [vmem:[%s7 + $0xe8] sm:$0xff]
    %v1961 = vld [vmem:[%s7 + $0xf0] sm:$0xff]
    %v1962 = vld [vmem:[%s7 + $0xf8] sm:$0xff]
    %v1963 = vld [vmem:[%s7 + $0x100] sm:$0xff]
    %v1964 = vld [vmem:[%s7 + $0x108] sm:$0xff]
    %v1965 = vld [vmem:[%s7 + $0x110] sm:$0xff]
    %v1966 = vld [vmem:[%s7 + $0x118] sm:$0xff]
    %v1967 = vld [vmem:[%s7 + $0x120] sm:$0xff]
    %v1968 = vld [vmem:[%s7 + $0x128] sm:$0xff]
    %v1969 = vld [vmem:[%s7 + $0x130] sm:$0xff]
    %v1970 = vld [vmem:[%s7 + $0x138] sm:$0xff]
    %v1971 = vld [vmem:[%s7 + $0x140] sm:$0xff]
    %v1972 = vld [vmem:[%s7 + $0x148] sm:$0xff]
    %v1973 = vld [vmem:[%s7 + $0x150] sm:$0xff]
    %v1974 = vld [vmem:[%s7 + $0x158] sm:$0xff]
    %v1975 = vld [vmem:[%s7 + $0x160] sm:$0xff]
    %v1976 = vld [vmem:[%s7 + $0x168] sm:$0xff]
    %v1977 = vld [vmem:[%s7 + $0x170] sm:$0xff]
    %v1978 = vld [vmem:[%s7 + $0x178] sm:$0xff]
    %v1979 = vld [vmem:[%s7 + $0x180] sm:$0xff]
    %v1980 = vld [vmem:[%s7 + $0x188] sm:$0xff]
    %v1981 = vld [vmem:[%s7 + $0x190] sm:$0xff]
    %v1982 = vld [vmem:[%s7 + $0x198] sm:$0xff]
    %v1983 = vld [vmem:[%s7 + $0x1a0] sm:$0xff]
    %v1984 = vld [vmem:[%s7 + $0x1a8] sm:$0xff]
    %v1985 = vld [vmem:[%s7 + $0x1b0] sm:$0xff]
    %v1986 = vld [vmem:[%s7 + $0x1b8] sm:$0xff]
    %v1987 = vld [vmem:[%s7 + $0x1c0] sm:$0xff]
    %v1988 = vld [vmem:[%s7 + $0x1c8] sm:$0xff]
    %v1989 = vld [vmem:[%s7 + $0x1d0] sm:$0xff]
    %v1990 = vld [vmem:[%s7 + $0x1d8] sm:$0xff]
    %v1991 = vld [vmem:[%s7 + $0x1e0] sm:$0xff]
    %v1992 = vld [vmem:[%s7 + $0x1e8] sm:$0xff]
    %v1993 = vld [vmem:[%s7 + $0x1f0] sm:$0xff]
    %v1994 = vld [vmem:[%s7 + $0x1f8] sm:$0xff]
    %v1995 = vld [vmem:[%s7 + $0x200] sm:$0xff]
    %v1996 = vld [vmem:[%s7 + $0x208] sm:$0xff]
    %v1997 = vld [vmem:[%s7 + $0x210] sm:$0xff]
    %v1998 = vld [vmem:[%s7 + $0x218] sm:$0xff]
    %v1999 = vld [vmem:[%s7 + $0x220] sm:$0xff]
    %v2000 = vld [vmem:[%s7 + $0x228] sm:$0xff]
    %v2001 = vld [vmem:[%s7 + $0x230] sm:$0xff]
    %v2002 = vld [vmem:[%s7 + $0x238] sm:$0xff]
    %v2003 = vld [vmem:[%s7 + $0x240] sm:$0xff]
    %v2004 = vld [vmem:[%s7 + $0x248] sm:$0xff]
    %v2005 = vld [vmem:[%s7 + $0x250] sm:$0xff]
    %v2006 = vld [vmem:[%s7 + $0x258] sm:$0xff]
    %v2007 = vld [vmem:[%s7 + $0x260] sm:$0xff]
    %v2008 = vld [vmem:[%s7 + $0x268] sm:$0xff]
    %v2009 = vld [vmem:[%s7 + $0x270] sm:$0xff]
    %v2010 = vld [vmem:[%s7 + $0x278] sm:$0xff]
    %v2011 = vld [vmem:[%s7 + $0x280] sm:$0xff]
    %v2012 = vld [vmem:[%s7 + $0x288] sm:$0xff]
    %v2013 = vld [vmem:[%s7 + $0x290] sm:$0xff]
    %v2014 = vld [vmem:[%s7 + $0x298] sm:$0xff]
    %v2015 = vld [vmem:[%s7 + $0x2a0] sm:$0xff]
    %v2016 = vld [vmem:[%s7 + $0x2a8] sm:$0xff]
    %v2017 = vld [vmem:[%s7 + $0x2b0] sm:$0xff]
    %v2018 = vld [vmem:[%s7 + $0x2b8] sm:$0xff]
    %v2019 = vld [vmem:[%s7 + $0x2c0] sm:$0xff]
    %v2020 = vld [vmem:[%s7 + $0x2c8] sm:$0xff]
    %v2021 = vld [vmem:[%s7 + $0x2d0] sm:$0xff]
    %v2022 = vld [vmem:[%s7 + $0x2d8] sm:$0xff]
    %v2023 = vld [vmem:[%s7 + $0x2e0] sm:$0xff]
    %v2024 = vld [vmem:[%s7 + $0x2e8] sm:$0xff]
    %v2025 = vld [vmem:[%s7 + $0x2f0] sm:$0xff]
    %v2026 = vld [vmem:[%s7 + $0x2f8] sm:$0xff]
    %v2027 = vld [vmem:[%s7 + $0x300] sm:$0xff]
    %v2028 = vld [vmem:[%s7 + $0x308] sm:$0xff]
    %v2029 = vld [vmem:[%s7 + $0x310] sm:$0xff]
    %v2030 = vld [vmem:[%s7 + $0x318] sm:$0xff]
    %v2031 = vld [vmem:[%s7 + $0x320] sm:$0xff]
    %v2032 = vld [vmem:[%s7 + $0x328] sm:$0xff]
    %v2033 = vld [vmem:[%s7 + $0x330] sm:$0xff]
    %v2034 = vld [vmem:[%s7 + $0x338] sm:$0xff]
    %v2035 = vld [vmem:[%s7 + $0x340] sm:$0xff]
    %v2036 = vld [vmem:[%s7 + $0x348] sm:$0xff]
    %v2037 = vld [vmem:[%s7 + $0x350] sm:$0xff]
    %v2038 = vld [vmem:[%s7 + $0x358] sm:$0xff]
    %v2039 = vld [vmem:[%s8] sm:$0x7]
    %v2041 = vlaneseq
    %v2042 = vshrl.u32 %v2041, 7
    %v2043 = vsub.s32 0, %v2042
    %v2044 = vrot.slane %v2039, %v2043
    %v2045 = vlaneseq
    %v2046 = vshrl.u32 %v2045, 7
    %v2047 = vsub.s32 1, %v2046
    %v2048 = vrot.slane %v2039, %v2047
    %v2049 = vlaneseq
    %v2050 = vshrl.u32 %v2049, 7
    %v2051 = vsub.s32 2, %v2050
    %v2052 = vrot.slane %v2039, %v2051
    %v2057 = vcombine.high %v1930, %v1930
    %v2059 = vunpack.c.l.s4 1983009808
    %v2060 = vunpack.c.0.s8 %v2059
    %v2061 = vlaneseq
    %v2062 = vshrl.u32 %v2061, 7
    %v2063 = vsub.s32 %v2060, %v2062
    %v2064 = vrot.slane %v1930, %v2063
    %v2066 = vunpack.c.l.s4 1983009808
    %v2067 = vunpack.c.0.s8 %v2066
    %v2068 = vlaneseq
    %v2069 = vshrl.u32 %v2068, 7
    %v2070 = vsub.s32 %v2067, %v2069
    %v2071 = vrot.slane %v2057, %v2070
    %v2072 = vcombine.high %v2064, %v2064
    %v2075 = vsel %vm1118, %v2071, 0
    %2077 = vmatprep.subr.mxu0 %v1977
    %2078 = vmatpush1.msra.mxu0 %v1976
    %2079 = vmatprep.subr.mxu0 %v1974
    %2080 = vmatpush1.msra.mxu0 %v1973
    %2081 = vmatprep.subr.mxu0 %v1971
    %2082 = vmatpush1.msra.mxu0 %v1970
    %2083 = vmatprep.subr.mxu0 %v1968
    %2084 = vmatpush1.msra.mxu0 %v1967
    %2085 = vmatprep.subr.mxu0 %v1965
    %2086 = vmatpush1.msra.mxu0 %v1964
    %2087 = vmatprep.subr.mxu0 %v1962
    %2088 = vmatpush1.msra.mxu0 %v1961
    %2089 = vmatprep.subr.mxu0 %v1959
    %2090 = vmatpush1.msra.mxu0 %v1958
    %2091 = vmatprep.subr.mxu0 %v1956
    %2092 = vmatpush1.msra.mxu0 %v1955
    %2093 = vmatprep.subr.mxu0 %v1953
    %2094 = vmatpush1.msra.mxu0 %v1952
    %2095 = vmatprep.subr.mxu0 %v1950
    %2096 = vmatpush1.msra.mxu0 %v1949
    %2097 = vmatprep.subr.mxu0 %v1947
    %2098 = vmatpush1.msra.mxu0 %v1946
    %2099 = vmatprep.subr.mxu0 %v1944
    %2100 = vmatpush1.msra.mxu0 %v1943
    %2101 = vmatprep.subr.mxu0 %v1941
    %2102 = vmatpush1.msra.mxu0 %v1940
    %2103 = vmatprep.subr.mxu0 %v1938
    %2104 = vmatpush1.msra.mxu0 %v1937
    %2105 = vmatprep.subr.mxu0 %v1935
    %2106 = vmatpush1.msra.mxu0 %v1934
    %2107 = vmatprep.subr.mxu0 %v1932
    %2108 = vmatpush1.msra.mxu0 %v1931
    %2109 = vmatprep.subr.mxu0 %v2025
    %2110 = vmatpush2.msra.mxu0 %v2024
    %2111 = vmatprep.subr.mxu0 %v2022
    %2112 = vmatpush2.msra.mxu0 %v2021
    %2113 = vmatprep.subr.mxu0 %v2019
    %2114 = vmatpush2.msra.mxu0 %v2018
    %2115 = vmatprep.subr.mxu0 %v2016
    %2116 = vmatpush2.msra.mxu0 %v2015
    %2117 = vmatprep.subr.mxu0 %v2013
    %2118 = vmatpush2.msra.mxu0 %v2012
    %2119 = vmatprep.subr.mxu0 %v2010
    %2120 = vmatpush2.msra.mxu0 %v2009
    %2121 = vmatprep.subr.mxu0 %v2007
    %2122 = vmatpush2.msra.mxu0 %v2006
    %2123 = vmatprep.subr.mxu0 %v2004
    %2124 = vmatpush2.msra.mxu0 %v2003
    %2125 = vmatprep.subr.mxu0 %v2001
    %2126 = vmatpush2.msra.mxu0 %v2000
    %2127 = vmatprep.subr.mxu0 %v1998
    %2128 = vmatpush2.msra.mxu0 %v1997
    %2129 = vmatprep.subr.mxu0 %v1995
    %2130 = vmatpush2.msra.mxu0 %v1994
    %2131 = vmatprep.subr.mxu0 %v1992
    %2132 = vmatpush2.msra.mxu0 %v1991
    %2133 = vmatprep.subr.mxu0 %v1989
    %2134 = vmatpush2.msra.mxu0 %v1988
    %2135 = vmatprep.subr.mxu0 %v1986
    %2136 = vmatpush2.msra.mxu0 %v1985
    %2137 = vmatprep.subr.mxu0 %v1983
    %2138 = vmatpush2.msra.mxu0 %v1982
    %2139 = vmatprep.subr.mxu0 %v1980
    %2140 = vmatpush2.msra.mxu0 %v1979
    %2141 = vmatprep.mubr.f32.mxu0 %v2072
    %2142 = vmatmul.mubr.f32.gmra.mxu0 %v2064
    %v2143 = vpop.f32.mrf.mxu0
    %v2144 = vadd.f32 %v2044, %v2143
    %v2145 = vpop.f32.mrf.mxu0
    %v2146 = vadd.f32 %v2048, %v2145
    %2147 = vdwg.mxu0
    %2148 = vmatprep.subr.mxu0 0.0
    %2149 = vmatpush1.msra.mxu0 0.0
    %2150 = vmatprep.subr.mxu0 0.0
    %2151 = vmatpush1.msra.mxu0 0.0
    %2152 = vmatprep.subr.mxu0 0.0
    %2153 = vmatpush1.msra.mxu0 0.0
    %2154 = vmatprep.subr.mxu0 0.0
    %2155 = vmatpush1.msra.mxu0 0.0
    %2156 = vmatprep.subr.mxu0 0.0
    %2157 = vmatpush1.msra.mxu0 0.0
    %2158 = vmatprep.subr.mxu0 0.0
    %2159 = vmatpush1.msra.mxu0 0.0
    %2160 = vmatprep.subr.mxu0 0.0
    %2161 = vmatpush1.msra.mxu0 0.0
    %2162 = vmatprep.subr.mxu0 0.0
    %2163 = vmatpush1.msra.mxu0 0.0
    %2164 = vmatprep.subr.mxu0 0.0
    %2165 = vmatpush1.msra.mxu0 0.0
    %2166 = vmatprep.subr.mxu0 0.0
    %2167 = vmatpush1.msra.mxu0 0.0
    %2168 = vmatprep.subr.mxu0 0.0
    %2169 = vmatpush1.msra.mxu0 0.0
    %2170 = vmatprep.subr.mxu0 0.0
    %2171 = vmatpush1.msra.mxu0 0.0
    %2172 = vmatprep.subr.mxu0 %v2037
    %2173 = vmatpush1.msra.mxu0 %v2036
    %2174 = vmatprep.subr.mxu0 %v2034
    %2175 = vmatpush1.msra.mxu0 %v2033
    %2176 = vmatprep.subr.mxu0 %v2031
    %2177 = vmatpush1.msra.mxu0 %v2030
    %2178 = vmatprep.subr.mxu0 %v2028
    %2179 = vmatpush1.msra.mxu0 %v2027
    %2180 = vmatprep.subr.mxu0 0.0
    %2181 = vmatpush2.msra.mxu0 0.0
    %2182 = vmatprep.subr.mxu0 0.0
    %2183 = vmatpush2.msra.mxu0 0.0
    %2184 = vmatprep.subr.mxu0 0.0
    %2185 = vmatpush2.msra.mxu0 0.0
    %2186 = vmatprep.subr.mxu0 0.0
    %2187 = vmatpush2.msra.mxu0 0.0
    %2188 = vmatprep.subr.mxu0 0.0
    %2189 = vmatpush2.msra.mxu0 0.0
    %2190 = vmatprep.subr.mxu0 0.0
    %2191 = vmatpush2.msra.mxu0 0.0
    %2192 = vmatprep.subr.mxu0 0.0
    %2193 = vmatpush2.msra.mxu0 0.0
    %2194 = vmatprep.subr.mxu0 0.0
    %2195 = vmatpush2.msra.mxu0 0.0
    %2196 = vmatprep.subr.mxu0 0.0
    %2197 = vmatpush2.msra.mxu0 0.0
    %2198 = vmatprep.subr.mxu0 0.0
    %2199 = vmatpush2.msra.mxu0 0.0
    %2200 = vmatprep.subr.mxu0 0.0
    %2201 = vmatpush2.msra.mxu0 0.0
    %2202 = vmatprep.subr.mxu0 0.0
    %2203 = vmatpush2.msra.mxu0 0.0
    %2204 = vmatprep.subr.mxu0 0.0
    %2205 = vmatpush2.msra.mxu0 0.0
    %2206 = vmatprep.subr.mxu0 0.0
    %2207 = vmatpush2.msra.mxu0 0.0
    %2208 = vmatprep.subr.mxu0 0.0
    %2209 = vmatpush2.msra.mxu0 0.0
    %2210 = vmatprep.subr.mxu0 0.0
    %2211 = vmatpush2.msra.mxu0 0.0
    %2212 = vmatprep.mubr.f32.mxu0 0.0
    %2213 = vmatmul.mubr.f32.gmra.mxu0 %v2075
    %v2214 = vpop.f32.mrf.mxu0
    %v2215 = vadd.f32 %v2144, %v2214
    %v2216 = vpop.f32.mrf.mxu0
    %v2217 = vadd.f32 %v2146, %v2216
    %2218 = vdwg.mxu0
    %2219 = vmatprep.subr.mxu0 0.0
    %2220 = vmatpush1.msra.mxu0 %v1978
    %2221 = vmatprep.subr.mxu0 0.0
    %2222 = vmatpush1.msra.mxu0 %v1975
    %2223 = vmatprep.subr.mxu0 0.0
    %2224 = vmatpush1.msra.mxu0 %v1972
    %2225 = vmatprep.subr.mxu0 0.0
    %2226 = vmatpush1.msra.mxu0 %v1969
    %2227 = vmatprep.subr.mxu0 0.0
    %2228 = vmatpush1.msra.mxu0 %v1966
    %2229 = vmatprep.subr.mxu0 0.0
    %2230 = vmatpush1.msra.mxu0 %v1963
    %2231 = vmatprep.subr.mxu0 0.0
    %2232 = vmatpush1.msra.mxu0 %v1960
    %2233 = vmatprep.subr.mxu0 0.0
    %2234 = vmatpush1.msra.mxu0 %v1957
    %2235 = vmatprep.subr.mxu0 0.0
    %2236 = vmatpush1.msra.mxu0 %v1954
    %2237 = vmatprep.subr.mxu0 0.0
    %2238 = vmatpush1.msra.mxu0 %v1951
    %2239 = vmatprep.subr.mxu0 0.0
    %2240 = vmatpush1.msra.mxu0 %v1948
    %2241 = vmatprep.subr.mxu0 0.0
    %2242 = vmatpush1.msra.mxu0 %v1945
    %2243 = vmatprep.subr.mxu0 0.0
    %2244 = vmatpush1.msra.mxu0 %v1942
    %2245 = vmatprep.subr.mxu0 0.0
    %2246 = vmatpush1.msra.mxu0 %v1939
    %2247 = vmatprep.subr.mxu0 0.0
    %2248 = vmatpush1.msra.mxu0 %v1936
    %2249 = vmatprep.subr.mxu0 0.0
    %2250 = vmatpush1.msra.mxu0 %v1933
    %2251 = vmatprep.subr.mxu0 0.0
    %2252 = vmatpush2.msra.mxu0 %v2026
    %2253 = vmatprep.subr.mxu0 0.0
    %2254 = vmatpush2.msra.mxu0 %v2023
    %2255 = vmatprep.subr.mxu0 0.0
    %2256 = vmatpush2.msra.mxu0 %v2020
    %2257 = vmatprep.subr.mxu0 0.0
    %2258 = vmatpush2.msra.mxu0 %v2017
    %2259 = vmatprep.subr.mxu0 0.0
    %2260 = vmatpush2.msra.mxu0 %v2014
    %2261 = vmatprep.subr.mxu0 0.0
    %2262 = vmatpush2.msra.mxu0 %v2011
    %2263 = vmatprep.subr.mxu0 0.0
    %2264 = vmatpush2.msra.mxu0 %v2008
    %2265 = vmatprep.subr.mxu0 0.0
    %2266 = vmatpush2.msra.mxu0 %v2005
    %2267 = vmatprep.subr.mxu0 0.0
    %2268 = vmatpush2.msra.mxu0 %v2002
    %2269 = vmatprep.subr.mxu0 0.0
    %2270 = vmatpush2.msra.mxu0 %v1999
    %2271 = vmatprep.subr.mxu0 0.0
    %2272 = vmatpush2.msra.mxu0 %v1996
    %2273 = vmatprep.subr.mxu0 0.0
    %2274 = vmatpush2.msra.mxu0 %v1993
    %2275 = vmatprep.subr.mxu0 0.0
    %2276 = vmatpush2.msra.mxu0 %v1990
    %2277 = vmatprep.subr.mxu0 0.0
    %2278 = vmatpush2.msra.mxu0 %v1987
    %2279 = vmatprep.subr.mxu0 0.0
    %2280 = vmatpush2.msra.mxu0 %v1984
    %2281 = vmatprep.subr.mxu0 0.0
    %2282 = vmatpush2.msra.mxu0 %v1981
    %2283 = vmatprep.mubr.f32.mxu0 %v2072
    %2284 = vmatmul.mubr.f32.gmra.mxu0 %v2064
    %v2285 = vpop.f32.mrf.mxu0
    %v2286 = vadd.f32 %v2052, %v2285
    %v2287 = vpop.f32.mrf.mxu0
    %2288 = vdwg.mxu0
    %2289 = vmatprep.subr.mxu0 0.0
    %2290 = vmatpush1.msra.mxu0 0.0
    %2291 = vmatprep.subr.mxu0 0.0
    %2292 = vmatpush1.msra.mxu0 0.0
    %2293 = vmatprep.subr.mxu0 0.0
    %2294 = vmatpush1.msra.mxu0 0.0
    %2295 = vmatprep.subr.mxu0 0.0
    %2296 = vmatpush1.msra.mxu0 0.0
    %2297 = vmatprep.subr.mxu0 0.0
    %2298 = vmatpush1.msra.mxu0 0.0
    %2299 = vmatprep.subr.mxu0 0.0
    %2300 = vmatpush1.msra.mxu0 0.0
    %2301 = vmatprep.subr.mxu0 0.0
    %2302 = vmatpush1.msra.mxu0 0.0
    %2303 = vmatprep.subr.mxu0 0.0
    %2304 = vmatpush1.msra.mxu0 0.0
    %2305 = vmatprep.subr.mxu0 0.0
    %2306 = vmatpush1.msra.mxu0 0.0
    %2307 = vmatprep.subr.mxu0 0.0
    %2308 = vmatpush1.msra.mxu0 0.0
    %2309 = vmatprep.subr.mxu0 0.0
    %2310 = vmatpush1.msra.mxu0 0.0
    %2311 = vmatprep.subr.mxu0 0.0
    %2312 = vmatpush1.msra.mxu0 0.0
    %2313 = vmatprep.subr.mxu0 0.0
    %2314 = vmatpush1.msra.mxu0 %v2038
    %2315 = vmatprep.subr.mxu0 0.0
    %2316 = vmatpush1.msra.mxu0 %v2035
    %2317 = vmatprep.subr.mxu0 0.0
    %2318 = vmatpush1.msra.mxu0 %v2032
    %2319 = vmatprep.subr.mxu0 0.0
    %2320 = vmatpush1.msra.mxu0 %v2029
    %2321 = vmatprep.subr.mxu0 0.0
    %2322 = vmatpush2.msra.mxu0 0.0
    %2323 = vmatprep.subr.mxu0 0.0
    %2324 = vmatpush2.msra.mxu0 0.0
    %2325 = vmatprep.subr.mxu0 0.0
    %2326 = vmatpush2.msra.mxu0 0.0
    %2327 = vmatprep.subr.mxu0 0.0
    %2328 = vmatpush2.msra.mxu0 0.0
    %2329 = vmatprep.subr.mxu0 0.0
    %2330 = vmatpush2.msra.mxu0 0.0
    %2331 = vmatprep.subr.mxu0 0.0
    %2332 = vmatpush2.msra.mxu0 0.0
    %2333 = vmatprep.subr.mxu0 0.0
    %2334 = vmatpush2.msra.mxu0 0.0
    %2335 = vmatprep.subr.mxu0 0.0
    %2336 = vmatpush2.msra.mxu0 0.0
    %2337 = vmatprep.subr.mxu0 0.0
    %2338 = vmatpush2.msra.mxu0 0.0
    %2339 = vmatprep.subr.mxu0 0.0
    %2340 = vmatpush2.msra.mxu0 0.0
    %2341 = vmatprep.subr.mxu0 0.0
    %2342 = vmatpush2.msra.mxu0 0.0
    %2343 = vmatprep.subr.mxu0 0.0
    %2344 = vmatpush2.msra.mxu0 0.0
    %2345 = vmatprep.subr.mxu0 0.0
    %2346 = vmatpush2.msra.mxu0 0.0
    %2347 = vmatprep.subr.mxu0 0.0
    %2348 = vmatpush2.msra.mxu0 0.0
    %2349 = vmatprep.subr.mxu0 0.0
    %2350 = vmatpush2.msra.mxu0 0.0
    %2351 = vmatprep.subr.mxu0 0.0
    %2352 = vmatpush2.msra.mxu0 0.0
    %2353 = vmatprep.mubr.f32.mxu0 0.0
    %2354 = vmatmul.mubr.f32.gmra.mxu0 %v2075
    %v2355 = vpop.f32.mrf.mxu0
    %v2356 = vadd.f32 %v2286, %v2355
    %v2357 = vpop.f32.mrf.mxu0
    %2358 = vdwg.mxu0
    %2359 = vst.msk [vmem:[#allocation7] sm:$0x3] %vm1620, %v2215
    %2361 = vrot.lane.b32.xlu0 %v2215, 119
    %v2362 = vpop.permute.xlu0 %2361
    %2364 = vst.msk [vmem:[#allocation7 + $0x2] sm:$0x3] %vm1620, %v2362
    %2365 = vrot.lane.b32.xlu0 %v2215, 110
    %v2366 = vpop.permute.xlu0 %2365
    %2368 = vst.msk [vmem:[#allocation7 + $0x4] sm:$0x3] %vm1620, %v2366
    %2369 = vrot.lane.b32.xlu0 %v2215, 101
    %v2370 = vpop.permute.xlu0 %2369
    %2372 = vst.msk [vmem:[#allocation7 + $0x6] sm:$0x3] %vm1620, %v2370
    %2373 = vrot.lane.b32.xlu0 %v2215, 92
    %v2374 = vpop.permute.xlu0 %2373
    %2376 = vst.msk [vmem:[#allocation7 + $0x8] sm:$0x3] %vm1620, %v2374
    %2377 = vrot.lane.b32.xlu0 %v2215, 83
    %v2378 = vpop.permute.xlu0 %2377
    %2380 = vst.msk [vmem:[#allocation7 + $0xa] sm:$0x3] %vm1620, %v2378
    %2381 = vrot.lane.b32.xlu0 %v2215, 74
    %v2382 = vpop.permute.xlu0 %2381
    %2384 = vst.msk [vmem:[#allocation7 + $0xc] sm:$0x3] %vm1620, %v2382
    %2385 = vrot.lane.b32.xlu0 %v2215, 65
    %v2386 = vpop.permute.xlu0 %2385
    %2388 = vst.msk [vmem:[#allocation7 + $0xe] sm:$0x3] %vm1620, %v2386
    %2389 = vrot.lane.b32.xlu0 %v2215, 56
    %v2390 = vpop.permute.xlu0 %2389
    %2392 = vst.msk [vmem:[#allocation7 + $0x10] sm:$0x3] %vm1620, %v2390
    %2393 = vrot.lane.b32.xlu0 %v2215, 47
    %v2394 = vpop.permute.xlu0 %2393
    %2396 = vst.msk [vmem:[#allocation7 + $0x12] sm:$0x3] %vm1620, %v2394
    %2397 = vrot.lane.b32.xlu0 %v2215, 38
    %v2398 = vpop.permute.xlu0 %2397
    %2400 = vst.msk [vmem:[#allocation7 + $0x14] sm:$0x3] %vm1620, %v2398
    %2401 = vrot.lane.b32.xlu0 %v2215, 29
    %v2402 = vpop.permute.xlu0 %2401
    %2404 = vst.msk [vmem:[#allocation7 + $0x16] sm:$0x3] %vm1620, %v2402
    %2405 = vrot.lane.b32.xlu0 %v2215, 20
    %v2406 = vpop.permute.xlu0 %2405
    %2408 = vst.msk [vmem:[#allocation7 + $0x18] sm:$0x3] %vm1620, %v2406
    %2409 = vrot.lane.b32.xlu0 %v2215, 11
    %v2410 = vpop.permute.xlu0 %2409
    %2412 = vst.msk [vmem:[#allocation7 + $0x1a] sm:$0x3] %vm1620, %v2410
    %2414 = vrot.lane.b32.xlu0 %v2215, 2
    %v2415 = vpop.permute.xlu0 %2414
    %2416 = vrot.lane.b32.xlu0 %v2217, 2
    %v2417 = vpop.permute.xlu0 %2416
    %vm2418 = vcmask 15360
    %v2419 = vsel %vm2418, %v2415, %v2417
    %2421 = vst.msk [vmem:[#allocation7 + $0x1c] sm:$0x3] %vm1620, %v2419
    %2422 = vrot.lane.b32.xlu0 %v2217, 121
    %v2423 = vpop.permute.xlu0 %2422
    %2425 = vst.msk [vmem:[#allocation7 + $0x1e] sm:$0x3] %vm1620, %v2423
    %2426 = vrot.lane.b32.xlu0 %v2217, 112
    %v2427 = vpop.permute.xlu0 %2426
    %2429 = vst.msk [vmem:[#allocation7 + $0x20] sm:$0x3] %vm1620, %v2427
    %2430 = vrot.lane.b32.xlu0 %v2217, 103
    %v2431 = vpop.permute.xlu0 %2430
    %2433 = vst.msk [vmem:[#allocation7 + $0x22] sm:$0x3] %vm1620, %v2431
    %2434 = vrot.lane.b32.xlu0 %v2217, 94
    %v2435 = vpop.permute.xlu0 %2434
    %2437 = vst.msk [vmem:[#allocation7 + $0x24] sm:$0x3] %vm1620, %v2435
    %2438 = vrot.lane.b32.xlu0 %v2217, 85
    %v2439 = vpop.permute.xlu0 %2438
    %2441 = vst.msk [vmem:[#allocation7 + $0x26] sm:$0x3] %vm1620, %v2439
    %2442 = vrot.lane.b32.xlu0 %v2217, 76
    %v2443 = vpop.permute.xlu0 %2442
    %2445 = vst.msk [vmem:[#allocation7 + $0x28] sm:$0x3] %vm1620, %v2443
    %2446 = vrot.lane.b32.xlu0 %v2217, 67
    %v2447 = vpop.permute.xlu0 %2446
    %2449 = vst.msk [vmem:[#allocation7 + $0x2a] sm:$0x3] %vm1620, %v2447
    %2450 = vrot.lane.b32.xlu0 %v2217, 58
    %v2451 = vpop.permute.xlu0 %2450
    %2453 = vst.msk [vmem:[#allocation7 + $0x2c] sm:$0x3] %vm1620, %v2451
    %2454 = vrot.lane.b32.xlu0 %v2217, 49
    %v2455 = vpop.permute.xlu0 %2454
    %2457 = vst.msk [vmem:[#allocation7 + $0x2e] sm:$0x3] %vm1620, %v2455
    %2458 = vrot.lane.b32.xlu0 %v2217, 40
    %v2459 = vpop.permute.xlu0 %2458
    %2461 = vst.msk [vmem:[#allocation7 + $0x30] sm:$0x3] %vm1620, %v2459
    %2462 = vrot.lane.b32.xlu0 %v2217, 31
    %v2463 = vpop.permute.xlu0 %2462
    %2465 = vst.msk [vmem:[#allocation7 + $0x32] sm:$0x3] %vm1620, %v2463
    %2466 = vrot.lane.b32.xlu0 %v2217, 22
    %v2467 = vpop.permute.xlu0 %2466
    %2469 = vst.msk [vmem:[#allocation7 + $0x34] sm:$0x3] %vm1620, %v2467
    %2470 = vrot.lane.b32.xlu0 %v2217, 13
    %v2471 = vpop.permute.xlu0 %2470
    %2473 = vst.msk [vmem:[#allocation7 + $0x36] sm:$0x3] %vm1620, %v2471
    %2475 = vrot.lane.b32.xlu0 %v2217, 4
    %v2476 = vpop.permute.xlu0 %2475
    %2477 = vrot.lane.b32.xlu0 %v2356, 4
    %v2478 = vpop.permute.xlu0 %2477
    %vm2479 = vcmask 31744
    %v2480 = vsel %vm2479, %v2476, %v2478
    %2482 = vst.msk [vmem:[#allocation7 + $0x38] sm:$0x3] %vm1620, %v2480
    %2483 = vrot.lane.b32.xlu0 %v2356, 123
    %v2484 = vpop.permute.xlu0 %2483
    %2486 = vst.msk [vmem:[#allocation7 + $0x3a] sm:$0x3] %vm1620, %v2484
    %2487 = vrot.lane.b32.xlu0 %v2356, 114
    %v2488 = vpop.permute.xlu0 %2487
    %2490 = vst.msk [vmem:[#allocation7 + $0x3c] sm:$0x3] %vm1620, %v2488
    %2491 = vrot.lane.b32.xlu0 %v2356, 105
    %v2492 = vpop.permute.xlu0 %2491
    %2494 = vst.msk [vmem:[#allocation7 + $0x3e] sm:$0x3] %vm1620, %v2492
    %v2495 = vld [vmem:[#allocation7] sm:$0xff]
    %v2496 = vld [vmem:[#allocation7 + $0x8] sm:$0xff]
    %v2497 = vld [vmem:[#allocation7 + $0x10] sm:$0xff]
    %v2498 = vld [vmem:[#allocation7 + $0x18] sm:$0xff]
    %v2499 = vld [vmem:[#allocation7 + $0x20] sm:$0xff]
    %v2500 = vld [vmem:[#allocation7 + $0x28] sm:$0xff]
    %v2501 = vld [vmem:[#allocation7 + $0x30] sm:$0xff]
    %v2502 = vld [vmem:[#allocation7 + $0x38] sm:$0xff]
    %v2503 = vld [vmem:[%s9] sm:$0xff]
    %v2504 = vld [vmem:[%s9 + $0x8] sm:$0x1]
    %vm2505 = vcmask 72704
    %v2507 = vsel %vm2505, %v2495, 0
    %v2510 = vsel %vm2505, %v2496, 0
    %v2513 = vsel %vm2505, %v2497, 0
    %v2516 = vsel %vm2505, %v2498, 0
    %v2519 = vsel %vm2505, %v2499, 0
    %v2522 = vsel %vm2505, %v2500, 0
    %v2525 = vsel %vm2505, %v2501, 0
    %v2528 = vsel %vm2505, %v2502, 0
    %vm2530 = vcmask 1040384
    %v2532 = vsel %vm2530, %v2504, 0
    %2534 = vmatprep.subr.mxu0 0.0
    %2535 = vmatpush1.msra.mxu0 0.0
    %2536 = vmatprep.subr.mxu0 0.0
    %2537 = vmatpush1.msra.mxu0 0.0
    %2538 = vmatprep.subr.mxu0 0.0
    %2539 = vmatpush1.msra.mxu0 0.0
    %2540 = vmatprep.subr.mxu0 0.0
    %2541 = vmatpush1.msra.mxu0 0.0
    %2542 = vmatprep.subr.mxu0 0.0
    %2543 = vmatpush1.msra.mxu0 0.0
    %2544 = vmatprep.subr.mxu0 0.0
    %2545 = vmatpush1.msra.mxu0 0.0
    %2546 = vmatprep.subr.mxu0 0.0
    %2547 = vmatpush1.msra.mxu0 0.0
    %2548 = vmatprep.subr.mxu0 0.0
    %2549 = vmatpush1.msra.mxu0 0.0
    %2550 = vmatprep.subr.mxu0 0.0
    %2551 = vmatpush1.msra.mxu0 0.0
    %2552 = vmatprep.subr.mxu0 0.0
    %2553 = vmatpush1.msra.mxu0 0.0
    %2554 = vmatprep.subr.mxu0 0.0
    %2555 = vmatpush1.msra.mxu0 0.0
    %2556 = vmatprep.subr.mxu0 0.0
    %2557 = vmatpush1.msra.mxu0 0.0
    %2558 = vmatprep.subr.mxu0 0.0
    %2559 = vmatpush1.msra.mxu0 0.0
    %2560 = vmatprep.subr.mxu0 0.0
    %2561 = vmatpush1.msra.mxu0 0.0
    %2562 = vmatprep.subr.mxu0 0.0
    %2563 = vmatpush1.msra.mxu0 %v2532
    %2564 = vmatprep.subr.mxu0 0.0
    %2565 = vmatpush1.msra.mxu0 %v2503
    %2566 = vmatprep.subr.mxu0 0.0
    %2567 = vmatpush2.msra.mxu0 0.0
    %2568 = vmatprep.subr.mxu0 0.0
    %2569 = vmatpush2.msra.mxu0 0.0
    %2570 = vmatprep.subr.mxu0 0.0
    %2571 = vmatpush2.msra.mxu0 0.0
    %2572 = vmatprep.subr.mxu0 0.0
    %2573 = vmatpush2.msra.mxu0 0.0
    %2574 = vmatprep.subr.mxu0 0.0
    %2575 = vmatpush2.msra.mxu0 0.0
    %2576 = vmatprep.subr.mxu0 0.0
    %2577 = vmatpush2.msra.mxu0 0.0
    %2578 = vmatprep.subr.mxu0 0.0
    %2579 = vmatpush2.msra.mxu0 0.0
    %2580 = vmatprep.subr.mxu0 0.0
    %2581 = vmatpush2.msra.mxu0 0.0
    %2582 = vmatprep.subr.mxu0 0.0
    %2583 = vmatpush2.msra.mxu0 0.0
    %2584 = vmatprep.subr.mxu0 0.0
    %2585 = vmatpush2.msra.mxu0 0.0
    %2586 = vmatprep.subr.mxu0 0.0
    %2587 = vmatpush2.msra.mxu0 0.0
    %2588 = vmatprep.subr.mxu0 0.0
    %2589 = vmatpush2.msra.mxu0 0.0
    %2590 = vmatprep.subr.mxu0 0.0
    %2591 = vmatpush2.msra.mxu0 0.0
    %2592 = vmatprep.subr.mxu0 0.0
    %2593 = vmatpush2.msra.mxu0 0.0
    %2594 = vmatprep.subr.mxu0 0.0
    %2595 = vmatpush2.msra.mxu0 0.0
    %2596 = vmatprep.subr.mxu0 0.0
    %2597 = vmatpush2.msra.mxu0 0.0
    %2598 = vmatprep.mubr.f32.mxu0 0.0
    %2599 = vmatmul.mubr.f32.gmra.mxu0 %v2507
    %v2600 = vpop.f32.mrf.mxu0
    %v2601 = vadd.f32 0.0, %v2600
    %v2602 = vpop.f32.mrf.mxu0
    %2603 = vmatprep.mubr.f32.mxu0 0.0
    %2604 = vmatmul.mubr.f32.gmra.mxu0 %v2510
    %v2605 = vpop.f32.mrf.mxu0
    %v2606 = vadd.f32 0.0, %v2605
    %v2607 = vpop.f32.mrf.mxu0
    %2608 = vmatprep.mubr.f32.mxu0 0.0
    %2609 = vmatmul.mubr.f32.gmra.mxu0 %v2513
    %v2610 = vpop.f32.mrf.mxu0
    %v2611 = vadd.f32 0.0, %v2610
    %v2612 = vpop.f32.mrf.mxu0
    %2613 = vmatprep.mubr.f32.mxu0 0.0
    %2614 = vmatmul.mubr.f32.gmra.mxu0 %v2516
    %v2615 = vpop.f32.mrf.mxu0
    %v2616 = vadd.f32 0.0, %v2615
    %v2617 = vpop.f32.mrf.mxu0
    %2618 = vmatprep.mubr.f32.mxu0 0.0
    %2619 = vmatmul.mubr.f32.gmra.mxu0 %v2519
    %v2620 = vpop.f32.mrf.mxu0
    %v2621 = vadd.f32 0.0, %v2620
    %v2622 = vpop.f32.mrf.mxu0
    %2623 = vmatprep.mubr.f32.mxu0 0.0
    %2624 = vmatmul.mubr.f32.gmra.mxu0 %v2522
    %v2625 = vpop.f32.mrf.mxu0
    %v2626 = vadd.f32 0.0, %v2625
    %v2627 = vpop.f32.mrf.mxu0
    %2628 = vmatprep.mubr.f32.mxu0 0.0
    %2629 = vmatmul.mubr.f32.gmra.mxu0 %v2525
    %v2630 = vpop.f32.mrf.mxu0
    %v2631 = vadd.f32 0.0, %v2630
    %v2632 = vpop.f32.mrf.mxu0
    %2633 = vmatprep.mubr.f32.mxu0 0.0
    %2634 = vmatmul.mubr.f32.gmra.mxu0 %v2528
    %v2635 = vpop.f32.mrf.mxu0
    %v2636 = vadd.f32 0.0, %v2635
    %v2637 = vpop.f32.mrf.mxu0
    %2638 = vdwg.mxu0
    %v2639 = vadd.f32 %v1393, %v2601
    %v2640 = vadd.f32 %v1394, %v2606
    %v2641 = vadd.f32 %v1395, %v2611
    %v2642 = vadd.f32 %v1396, %v2616
    %v2643 = vadd.f32 %v1397, %v2621
    %v2644 = vadd.f32 %v1398, %v2626
    %v2645 = vadd.f32 %v1399, %v2631
    %v2646 = vadd.f32 %v1400, %v2636
    %v2647 = vld [vmem:[%s10] sm:$0xff]
    %v2648 = vld [vmem:[%s10 + $0x8] sm:$0xff]
    %v2649 = vld [vmem:[%s10 + $0x10] sm:$0xff]
    %v2650 = vld [vmem:[%s10 + $0x18] sm:$0xff]
    %v2651 = vld [vmem:[%s10 + $0x20] sm:$0xff]
    %v2652 = vld [vmem:[%s10 + $0x28] sm:$0x3f]
    %v2654 = vsel %vm873, %v2639, 0
    %v2657 = vsel %vm873, %v2640, 0
    %v2660 = vsel %vm873, %v2641, 0
    %v2663 = vsel %vm873, %v2642, 0
    %v2666 = vsel %vm873, %v2643, 0
    %v2669 = vsel %vm873, %v2644, 0
    %v2672 = vsel %vm873, %v2645, 0
    %v2675 = vsel %vm873, %v2646, 0
    %vm2677 = vcmask 1045504
    %v2679 = vsel %vm2677, %v2652, 0
    %2681 = vmatprep.subr.mxu0 0.0
    %2682 = vmatpush1.msra.mxu0 0.0
    %2683 = vmatprep.subr.mxu0 0.0
    %2684 = vmatpush1.msra.mxu0 0.0
    %2685 = vmatprep.subr.mxu0 0.0
    %2686 = vmatpush1.msra.mxu0 0.0
    %2687 = vmatprep.subr.mxu0 0.0
    %2688 = vmatpush1.msra.mxu0 0.0
    %2689 = vmatprep.subr.mxu0 0.0
    %2690 = vmatpush1.msra.mxu0 0.0
    %2691 = vmatprep.subr.mxu0 0.0
    %2692 = vmatpush1.msra.mxu0 0.0
    %2693 = vmatprep.subr.mxu0 0.0
    %2694 = vmatpush1.msra.mxu0 0.0
    %2695 = vmatprep.subr.mxu0 0.0
    %2696 = vmatpush1.msra.mxu0 0.0
    %2697 = vmatprep.subr.mxu0 0.0
    %2698 = vmatpush1.msra.mxu0 0.0
    %2699 = vmatprep.subr.mxu0 0.0
    %2700 = vmatpush1.msra.mxu0 0.0
    %2701 = vmatprep.subr.mxu0 0.0
    %2702 = vmatpush1.msra.mxu0 %v2679
    %2703 = vmatprep.subr.mxu0 0.0
    %2704 = vmatpush1.msra.mxu0 %v2651
    %2705 = vmatprep.subr.mxu0 0.0
    %2706 = vmatpush1.msra.mxu0 %v2650
    %2707 = vmatprep.subr.mxu0 0.0
    %2708 = vmatpush1.msra.mxu0 %v2649
    %2709 = vmatprep.subr.mxu0 0.0
    %2710 = vmatpush1.msra.mxu0 %v2648
    %2711 = vmatprep.subr.mxu0 0.0
    %2712 = vmatpush1.msra.mxu0 %v2647
    %2713 = vmatprep.subr.mxu0 0.0
    %2714 = vmatpush2.msra.mxu0 0.0
    %2715 = vmatprep.subr.mxu0 0.0
    %2716 = vmatpush2.msra.mxu0 0.0
    %2717 = vmatprep.subr.mxu0 0.0
    %2718 = vmatpush2.msra.mxu0 0.0
    %2719 = vmatprep.subr.mxu0 0.0
    %2720 = vmatpush2.msra.mxu0 0.0
    %2721 = vmatprep.subr.mxu0 0.0
    %2722 = vmatpush2.msra.mxu0 0.0
    %2723 = vmatprep.subr.mxu0 0.0
    %2724 = vmatpush2.msra.mxu0 0.0
    %2725 = vmatprep.subr.mxu0 0.0
    %2726 = vmatpush2.msra.mxu0 0.0
    %2727 = vmatprep.subr.mxu0 0.0
    %2728 = vmatpush2.msra.mxu0 0.0
    %2729 = vmatprep.subr.mxu0 0.0
    %2730 = vmatpush2.msra.mxu0 0.0
    %2731 = vmatprep.subr.mxu0 0.0
    %2732 = vmatpush2.msra.mxu0 0.0
    %2733 = vmatprep.subr.mxu0 0.0
    %2734 = vmatpush2.msra.mxu0 0.0
    %2735 = vmatprep.subr.mxu0 0.0
    %2736 = vmatpush2.msra.mxu0 0.0
    %2737 = vmatprep.subr.mxu0 0.0
    %2738 = vmatpush2.msra.mxu0 0.0
    %2739 = vmatprep.subr.mxu0 0.0
    %2740 = vmatpush2.msra.mxu0 0.0
    %2741 = vmatprep.subr.mxu0 0.0
    %2742 = vmatpush2.msra.mxu0 0.0
    %2743 = vmatprep.subr.mxu0 0.0
    %2744 = vmatpush2.msra.mxu0 0.0
    %2745 = vmatprep.mubr.f32.mxu0 0.0
    %2746 = vmatmul.mubr.f32.gmra.mxu0 %v2654
    %v2747 = vpop.f32.mrf.mxu0
    %v2748 = vadd.f32 0.0, %v2747
    %v2749 = vpop.f32.mrf.mxu0
    %2750 = vmatprep.mubr.f32.mxu0 0.0
    %2751 = vmatmul.mubr.f32.gmra.mxu0 %v2657
    %v2752 = vpop.f32.mrf.mxu0
    %v2753 = vadd.f32 0.0, %v2752
    %v2754 = vpop.f32.mrf.mxu0
    %2755 = vmatprep.mubr.f32.mxu0 0.0
    %2756 = vmatmul.mubr.f32.gmra.mxu0 %v2660
    %v2757 = vpop.f32.mrf.mxu0
    %v2758 = vadd.f32 0.0, %v2757
    %v2759 = vpop.f32.mrf.mxu0
    %2760 = vmatprep.mubr.f32.mxu0 0.0
    %2761 = vmatmul.mubr.f32.gmra.mxu0 %v2663
    %v2762 = vpop.f32.mrf.mxu0
    %v2763 = vadd.f32 0.0, %v2762
    %v2764 = vpop.f32.mrf.mxu0
    %2765 = vmatprep.mubr.f32.mxu0 0.0
    %2766 = vmatmul.mubr.f32.gmra.mxu0 %v2666
    %v2767 = vpop.f32.mrf.mxu0
    %v2768 = vadd.f32 0.0, %v2767
    %v2769 = vpop.f32.mrf.mxu0
    %2770 = vmatprep.mubr.f32.mxu0 0.0
    %2771 = vmatmul.mubr.f32.gmra.mxu0 %v2669
    %v2772 = vpop.f32.mrf.mxu0
    %v2773 = vadd.f32 0.0, %v2772
    %v2774 = vpop.f32.mrf.mxu0
    %2775 = vmatprep.mubr.f32.mxu0 0.0
    %2776 = vmatmul.mubr.f32.gmra.mxu0 %v2672
    %v2777 = vpop.f32.mrf.mxu0
    %v2778 = vadd.f32 0.0, %v2777
    %v2779 = vpop.f32.mrf.mxu0
    %2780 = vmatprep.mubr.f32.mxu0 0.0
    %2781 = vmatmul.mubr.f32.gmra.mxu0 %v2675
    %v2782 = vpop.f32.mrf.mxu0
    %v2783 = vadd.f32 0.0, %v2782
    %v2784 = vpop.f32.mrf.mxu0
    %2785 = vdwg.mxu0
    %vm2786 = vcmask 637952
    %2787 = vst.msk [vmem:[#allocation4] sm:$0xff] %vm2786, %v2748
    %2788 = vst.msk [vmem:[#allocation4 + $0x8] sm:$0xff] %vm2786, %v2753
    %2789 = vst.msk [vmem:[#allocation4 + $0x10] sm:$0xff] %vm2786, %v2758
    %2790 = vst.msk [vmem:[#allocation4 + $0x18] sm:$0xff] %vm2786, %v2763
    %2791 = vst.msk [vmem:[#allocation4 + $0x20] sm:$0xff] %vm2786, %v2768
    %2792 = vst.msk [vmem:[#allocation4 + $0x28] sm:$0xff] %vm2786, %v2773
    %2793 = vst.msk [vmem:[#allocation4 + $0x30] sm:$0xff] %vm2786, %v2778
    %2794 = vst.msk [vmem:[#allocation4 + $0x38] sm:$0xff] %vm2786, %v2783
    %2803 = vrot.lane.b32.xlu0 %v2748, 127
    %v2804 = vpop.permute.xlu0 %2803
    %2805 = vrot.lane.b32.xlu0 %v2753, 127
    %v2806 = vpop.permute.xlu0 %2805
    %2807 = vrot.lane.b32.xlu0 %v2758, 127
    %v2808 = vpop.permute.xlu0 %2807
    %2809 = vrot.lane.b32.xlu0 %v2763, 127
    %v2810 = vpop.permute.xlu0 %2809
    %2811 = vrot.lane.b32.xlu0 %v2768, 127
    %v2812 = vpop.permute.xlu0 %2811
    %2813 = vrot.lane.b32.xlu0 %v2773, 127
    %v2814 = vpop.permute.xlu0 %2813
    %2815 = vrot.lane.b32.xlu0 %v2778, 127
    %v2816 = vpop.permute.xlu0 %2815
    %2817 = vrot.lane.b32.xlu0 %v2783, 127
    %v2818 = vpop.permute.xlu0 %2817
    %2827 = vst.msk [vmem:[#allocation4 + $0x40] sm:$0xff] %vm2786, %v2804
    %2828 = vst.msk [vmem:[#allocation4 + $0x48] sm:$0xff] %vm2786, %v2806
    %2829 = vst.msk [vmem:[#allocation4 + $0x50] sm:$0xff] %vm2786, %v2808
    %2830 = vst.msk [vmem:[#allocation4 + $0x58] sm:$0xff] %vm2786, %v2810
    %2831 = vst.msk [vmem:[#allocation4 + $0x60] sm:$0xff] %vm2786, %v2812
    %2832 = vst.msk [vmem:[#allocation4 + $0x68] sm:$0xff] %vm2786, %v2814
    %2833 = vst.msk [vmem:[#allocation4 + $0x70] sm:$0xff] %vm2786, %v2816
    %2834 = vst.msk [vmem:[#allocation4 + $0x78] sm:$0xff] %vm2786, %v2818
    %2835 = vrot.lane.b32.xlu0 %v2748, 126
    %v2836 = vpop.permute.xlu0 %2835
    %2837 = vrot.lane.b32.xlu0 %v2753, 126
    %v2838 = vpop.permute.xlu0 %2837
    %2839 = vrot.lane.b32.xlu0 %v2758, 126
    %v2840 = vpop.permute.xlu0 %2839
    %2841 = vrot.lane.b32.xlu0 %v2763, 126
    %v2842 = vpop.permute.xlu0 %2841
    %2843 = vrot.lane.b32.xlu0 %v2768, 126
    %v2844 = vpop.permute.xlu0 %2843
    %2845 = vrot.lane.b32.xlu0 %v2773, 126
    %v2846 = vpop.permute.xlu0 %2845
    %2847 = vrot.lane.b32.xlu0 %v2778, 126
    %v2848 = vpop.permute.xlu0 %2847
    %2849 = vrot.lane.b32.xlu0 %v2783, 126
    %v2850 = vpop.permute.xlu0 %2849
    %2859 = vst.msk [vmem:[#allocation4 + $0x80] sm:$0xff] %vm2786, %v2836
    %2860 = vst.msk [vmem:[#allocation4 + $0x88] sm:$0xff] %vm2786, %v2838
    %2861 = vst.msk [vmem:[#allocation4 + $0x90] sm:$0xff] %vm2786, %v2840
    %2862 = vst.msk [vmem:[#allocation4 + $0x98] sm:$0xff] %vm2786, %v2842
    %2863 = vst.msk [vmem:[#allocation4 + $0xa0] sm:$0xff] %vm2786, %v2844
    %2864 = vst.msk [vmem:[#allocation4 + $0xa8] sm:$0xff] %vm2786, %v2846
    %2865 = vst.msk [vmem:[#allocation4 + $0xb0] sm:$0xff] %vm2786, %v2848
    %2866 = vst.msk [vmem:[#allocation4 + $0xb8] sm:$0xff] %vm2786, %v2850
    %2867 = vrot.lane.b32.xlu0 %v2748, 118
    %v2868 = vpop.permute.xlu0 %2867
    %2869 = vrot.lane.b32.xlu0 %v2753, 118
    %v2870 = vpop.permute.xlu0 %2869
    %2871 = vrot.lane.b32.xlu0 %v2758, 118
    %v2872 = vpop.permute.xlu0 %2871
    %2873 = vrot.lane.b32.xlu0 %v2763, 118
    %v2874 = vpop.permute.xlu0 %2873
    %2875 = vrot.lane.b32.xlu0 %v2768, 118
    %v2876 = vpop.permute.xlu0 %2875
    %2877 = vrot.lane.b32.xlu0 %v2773, 118
    %v2878 = vpop.permute.xlu0 %2877
    %2879 = vrot.lane.b32.xlu0 %v2778, 118
    %v2880 = vpop.permute.xlu0 %2879
    %2881 = vrot.lane.b32.xlu0 %v2783, 118
    %v2882 = vpop.permute.xlu0 %2881
    %2891 = vst.msk [vmem:[#allocation4 + $0xc0] sm:$0xff] %vm2786, %v2868
    %2892 = vst.msk [vmem:[#allocation4 + $0xc8] sm:$0xff] %vm2786, %v2870
    %2893 = vst.msk [vmem:[#allocation4 + $0xd0] sm:$0xff] %vm2786, %v2872
    %2894 = vst.msk [vmem:[#allocation4 + $0xd8] sm:$0xff] %vm2786, %v2874
    %2895 = vst.msk [vmem:[#allocation4 + $0xe0] sm:$0xff] %vm2786, %v2876
    %2896 = vst.msk [vmem:[#allocation4 + $0xe8] sm:$0xff] %vm2786, %v2878
    %2897 = vst.msk [vmem:[#allocation4 + $0xf0] sm:$0xff] %vm2786, %v2880
    %2898 = vst.msk [vmem:[#allocation4 + $0xf8] sm:$0xff] %vm2786, %v2882
    %2899 = vrot.lane.b32.xlu0 %v2748, 117
    %v2900 = vpop.permute.xlu0 %2899
    %2901 = vrot.lane.b32.xlu0 %v2753, 117
    %v2902 = vpop.permute.xlu0 %2901
    %2903 = vrot.lane.b32.xlu0 %v2758, 117
    %v2904 = vpop.permute.xlu0 %2903
    %2905 = vrot.lane.b32.xlu0 %v2763, 117
    %v2906 = vpop.permute.xlu0 %2905
    %2907 = vrot.lane.b32.xlu0 %v2768, 117
    %v2908 = vpop.permute.xlu0 %2907
    %2909 = vrot.lane.b32.xlu0 %v2773, 117
    %v2910 = vpop.permute.xlu0 %2909
    %2911 = vrot.lane.b32.xlu0 %v2778, 117
    %v2912 = vpop.permute.xlu0 %2911
    %2913 = vrot.lane.b32.xlu0 %v2783, 117
    %v2914 = vpop.permute.xlu0 %2913
    %2923 = vst.msk [vmem:[#allocation4 + $0x100] sm:$0xff] %vm2786, %v2900
    %2924 = vst.msk [vmem:[#allocation4 + $0x108] sm:$0xff] %vm2786, %v2902
    %2925 = vst.msk [vmem:[#allocation4 + $0x110] sm:$0xff] %vm2786, %v2904
    %2926 = vst.msk [vmem:[#allocation4 + $0x118] sm:$0xff] %vm2786, %v2906
    %2927 = vst.msk [vmem:[#allocation4 + $0x120] sm:$0xff] %vm2786, %v2908
    %2928 = vst.msk [vmem:[#allocation4 + $0x128] sm:$0xff] %vm2786, %v2910
    %2929 = vst.msk [vmem:[#allocation4 + $0x130] sm:$0xff] %vm2786, %v2912
    %2930 = vst.msk [vmem:[#allocation4 + $0x138] sm:$0xff] %vm2786, %v2914
    %2931 = vrot.lane.b32.xlu0 %v2748, 116
    %v2932 = vpop.permute.xlu0 %2931
    %2933 = vrot.lane.b32.xlu0 %v2753, 116
    %v2934 = vpop.permute.xlu0 %2933
    %2935 = vrot.lane.b32.xlu0 %v2758, 116
    %v2936 = vpop.permute.xlu0 %2935
    %2937 = vrot.lane.b32.xlu0 %v2763, 116
    %v2938 = vpop.permute.xlu0 %2937
    %2939 = vrot.lane.b32.xlu0 %v2768, 116
    %v2940 = vpop.permute.xlu0 %2939
    %2941 = vrot.lane.b32.xlu0 %v2773, 116
    %v2942 = vpop.permute.xlu0 %2941
    %2943 = vrot.lane.b32.xlu0 %v2778, 116
    %v2944 = vpop.permute.xlu0 %2943
    %2945 = vrot.lane.b32.xlu0 %v2783, 116
    %v2946 = vpop.permute.xlu0 %2945
    %2955 = vst.msk [vmem:[#allocation4 + $0x140] sm:$0xff] %vm2786, %v2932
    %2956 = vst.msk [vmem:[#allocation4 + $0x148] sm:$0xff] %vm2786, %v2934
    %2957 = vst.msk [vmem:[#allocation4 + $0x150] sm:$0xff] %vm2786, %v2936
    %2958 = vst.msk [vmem:[#allocation4 + $0x158] sm:$0xff] %vm2786, %v2938
    %2959 = vst.msk [vmem:[#allocation4 + $0x160] sm:$0xff] %vm2786, %v2940
    %2960 = vst.msk [vmem:[#allocation4 + $0x168] sm:$0xff] %vm2786, %v2942
    %2961 = vst.msk [vmem:[#allocation4 + $0x170] sm:$0xff] %vm2786, %v2944
    %2962 = vst.msk [vmem:[#allocation4 + $0x178] sm:$0xff] %vm2786, %v2946
    %2963 = vrot.lane.b32.xlu0 %v2748, 108
    %v2964 = vpop.permute.xlu0 %2963
    %2965 = vrot.lane.b32.xlu0 %v2753, 108
    %v2966 = vpop.permute.xlu0 %2965
    %2967 = vrot.lane.b32.xlu0 %v2758, 108
    %v2968 = vpop.permute.xlu0 %2967
    %2969 = vrot.lane.b32.xlu0 %v2763, 108
    %v2970 = vpop.permute.xlu0 %2969
    %2971 = vrot.lane.b32.xlu0 %v2768, 108
    %v2972 = vpop.permute.xlu0 %2971
    %2973 = vrot.lane.b32.xlu0 %v2773, 108
    %v2974 = vpop.permute.xlu0 %2973
    %2975 = vrot.lane.b32.xlu0 %v2778, 108
    %v2976 = vpop.permute.xlu0 %2975
    %2977 = vrot.lane.b32.xlu0 %v2783, 108
    %v2978 = vpop.permute.xlu0 %2977
    %2987 = vst.msk [vmem:[#allocation4 + $0x180] sm:$0xff] %vm2786, %v2964
    %2988 = vst.msk [vmem:[#allocation4 + $0x188] sm:$0xff] %vm2786, %v2966
    %2989 = vst.msk [vmem:[#allocation4 + $0x190] sm:$0xff] %vm2786, %v2968
    %2990 = vst.msk [vmem:[#allocation4 + $0x198] sm:$0xff] %vm2786, %v2970
    %2991 = vst.msk [vmem:[#allocation4 + $0x1a0] sm:$0xff] %vm2786, %v2972
    %2992 = vst.msk [vmem:[#allocation4 + $0x1a8] sm:$0xff] %vm2786, %v2974
    %2993 = vst.msk [vmem:[#allocation4 + $0x1b0] sm:$0xff] %vm2786, %v2976
    %2994 = vst.msk [vmem:[#allocation4 + $0x1b8] sm:$0xff] %vm2786, %v2978
    %2995 = vrot.lane.b32.xlu0 %v2748, 107
    %v2996 = vpop.permute.xlu0 %2995
    %2997 = vrot.lane.b32.xlu0 %v2753, 107
    %v2998 = vpop.permute.xlu0 %2997
    %2999 = vrot.lane.b32.xlu0 %v2758, 107
    %v3000 = vpop.permute.xlu0 %2999
    %3001 = vrot.lane.b32.xlu0 %v2763, 107
    %v3002 = vpop.permute.xlu0 %3001
    %3003 = vrot.lane.b32.xlu0 %v2768, 107
    %v3004 = vpop.permute.xlu0 %3003
    %3005 = vrot.lane.b32.xlu0 %v2773, 107
    %v3006 = vpop.permute.xlu0 %3005
    %3007 = vrot.lane.b32.xlu0 %v2778, 107
    %v3008 = vpop.permute.xlu0 %3007
    %3009 = vrot.lane.b32.xlu0 %v2783, 107
    %v3010 = vpop.permute.xlu0 %3009
    %3019 = vst.msk [vmem:[#allocation4 + $0x1c0] sm:$0xff] %vm2786, %v2996
    %3020 = vst.msk [vmem:[#allocation4 + $0x1c8] sm:$0xff] %vm2786, %v2998
    %3021 = vst.msk [vmem:[#allocation4 + $0x1d0] sm:$0xff] %vm2786, %v3000
    %3022 = vst.msk [vmem:[#allocation4 + $0x1d8] sm:$0xff] %vm2786, %v3002
    %3023 = vst.msk [vmem:[#allocation4 + $0x1e0] sm:$0xff] %vm2786, %v3004
    %3024 = vst.msk [vmem:[#allocation4 + $0x1e8] sm:$0xff] %vm2786, %v3006
    %3025 = vst.msk [vmem:[#allocation4 + $0x1f0] sm:$0xff] %vm2786, %v3008
    %3026 = vst.msk [vmem:[#allocation4 + $0x1f8] sm:$0xff] %vm2786, %v3010
    %3027 = vrot.lane.b32.xlu0 %v2748, 106
    %v3028 = vpop.permute.xlu0 %3027
    %3029 = vrot.lane.b32.xlu0 %v2753, 106
    %v3030 = vpop.permute.xlu0 %3029
    %3031 = vrot.lane.b32.xlu0 %v2758, 106
    %v3032 = vpop.permute.xlu0 %3031
    %3033 = vrot.lane.b32.xlu0 %v2763, 106
    %v3034 = vpop.permute.xlu0 %3033
    %3035 = vrot.lane.b32.xlu0 %v2768, 106
    %v3036 = vpop.permute.xlu0 %3035
    %3037 = vrot.lane.b32.xlu0 %v2773, 106
    %v3038 = vpop.permute.xlu0 %3037
    %3039 = vrot.lane.b32.xlu0 %v2778, 106
    %v3040 = vpop.permute.xlu0 %3039
    %3041 = vrot.lane.b32.xlu0 %v2783, 106
    %v3042 = vpop.permute.xlu0 %3041
    %3051 = vst.msk [vmem:[#allocation4 + $0x200] sm:$0xff] %vm2786, %v3028
    %3052 = vst.msk [vmem:[#allocation4 + $0x208] sm:$0xff] %vm2786, %v3030
    %3053 = vst.msk [vmem:[#allocation4 + $0x210] sm:$0xff] %vm2786, %v3032
    %3054 = vst.msk [vmem:[#allocation4 + $0x218] sm:$0xff] %vm2786, %v3034
    %3055 = vst.msk [vmem:[#allocation4 + $0x220] sm:$0xff] %vm2786, %v3036
    %3056 = vst.msk [vmem:[#allocation4 + $0x228] sm:$0xff] %vm2786, %v3038
    %3057 = vst.msk [vmem:[#allocation4 + $0x230] sm:$0xff] %vm2786, %v3040
    %3058 = vst.msk [vmem:[#allocation4 + $0x238] sm:$0xff] %vm2786, %v3042
    %v3059 = vld [vmem:[%s11] sm:$0xff]
    %v3060 = vld [vmem:[%s11 + $0x8] sm:$0xff]
    %v3061 = vld [vmem:[%s11 + $0x10] sm:$0xff]
    %v3062 = vld [vmem:[%s11 + $0x18] sm:$0xff]
    %v3063 = vld [vmem:[%s11 + $0x20] sm:$0xff]
    %v3064 = vld [vmem:[%s11 + $0x28] sm:$0xff]
    %v3065 = vld [vmem:[%s11 + $0x30] sm:$0xff]
    %v3066 = vld [vmem:[%s11 + $0x38] sm:$0xff]
    %v3067 = vld [vmem:[%s11 + $0x40] sm:$0xff]
    %v3068 = vld [vmem:[%s11 + $0x48] sm:$0xff]
    %v3069 = vld [vmem:[%s11 + $0x50] sm:$0xff]
    %v3070 = vld [vmem:[%s11 + $0x58] sm:$0xff]
    %v3071 = vld [vmem:[%s11 + $0x60] sm:$0xff]
    %v3072 = vld [vmem:[%s11 + $0x68] sm:$0xff]
    %v3073 = vld [vmem:[%s11 + $0x70] sm:$0xff]
    %v3074 = vld [vmem:[%s11 + $0x78] sm:$0xff]
    %v3075 = vld [vmem:[%s11 + $0x80] sm:$0xff]
    %v3076 = vld [vmem:[%s11 + $0x88] sm:$0xff]
    %v3077 = vld [vmem:[%s11 + $0x90] sm:$0xff]
    %v3078 = vld [vmem:[%s11 + $0x98] sm:$0xff]
    %v3079 = vld [vmem:[#allocation4] sm:$0xff]
    %v3080 = vld [vmem:[#allocation4 + $0x8] sm:$0xff]
    %v3081 = vld [vmem:[#allocation4 + $0x10] sm:$0xff]
    %v3082 = vld [vmem:[#allocation4 + $0x18] sm:$0xff]
    %v3083 = vld [vmem:[#allocation4 + $0x20] sm:$0xff]
    %v3084 = vld [vmem:[#allocation4 + $0x28] sm:$0xff]
    %v3085 = vld [vmem:[#allocation4 + $0x30] sm:$0xff]
    %v3086 = vld [vmem:[#allocation4 + $0x38] sm:$0xff]
    %v3087 = vld [vmem:[#allocation4 + $0x40] sm:$0xff]
    %v3088 = vld [vmem:[#allocation4 + $0x48] sm:$0xff]
    %v3089 = vld [vmem:[#allocation4 + $0x50] sm:$0xff]
    %v3090 = vld [vmem:[#allocation4 + $0x58] sm:$0xff]
    %v3091 = vld [vmem:[#allocation4 + $0x60] sm:$0xff]
    %v3092 = vld [vmem:[#allocation4 + $0x68] sm:$0xff]
    %v3093 = vld [vmem:[#allocation4 + $0x70] sm:$0xff]
    %v3094 = vld [vmem:[#allocation4 + $0x78] sm:$0xff]
    %v3095 = vld [vmem:[#allocation4 + $0x80] sm:$0xff]
    %v3096 = vld [vmem:[#allocation4 + $0x88] sm:$0xff]
    %v3097 = vld [vmem:[#allocation4 + $0x90] sm:$0xff]
    %v3098 = vld [vmem:[#allocation4 + $0x98] sm:$0xff]
    %v3099 = vld [vmem:[#allocation4 + $0xa0] sm:$0xff]
    %v3100 = vld [vmem:[#allocation4 + $0xa8] sm:$0xff]
    %v3101 = vld [vmem:[#allocation4 + $0xb0] sm:$0xff]
    %v3102 = vld [vmem:[#allocation4 + $0xb8] sm:$0xff]
    %v3103 = vld [vmem:[#allocation4 + $0xc0] sm:$0xff]
    %v3104 = vld [vmem:[#allocation4 + $0xc8] sm:$0xff]
    %v3105 = vld [vmem:[#allocation4 + $0xd0] sm:$0xff]
    %v3106 = vld [vmem:[#allocation4 + $0xd8] sm:$0xff]
    %v3107 = vld [vmem:[#allocation4 + $0xe0] sm:$0xff]
    %v3108 = vld [vmem:[#allocation4 + $0xe8] sm:$0xff]
    %v3109 = vld [vmem:[#allocation4 + $0xf0] sm:$0xff]
    %v3110 = vld [vmem:[#allocation4 + $0xf8] sm:$0xff]
    %v3111 = vld [vmem:[#allocation4 + $0x100] sm:$0xff]
    %v3112 = vld [vmem:[#allocation4 + $0x108] sm:$0xff]
    %v3113 = vld [vmem:[#allocation4 + $0x110] sm:$0xff]
    %v3114 = vld [vmem:[#allocation4 + $0x118] sm:$0xff]
    %v3115 = vld [vmem:[#allocation4 + $0x120] sm:$0xff]
    %v3116 = vld [vmem:[#allocation4 + $0x128] sm:$0xff]
    %v3117 = vld [vmem:[#allocation4 + $0x130] sm:$0xff]
    %v3118 = vld [vmem:[#allocation4 + $0x138] sm:$0xff]
    %v3119 = vld [vmem:[#allocation4 + $0x140] sm:$0xff]
    %v3120 = vld [vmem:[#allocation4 + $0x148] sm:$0xff]
    %v3121 = vld [vmem:[#allocation4 + $0x150] sm:$0xff]
    %v3122 = vld [vmem:[#allocation4 + $0x158] sm:$0xff]
    %v3123 = vld [vmem:[#allocation4 + $0x160] sm:$0xff]
    %v3124 = vld [vmem:[#allocation4 + $0x168] sm:$0xff]
    %v3125 = vld [vmem:[#allocation4 + $0x170] sm:$0xff]
    %v3126 = vld [vmem:[#allocation4 + $0x178] sm:$0xff]
    %v3127 = vld [vmem:[#allocation4 + $0x180] sm:$0xff]
    %v3128 = vld [vmem:[#allocation4 + $0x188] sm:$0xff]
    %v3129 = vld [vmem:[#allocation4 + $0x190] sm:$0xff]
    %v3130 = vld [vmem:[#allocation4 + $0x198] sm:$0xff]
    %v3131 = vld [vmem:[#allocation4 + $0x1a0] sm:$0xff]
    %v3132 = vld [vmem:[#allocation4 + $0x1a8] sm:$0xff]
    %v3133 = vld [vmem:[#allocation4 + $0x1b0] sm:$0xff]
    %v3134 = vld [vmem:[#allocation4 + $0x1b8] sm:$0xff]
    %v3135 = vld [vmem:[#allocation4 + $0x1c0] sm:$0xff]
    %v3136 = vld [vmem:[#allocation4 + $0x1c8] sm:$0xff]
    %v3137 = vld [vmem:[#allocation4 + $0x1d0] sm:$0xff]
    %v3138 = vld [vmem:[#allocation4 + $0x1d8] sm:$0xff]
    %v3139 = vld [vmem:[#allocation4 + $0x1e0] sm:$0xff]
    %v3140 = vld [vmem:[#allocation4 + $0x1e8] sm:$0xff]
    %v3141 = vld [vmem:[#allocation4 + $0x1f0] sm:$0xff]
    %v3142 = vld [vmem:[#allocation4 + $0x1f8] sm:$0xff]
    %v3143 = vld [vmem:[#allocation4 + $0x200] sm:$0xff]
    %v3144 = vld [vmem:[#allocation4 + $0x208] sm:$0xff]
    %v3145 = vld [vmem:[#allocation4 + $0x210] sm:$0xff]
    %v3146 = vld [vmem:[#allocation4 + $0x218] sm:$0xff]
    %v3147 = vld [vmem:[#allocation4 + $0x220] sm:$0xff]
    %v3148 = vld [vmem:[#allocation4 + $0x228] sm:$0xff]
    %v3149 = vld [vmem:[#allocation4 + $0x230] sm:$0xff]
    %v3150 = vld [vmem:[#allocation4 + $0x238] sm:$0xff]
    %v3151 = vld [vmem:[%s12] sm:$0xff]
    %v3152 = vld [vmem:[%s12 + $0x8] sm:$0xff]
    %v3153 = vld [vmem:[%s12 + $0x10] sm:$0xff]
    %v3154 = vld [vmem:[%s12 + $0x18] sm:$0xff]
    %3156 = vset.pattern.permute.xlu0 0
    %3157 = vperm.xlu0 %3156, %v3151
    %v3158 = vpop.permute.xlu0 %3157
    %3161 = vset.pattern.permute.xlu0 0
    %3162 = vperm.xlu0 %3161, %v3152
    %v3163 = vpop.permute.xlu0 %3162
    %3166 = vset.pattern.permute.xlu0 0
    %3167 = vperm.xlu0 %3166, %v3153
    %v3168 = vpop.permute.xlu0 %3167
    %3171 = vset.pattern.permute.xlu0 0
    %3172 = vperm.xlu0 %3171, %v3154
    %v3173 = vpop.permute.xlu0 %3172
    %vm3175 = vcmask 523264
    %v3177 = vsel %vm3175, %v3063, 0
    %v3180 = vsel %vm3175, %v3068, 0
    %v3183 = vsel %vm3175, %v3073, 0
    %v3186 = vsel %vm3175, %v3078, 0
    %3188 = vmatprep.subr.mxu0 0.0
    %3189 = vmatpush1.msra.mxu0 %v3094
    %3190 = vmatprep.subr.mxu0 0.0
    %3191 = vmatpush1.msra.mxu0 %v3093
    %3192 = vmatprep.subr.mxu0 0.0
    %3193 = vmatpush1.msra.mxu0 %v3092
    %3194 = vmatprep.subr.mxu0 0.0
    %3195 = vmatpush1.msra.mxu0 %v3091
    %3196 = vmatprep.subr.mxu0 0.0
    %3197 = vmatpush1.msra.mxu0 %v3090
    %3198 = vmatprep.subr.mxu0 0.0
    %3199 = vmatpush1.msra.mxu0 %v3089
    %3200 = vmatprep.subr.mxu0 0.0
    %3201 = vmatpush1.msra.mxu0 %v3088
    %3202 = vmatprep.subr.mxu0 0.0
    %3203 = vmatpush1.msra.mxu0 %v3087
    %3204 = vmatprep.subr.mxu0 0.0
    %3205 = vmatpush1.msra.mxu0 %v3086
    %3206 = vmatprep.subr.mxu0 0.0
    %3207 = vmatpush1.msra.mxu0 %v3085
    %3208 = vmatprep.subr.mxu0 0.0
    %3209 = vmatpush1.msra.mxu0 %v3084
    %3210 = vmatprep.subr.mxu0 0.0
    %3211 = vmatpush1.msra.mxu0 %v3083
    %3212 = vmatprep.subr.mxu0 0.0
    %3213 = vmatpush1.msra.mxu0 %v3082
    %3214 = vmatprep.subr.mxu0 0.0
    %3215 = vmatpush1.msra.mxu0 %v3081
    %3216 = vmatprep.subr.mxu0 0.0
    %3217 = vmatpush1.msra.mxu0 %v3080
    %3218 = vmatprep.subr.mxu0 0.0
    %3219 = vmatpush1.msra.mxu0 %v3079
    %3220 = vmatprep.subr.mxu0 0.0
    %3221 = vmatpush2.msra.mxu0 %v3110
    %3222 = vmatprep.subr.mxu0 0.0
    %3223 = vmatpush2.msra.mxu0 %v3109
    %3224 = vmatprep.subr.mxu0 0.0
    %3225 = vmatpush2.msra.mxu0 %v3108
    %3226 = vmatprep.subr.mxu0 0.0
    %3227 = vmatpush2.msra.mxu0 %v3107
    %3228 = vmatprep.subr.mxu0 0.0
    %3229 = vmatpush2.msra.mxu0 %v3106
    %3230 = vmatprep.subr.mxu0 0.0
    %3231 = vmatpush2.msra.mxu0 %v3105
    %3232 = vmatprep.subr.mxu0 0.0
    %3233 = vmatpush2.msra.mxu0 %v3104
    %3234 = vmatprep.subr.mxu0 0.0
    %3235 = vmatpush2.msra.mxu0 %v3103
    %3236 = vmatprep.subr.mxu0 0.0
    %3237 = vmatpush2.msra.mxu0 %v3102
    %3238 = vmatprep.subr.mxu0 0.0
    %3239 = vmatpush2.msra.mxu0 %v3101
    %3240 = vmatprep.subr.mxu0 0.0
    %3241 = vmatpush2.msra.mxu0 %v3100
    %3242 = vmatprep.subr.mxu0 0.0
    %3243 = vmatpush2.msra.mxu0 %v3099
    %3244 = vmatprep.subr.mxu0 0.0
    %3245 = vmatpush2.msra.mxu0 %v3098
    %3246 = vmatprep.subr.mxu0 0.0
    %3247 = vmatpush2.msra.mxu0 %v3097
    %3248 = vmatprep.subr.mxu0 0.0
    %3249 = vmatpush2.msra.mxu0 %v3096
    %3250 = vmatprep.subr.mxu0 0.0
    %3251 = vmatpush2.msra.mxu0 %v3095
    %3252 = vmatprep.mubr.f32.mxu0 %v3060
    %3253 = vmatmul.mubr.f32.gmra.mxu0 %v3059
    %v3254 = vpop.f32.mrf.mxu0
    %v3255 = vadd.f32 %v3158, %v3254
    %v3256 = vpop.f32.mrf.mxu0
    %3257 = vmatprep.mubr.f32.mxu0 %v3065
    %3258 = vmatmul.mubr.f32.gmra.mxu0 %v3064
    %v3259 = vpop.f32.mrf.mxu0
    %v3260 = vadd.f32 %v3163, %v3259
    %v3261 = vpop.f32.mrf.mxu0
    %3262 = vmatprep.mubr.f32.mxu0 %v3070
    %3263 = vmatmul.mubr.f32.gmra.mxu0 %v3069
    %v3264 = vpop.f32.mrf.mxu0
    %v3265 = vadd.f32 %v3168, %v3264
    %v3266 = vpop.f32.mrf.mxu0
    %3267 = vmatprep.mubr.f32.mxu0 %v3075
    %3268 = vmatmul.mubr.f32.gmra.mxu0 %v3074
    %v3269 = vpop.f32.mrf.mxu0
    %v3270 = vadd.f32 %v3173, %v3269
    %v3271 = vpop.f32.mrf.mxu0
    %3272 = vdwg.mxu0
    %3273 = vmatprep.subr.mxu0 0.0
    %3274 = vmatpush1.msra.mxu0 %v3126
    %3275 = vmatprep.subr.mxu0 0.0
    %3276 = vmatpush1.msra.mxu0 %v3125
    %3277 = vmatprep.subr.mxu0 0.0
    %3278 = vmatpush1.msra.mxu0 %v3124
    %3279 = vmatprep.subr.mxu0 0.0
    %3280 = vmatpush1.msra.mxu0 %v3123
    %3281 = vmatprep.subr.mxu0 0.0
    %3282 = vmatpush1.msra.mxu0 %v3122
    %3283 = vmatprep.subr.mxu0 0.0
    %3284 = vmatpush1.msra.mxu0 %v3121
    %3285 = vmatprep.subr.mxu0 0.0
    %3286 = vmatpush1.msra.mxu0 %v3120
    %3287 = vmatprep.subr.mxu0 0.0
    %3288 = vmatpush1.msra.mxu0 %v3119
    %3289 = vmatprep.subr.mxu0 0.0
    %3290 = vmatpush1.msra.mxu0 %v3118
    %3291 = vmatprep.subr.mxu0 0.0
    %3292 = vmatpush1.msra.mxu0 %v3117
    %3293 = vmatprep.subr.mxu0 0.0
    %3294 = vmatpush1.msra.mxu0 %v3116
    %3295 = vmatprep.subr.mxu0 0.0
    %3296 = vmatpush1.msra.mxu0 %v3115
    %3297 = vmatprep.subr.mxu0 0.0
    %3298 = vmatpush1.msra.mxu0 %v3114
    %3299 = vmatprep.subr.mxu0 0.0
    %3300 = vmatpush1.msra.mxu0 %v3113
    %3301 = vmatprep.subr.mxu0 0.0
    %3302 = vmatpush1.msra.mxu0 %v3112
    %3303 = vmatprep.subr.mxu0 0.0
    %3304 = vmatpush1.msra.mxu0 %v3111
    %3305 = vmatprep.subr.mxu0 0.0
    %3306 = vmatpush2.msra.mxu0 %v3142
    %3307 = vmatprep.subr.mxu0 0.0
    %3308 = vmatpush2.msra.mxu0 %v3141
    %3309 = vmatprep.subr.mxu0 0.0
    %3310 = vmatpush2.msra.mxu0 %v3140
    %3311 = vmatprep.subr.mxu0 0.0
    %3312 = vmatpush2.msra.mxu0 %v3139
    %3313 = vmatprep.subr.mxu0 0.0
    %3314 = vmatpush2.msra.mxu0 %v3138
    %3315 = vmatprep.subr.mxu0 0.0
    %3316 = vmatpush2.msra.mxu0 %v3137
    %3317 = vmatprep.subr.mxu0 0.0
    %3318 = vmatpush2.msra.mxu0 %v3136
    %3319 = vmatprep.subr.mxu0 0.0
    %3320 = vmatpush2.msra.mxu0 %v3135
    %3321 = vmatprep.subr.mxu0 0.0
    %3322 = vmatpush2.msra.mxu0 %v3134
    %3323 = vmatprep.subr.mxu0 0.0
    %3324 = vmatpush2.msra.mxu0 %v3133
    %3325 = vmatprep.subr.mxu0 0.0
    %3326 = vmatpush2.msra.mxu0 %v3132
    %3327 = vmatprep.subr.mxu0 0.0
    %3328 = vmatpush2.msra.mxu0 %v3131
    %3329 = vmatprep.subr.mxu0 0.0
    %3330 = vmatpush2.msra.mxu0 %v3130
    %3331 = vmatprep.subr.mxu0 0.0
    %3332 = vmatpush2.msra.mxu0 %v3129
    %3333 = vmatprep.subr.mxu0 0.0
    %3334 = vmatpush2.msra.mxu0 %v3128
    %3335 = vmatprep.subr.mxu0 0.0
    %3336 = vmatpush2.msra.mxu0 %v3127
    %3337 = vmatprep.mubr.f32.mxu0 %v3062
    %3338 = vmatmul.mubr.f32.gmra.mxu0 %v3061
    %v3339 = vpop.f32.mrf.mxu0
    %v3340 = vadd.f32 %v3255, %v3339
    %v3341 = vpop.f32.mrf.mxu0
    %3342 = vmatprep.mubr.f32.mxu0 %v3067
    %3343 = vmatmul.mubr.f32.gmra.mxu0 %v3066
    %v3344 = vpop.f32.mrf.mxu0
    %v3345 = vadd.f32 %v3260, %v3344
    %v3346 = vpop.f32.mrf.mxu0
    %3347 = vmatprep.mubr.f32.mxu0 %v3072
    %3348 = vmatmul.mubr.f32.gmra.mxu0 %v3071
    %v3349 = vpop.f32.mrf.mxu0
    %v3350 = vadd.f32 %v3265, %v3349
    %v3351 = vpop.f32.mrf.mxu0
    %3352 = vmatprep.mubr.f32.mxu0 %v3077
    %3353 = vmatmul.mubr.f32.gmra.mxu0 %v3076
    %v3354 = vpop.f32.mrf.mxu0
    %v3355 = vadd.f32 %v3270, %v3354
    %v3356 = vpop.f32.mrf.mxu0
    %3357 = vdwg.mxu0
    %3358 = vmatprep.subr.mxu0 0.0
    %3359 = vmatpush1.msra.mxu0 0.0
    %3360 = vmatprep.subr.mxu0 0.0
    %3361 = vmatpush1.msra.mxu0 0.0
    %3362 = vmatprep.subr.mxu0 0.0
    %3363 = vmatpush1.msra.mxu0 0.0
    %3364 = vmatprep.subr.mxu0 0.0
    %3365 = vmatpush1.msra.mxu0 0.0
    %3366 = vmatprep.subr.mxu0 0.0
    %3367 = vmatpush1.msra.mxu0 0.0
    %3368 = vmatprep.subr.mxu0 0.0
    %3369 = vmatpush1.msra.mxu0 0.0
    %3370 = vmatprep.subr.mxu0 0.0
    %3371 = vmatpush1.msra.mxu0 0.0
    %3372 = vmatprep.subr.mxu0 0.0
    %3373 = vmatpush1.msra.mxu0 0.0
    %3374 = vmatprep.subr.mxu0 0.0
    %3375 = vmatpush1.msra.mxu0 %v3150
    %3376 = vmatprep.subr.mxu0 0.0
    %3377 = vmatpush1.msra.mxu0 %v3149
    %3378 = vmatprep.subr.mxu0 0.0
    %3379 = vmatpush1.msra.mxu0 %v3148
    %3380 = vmatprep.subr.mxu0 0.0
    %3381 = vmatpush1.msra.mxu0 %v3147
    %3382 = vmatprep.subr.mxu0 0.0
    %3383 = vmatpush1.msra.mxu0 %v3146
    %3384 = vmatprep.subr.mxu0 0.0
    %3385 = vmatpush1.msra.mxu0 %v3145
    %3386 = vmatprep.subr.mxu0 0.0
    %3387 = vmatpush1.msra.mxu0 %v3144
    %3388 = vmatprep.subr.mxu0 0.0
    %3389 = vmatpush1.msra.mxu0 %v3143
    %3390 = vmatprep.subr.mxu0 0.0
    %3391 = vmatpush2.msra.mxu0 0.0
    %3392 = vmatprep.subr.mxu0 0.0
    %3393 = vmatpush2.msra.mxu0 0.0
    %3394 = vmatprep.subr.mxu0 0.0
    %3395 = vmatpush2.msra.mxu0 0.0
    %3396 = vmatprep.subr.mxu0 0.0
    %3397 = vmatpush2.msra.mxu0 0.0
    %3398 = vmatprep.subr.mxu0 0.0
    %3399 = vmatpush2.msra.mxu0 0.0
    %3400 = vmatprep.subr.mxu0 0.0
    %3401 = vmatpush2.msra.mxu0 0.0
    %3402 = vmatprep.subr.mxu0 0.0
    %3403 = vmatpush2.msra.mxu0 0.0
    %3404 = vmatprep.subr.mxu0 0.0
    %3405 = vmatpush2.msra.mxu0 0.0
    %3406 = vmatprep.subr.mxu0 0.0
    %3407 = vmatpush2.msra.mxu0 0.0
    %3408 = vmatprep.subr.mxu0 0.0
    %3409 = vmatpush2.msra.mxu0 0.0
    %3410 = vmatprep.subr.mxu0 0.0
    %3411 = vmatpush2.msra.mxu0 0.0
    %3412 = vmatprep.subr.mxu0 0.0
    %3413 = vmatpush2.msra.mxu0 0.0
    %3414 = vmatprep.subr.mxu0 0.0
    %3415 = vmatpush2.msra.mxu0 0.0
    %3416 = vmatprep.subr.mxu0 0.0
    %3417 = vmatpush2.msra.mxu0 0.0
    %3418 = vmatprep.subr.mxu0 0.0
    %3419 = vmatpush2.msra.mxu0 0.0
    %3420 = vmatprep.subr.mxu0 0.0
    %3421 = vmatpush2.msra.mxu0 0.0
    %3422 = vmatprep.mubr.f32.mxu0 0.0
    %3423 = vmatmul.mubr.f32.gmra.mxu0 %v3177
    %v3424 = vpop.f32.mrf.mxu0
    %v3425 = vadd.f32 %v3340, %v3424
    %v3426 = vpop.f32.mrf.mxu0
    %3427 = vmatprep.mubr.f32.mxu0 0.0
    %3428 = vmatmul.mubr.f32.gmra.mxu0 %v3180
    %v3429 = vpop.f32.mrf.mxu0
    %v3430 = vadd.f32 %v3345, %v3429
    %v3431 = vpop.f32.mrf.mxu0
    %3432 = vmatprep.mubr.f32.mxu0 0.0
    %3433 = vmatmul.mubr.f32.gmra.mxu0 %v3183
    %v3434 = vpop.f32.mrf.mxu0
    %v3435 = vadd.f32 %v3350, %v3434
    %v3436 = vpop.f32.mrf.mxu0
    %3437 = vmatprep.mubr.f32.mxu0 0.0
    %3438 = vmatmul.mubr.f32.gmra.mxu0 %v3186
    %v3439 = vpop.f32.mrf.mxu0
    %v3440 = vadd.f32 %v3355, %v3439
    %v3441 = vpop.f32.mrf.mxu0
    %3442 = vdwg.mxu0
    %v3443 = vld [vmem:[%s13] sm:$0xff]
    %v3444 = vld [vmem:[%s13 + $0x8] sm:$0xff]
    %v3445 = vld [vmem:[%s13 + $0x10] sm:$0xff]
    %v3446 = vld [vmem:[%s13 + $0x18] sm:$0xff]
    %v3447 = vld [vmem:[%s13 + $0x20] sm:$0xff]
    %v3448 = vld [vmem:[%s13 + $0x28] sm:$0xff]
    %v3449 = vld [vmem:[%s13 + $0x30] sm:$0xff]
    %v3450 = vld [vmem:[%s13 + $0x38] sm:$0xff]
    %v3451 = vld [vmem:[%s13 + $0x40] sm:$0xff]
    %v3452 = vld [vmem:[%s13 + $0x48] sm:$0xff]
    %v3453 = vld [vmem:[%s13 + $0x50] sm:$0xff]
    %v3454 = vld [vmem:[%s13 + $0x58] sm:$0xff]
    %v3455 = vld [vmem:[%s13 + $0x60] sm:$0xff]
    %v3456 = vld [vmem:[%s13 + $0x68] sm:$0xff]
    %v3457 = vld [vmem:[%s13 + $0x70] sm:$0xff]
    %v3458 = vld [vmem:[%s13 + $0x78] sm:$0xff]
    %v3459 = vld [vmem:[%s13 + $0x80] sm:$0xff]
    %v3460 = vld [vmem:[%s13 + $0x88] sm:$0xff]
    %v3461 = vld [vmem:[%s13 + $0x90] sm:$0xff]
    %v3462 = vld [vmem:[%s13 + $0x98] sm:$0xff]
    %v3463 = vld [vmem:[%s13 + $0xa0] sm:$0xff]
    %v3464 = vld [vmem:[%s13 + $0xa8] sm:$0xff]
    %v3465 = vld [vmem:[%s13 + $0xb0] sm:$0xff]
    %v3466 = vld [vmem:[%s13 + $0xb8] sm:$0xff]
    %v3467 = vld [vmem:[%s13 + $0xc0] sm:$0xff]
    %v3468 = vld [vmem:[%s13 + $0xc8] sm:$0xff]
    %v3469 = vld [vmem:[%s13 + $0xd0] sm:$0xff]
    %v3470 = vld [vmem:[%s13 + $0xd8] sm:$0x3f]
    %v3471 = vld [vmem:[%s13 + $0xe0] sm:$0x3f]
    %v3472 = vld [vmem:[%s13 + $0xe8] sm:$0x3f]
    %v3474 = vsel %vm2786, %v3425, 0
    %v3477 = vsel %vm2786, %v3430, 0
    %v3480 = vsel %vm2786, %v3435, 0
    %v3483 = vsel %vm2786, %v3440, 0
    %v3486 = vsel %vm2677, %v3470, 0
    %v3489 = vsel %vm2677, %v3471, 0
    %v3492 = vsel %vm2677, %v3472, 0
    %3494 = vmatprep.subr.mxu0 0.0
    %3495 = vmatpush1.msra.mxu0 0.0
    %3496 = vmatprep.subr.mxu0 0.0
    %3497 = vmatpush1.msra.mxu0 0.0
    %3498 = vmatprep.subr.mxu0 0.0
    %3499 = vmatpush1.msra.mxu0 0.0
    %3500 = vmatprep.subr.mxu0 0.0
    %3501 = vmatpush1.msra.mxu0 0.0
    %3502 = vmatprep.subr.mxu0 0.0
    %3503 = vmatpush1.msra.mxu0 0.0
    %3504 = vmatprep.subr.mxu0 0.0
    %3505 = vmatpush1.msra.mxu0 0.0
    %3506 = vmatprep.subr.mxu0 %v3489
    %3507 = vmatpush1.msra.mxu0 %v3486
    %3508 = vmatprep.subr.mxu0 %v3468
    %3509 = vmatpush1.msra.mxu0 %v3467
    %3510 = vmatprep.subr.mxu0 %v3465
    %3511 = vmatpush1.msra.mxu0 %v3464
    %3512 = vmatprep.subr.mxu0 %v3462
    %3513 = vmatpush1.msra.mxu0 %v3461
    %3514 = vmatprep.subr.mxu0 %v3459
    %3515 = vmatpush1.msra.mxu0 %v3458
    %3516 = vmatprep.subr.mxu0 %v3456
    %3517 = vmatpush1.msra.mxu0 %v3455
    %3518 = vmatprep.subr.mxu0 %v3453
    %3519 = vmatpush1.msra.mxu0 %v3452
    %3520 = vmatprep.subr.mxu0 %v3450
    %3521 = vmatpush1.msra.mxu0 %v3449
    %3522 = vmatprep.subr.mxu0 %v3447
    %3523 = vmatpush1.msra.mxu0 %v3446
    %3524 = vmatprep.subr.mxu0 %v3444
    %3525 = vmatpush1.msra.mxu0 %v3443
    %3526 = vmatprep.subr.mxu0 0.0
    %3527 = vmatpush2.msra.mxu0 0.0
    %3528 = vmatprep.subr.mxu0 0.0
    %3529 = vmatpush2.msra.mxu0 0.0
    %3530 = vmatprep.subr.mxu0 0.0
    %3531 = vmatpush2.msra.mxu0 0.0
    %3532 = vmatprep.subr.mxu0 0.0
    %3533 = vmatpush2.msra.mxu0 0.0
    %3534 = vmatprep.subr.mxu0 0.0
    %3535 = vmatpush2.msra.mxu0 0.0
    %3536 = vmatprep.subr.mxu0 0.0
    %3537 = vmatpush2.msra.mxu0 0.0
    %3538 = vmatprep.subr.mxu0 0.0
    %3539 = vmatpush2.msra.mxu0 0.0
    %3540 = vmatprep.subr.mxu0 0.0
    %3541 = vmatpush2.msra.mxu0 0.0
    %3542 = vmatprep.subr.mxu0 0.0
    %3543 = vmatpush2.msra.mxu0 0.0
    %3544 = vmatprep.subr.mxu0 0.0
    %3545 = vmatpush2.msra.mxu0 0.0
    %3546 = vmatprep.subr.mxu0 0.0
    %3547 = vmatpush2.msra.mxu0 0.0
    %3548 = vmatprep.subr.mxu0 0.0
    %3549 = vmatpush2.msra.mxu0 0.0
    %3550 = vmatprep.subr.mxu0 0.0
    %3551 = vmatpush2.msra.mxu0 0.0
    %3552 = vmatprep.subr.mxu0 0.0
    %3553 = vmatpush2.msra.mxu0 0.0
    %3554 = vmatprep.subr.mxu0 0.0
    %3555 = vmatpush2.msra.mxu0 0.0
    %3556 = vmatprep.subr.mxu0 0.0
    %3557 = vmatpush2.msra.mxu0 0.0
    %3558 = vmatprep.mubr.f32.mxu0 0.0
    %3559 = vmatmul.mubr.f32.gmra.mxu0 %v3474
    %v3560 = vpop.f32.mrf.mxu0
    %v3561 = vadd.f32 0.0, %v3560
    %v3562 = vpop.f32.mrf.mxu0
    %v3563 = vadd.f32 0.0, %v3562
    %3564 = vmatprep.mubr.f32.mxu0 0.0
    %3565 = vmatmul.mubr.f32.gmra.mxu0 %v3477
    %v3566 = vpop.f32.mrf.mxu0
    %v3567 = vadd.f32 0.0, %v3566
    %v3568 = vpop.f32.mrf.mxu0
    %v3569 = vadd.f32 0.0, %v3568
    %3570 = vmatprep.mubr.f32.mxu0 0.0
    %3571 = vmatmul.mubr.f32.gmra.mxu0 %v3480
    %v3572 = vpop.f32.mrf.mxu0
    %v3573 = vadd.f32 0.0, %v3572
    %v3574 = vpop.f32.mrf.mxu0
    %v3575 = vadd.f32 0.0, %v3574
    %3576 = vmatprep.mubr.f32.mxu0 0.0
    %3577 = vmatmul.mubr.f32.gmra.mxu0 %v3483
    %v3578 = vpop.f32.mrf.mxu0
    %v3579 = vadd.f32 0.0, %v3578
    %v3580 = vpop.f32.mrf.mxu0
    %v3581 = vadd.f32 0.0, %v3580
    %3582 = vdwg.mxu0
    %3583 = vmatprep.subr.mxu0 0.0
    %3584 = vmatpush1.msra.mxu0 0.0
    %3585 = vmatprep.subr.mxu0 0.0
    %3586 = vmatpush1.msra.mxu0 0.0
    %3587 = vmatprep.subr.mxu0 0.0
    %3588 = vmatpush1.msra.mxu0 0.0
    %3589 = vmatprep.subr.mxu0 0.0
    %3590 = vmatpush1.msra.mxu0 0.0
    %3591 = vmatprep.subr.mxu0 0.0
    %3592 = vmatpush1.msra.mxu0 0.0
    %3593 = vmatprep.subr.mxu0 0.0
    %3594 = vmatpush1.msra.mxu0 0.0
    %3595 = vmatprep.subr.mxu0 0.0
    %3596 = vmatpush1.msra.mxu0 %v3492
    %3597 = vmatprep.subr.mxu0 0.0
    %3598 = vmatpush1.msra.mxu0 %v3469
    %3599 = vmatprep.subr.mxu0 0.0
    %3600 = vmatpush1.msra.mxu0 %v3466
    %3601 = vmatprep.subr.mxu0 0.0
    %3602 = vmatpush1.msra.mxu0 %v3463
    %3603 = vmatprep.subr.mxu0 0.0
    %3604 = vmatpush1.msra.mxu0 %v3460
    %3605 = vmatprep.subr.mxu0 0.0
    %3606 = vmatpush1.msra.mxu0 %v3457
    %3607 = vmatprep.subr.mxu0 0.0
    %3608 = vmatpush1.msra.mxu0 %v3454
    %3609 = vmatprep.subr.mxu0 0.0
    %3610 = vmatpush1.msra.mxu0 %v3451
    %3611 = vmatprep.subr.mxu0 0.0
    %3612 = vmatpush1.msra.mxu0 %v3448
    %3613 = vmatprep.subr.mxu0 0.0
    %3614 = vmatpush1.msra.mxu0 %v3445
    %3615 = vmatprep.subr.mxu0 0.0
    %3616 = vmatpush2.msra.mxu0 0.0
    %3617 = vmatprep.subr.mxu0 0.0
    %3618 = vmatpush2.msra.mxu0 0.0
    %3619 = vmatprep.subr.mxu0 0.0
    %3620 = vmatpush2.msra.mxu0 0.0
    %3621 = vmatprep.subr.mxu0 0.0
    %3622 = vmatpush2.msra.mxu0 0.0
    %3623 = vmatprep.subr.mxu0 0.0
    %3624 = vmatpush2.msra.mxu0 0.0
    %3625 = vmatprep.subr.mxu0 0.0
    %3626 = vmatpush2.msra.mxu0 0.0
    %3627 = vmatprep.subr.mxu0 0.0
    %3628 = vmatpush2.msra.mxu0 0.0
    %3629 = vmatprep.subr.mxu0 0.0
    %3630 = vmatpush2.msra.mxu0 0.0
    %3631 = vmatprep.subr.mxu0 0.0
    %3632 = vmatpush2.msra.mxu0 0.0
    %3633 = vmatprep.subr.mxu0 0.0
    %3634 = vmatpush2.msra.mxu0 0.0
    %3635 = vmatprep.subr.mxu0 0.0
    %3636 = vmatpush2.msra.mxu0 0.0
    %3637 = vmatprep.subr.mxu0 0.0
    %3638 = vmatpush2.msra.mxu0 0.0
    %3639 = vmatprep.subr.mxu0 0.0
    %3640 = vmatpush2.msra.mxu0 0.0
    %3641 = vmatprep.subr.mxu0 0.0
    %3642 = vmatpush2.msra.mxu0 0.0
    %3643 = vmatprep.subr.mxu0 0.0
    %3644 = vmatpush2.msra.mxu0 0.0
    %3645 = vmatprep.subr.mxu0 0.0
    %3646 = vmatpush2.msra.mxu0 0.0
    %3647 = vmatprep.mubr.f32.mxu0 0.0
    %3648 = vmatmul.mubr.f32.gmra.mxu0 %v3474
    %v3649 = vpop.f32.mrf.mxu0
    %v3650 = vadd.f32 0.0, %v3649
    %v3651 = vpop.f32.mrf.mxu0
    %3652 = vmatprep.mubr.f32.mxu0 0.0
    %3653 = vmatmul.mubr.f32.gmra.mxu0 %v3477
    %v3654 = vpop.f32.mrf.mxu0
    %v3655 = vadd.f32 0.0, %v3654
    %v3656 = vpop.f32.mrf.mxu0
    %3657 = vmatprep.mubr.f32.mxu0 0.0
    %3658 = vmatmul.mubr.f32.gmra.mxu0 %v3480
    %v3659 = vpop.f32.mrf.mxu0
    %v3660 = vadd.f32 0.0, %v3659
    %v3661 = vpop.f32.mrf.mxu0
    %3662 = vmatprep.mubr.f32.mxu0 0.0
    %3663 = vmatmul.mubr.f32.gmra.mxu0 %v3483
    %v3664 = vpop.f32.mrf.mxu0
    %v3665 = vadd.f32 0.0, %v3664
    %v3666 = vpop.f32.mrf.mxu0
    %3667 = vdwg.mxu0
    %v3668 = vadd.f32 %v504, %v3561
    %v3669 = vadd.f32 %v505, %v3563
    %v3670 = vadd.f32 %v506, %v3650
    %v3671 = vadd.f32 %v507, %v3567
    %v3672 = vadd.f32 %v508, %v3569
    %v3673 = vadd.f32 %v509, %v3655
    %v3674 = vadd.f32 %v510, %v3573
    %v3675 = vadd.f32 %v511, %v3575
    %v3676 = vadd.f32 %v512, %v3660
    %v3677 = vadd.f32 %v513, %v3579
    %v3678 = vadd.f32 %v514, %v3581
    %v3679 = vadd.f32 %v515, %v3665
    %v3680 = vld [vmem:[%s14] sm:$0xff]
    %v3681 = vld [vmem:[%s14 + $0x8] sm:$0xff]
    %v3682 = vld [vmem:[%s14 + $0x10] sm:$0xff]
    %v3683 = vld [vmem:[%s14 + $0x18] sm:$0xff]
    %v3684 = vld [vmem:[%s14 + $0x20] sm:$0xff]
    %v3685 = vld [vmem:[%s14 + $0x28] sm:$0xff]
    %v3686 = vld [vmem:[%s14 + $0x30] sm:$0xff]
    %v3687 = vld [vmem:[%s14 + $0x38] sm:$0xff]
    %v3688 = vld [vmem:[%s14 + $0x40] sm:$0xff]
    %v3689 = vld [vmem:[%s14 + $0x48] sm:$0xff]
    %v3690 = vld [vmem:[%s14 + $0x50] sm:$0xff]
    %v3691 = vld [vmem:[%s14 + $0x58] sm:$0xff]
    %v3692 = vld [vmem:[%s14 + $0x60] sm:$0xff]
    %v3693 = vld [vmem:[%s14 + $0x68] sm:$0xff]
    %v3694 = vld [vmem:[%s14 + $0x70] sm:$0xff]
    %v3695 = vld [vmem:[%s14 + $0x78] sm:$0xff]
    %v3696 = vld [vmem:[%s14 + $0x80] sm:$0xff]
    %v3697 = vld [vmem:[%s14 + $0x88] sm:$0xff]
    %v3698 = vld [vmem:[%s14 + $0x90] sm:$0xff]
    %v3699 = vld [vmem:[%s14 + $0x98] sm:$0xff]
    %v3700 = vld [vmem:[%s14 + $0xa0] sm:$0xff]
    %v3701 = vld [vmem:[%s14 + $0xa8] sm:$0xff]
    %v3702 = vld [vmem:[%s14 + $0xb0] sm:$0xff]
    %v3703 = vld [vmem:[%s14 + $0xb8] sm:$0xff]
    %v3704 = vld [vmem:[%s14 + $0xc0] sm:$0xff]
    %v3705 = vld [vmem:[%s14 + $0xc8] sm:$0xff]
    %v3706 = vld [vmem:[%s14 + $0xd0] sm:$0xff]
    %v3707 = vld [vmem:[%s14 + $0xd8] sm:$0xff]
    %v3708 = vld [vmem:[%s14 + $0xe0] sm:$0xff]
    %v3709 = vld [vmem:[%s14 + $0xe8] sm:$0xff]
    %v3710 = vld [vmem:[%s14 + $0xf0] sm:$0xff]
    %v3711 = vld [vmem:[%s14 + $0xf8] sm:$0xff]
    %v3712 = vld [vmem:[%s14 + $0x100] sm:$0xff]
    %v3713 = vld [vmem:[%s14 + $0x108] sm:$0xff]
    %v3714 = vld [vmem:[%s14 + $0x110] sm:$0xff]
    %v3715 = vld [vmem:[%s14 + $0x118] sm:$0xff]
    %v3716 = vld [vmem:[%s14 + $0x120] sm:$0xff]
    %v3717 = vld [vmem:[%s14 + $0x128] sm:$0xff]
    %v3718 = vld [vmem:[%s14 + $0x130] sm:$0xff]
    %v3719 = vld [vmem:[%s14 + $0x138] sm:$0xff]
    %v3720 = vld [vmem:[%s14 + $0x140] sm:$0xff]
    %v3721 = vld [vmem:[%s14 + $0x148] sm:$0xff]
    %v3722 = vld [vmem:[%s14 + $0x150] sm:$0xff]
    %v3723 = vld [vmem:[%s14 + $0x158] sm:$0xff]
    %v3724 = vld [vmem:[%s14 + $0x160] sm:$0xff]
    %v3725 = vld [vmem:[%s14 + $0x168] sm:$0xff]
    %v3726 = vld [vmem:[%s14 + $0x170] sm:$0xff]
    %v3727 = vld [vmem:[%s14 + $0x178] sm:$0xff]
    %v3728 = vld [vmem:[%s14 + $0x180] sm:$0xff]
    %v3729 = vld [vmem:[%s14 + $0x188] sm:$0xff]
    %v3730 = vld [vmem:[%s14 + $0x190] sm:$0xff]
    %v3731 = vld [vmem:[%s14 + $0x198] sm:$0xff]
    %v3732 = vld [vmem:[%s14 + $0x1a0] sm:$0xff]
    %v3733 = vld [vmem:[%s14 + $0x1a8] sm:$0xff]
    %v3734 = vld [vmem:[%s14 + $0x1b0] sm:$0xff]
    %v3735 = vld [vmem:[%s14 + $0x1b8] sm:$0xff]
    %v3736 = vld [vmem:[%s14 + $0x1c0] sm:$0xff]
    %v3737 = vld [vmem:[%s14 + $0x1c8] sm:$0xff]
    %v3738 = vld [vmem:[%s14 + $0x1d0] sm:$0xff]
    %v3739 = vld [vmem:[%s14 + $0x1d8] sm:$0xff]
    %v3740 = vld [vmem:[%s14 + $0x1e0] sm:$0xff]
    %v3741 = vld [vmem:[%s14 + $0x1e8] sm:$0xff]
    %v3742 = vld [vmem:[%s14 + $0x1f0] sm:$0xff]
    %v3743 = vld [vmem:[%s14 + $0x1f8] sm:$0xff]
    %v3744 = vld [vmem:[%s14 + $0x200] sm:$0xff]
    %v3745 = vld [vmem:[%s14 + $0x208] sm:$0xff]
    %v3746 = vld [vmem:[%s14 + $0x210] sm:$0xff]
    %v3747 = vld [vmem:[%s14 + $0x218] sm:$0xff]
    %v3748 = vld [vmem:[%s14 + $0x220] sm:$0xff]
    %v3749 = vld [vmem:[%s14 + $0x228] sm:$0xff]
    %v3750 = vld [vmem:[%s14 + $0x230] sm:$0xff]
    %v3751 = vld [vmem:[%s14 + $0x238] sm:$0xff]
    %v3752 = vld [vmem:[%s14 + $0x240] sm:$0xff]
    %v3753 = vld [vmem:[%s14 + $0x248] sm:$0xff]
    %v3754 = vld [vmem:[%s14 + $0x250] sm:$0xff]
    %v3755 = vld [vmem:[%s14 + $0x258] sm:$0xff]
    %v3756 = vld [vmem:[%s14 + $0x260] sm:$0xff]
    %v3757 = vld [vmem:[%s14 + $0x268] sm:$0xff]
    %v3758 = vld [vmem:[%s14 + $0x270] sm:$0xff]
    %v3759 = vld [vmem:[%s14 + $0x278] sm:$0xff]
    %v3760 = vld [vmem:[%s14 + $0x280] sm:$0xff]
    %v3761 = vld [vmem:[%s14 + $0x288] sm:$0xff]
    %v3762 = vld [vmem:[%s14 + $0x290] sm:$0xff]
    %v3763 = vld [vmem:[%s14 + $0x298] sm:$0xff]
    %v3764 = vld [vmem:[%s14 + $0x2a0] sm:$0xff]
    %v3765 = vld [vmem:[%s14 + $0x2a8] sm:$0xff]
    %v3766 = vld [vmem:[%s14 + $0x2b0] sm:$0xff]
    %v3767 = vld [vmem:[%s14 + $0x2b8] sm:$0xff]
    %v3768 = vld [vmem:[%s14 + $0x2c0] sm:$0xff]
    %v3769 = vld [vmem:[%s14 + $0x2c8] sm:$0xff]
    %v3770 = vld [vmem:[%s14 + $0x2d0] sm:$0xff]
    %v3771 = vld [vmem:[%s14 + $0x2d8] sm:$0xff]
    %v3772 = vld [vmem:[%s14 + $0x2e0] sm:$0xff]
    %v3773 = vld [vmem:[%s14 + $0x2e8] sm:$0xff]
    %v3774 = vld [vmem:[%s14 + $0x2f0] sm:$0xff]
    %v3775 = vld [vmem:[%s14 + $0x2f8] sm:$0xff]
    %v3776 = vld [vmem:[%s14 + $0x300] sm:$0xff]
    %v3777 = vld [vmem:[%s14 + $0x308] sm:$0xff]
    %v3778 = vld [vmem:[%s14 + $0x310] sm:$0xff]
    %v3779 = vld [vmem:[%s14 + $0x318] sm:$0xff]
    %v3780 = vld [vmem:[%s14 + $0x320] sm:$0xff]
    %v3781 = vld [vmem:[%s14 + $0x328] sm:$0xff]
    %v3782 = vld [vmem:[%s14 + $0x330] sm:$0xff]
    %v3783 = vld [vmem:[%s14 + $0x338] sm:$0xff]
    %v3784 = vld [vmem:[%s14 + $0x340] sm:$0xff]
    %v3785 = vld [vmem:[%s14 + $0x348] sm:$0xff]
    %v3786 = vld [vmem:[%s14 + $0x350] sm:$0xff]
    %v3787 = vld [vmem:[%s14 + $0x358] sm:$0xff]
    %v3788 = vld [vmem:[%s14 + $0x360] sm:$0xff]
    %v3789 = vld [vmem:[%s14 + $0x368] sm:$0xff]
    %v3790 = vld [vmem:[%s14 + $0x370] sm:$0xff]
    %v3791 = vld [vmem:[%s14 + $0x378] sm:$0xff]
    %v3792 = vld [vmem:[%s14 + $0x380] sm:$0xff]
    %v3793 = vld [vmem:[%s14 + $0x388] sm:$0xff]
    %v3794 = vld [vmem:[%s14 + $0x390] sm:$0xff]
    %v3795 = vld [vmem:[%s14 + $0x398] sm:$0xff]
    %v3796 = vld [vmem:[%s14 + $0x3a0] sm:$0xff]
    %v3797 = vld [vmem:[%s14 + $0x3a8] sm:$0xff]
    %v3798 = vld [vmem:[%s14 + $0x3b0] sm:$0xff]
    %v3799 = vld [vmem:[%s14 + $0x3b8] sm:$0xff]
    %v3800 = vld [vmem:[%s14 + $0x3c0] sm:$0xff]
    %v3801 = vld [vmem:[%s14 + $0x3c8] sm:$0xff]
    %v3802 = vld [vmem:[%s14 + $0x3d0] sm:$0xff]
    %v3803 = vld [vmem:[%s14 + $0x3d8] sm:$0xff]
    %v3804 = vld [vmem:[%s14 + $0x3e0] sm:$0xff]
    %v3805 = vld [vmem:[%s14 + $0x3e8] sm:$0xff]
    %v3806 = vld [vmem:[%s14 + $0x3f0] sm:$0xff]
    %v3807 = vld [vmem:[%s14 + $0x3f8] sm:$0xff]
    %v3808 = vld [vmem:[%s14 + $0x400] sm:$0xff]
    %v3809 = vld [vmem:[%s14 + $0x408] sm:$0xff]
    %v3810 = vld [vmem:[%s14 + $0x410] sm:$0xff]
    %v3811 = vld [vmem:[%s14 + $0x418] sm:$0xff]
    %v3812 = vld [vmem:[%s14 + $0x420] sm:$0xff]
    %v3813 = vld [vmem:[%s14 + $0x428] sm:$0xff]
    %v3814 = vld [vmem:[%s14 + $0x430] sm:$0xff]
    %v3815 = vld [vmem:[%s14 + $0x438] sm:$0xff]
    %v3816 = vld [vmem:[%s14 + $0x440] sm:$0xff]
    %v3817 = vld [vmem:[%s14 + $0x448] sm:$0xff]
    %v3818 = vld [vmem:[%s14 + $0x450] sm:$0xff]
    %v3819 = vld [vmem:[%s14 + $0x458] sm:$0xff]
    %v3820 = vld [vmem:[%s14 + $0x460] sm:$0x3f]
    %v3821 = vld [vmem:[%s14 + $0x468] sm:$0x3f]
    %v3822 = vld [vmem:[%s14 + $0x470] sm:$0x3f]
    %v3823 = vld [vmem:[%s14 + $0x478] sm:$0x3f]
    %vm3824 = vcmask 244736
    %v3826 = vsel %vm3824, %v3670, 0
    %v3829 = vsel %vm3824, %v3673, 0
    %v3832 = vsel %vm3824, %v3676, 0
    %v3835 = vsel %vm3824, %v3679, 0
    %v3838 = vsel %vm2677, %v3820, 0
    %v3841 = vsel %vm2677, %v3821, 0
    %v3844 = vsel %vm2677, %v3822, 0
    %v3847 = vsel %vm2677, %v3823, 0
    %3849 = vmatprep.subr.mxu0 %v3741
    %3850 = vmatpush1.msra.mxu0 %v3740
    %3851 = vmatprep.subr.mxu0 %v3737
    %3852 = vmatpush1.msra.mxu0 %v3736
    %3853 = vmatprep.subr.mxu0 %v3733
    %3854 = vmatpush1.msra.mxu0 %v3732
    %3855 = vmatprep.subr.mxu0 %v3729
    %3856 = vmatpush1.msra.mxu0 %v3728
    %3857 = vmatprep.subr.mxu0 %v3725
    %3858 = vmatpush1.msra.mxu0 %v3724
    %3859 = vmatprep.subr.mxu0 %v3721
    %3860 = vmatpush1.msra.mxu0 %v3720
    %3861 = vmatprep.subr.mxu0 %v3717
    %3862 = vmatpush1.msra.mxu0 %v3716
    %3863 = vmatprep.subr.mxu0 %v3713
    %3864 = vmatpush1.msra.mxu0 %v3712
    %3865 = vmatprep.subr.mxu0 %v3709
    %3866 = vmatpush1.msra.mxu0 %v3708
    %3867 = vmatprep.subr.mxu0 %v3705
    %3868 = vmatpush1.msra.mxu0 %v3704
    %3869 = vmatprep.subr.mxu0 %v3701
    %3870 = vmatpush1.msra.mxu0 %v3700
    %3871 = vmatprep.subr.mxu0 %v3697
    %3872 = vmatpush1.msra.mxu0 %v3696
    %3873 = vmatprep.subr.mxu0 %v3693
    %3874 = vmatpush1.msra.mxu0 %v3692
    %3875 = vmatprep.subr.mxu0 %v3689
    %3876 = vmatpush1.msra.mxu0 %v3688
    %3877 = vmatprep.subr.mxu0 %v3685
    %3878 = vmatpush1.msra.mxu0 %v3684
    %3879 = vmatprep.subr.mxu0 %v3681
    %3880 = vmatpush1.msra.mxu0 %v3680
    %3881 = vmatprep.subr.mxu0 %v3805
    %3882 = vmatpush2.msra.mxu0 %v3804
    %3883 = vmatprep.subr.mxu0 %v3801
    %3884 = vmatpush2.msra.mxu0 %v3800
    %3885 = vmatprep.subr.mxu0 %v3797
    %3886 = vmatpush2.msra.mxu0 %v3796
    %3887 = vmatprep.subr.mxu0 %v3793
    %3888 = vmatpush2.msra.mxu0 %v3792
    %3889 = vmatprep.subr.mxu0 %v3789
    %3890 = vmatpush2.msra.mxu0 %v3788
    %3891 = vmatprep.subr.mxu0 %v3785
    %3892 = vmatpush2.msra.mxu0 %v3784
    %3893 = vmatprep.subr.mxu0 %v3781
    %3894 = vmatpush2.msra.mxu0 %v3780
    %3895 = vmatprep.subr.mxu0 %v3777
    %3896 = vmatpush2.msra.mxu0 %v3776
    %3897 = vmatprep.subr.mxu0 %v3773
    %3898 = vmatpush2.msra.mxu0 %v3772
    %3899 = vmatprep.subr.mxu0 %v3769
    %3900 = vmatpush2.msra.mxu0 %v3768
    %3901 = vmatprep.subr.mxu0 %v3765
    %3902 = vmatpush2.msra.mxu0 %v3764
    %3903 = vmatprep.subr.mxu0 %v3761
    %3904 = vmatpush2.msra.mxu0 %v3760
    %3905 = vmatprep.subr.mxu0 %v3757
    %3906 = vmatpush2.msra.mxu0 %v3756
    %3907 = vmatprep.subr.mxu0 %v3753
    %3908 = vmatpush2.msra.mxu0 %v3752
    %3909 = vmatprep.subr.mxu0 %v3749
    %3910 = vmatpush2.msra.mxu0 %v3748
    %3911 = vmatprep.subr.mxu0 %v3745
    %3912 = vmatpush2.msra.mxu0 %v3744
    %3913 = vmatprep.mubr.f32.mxu0 %v3669
    %3914 = vmatmul.mubr.f32.gmra.mxu0 %v3668
    %v3915 = vpop.f32.mrf.mxu0
    %v3916 = vadd.f32 0.0, %v3915
    %v3917 = vpop.f32.mrf.mxu0
    %v3918 = vadd.f32 0.0, %v3917
    %3919 = vmatprep.mubr.f32.mxu0 %v3672
    %3920 = vmatmul.mubr.f32.gmra.mxu0 %v3671
    %v3921 = vpop.f32.mrf.mxu0
    %v3922 = vadd.f32 0.0, %v3921
    %v3923 = vpop.f32.mrf.mxu0
    %v3924 = vadd.f32 0.0, %v3923
    %3925 = vmatprep.mubr.f32.mxu0 %v3675
    %3926 = vmatmul.mubr.f32.gmra.mxu0 %v3674
    %v3927 = vpop.f32.mrf.mxu0
    %v3928 = vadd.f32 0.0, %v3927
    %v3929 = vpop.f32.mrf.mxu0
    %v3930 = vadd.f32 0.0, %v3929
    %3931 = vmatprep.mubr.f32.mxu0 %v3678
    %3932 = vmatmul.mubr.f32.gmra.mxu0 %v3677
    %v3933 = vpop.f32.mrf.mxu0
    %v3934 = vadd.f32 0.0, %v3933
    %v3935 = vpop.f32.mrf.mxu0
    %v3936 = vadd.f32 0.0, %v3935
    %3937 = vdwg.mxu0
    %3938 = vmatprep.subr.mxu0 0.0
    %3939 = vmatpush1.msra.mxu0 0.0
    %3940 = vmatprep.subr.mxu0 0.0
    %3941 = vmatpush1.msra.mxu0 0.0
    %3942 = vmatprep.subr.mxu0 0.0
    %3943 = vmatpush1.msra.mxu0 0.0
    %3944 = vmatprep.subr.mxu0 0.0
    %3945 = vmatpush1.msra.mxu0 0.0
    %3946 = vmatprep.subr.mxu0 0.0
    %3947 = vmatpush1.msra.mxu0 0.0
    %3948 = vmatprep.subr.mxu0 0.0
    %3949 = vmatpush1.msra.mxu0 0.0
    %3950 = vmatprep.subr.mxu0 0.0
    %3951 = vmatpush1.msra.mxu0 0.0
    %3952 = vmatprep.subr.mxu0 0.0
    %3953 = vmatpush1.msra.mxu0 0.0
    %3954 = vmatprep.subr.mxu0 0.0
    %3955 = vmatpush1.msra.mxu0 0.0
    %3956 = vmatprep.subr.mxu0 0.0
    %3957 = vmatpush1.msra.mxu0 0.0
    %3958 = vmatprep.subr.mxu0 0.0
    %3959 = vmatpush1.msra.mxu0 0.0
    %3960 = vmatprep.subr.mxu0 0.0
    %3961 = vmatpush1.msra.mxu0 0.0
    %3962 = vmatprep.subr.mxu0 %v3841
    %3963 = vmatpush1.msra.mxu0 %v3838
    %3964 = vmatprep.subr.mxu0 %v3817
    %3965 = vmatpush1.msra.mxu0 %v3816
    %3966 = vmatprep.subr.mxu0 %v3813
    %3967 = vmatpush1.msra.mxu0 %v3812
    %3968 = vmatprep.subr.mxu0 %v3809
    %3969 = vmatpush1.msra.mxu0 %v3808
    %3970 = vmatprep.subr.mxu0 0.0
    %3971 = vmatpush2.msra.mxu0 0.0
    %3972 = vmatprep.subr.mxu0 0.0
    %3973 = vmatpush2.msra.mxu0 0.0
    %3974 = vmatprep.subr.mxu0 0.0
    %3975 = vmatpush2.msra.mxu0 0.0
    %3976 = vmatprep.subr.mxu0 0.0
    %3977 = vmatpush2.msra.mxu0 0.0
    %3978 = vmatprep.subr.mxu0 0.0
    %3979 = vmatpush2.msra.mxu0 0.0
    %3980 = vmatprep.subr.mxu0 0.0
    %3981 = vmatpush2.msra.mxu0 0.0
    %3982 = vmatprep.subr.mxu0 0.0
    %3983 = vmatpush2.msra.mxu0 0.0
    %3984 = vmatprep.subr.mxu0 0.0
    %3985 = vmatpush2.msra.mxu0 0.0
    %3986 = vmatprep.subr.mxu0 0.0
    %3987 = vmatpush2.msra.mxu0 0.0
    %3988 = vmatprep.subr.mxu0 0.0
    %3989 = vmatpush2.msra.mxu0 0.0
    %3990 = vmatprep.subr.mxu0 0.0
    %3991 = vmatpush2.msra.mxu0 0.0
    %3992 = vmatprep.subr.mxu0 0.0
    %3993 = vmatpush2.msra.mxu0 0.0
    %3994 = vmatprep.subr.mxu0 0.0
    %3995 = vmatpush2.msra.mxu0 0.0
    %3996 = vmatprep.subr.mxu0 0.0
    %3997 = vmatpush2.msra.mxu0 0.0
    %3998 = vmatprep.subr.mxu0 0.0
    %3999 = vmatpush2.msra.mxu0 0.0
    %4000 = vmatprep.subr.mxu0 0.0
    %4001 = vmatpush2.msra.mxu0 0.0
    %4002 = vmatprep.mubr.f32.mxu0 0.0
    %4003 = vmatmul.mubr.f32.gmra.mxu0 %v3826
    %v4004 = vpop.f32.mrf.mxu0
    %v4005 = vadd.f32 %v3916, %v4004
    %v4006 = vpop.f32.mrf.mxu0
    %v4007 = vadd.f32 %v3918, %v4006
    %4008 = vmatprep.mubr.f32.mxu0 0.0
    %4009 = vmatmul.mubr.f32.gmra.mxu0 %v3829
    %v4010 = vpop.f32.mrf.mxu0
    %v4011 = vadd.f32 %v3922, %v4010
    %v4012 = vpop.f32.mrf.mxu0
    %v4013 = vadd.f32 %v3924, %v4012
    %4014 = vmatprep.mubr.f32.mxu0 0.0
    %4015 = vmatmul.mubr.f32.gmra.mxu0 %v3832
    %v4016 = vpop.f32.mrf.mxu0
    %v4017 = vadd.f32 %v3928, %v4016
    %v4018 = vpop.f32.mrf.mxu0
    %v4019 = vadd.f32 %v3930, %v4018
    %4020 = vmatprep.mubr.f32.mxu0 0.0
    %4021 = vmatmul.mubr.f32.gmra.mxu0 %v3835
    %v4022 = vpop.f32.mrf.mxu0
    %v4023 = vadd.f32 %v3934, %v4022
    %v4024 = vpop.f32.mrf.mxu0
    %v4025 = vadd.f32 %v3936, %v4024
    %4026 = vdwg.mxu0
    %4027 = vmatprep.subr.mxu0 %v3743
    %4028 = vmatpush1.msra.mxu0 %v3742
    %4029 = vmatprep.subr.mxu0 %v3739
    %4030 = vmatpush1.msra.mxu0 %v3738
    %4031 = vmatprep.subr.mxu0 %v3735
    %4032 = vmatpush1.msra.mxu0 %v3734
    %4033 = vmatprep.subr.mxu0 %v3731
    %4034 = vmatpush1.msra.mxu0 %v3730
    %4035 = vmatprep.subr.mxu0 %v3727
    %4036 = vmatpush1.msra.mxu0 %v3726
    %4037 = vmatprep.subr.mxu0 %v3723
    %4038 = vmatpush1.msra.mxu0 %v3722
    %4039 = vmatprep.subr.mxu0 %v3719
    %4040 = vmatpush1.msra.mxu0 %v3718
    %4041 = vmatprep.subr.mxu0 %v3715
    %4042 = vmatpush1.msra.mxu0 %v3714
    %4043 = vmatprep.subr.mxu0 %v3711
    %4044 = vmatpush1.msra.mxu0 %v3710
    %4045 = vmatprep.subr.mxu0 %v3707
    %4046 = vmatpush1.msra.mxu0 %v3706
    %4047 = vmatprep.subr.mxu0 %v3703
    %4048 = vmatpush1.msra.mxu0 %v3702
    %4049 = vmatprep.subr.mxu0 %v3699
    %4050 = vmatpush1.msra.mxu0 %v3698
    %4051 = vmatprep.subr.mxu0 %v3695
    %4052 = vmatpush1.msra.mxu0 %v3694
    %4053 = vmatprep.subr.mxu0 %v3691
    %4054 = vmatpush1.msra.mxu0 %v3690
    %4055 = vmatprep.subr.mxu0 %v3687
    %4056 = vmatpush1.msra.mxu0 %v3686
    %4057 = vmatprep.subr.mxu0 %v3683
    %4058 = vmatpush1.msra.mxu0 %v3682
    %4059 = vmatprep.subr.mxu0 %v3807
    %4060 = vmatpush2.msra.mxu0 %v3806
    %4061 = vmatprep.subr.mxu0 %v3803
    %4062 = vmatpush2.msra.mxu0 %v3802
    %4063 = vmatprep.subr.mxu0 %v3799
    %4064 = vmatpush2.msra.mxu0 %v3798
    %4065 = vmatprep.subr.mxu0 %v3795
    %4066 = vmatpush2.msra.mxu0 %v3794
    %4067 = vmatprep.subr.mxu0 %v3791
    %4068 = vmatpush2.msra.mxu0 %v3790
    %4069 = vmatprep.subr.mxu0 %v3787
    %4070 = vmatpush2.msra.mxu0 %v3786
    %4071 = vmatprep.subr.mxu0 %v3783
    %4072 = vmatpush2.msra.mxu0 %v3782
    %4073 = vmatprep.subr.mxu0 %v3779
    %4074 = vmatpush2.msra.mxu0 %v3778
    %4075 = vmatprep.subr.mxu0 %v3775
    %4076 = vmatpush2.msra.mxu0 %v3774
    %4077 = vmatprep.subr.mxu0 %v3771
    %4078 = vmatpush2.msra.mxu0 %v3770
    %4079 = vmatprep.subr.mxu0 %v3767
    %4080 = vmatpush2.msra.mxu0 %v3766
    %4081 = vmatprep.subr.mxu0 %v3763
    %4082 = vmatpush2.msra.mxu0 %v3762
    %4083 = vmatprep.subr.mxu0 %v3759
    %4084 = vmatpush2.msra.mxu0 %v3758
    %4085 = vmatprep.subr.mxu0 %v3755
    %4086 = vmatpush2.msra.mxu0 %v3754
    %4087 = vmatprep.subr.mxu0 %v3751
    %4088 = vmatpush2.msra.mxu0 %v3750
    %4089 = vmatprep.subr.mxu0 %v3747
    %4090 = vmatpush2.msra.mxu0 %v3746
    %4091 = vmatprep.mubr.f32.mxu0 %v3669
    %4092 = vmatmul.mubr.f32.gmra.mxu0 %v3668
    %v4093 = vpop.f32.mrf.mxu0
    %v4094 = vadd.f32 0.0, %v4093
    %v4095 = vpop.f32.mrf.mxu0
    %v4096 = vadd.f32 0.0, %v4095
    %4097 = vmatprep.mubr.f32.mxu0 %v3672
    %4098 = vmatmul.mubr.f32.gmra.mxu0 %v3671
    %v4099 = vpop.f32.mrf.mxu0
    %v4100 = vadd.f32 0.0, %v4099
    %v4101 = vpop.f32.mrf.mxu0
    %v4102 = vadd.f32 0.0, %v4101
    %4103 = vmatprep.mubr.f32.mxu0 %v3675
    %4104 = vmatmul.mubr.f32.gmra.mxu0 %v3674
    %v4105 = vpop.f32.mrf.mxu0
    %v4106 = vadd.f32 0.0, %v4105
    %v4107 = vpop.f32.mrf.mxu0
    %v4108 = vadd.f32 0.0, %v4107
    %4109 = vmatprep.mubr.f32.mxu0 %v3678
    %4110 = vmatmul.mubr.f32.gmra.mxu0 %v3677
    %v4111 = vpop.f32.mrf.mxu0
    %v4112 = vadd.f32 0.0, %v4111
    %v4113 = vpop.f32.mrf.mxu0
    %v4114 = vadd.f32 0.0, %v4113
    %4115 = vdwg.mxu0
    %4116 = vmatprep.subr.mxu0 0.0
    %4117 = vmatpush1.msra.mxu0 0.0
    %4118 = vmatprep.subr.mxu0 0.0
    %4119 = vmatpush1.msra.mxu0 0.0
    %4120 = vmatprep.subr.mxu0 0.0
    %4121 = vmatpush1.msra.mxu0 0.0
    %4122 = vmatprep.subr.mxu0 0.0
    %4123 = vmatpush1.msra.mxu0 0.0
    %4124 = vmatprep.subr.mxu0 0.0
    %4125 = vmatpush1.msra.mxu0 0.0
    %4126 = vmatprep.subr.mxu0 0.0
    %4127 = vmatpush1.msra.mxu0 0.0
    %4128 = vmatprep.subr.mxu0 0.0
    %4129 = vmatpush1.msra.mxu0 0.0
    %4130 = vmatprep.subr.mxu0 0.0
    %4131 = vmatpush1.msra.mxu0 0.0
    %4132 = vmatprep.subr.mxu0 0.0
    %4133 = vmatpush1.msra.mxu0 0.0
    %4134 = vmatprep.subr.mxu0 0.0
    %4135 = vmatpush1.msra.mxu0 0.0
    %4136 = vmatprep.subr.mxu0 0.0
    %4137 = vmatpush1.msra.mxu0 0.0
    %4138 = vmatprep.subr.mxu0 0.0
    %4139 = vmatpush1.msra.mxu0 0.0
    %4140 = vmatprep.subr.mxu0 %v3847
    %4141 = vmatpush1.msra.mxu0 %v3844
    %4142 = vmatprep.subr.mxu0 %v3819
    %4143 = vmatpush1.msra.mxu0 %v3818
    %4144 = vmatprep.subr.mxu0 %v3815
    %4145 = vmatpush1.msra.mxu0 %v3814
    %4146 = vmatprep.subr.mxu0 %v3811
    %4147 = vmatpush1.msra.mxu0 %v3810
    %4148 = vmatprep.subr.mxu0 0.0
    %4149 = vmatpush2.msra.mxu0 0.0
    %4150 = vmatprep.subr.mxu0 0.0
    %4151 = vmatpush2.msra.mxu0 0.0
    %4152 = vmatprep.subr.mxu0 0.0
    %4153 = vmatpush2.msra.mxu0 0.0
    %4154 = vmatprep.subr.mxu0 0.0
    %4155 = vmatpush2.msra.mxu0 0.0
    %4156 = vmatprep.subr.mxu0 0.0
    %4157 = vmatpush2.msra.mxu0 0.0
    %4158 = vmatprep.subr.mxu0 0.0
    %4159 = vmatpush2.msra.mxu0 0.0
    %4160 = vmatprep.subr.mxu0 0.0
    %4161 = vmatpush2.msra.mxu0 0.0
    %4162 = vmatprep.subr.mxu0 0.0
    %4163 = vmatpush2.msra.mxu0 0.0
    %4164 = vmatprep.subr.mxu0 0.0
    %4165 = vmatpush2.msra.mxu0 0.0
    %4166 = vmatprep.subr.mxu0 0.0
    %4167 = vmatpush2.msra.mxu0 0.0
    %4168 = vmatprep.subr.mxu0 0.0
    %4169 = vmatpush2.msra.mxu0 0.0
    %4170 = vmatprep.subr.mxu0 0.0
    %4171 = vmatpush2.msra.mxu0 0.0
    %4172 = vmatprep.subr.mxu0 0.0
    %4173 = vmatpush2.msra.mxu0 0.0
    %4174 = vmatprep.subr.mxu0 0.0
    %4175 = vmatpush2.msra.mxu0 0.0
    %4176 = vmatprep.subr.mxu0 0.0
    %4177 = vmatpush2.msra.mxu0 0.0
    %4178 = vmatprep.subr.mxu0 0.0
    %4179 = vmatpush2.msra.mxu0 0.0
    %4180 = vmatprep.mubr.f32.mxu0 0.0
    %4181 = vmatmul.mubr.f32.gmra.mxu0 %v3826
    %v4182 = vpop.f32.mrf.mxu0
    %v4183 = vadd.f32 %v4094, %v4182
    %v4184 = vpop.f32.mrf.mxu0
    %v4185 = vadd.f32 %v4096, %v4184
    %4186 = vmatprep.mubr.f32.mxu0 0.0
    %4187 = vmatmul.mubr.f32.gmra.mxu0 %v3829
    %v4188 = vpop.f32.mrf.mxu0
    %v4189 = vadd.f32 %v4100, %v4188
    %v4190 = vpop.f32.mrf.mxu0
    %v4191 = vadd.f32 %v4102, %v4190
    %4192 = vmatprep.mubr.f32.mxu0 0.0
    %4193 = vmatmul.mubr.f32.gmra.mxu0 %v3832
    %v4194 = vpop.f32.mrf.mxu0
    %v4195 = vadd.f32 %v4106, %v4194
    %v4196 = vpop.f32.mrf.mxu0
    %v4197 = vadd.f32 %v4108, %v4196
    %4198 = vmatprep.mubr.f32.mxu0 0.0
    %4199 = vmatmul.mubr.f32.gmra.mxu0 %v3835
    %v4200 = vpop.f32.mrf.mxu0
    %v4201 = vadd.f32 %v4112, %v4200
    %v4202 = vpop.f32.mrf.mxu0
    %v4203 = vadd.f32 %v4114, %v4202
    %4204 = vdwg.mxu0
    %4205 = vst [vmem:[#allocation5] sm:$0xff] %v4005
    %4206 = vst [vmem:[#allocation5 + $0x8] sm:$0xff] %v4007
    %vm4207 = vcmask 834560
    %4208 = vst.msk [vmem:[#allocation5 + $0x10] sm:$0xff] %vm4207, %v4183
    %4209 = vst [vmem:[#allocation5 + $0x18] sm:$0xff] %v4011
    %4210 = vst [vmem:[#allocation5 + $0x20] sm:$0xff] %v4013
    %4211 = vst.msk [vmem:[#allocation5 + $0x28] sm:$0xff] %vm4207, %v4189
    %4212 = vst [vmem:[#allocation5 + $0x30] sm:$0xff] %v4017
    %4213 = vst [vmem:[#allocation5 + $0x38] sm:$0xff] %v4019
    %4214 = vst.msk [vmem:[#allocation5 + $0x40] sm:$0xff] %vm4207, %v4195
    %4215 = vst [vmem:[#allocation5 + $0x48] sm:$0xff] %v4023
    %4216 = vst [vmem:[#allocation5 + $0x50] sm:$0xff] %v4025
    %4217 = vst.msk [vmem:[#allocation5 + $0x58] sm:$0xff] %vm4207, %v4201
    %4230 = vrot.lane.b32.xlu0 %v4005, 127
    %v4231 = vpop.permute.xlu0 %4230
    %4232 = vrot.lane.b32.xlu0 %v4007, 127
    %v4233 = vpop.permute.xlu0 %4232
    %4234 = vrot.lane.b32.xlu0 %v4183, 127
    %v4235 = vpop.permute.xlu0 %4234
    %4236 = vrot.lane.b32.xlu0 %v4011, 127
    %v4237 = vpop.permute.xlu0 %4236
    %4238 = vrot.lane.b32.xlu0 %v4013, 127
    %v4239 = vpop.permute.xlu0 %4238
    %4240 = vrot.lane.b32.xlu0 %v4189, 127
    %v4241 = vpop.permute.xlu0 %4240
    %4242 = vrot.lane.b32.xlu0 %v4017, 127
    %v4243 = vpop.permute.xlu0 %4242
    %4244 = vrot.lane.b32.xlu0 %v4019, 127
    %v4245 = vpop.permute.xlu0 %4244
    %4246 = vrot.lane.b32.xlu0 %v4195, 127
    %v4247 = vpop.permute.xlu0 %4246
    %4248 = vrot.lane.b32.xlu0 %v4023, 127
    %v4249 = vpop.permute.xlu0 %4248
    %4250 = vrot.lane.b32.xlu0 %v4025, 127
    %v4251 = vpop.permute.xlu0 %4250
    %4252 = vrot.lane.b32.xlu0 %v4201, 127
    %v4253 = vpop.permute.xlu0 %4252
    %v4254 = vsel %vm89, %v4231, %v4233
    %v4255 = vsel %vm89, %v4233, %v4235
    %v4256 = vsel %vm89, %v4237, %v4239
    %v4257 = vsel %vm89, %v4239, %v4241
    %v4258 = vsel %vm89, %v4243, %v4245
    %v4259 = vsel %vm89, %v4245, %v4247
    %v4260 = vsel %vm89, %v4249, %v4251
    %v4261 = vsel %vm89, %v4251, %v4253
    %4274 = vst [vmem:[#allocation5 + $0x60] sm:$0xff] %v4254
    %4275 = vst [vmem:[#allocation5 + $0x68] sm:$0xff] %v4255
    %4276 = vst.msk [vmem:[#allocation5 + $0x70] sm:$0xff] %vm4207, %v4235
    %4277 = vst [vmem:[#allocation5 + $0x78] sm:$0xff] %v4256
    %4278 = vst [vmem:[#allocation5 + $0x80] sm:$0xff] %v4257
    %4279 = vst.msk [vmem:[#allocation5 + $0x88] sm:$0xff] %vm4207, %v4241
    %4280 = vst [vmem:[#allocation5 + $0x90] sm:$0xff] %v4258
    %4281 = vst [vmem:[#allocation5 + $0x98] sm:$0xff] %v4259
    %4282 = vst.msk [vmem:[#allocation5 + $0xa0] sm:$0xff] %vm4207, %v4247
    %4283 = vst [vmem:[#allocation5 + $0xa8] sm:$0xff] %v4260
    %4284 = vst [vmem:[#allocation5 + $0xb0] sm:$0xff] %v4261
    %4285 = vst.msk [vmem:[#allocation5 + $0xb8] sm:$0xff] %vm4207, %v4253
    %4286 = vrot.lane.b32.xlu0 %v4005, 126
    %v4287 = vpop.permute.xlu0 %4286
    %4288 = vrot.lane.b32.xlu0 %v4007, 126
    %v4289 = vpop.permute.xlu0 %4288
    %4290 = vrot.lane.b32.xlu0 %v4183, 126
    %v4291 = vpop.permute.xlu0 %4290
    %4292 = vrot.lane.b32.xlu0 %v4011, 126
    %v4293 = vpop.permute.xlu0 %4292
    %4294 = vrot.lane.b32.xlu0 %v4013, 126
    %v4295 = vpop.permute.xlu0 %4294
    %4296 = vrot.lane.b32.xlu0 %v4189, 126
    %v4297 = vpop.permute.xlu0 %4296
    %4298 = vrot.lane.b32.xlu0 %v4017, 126
    %v4299 = vpop.permute.xlu0 %4298
    %4300 = vrot.lane.b32.xlu0 %v4019, 126
    %v4301 = vpop.permute.xlu0 %4300
    %4302 = vrot.lane.b32.xlu0 %v4195, 126
    %v4303 = vpop.permute.xlu0 %4302
    %4304 = vrot.lane.b32.xlu0 %v4023, 126
    %v4305 = vpop.permute.xlu0 %4304
    %4306 = vrot.lane.b32.xlu0 %v4025, 126
    %v4307 = vpop.permute.xlu0 %4306
    %4308 = vrot.lane.b32.xlu0 %v4201, 126
    %v4309 = vpop.permute.xlu0 %4308
    %v4310 = vsel %vm105, %v4287, %v4289
    %v4311 = vsel %vm105, %v4289, %v4291
    %v4312 = vsel %vm105, %v4293, %v4295
    %v4313 = vsel %vm105, %v4295, %v4297
    %v4314 = vsel %vm105, %v4299, %v4301
    %v4315 = vsel %vm105, %v4301, %v4303
    %v4316 = vsel %vm105, %v4305, %v4307
    %v4317 = vsel %vm105, %v4307, %v4309
    %4330 = vst [vmem:[#allocation5 + $0xc0] sm:$0xff] %v4310
    %4331 = vst [vmem:[#allocation5 + $0xc8] sm:$0xff] %v4311
    %4332 = vst.msk [vmem:[#allocation5 + $0xd0] sm:$0xff] %vm4207, %v4291
    %4333 = vst [vmem:[#allocation5 + $0xd8] sm:$0xff] %v4312
    %4334 = vst [vmem:[#allocation5 + $0xe0] sm:$0xff] %v4313
    %4335 = vst.msk [vmem:[#allocation5 + $0xe8] sm:$0xff] %vm4207, %v4297
    %4336 = vst [vmem:[#allocation5 + $0xf0] sm:$0xff] %v4314
    %4337 = vst [vmem:[#allocation5 + $0xf8] sm:$0xff] %v4315
    %4338 = vst.msk [vmem:[#allocation5 + $0x100] sm:$0xff] %vm4207, %v4303
    %4339 = vst [vmem:[#allocation5 + $0x108] sm:$0xff] %v4316
    %4340 = vst [vmem:[#allocation5 + $0x110] sm:$0xff] %v4317
    %4341 = vst.msk [vmem:[#allocation5 + $0x118] sm:$0xff] %vm4207, %v4309
    %4342 = vrot.lane.b32.xlu0 %v4005, 108
    %v4343 = vpop.permute.xlu0 %4342
    %4344 = vrot.lane.b32.xlu0 %v4007, 108
    %v4345 = vpop.permute.xlu0 %4344
    %4346 = vrot.lane.b32.xlu0 %v4183, 108
    %v4347 = vpop.permute.xlu0 %4346
    %4348 = vrot.lane.b32.xlu0 %v4011, 108
    %v4349 = vpop.permute.xlu0 %4348
    %4350 = vrot.lane.b32.xlu0 %v4013, 108
    %v4351 = vpop.permute.xlu0 %4350
    %4352 = vrot.lane.b32.xlu0 %v4189, 108
    %v4353 = vpop.permute.xlu0 %4352
    %4354 = vrot.lane.b32.xlu0 %v4017, 108
    %v4355 = vpop.permute.xlu0 %4354
    %4356 = vrot.lane.b32.xlu0 %v4019, 108
    %v4357 = vpop.permute.xlu0 %4356
    %4358 = vrot.lane.b32.xlu0 %v4195, 108
    %v4359 = vpop.permute.xlu0 %4358
    %4360 = vrot.lane.b32.xlu0 %v4023, 108
    %v4361 = vpop.permute.xlu0 %4360
    %4362 = vrot.lane.b32.xlu0 %v4025, 108
    %v4363 = vpop.permute.xlu0 %4362
    %4364 = vrot.lane.b32.xlu0 %v4201, 108
    %v4365 = vpop.permute.xlu0 %4364
    %v4366 = vsel %vm150, %v4343, %v4345
    %v4367 = vsel %vm150, %v4345, %v4347
    %v4368 = vsel %vm150, %v4349, %v4351
    %v4369 = vsel %vm150, %v4351, %v4353
    %v4370 = vsel %vm150, %v4355, %v4357
    %v4371 = vsel %vm150, %v4357, %v4359
    %v4372 = vsel %vm150, %v4361, %v4363
    %v4373 = vsel %vm150, %v4363, %v4365
    %4386 = vst [vmem:[#allocation5 + $0x120] sm:$0xff] %v4366
    %4387 = vst [vmem:[#allocation5 + $0x128] sm:$0xff] %v4367
    %4388 = vst.msk [vmem:[#allocation5 + $0x130] sm:$0xff] %vm4207, %v4347
    %4389 = vst [vmem:[#allocation5 + $0x138] sm:$0xff] %v4368
    %4390 = vst [vmem:[#allocation5 + $0x140] sm:$0xff] %v4369
    %4391 = vst.msk [vmem:[#allocation5 + $0x148] sm:$0xff] %vm4207, %v4353
    %4392 = vst [vmem:[#allocation5 + $0x150] sm:$0xff] %v4370
    %4393 = vst [vmem:[#allocation5 + $0x158] sm:$0xff] %v4371
    %4394 = vst.msk [vmem:[#allocation5 + $0x160] sm:$0xff] %vm4207, %v4359
    %4395 = vst [vmem:[#allocation5 + $0x168] sm:$0xff] %v4372
    %4396 = vst [vmem:[#allocation5 + $0x170] sm:$0xff] %v4373
    %4397 = vst.msk [vmem:[#allocation5 + $0x178] sm:$0xff] %vm4207, %v4365
    %4398 = vrot.lane.b32.xlu0 %v4005, 107
    %v4399 = vpop.permute.xlu0 %4398
    %4400 = vrot.lane.b32.xlu0 %v4007, 107
    %v4401 = vpop.permute.xlu0 %4400
    %4402 = vrot.lane.b32.xlu0 %v4183, 107
    %v4403 = vpop.permute.xlu0 %4402
    %4404 = vrot.lane.b32.xlu0 %v4011, 107
    %v4405 = vpop.permute.xlu0 %4404
    %4406 = vrot.lane.b32.xlu0 %v4013, 107
    %v4407 = vpop.permute.xlu0 %4406
    %4408 = vrot.lane.b32.xlu0 %v4189, 107
    %v4409 = vpop.permute.xlu0 %4408
    %4410 = vrot.lane.b32.xlu0 %v4017, 107
    %v4411 = vpop.permute.xlu0 %4410
    %4412 = vrot.lane.b32.xlu0 %v4019, 107
    %v4413 = vpop.permute.xlu0 %4412
    %4414 = vrot.lane.b32.xlu0 %v4195, 107
    %v4415 = vpop.permute.xlu0 %4414
    %4416 = vrot.lane.b32.xlu0 %v4023, 107
    %v4417 = vpop.permute.xlu0 %4416
    %4418 = vrot.lane.b32.xlu0 %v4025, 107
    %v4419 = vpop.permute.xlu0 %4418
    %4420 = vrot.lane.b32.xlu0 %v4201, 107
    %v4421 = vpop.permute.xlu0 %4420
    %vm4422 = vcmask 875520
    %v4423 = vsel %vm4422, %v4399, %v4401
    %v4424 = vsel %vm4422, %v4401, %v4403
    %v4425 = vsel %vm4422, %v4405, %v4407
    %v4426 = vsel %vm4422, %v4407, %v4409
    %v4427 = vsel %vm4422, %v4411, %v4413
    %v4428 = vsel %vm4422, %v4413, %v4415
    %v4429 = vsel %vm4422, %v4417, %v4419
    %v4430 = vsel %vm4422, %v4419, %v4421
    %4443 = vst [vmem:[#allocation5 + $0x180] sm:$0xff] %v4423
    %4444 = vst [vmem:[#allocation5 + $0x188] sm:$0xff] %v4424
    %4445 = vst.msk [vmem:[#allocation5 + $0x190] sm:$0xff] %vm4207, %v4403
    %4446 = vst [vmem:[#allocation5 + $0x198] sm:$0xff] %v4425
    %4447 = vst [vmem:[#allocation5 + $0x1a0] sm:$0xff] %v4426
    %4448 = vst.msk [vmem:[#allocation5 + $0x1a8] sm:$0xff] %vm4207, %v4409
    %4449 = vst [vmem:[#allocation5 + $0x1b0] sm:$0xff] %v4427
    %4450 = vst [vmem:[#allocation5 + $0x1b8] sm:$0xff] %v4428
    %4451 = vst.msk [vmem:[#allocation5 + $0x1c0] sm:$0xff] %vm4207, %v4415
    %4452 = vst [vmem:[#allocation5 + $0x1c8] sm:$0xff] %v4429
    %4453 = vst [vmem:[#allocation5 + $0x1d0] sm:$0xff] %v4430
    %4454 = vst.msk [vmem:[#allocation5 + $0x1d8] sm:$0xff] %vm4207, %v4421
    %4455 = vrot.lane.b32.xlu0 %v4005, 106
    %v4456 = vpop.permute.xlu0 %4455
    %4457 = vrot.lane.b32.xlu0 %v4007, 106
    %v4458 = vpop.permute.xlu0 %4457
    %4459 = vrot.lane.b32.xlu0 %v4183, 106
    %v4460 = vpop.permute.xlu0 %4459
    %4461 = vrot.lane.b32.xlu0 %v4011, 106
    %v4462 = vpop.permute.xlu0 %4461
    %4463 = vrot.lane.b32.xlu0 %v4013, 106
    %v4464 = vpop.permute.xlu0 %4463
    %4465 = vrot.lane.b32.xlu0 %v4189, 106
    %v4466 = vpop.permute.xlu0 %4465
    %4467 = vrot.lane.b32.xlu0 %v4017, 106
    %v4468 = vpop.permute.xlu0 %4467
    %4469 = vrot.lane.b32.xlu0 %v4019, 106
    %v4470 = vpop.permute.xlu0 %4469
    %4471 = vrot.lane.b32.xlu0 %v4195, 106
    %v4472 = vpop.permute.xlu0 %4471
    %4473 = vrot.lane.b32.xlu0 %v4023, 106
    %v4474 = vpop.permute.xlu0 %4473
    %4475 = vrot.lane.b32.xlu0 %v4025, 106
    %v4476 = vpop.permute.xlu0 %4475
    %4477 = vrot.lane.b32.xlu0 %v4201, 106
    %v4478 = vpop.permute.xlu0 %4477
    %vm4479 = vcmask 867328
    %v4480 = vsel %vm4479, %v4456, %v4458
    %v4481 = vsel %vm4479, %v4458, %v4460
    %v4482 = vsel %vm4479, %v4462, %v4464
    %v4483 = vsel %vm4479, %v4464, %v4466
    %v4484 = vsel %vm4479, %v4468, %v4470
    %v4485 = vsel %vm4479, %v4470, %v4472
    %v4486 = vsel %vm4479, %v4474, %v4476
    %v4487 = vsel %vm4479, %v4476, %v4478
    %4500 = vst [vmem:[#allocation5 + $0x1e0] sm:$0xff] %v4480
    %4501 = vst [vmem:[#allocation5 + $0x1e8] sm:$0xff] %v4481
    %4502 = vst.msk [vmem:[#allocation5 + $0x1f0] sm:$0xff] %vm4207, %v4460
    %4503 = vst [vmem:[#allocation5 + $0x1f8] sm:$0xff] %v4482
    %4504 = vst [vmem:[#allocation5 + $0x200] sm:$0xff] %v4483
    %4505 = vst.msk [vmem:[#allocation5 + $0x208] sm:$0xff] %vm4207, %v4466
    %4506 = vst [vmem:[#allocation5 + $0x210] sm:$0xff] %v4484
    %4507 = vst [vmem:[#allocation5 + $0x218] sm:$0xff] %v4485
    %4508 = vst.msk [vmem:[#allocation5 + $0x220] sm:$0xff] %vm4207, %v4472
    %4509 = vst [vmem:[#allocation5 + $0x228] sm:$0xff] %v4486
    %4510 = vst [vmem:[#allocation5 + $0x230] sm:$0xff] %v4487
    %4511 = vst.msk [vmem:[#allocation5 + $0x238] sm:$0xff] %vm4207, %v4478
    %4516 = vrot.lane.b32.xlu0 %v4005, 88
    %v4517 = vpop.permute.xlu0 %4516
    %4518 = vrot.lane.b32.xlu0 %v4007, 88
    %v4519 = vpop.permute.xlu0 %4518
    %4520 = vrot.lane.b32.xlu0 %v4183, 88
    %v4521 = vpop.permute.xlu0 %4520
    %4522 = vrot.lane.b32.xlu0 %v4185, 88
    %v4523 = vpop.permute.xlu0 %4522
    %4524 = vrot.lane.b32.xlu0 %v4011, 88
    %v4525 = vpop.permute.xlu0 %4524
    %4526 = vrot.lane.b32.xlu0 %v4013, 88
    %v4527 = vpop.permute.xlu0 %4526
    %4528 = vrot.lane.b32.xlu0 %v4189, 88
    %v4529 = vpop.permute.xlu0 %4528
    %4530 = vrot.lane.b32.xlu0 %v4191, 88
    %v4531 = vpop.permute.xlu0 %4530
    %4532 = vrot.lane.b32.xlu0 %v4017, 88
    %v4533 = vpop.permute.xlu0 %4532
    %4534 = vrot.lane.b32.xlu0 %v4019, 88
    %v4535 = vpop.permute.xlu0 %4534
    %4536 = vrot.lane.b32.xlu0 %v4195, 88
    %v4537 = vpop.permute.xlu0 %4536
    %4538 = vrot.lane.b32.xlu0 %v4197, 88
    %v4539 = vpop.permute.xlu0 %4538
    %4540 = vrot.lane.b32.xlu0 %v4023, 88
    %v4541 = vpop.permute.xlu0 %4540
    %4542 = vrot.lane.b32.xlu0 %v4025, 88
    %v4543 = vpop.permute.xlu0 %4542
    %4544 = vrot.lane.b32.xlu0 %v4201, 88
    %v4545 = vpop.permute.xlu0 %4544
    %4546 = vrot.lane.b32.xlu0 %v4203, 88
    %v4547 = vpop.permute.xlu0 %4546
    %vm4548 = vcmask 719872
    %v4549 = vsel %vm4548, %v4517, %v4519
    %v4550 = vsel %vm4548, %v4519, %v4521
    %v4551 = vsel %vm4548, %v4521, %v4523
    %v4552 = vsel %vm4548, %v4525, %v4527
    %v4553 = vsel %vm4548, %v4527, %v4529
    %v4554 = vsel %vm4548, %v4529, %v4531
    %v4555 = vsel %vm4548, %v4533, %v4535
    %v4556 = vsel %vm4548, %v4535, %v4537
    %v4557 = vsel %vm4548, %v4537, %v4539
    %v4558 = vsel %vm4548, %v4541, %v4543
    %v4559 = vsel %vm4548, %v4543, %v4545
    %v4560 = vsel %vm4548, %v4545, %v4547
    %4573 = vst [vmem:[#allocation5 + $0x240] sm:$0xff] %v4549
    %4574 = vst [vmem:[#allocation5 + $0x248] sm:$0xff] %v4550
    %4575 = vst.msk [vmem:[#allocation5 + $0x250] sm:$0xff] %vm4207, %v4551
    %4576 = vst [vmem:[#allocation5 + $0x258] sm:$0xff] %v4552
    %4577 = vst [vmem:[#allocation5 + $0x260] sm:$0xff] %v4553
    %4578 = vst.msk [vmem:[#allocation5 + $0x268] sm:$0xff] %vm4207, %v4554
    %4579 = vst [vmem:[#allocation5 + $0x270] sm:$0xff] %v4555
    %4580 = vst [vmem:[#allocation5 + $0x278] sm:$0xff] %v4556
    %4581 = vst.msk [vmem:[#allocation5 + $0x280] sm:$0xff] %vm4207, %v4557
    %4582 = vst [vmem:[#allocation5 + $0x288] sm:$0xff] %v4558
    %4583 = vst [vmem:[#allocation5 + $0x290] sm:$0xff] %v4559
    %4584 = vst.msk [vmem:[#allocation5 + $0x298] sm:$0xff] %vm4207, %v4560
    %4585 = vrot.lane.b32.xlu0 %v4005, 87
    %v4586 = vpop.permute.xlu0 %4585
    %4587 = vrot.lane.b32.xlu0 %v4007, 87
    %v4588 = vpop.permute.xlu0 %4587
    %4589 = vrot.lane.b32.xlu0 %v4183, 87
    %v4590 = vpop.permute.xlu0 %4589
    %4591 = vrot.lane.b32.xlu0 %v4185, 87
    %v4592 = vpop.permute.xlu0 %4591
    %4593 = vrot.lane.b32.xlu0 %v4011, 87
    %v4594 = vpop.permute.xlu0 %4593
    %4595 = vrot.lane.b32.xlu0 %v4013, 87
    %v4596 = vpop.permute.xlu0 %4595
    %4597 = vrot.lane.b32.xlu0 %v4189, 87
    %v4598 = vpop.permute.xlu0 %4597
    %4599 = vrot.lane.b32.xlu0 %v4191, 87
    %v4600 = vpop.permute.xlu0 %4599
    %4601 = vrot.lane.b32.xlu0 %v4017, 87
    %v4602 = vpop.permute.xlu0 %4601
    %4603 = vrot.lane.b32.xlu0 %v4019, 87
    %v4604 = vpop.permute.xlu0 %4603
    %4605 = vrot.lane.b32.xlu0 %v4195, 87
    %v4606 = vpop.permute.xlu0 %4605
    %4607 = vrot.lane.b32.xlu0 %v4197, 87
    %v4608 = vpop.permute.xlu0 %4607
    %4609 = vrot.lane.b32.xlu0 %v4023, 87
    %v4610 = vpop.permute.xlu0 %4609
    %4611 = vrot.lane.b32.xlu0 %v4025, 87
    %v4612 = vpop.permute.xlu0 %4611
    %4613 = vrot.lane.b32.xlu0 %v4201, 87
    %v4614 = vpop.permute.xlu0 %4613
    %4615 = vrot.lane.b32.xlu0 %v4203, 87
    %v4616 = vpop.permute.xlu0 %4615
    %vm4617 = vcmask 711680
    %v4618 = vsel %vm4617, %v4586, %v4588
    %v4619 = vsel %vm4617, %v4588, %v4590
    %v4620 = vsel %vm4617, %v4590, %v4592
    %v4621 = vsel %vm4617, %v4594, %v4596
    %v4622 = vsel %vm4617, %v4596, %v4598
    %v4623 = vsel %vm4617, %v4598, %v4600
    %v4624 = vsel %vm4617, %v4602, %v4604
    %v4625 = vsel %vm4617, %v4604, %v4606
    %v4626 = vsel %vm4617, %v4606, %v4608
    %v4627 = vsel %vm4617, %v4610, %v4612
    %v4628 = vsel %vm4617, %v4612, %v4614
    %v4629 = vsel %vm4617, %v4614, %v4616
    %4642 = vst [vmem:[#allocation5 + $0x2a0] sm:$0xff] %v4618
    %4643 = vst [vmem:[#allocation5 + $0x2a8] sm:$0xff] %v4619
    %4644 = vst.msk [vmem:[#allocation5 + $0x2b0] sm:$0xff] %vm4207, %v4620
    %4645 = vst [vmem:[#allocation5 + $0x2b8] sm:$0xff] %v4621
    %4646 = vst [vmem:[#allocation5 + $0x2c0] sm:$0xff] %v4622
    %4647 = vst.msk [vmem:[#allocation5 + $0x2c8] sm:$0xff] %vm4207, %v4623
    %4648 = vst [vmem:[#allocation5 + $0x2d0] sm:$0xff] %v4624
    %4649 = vst [vmem:[#allocation5 + $0x2d8] sm:$0xff] %v4625
    %4650 = vst.msk [vmem:[#allocation5 + $0x2e0] sm:$0xff] %vm4207, %v4626
    %4651 = vst [vmem:[#allocation5 + $0x2e8] sm:$0xff] %v4627
    %4652 = vst [vmem:[#allocation5 + $0x2f0] sm:$0xff] %v4628
    %4653 = vst.msk [vmem:[#allocation5 + $0x2f8] sm:$0xff] %vm4207, %v4629
    %4654 = vrot.lane.b32.xlu0 %v4005, 86
    %v4655 = vpop.permute.xlu0 %4654
    %4656 = vrot.lane.b32.xlu0 %v4007, 86
    %v4657 = vpop.permute.xlu0 %4656
    %4658 = vrot.lane.b32.xlu0 %v4183, 86
    %v4659 = vpop.permute.xlu0 %4658
    %4660 = vrot.lane.b32.xlu0 %v4185, 86
    %v4661 = vpop.permute.xlu0 %4660
    %4662 = vrot.lane.b32.xlu0 %v4011, 86
    %v4663 = vpop.permute.xlu0 %4662
    %4664 = vrot.lane.b32.xlu0 %v4013, 86
    %v4665 = vpop.permute.xlu0 %4664
    %4666 = vrot.lane.b32.xlu0 %v4189, 86
    %v4667 = vpop.permute.xlu0 %4666
    %4668 = vrot.lane.b32.xlu0 %v4191, 86
    %v4669 = vpop.permute.xlu0 %4668
    %4670 = vrot.lane.b32.xlu0 %v4017, 86
    %v4671 = vpop.permute.xlu0 %4670
    %4672 = vrot.lane.b32.xlu0 %v4019, 86
    %v4673 = vpop.permute.xlu0 %4672
    %4674 = vrot.lane.b32.xlu0 %v4195, 86
    %v4675 = vpop.permute.xlu0 %4674
    %4676 = vrot.lane.b32.xlu0 %v4197, 86
    %v4677 = vpop.permute.xlu0 %4676
    %4678 = vrot.lane.b32.xlu0 %v4023, 86
    %v4679 = vpop.permute.xlu0 %4678
    %4680 = vrot.lane.b32.xlu0 %v4025, 86
    %v4681 = vpop.permute.xlu0 %4680
    %4682 = vrot.lane.b32.xlu0 %v4201, 86
    %v4683 = vpop.permute.xlu0 %4682
    %4684 = vrot.lane.b32.xlu0 %v4203, 86
    %v4685 = vpop.permute.xlu0 %4684
    %vm4686 = vcmask 703488
    %v4687 = vsel %vm4686, %v4655, %v4657
    %v4688 = vsel %vm4686, %v4657, %v4659
    %v4689 = vsel %vm4686, %v4659, %v4661
    %v4690 = vsel %vm4686, %v4663, %v4665
    %v4691 = vsel %vm4686, %v4665, %v4667
    %v4692 = vsel %vm4686, %v4667, %v4669
    %v4693 = vsel %vm4686, %v4671, %v4673
    %v4694 = vsel %vm4686, %v4673, %v4675
    %v4695 = vsel %vm4686, %v4675, %v4677
    %v4696 = vsel %vm4686, %v4679, %v4681
    %v4697 = vsel %vm4686, %v4681, %v4683
    %v4698 = vsel %vm4686, %v4683, %v4685
    %4711 = vst [vmem:[#allocation5 + $0x300] sm:$0xff] %v4687
    %4712 = vst [vmem:[#allocation5 + $0x308] sm:$0xff] %v4688
    %4713 = vst.msk [vmem:[#allocation5 + $0x310] sm:$0xff] %vm4207, %v4689
    %4714 = vst [vmem:[#allocation5 + $0x318] sm:$0xff] %v4690
    %4715 = vst [vmem:[#allocation5 + $0x320] sm:$0xff] %v4691
    %4716 = vst.msk [vmem:[#allocation5 + $0x328] sm:$0xff] %vm4207, %v4692
    %4717 = vst [vmem:[#allocation5 + $0x330] sm:$0xff] %v4693
    %4718 = vst [vmem:[#allocation5 + $0x338] sm:$0xff] %v4694
    %4719 = vst.msk [vmem:[#allocation5 + $0x340] sm:$0xff] %vm4207, %v4695
    %4720 = vst [vmem:[#allocation5 + $0x348] sm:$0xff] %v4696
    %4721 = vst [vmem:[#allocation5 + $0x350] sm:$0xff] %v4697
    %4722 = vst.msk [vmem:[#allocation5 + $0x358] sm:$0xff] %vm4207, %v4698
    %v4723 = vld [vmem:[#allocation8] sm:$0xff]
    %v4724 = vld [vmem:[#allocation8 + $0x8] sm:$0xf]
    %v4725 = vld [vmem:[#allocation5] sm:$0xff]
    %v4726 = vld [vmem:[#allocation5 + $0x8] sm:$0xff]
    %v4727 = vld [vmem:[#allocation5 + $0x10] sm:$0xff]
    %v4728 = vld [vmem:[#allocation5 + $0x18] sm:$0xff]
    %v4729 = vld [vmem:[#allocation5 + $0x20] sm:$0xff]
    %v4730 = vld [vmem:[#allocation5 + $0x28] sm:$0xff]
    %v4731 = vld [vmem:[#allocation5 + $0x30] sm:$0xff]
    %v4732 = vld [vmem:[#allocation5 + $0x38] sm:$0xff]
    %v4733 = vld [vmem:[#allocation5 + $0x40] sm:$0xff]
    %v4734 = vld [vmem:[#allocation5 + $0x48] sm:$0xff]
    %v4735 = vld [vmem:[#allocation5 + $0x50] sm:$0xff]
    %v4736 = vld [vmem:[#allocation5 + $0x58] sm:$0xff]
    %v4737 = vld [vmem:[#allocation5 + $0x60] sm:$0xff]
    %v4738 = vld [vmem:[#allocation5 + $0x68] sm:$0xff]
    %v4739 = vld [vmem:[#allocation5 + $0x70] sm:$0xff]
    %v4740 = vld [vmem:[#allocation5 + $0x78] sm:$0xff]
    %v4741 = vld [vmem:[#allocation5 + $0x80] sm:$0xff]
    %v4742 = vld [vmem:[#allocation5 + $0x88] sm:$0xff]
    %v4743 = vld [vmem:[#allocation5 + $0x90] sm:$0xff]
    %v4744 = vld [vmem:[#allocation5 + $0x98] sm:$0xff]
    %v4745 = vld [vmem:[#allocation5 + $0xa0] sm:$0xff]
    %v4746 = vld [vmem:[#allocation5 + $0xa8] sm:$0xff]
    %v4747 = vld [vmem:[#allocation5 + $0xb0] sm:$0xff]
    %v4748 = vld [vmem:[#allocation5 + $0xb8] sm:$0xff]
    %v4749 = vld [vmem:[#allocation5 + $0xc0] sm:$0xff]
    %v4750 = vld [vmem:[#allocation5 + $0xc8] sm:$0xff]
    %v4751 = vld [vmem:[#allocation5 + $0xd0] sm:$0xff]
    %v4752 = vld [vmem:[#allocation5 + $0xd8] sm:$0xff]
    %v4753 = vld [vmem:[#allocation5 + $0xe0] sm:$0xff]
    %v4754 = vld [vmem:[#allocation5 + $0xe8] sm:$0xff]
    %v4755 = vld [vmem:[#allocation5 + $0xf0] sm:$0xff]
    %v4756 = vld [vmem:[#allocation5 + $0xf8] sm:$0xff]
    %v4757 = vld [vmem:[#allocation5 + $0x100] sm:$0xff]
    %v4758 = vld [vmem:[#allocation5 + $0x108] sm:$0xff]
    %v4759 = vld [vmem:[#allocation5 + $0x110] sm:$0xff]
    %v4760 = vld [vmem:[#allocation5 + $0x118] sm:$0xff]
    %v4761 = vld [vmem:[#allocation5 + $0x120] sm:$0xff]
    %v4762 = vld [vmem:[#allocation5 + $0x128] sm:$0xff]
    %v4763 = vld [vmem:[#allocation5 + $0x130] sm:$0xff]
    %v4764 = vld [vmem:[#allocation5 + $0x138] sm:$0xff]
    %v4765 = vld [vmem:[#allocation5 + $0x140] sm:$0xff]
    %v4766 = vld [vmem:[#allocation5 + $0x148] sm:$0xff]
    %v4767 = vld [vmem:[#allocation5 + $0x150] sm:$0xff]
    %v4768 = vld [vmem:[#allocation5 + $0x158] sm:$0xff]
    %v4769 = vld [vmem:[#allocation5 + $0x160] sm:$0xff]
    %v4770 = vld [vmem:[#allocation5 + $0x168] sm:$0xff]
    %v4771 = vld [vmem:[#allocation5 + $0x170] sm:$0xff]
    %v4772 = vld [vmem:[#allocation5 + $0x178] sm:$0xff]
    %v4773 = vld [vmem:[#allocation5 + $0x180] sm:$0xff]
    %v4774 = vld [vmem:[#allocation5 + $0x188] sm:$0xff]
    %v4775 = vld [vmem:[#allocation5 + $0x190] sm:$0xff]
    %v4776 = vld [vmem:[#allocation5 + $0x198] sm:$0xff]
    %v4777 = vld [vmem:[#allocation5 + $0x1a0] sm:$0xff]
    %v4778 = vld [vmem:[#allocation5 + $0x1a8] sm:$0xff]
    %v4779 = vld [vmem:[#allocation5 + $0x1b0] sm:$0xff]
    %v4780 = vld [vmem:[#allocation5 + $0x1b8] sm:$0xff]
    %v4781 = vld [vmem:[#allocation5 + $0x1c0] sm:$0xff]
    %v4782 = vld [vmem:[#allocation5 + $0x1c8] sm:$0xff]
    %v4783 = vld [vmem:[#allocation5 + $0x1d0] sm:$0xff]
    %v4784 = vld [vmem:[#allocation5 + $0x1d8] sm:$0xff]
    %v4785 = vld [vmem:[#allocation5 + $0x1e0] sm:$0xff]
    %v4786 = vld [vmem:[#allocation5 + $0x1e8] sm:$0xff]
    %v4787 = vld [vmem:[#allocation5 + $0x1f0] sm:$0xff]
    %v4788 = vld [vmem:[#allocation5 + $0x1f8] sm:$0xff]
    %v4789 = vld [vmem:[#allocation5 + $0x200] sm:$0xff]
    %v4790 = vld [vmem:[#allocation5 + $0x208] sm:$0xff]
    %v4791 = vld [vmem:[#allocation5 + $0x210] sm:$0xff]
    %v4792 = vld [vmem:[#allocation5 + $0x218] sm:$0xff]
    %v4793 = vld [vmem:[#allocation5 + $0x220] sm:$0xff]
    %v4794 = vld [vmem:[#allocation5 + $0x228] sm:$0xff]
    %v4795 = vld [vmem:[#allocation5 + $0x230] sm:$0xff]
    %v4796 = vld [vmem:[#allocation5 + $0x238] sm:$0xff]
    %v4797 = vld [vmem:[#allocation5 + $0x240] sm:$0xff]
    %v4798 = vld [vmem:[#allocation5 + $0x248] sm:$0xff]
    %v4799 = vld [vmem:[#allocation5 + $0x250] sm:$0xff]
    %v4800 = vld [vmem:[#allocation5 + $0x258] sm:$0xff]
    %v4801 = vld [vmem:[#allocation5 + $0x260] sm:$0xff]
    %v4802 = vld [vmem:[#allocation5 + $0x268] sm:$0xff]
    %v4803 = vld [vmem:[#allocation5 + $0x270] sm:$0xff]
    %v4804 = vld [vmem:[#allocation5 + $0x278] sm:$0xff]
    %v4805 = vld [vmem:[#allocation5 + $0x280] sm:$0xff]
    %v4806 = vld [vmem:[#allocation5 + $0x288] sm:$0xff]
    %v4807 = vld [vmem:[#allocation5 + $0x290] sm:$0xff]
    %v4808 = vld [vmem:[#allocation5 + $0x298] sm:$0xff]
    %v4809 = vld [vmem:[#allocation5 + $0x2a0] sm:$0xff]
    %v4810 = vld [vmem:[#allocation5 + $0x2a8] sm:$0xff]
    %v4811 = vld [vmem:[#allocation5 + $0x2b0] sm:$0xff]
    %v4812 = vld [vmem:[#allocation5 + $0x2b8] sm:$0xff]
    %v4813 = vld [vmem:[#allocation5 + $0x2c0] sm:$0xff]
    %v4814 = vld [vmem:[#allocation5 + $0x2c8] sm:$0xff]
    %v4815 = vld [vmem:[#allocation5 + $0x2d0] sm:$0xff]
    %v4816 = vld [vmem:[#allocation5 + $0x2d8] sm:$0xff]
    %v4817 = vld [vmem:[#allocation5 + $0x2e0] sm:$0xff]
    %v4818 = vld [vmem:[#allocation5 + $0x2e8] sm:$0xff]
    %v4819 = vld [vmem:[#allocation5 + $0x2f0] sm:$0xff]
    %v4820 = vld [vmem:[#allocation5 + $0x2f8] sm:$0xff]
    %v4821 = vld [vmem:[#allocation5 + $0x300] sm:$0xff]
    %v4822 = vld [vmem:[#allocation5 + $0x308] sm:$0xff]
    %v4823 = vld [vmem:[#allocation5 + $0x310] sm:$0xff]
    %v4824 = vld [vmem:[#allocation5 + $0x318] sm:$0xff]
    %v4825 = vld [vmem:[#allocation5 + $0x320] sm:$0xff]
    %v4826 = vld [vmem:[#allocation5 + $0x328] sm:$0xff]
    %v4827 = vld [vmem:[#allocation5 + $0x330] sm:$0xff]
    %v4828 = vld [vmem:[#allocation5 + $0x338] sm:$0xff]
    %v4829 = vld [vmem:[#allocation5 + $0x340] sm:$0xff]
    %v4830 = vld [vmem:[#allocation5 + $0x348] sm:$0xff]
    %v4831 = vld [vmem:[#allocation5 + $0x350] sm:$0xff]
    %v4832 = vld [vmem:[#allocation5 + $0x358] sm:$0xff]
    %v4833 = vld [vmem:[%s16] sm:$0xf]
    %4835 = vset.pattern.permute.xlu0 0
    %4836 = vperm.xlu0 %4835, %v4833
    %v4837 = vpop.permute.xlu0 %4836
    %v4841 = vcombine.high %v4723, %v4723
    %v4843 = vsel %vm1118, %v4724, 0
    %4845 = vmatprep.subr.mxu0 %v4771
    %4846 = vmatpush1.msra.mxu0 %v4770
    %4847 = vmatprep.subr.mxu0 %v4768
    %4848 = vmatpush1.msra.mxu0 %v4767
    %4849 = vmatprep.subr.mxu0 %v4765
    %4850 = vmatpush1.msra.mxu0 %v4764
    %4851 = vmatprep.subr.mxu0 %v4762
    %4852 = vmatpush1.msra.mxu0 %v4761
    %4853 = vmatprep.subr.mxu0 %v4759
    %4854 = vmatpush1.msra.mxu0 %v4758
    %4855 = vmatprep.subr.mxu0 %v4756
    %4856 = vmatpush1.msra.mxu0 %v4755
    %4857 = vmatprep.subr.mxu0 %v4753
    %4858 = vmatpush1.msra.mxu0 %v4752
    %4859 = vmatprep.subr.mxu0 %v4750
    %4860 = vmatpush1.msra.mxu0 %v4749
    %4861 = vmatprep.subr.mxu0 %v4747
    %4862 = vmatpush1.msra.mxu0 %v4746
    %4863 = vmatprep.subr.mxu0 %v4744
    %4864 = vmatpush1.msra.mxu0 %v4743
    %4865 = vmatprep.subr.mxu0 %v4741
    %4866 = vmatpush1.msra.mxu0 %v4740
    %4867 = vmatprep.subr.mxu0 %v4738
    %4868 = vmatpush1.msra.mxu0 %v4737
    %4869 = vmatprep.subr.mxu0 %v4735
    %4870 = vmatpush1.msra.mxu0 %v4734
    %4871 = vmatprep.subr.mxu0 %v4732
    %4872 = vmatpush1.msra.mxu0 %v4731
    %4873 = vmatprep.subr.mxu0 %v4729
    %4874 = vmatpush1.msra.mxu0 %v4728
    %4875 = vmatprep.subr.mxu0 %v4726
    %4876 = vmatpush1.msra.mxu0 %v4725
    %4877 = vmatprep.subr.mxu0 %v4819
    %4878 = vmatpush2.msra.mxu0 %v4818
    %4879 = vmatprep.subr.mxu0 %v4816
    %4880 = vmatpush2.msra.mxu0 %v4815
    %4881 = vmatprep.subr.mxu0 %v4813
    %4882 = vmatpush2.msra.mxu0 %v4812
    %4883 = vmatprep.subr.mxu0 %v4810
    %4884 = vmatpush2.msra.mxu0 %v4809
    %4885 = vmatprep.subr.mxu0 %v4807
    %4886 = vmatpush2.msra.mxu0 %v4806
    %4887 = vmatprep.subr.mxu0 %v4804
    %4888 = vmatpush2.msra.mxu0 %v4803
    %4889 = vmatprep.subr.mxu0 %v4801
    %4890 = vmatpush2.msra.mxu0 %v4800
    %4891 = vmatprep.subr.mxu0 %v4798
    %4892 = vmatpush2.msra.mxu0 %v4797
    %4893 = vmatprep.subr.mxu0 %v4795
    %4894 = vmatpush2.msra.mxu0 %v4794
    %4895 = vmatprep.subr.mxu0 %v4792
    %4896 = vmatpush2.msra.mxu0 %v4791
    %4897 = vmatprep.subr.mxu0 %v4789
    %4898 = vmatpush2.msra.mxu0 %v4788
    %4899 = vmatprep.subr.mxu0 %v4786
    %4900 = vmatpush2.msra.mxu0 %v4785
    %4901 = vmatprep.subr.mxu0 %v4783
    %4902 = vmatpush2.msra.mxu0 %v4782
    %4903 = vmatprep.subr.mxu0 %v4780
    %4904 = vmatpush2.msra.mxu0 %v4779
    %4905 = vmatprep.subr.mxu0 %v4777
    %4906 = vmatpush2.msra.mxu0 %v4776
    %4907 = vmatprep.subr.mxu0 %v4774
    %4908 = vmatpush2.msra.mxu0 %v4773
    %4909 = vmatprep.mubr.f32.mxu0 %v4841
    %4910 = vmatmul.mubr.f32.gmra.mxu0 %v4723
    %v4911 = vpop.f32.mrf.mxu0
    %v4912 = vadd.f32 %v4837, %v4911
    %v4913 = vpop.f32.mrf.mxu0
    %v4914 = vadd.f32 %v4837, %v4913
    %4915 = vdwg.mxu0
    %4916 = vmatprep.subr.mxu0 0.0
    %4917 = vmatpush1.msra.mxu0 0.0
    %4918 = vmatprep.subr.mxu0 0.0
    %4919 = vmatpush1.msra.mxu0 0.0
    %4920 = vmatprep.subr.mxu0 0.0
    %4921 = vmatpush1.msra.mxu0 0.0
    %4922 = vmatprep.subr.mxu0 0.0
    %4923 = vmatpush1.msra.mxu0 0.0
    %4924 = vmatprep.subr.mxu0 0.0
    %4925 = vmatpush1.msra.mxu0 0.0
    %4926 = vmatprep.subr.mxu0 0.0
    %4927 = vmatpush1.msra.mxu0 0.0
    %4928 = vmatprep.subr.mxu0 0.0
    %4929 = vmatpush1.msra.mxu0 0.0
    %4930 = vmatprep.subr.mxu0 0.0
    %4931 = vmatpush1.msra.mxu0 0.0
    %4932 = vmatprep.subr.mxu0 0.0
    %4933 = vmatpush1.msra.mxu0 0.0
    %4934 = vmatprep.subr.mxu0 0.0
    %4935 = vmatpush1.msra.mxu0 0.0
    %4936 = vmatprep.subr.mxu0 0.0
    %4937 = vmatpush1.msra.mxu0 0.0
    %4938 = vmatprep.subr.mxu0 0.0
    %4939 = vmatpush1.msra.mxu0 0.0
    %4940 = vmatprep.subr.mxu0 %v4831
    %4941 = vmatpush1.msra.mxu0 %v4830
    %4942 = vmatprep.subr.mxu0 %v4828
    %4943 = vmatpush1.msra.mxu0 %v4827
    %4944 = vmatprep.subr.mxu0 %v4825
    %4945 = vmatpush1.msra.mxu0 %v4824
    %4946 = vmatprep.subr.mxu0 %v4822
    %4947 = vmatpush1.msra.mxu0 %v4821
    %4948 = vmatprep.subr.mxu0 0.0
    %4949 = vmatpush2.msra.mxu0 0.0
    %4950 = vmatprep.subr.mxu0 0.0
    %4951 = vmatpush2.msra.mxu0 0.0
    %4952 = vmatprep.subr.mxu0 0.0
    %4953 = vmatpush2.msra.mxu0 0.0
    %4954 = vmatprep.subr.mxu0 0.0
    %4955 = vmatpush2.msra.mxu0 0.0
    %4956 = vmatprep.subr.mxu0 0.0
    %4957 = vmatpush2.msra.mxu0 0.0
    %4958 = vmatprep.subr.mxu0 0.0
    %4959 = vmatpush2.msra.mxu0 0.0
    %4960 = vmatprep.subr.mxu0 0.0
    %4961 = vmatpush2.msra.mxu0 0.0
    %4962 = vmatprep.subr.mxu0 0.0
    %4963 = vmatpush2.msra.mxu0 0.0
    %4964 = vmatprep.subr.mxu0 0.0
    %4965 = vmatpush2.msra.mxu0 0.0
    %4966 = vmatprep.subr.mxu0 0.0
    %4967 = vmatpush2.msra.mxu0 0.0
    %4968 = vmatprep.subr.mxu0 0.0
    %4969 = vmatpush2.msra.mxu0 0.0
    %4970 = vmatprep.subr.mxu0 0.0
    %4971 = vmatpush2.msra.mxu0 0.0
    %4972 = vmatprep.subr.mxu0 0.0
    %4973 = vmatpush2.msra.mxu0 0.0
    %4974 = vmatprep.subr.mxu0 0.0
    %4975 = vmatpush2.msra.mxu0 0.0
    %4976 = vmatprep.subr.mxu0 0.0
    %4977 = vmatpush2.msra.mxu0 0.0
    %4978 = vmatprep.subr.mxu0 0.0
    %4979 = vmatpush2.msra.mxu0 0.0
    %4980 = vmatprep.mubr.f32.mxu0 0.0
    %4981 = vmatmul.mubr.f32.gmra.mxu0 %v4843
    %v4982 = vpop.f32.mrf.mxu0
    %v4983 = vadd.f32 %v4912, %v4982
    %v4984 = vpop.f32.mrf.mxu0
    %v4985 = vadd.f32 %v4914, %v4984
    %4986 = vdwg.mxu0
    %4987 = vmatprep.subr.mxu0 0.0
    %4988 = vmatpush1.msra.mxu0 %v4772
    %4989 = vmatprep.subr.mxu0 0.0
    %4990 = vmatpush1.msra.mxu0 %v4769
    %4991 = vmatprep.subr.mxu0 0.0
    %4992 = vmatpush1.msra.mxu0 %v4766
    %4993 = vmatprep.subr.mxu0 0.0
    %4994 = vmatpush1.msra.mxu0 %v4763
    %4995 = vmatprep.subr.mxu0 0.0
    %4996 = vmatpush1.msra.mxu0 %v4760
    %4997 = vmatprep.subr.mxu0 0.0
    %4998 = vmatpush1.msra.mxu0 %v4757
    %4999 = vmatprep.subr.mxu0 0.0
    %5000 = vmatpush1.msra.mxu0 %v4754
    %5001 = vmatprep.subr.mxu0 0.0
    %5002 = vmatpush1.msra.mxu0 %v4751
    %5003 = vmatprep.subr.mxu0 0.0
    %5004 = vmatpush1.msra.mxu0 %v4748
    %5005 = vmatprep.subr.mxu0 0.0
    %5006 = vmatpush1.msra.mxu0 %v4745
    %5007 = vmatprep.subr.mxu0 0.0
    %5008 = vmatpush1.msra.mxu0 %v4742
    %5009 = vmatprep.subr.mxu0 0.0
    %5010 = vmatpush1.msra.mxu0 %v4739
    %5011 = vmatprep.subr.mxu0 0.0
    %5012 = vmatpush1.msra.mxu0 %v4736
    %5013 = vmatprep.subr.mxu0 0.0
    %5014 = vmatpush1.msra.mxu0 %v4733
    %5015 = vmatprep.subr.mxu0 0.0
    %5016 = vmatpush1.msra.mxu0 %v4730
    %5017 = vmatprep.subr.mxu0 0.0
    %5018 = vmatpush1.msra.mxu0 %v4727
    %5019 = vmatprep.subr.mxu0 0.0
    %5020 = vmatpush2.msra.mxu0 %v4820
    %5021 = vmatprep.subr.mxu0 0.0
    %5022 = vmatpush2.msra.mxu0 %v4817
    %5023 = vmatprep.subr.mxu0 0.0
    %5024 = vmatpush2.msra.mxu0 %v4814
    %5025 = vmatprep.subr.mxu0 0.0
    %5026 = vmatpush2.msra.mxu0 %v4811
    %5027 = vmatprep.subr.mxu0 0.0
    %5028 = vmatpush2.msra.mxu0 %v4808
    %5029 = vmatprep.subr.mxu0 0.0
    %5030 = vmatpush2.msra.mxu0 %v4805
    %5031 = vmatprep.subr.mxu0 0.0
    %5032 = vmatpush2.msra.mxu0 %v4802
    %5033 = vmatprep.subr.mxu0 0.0
    %5034 = vmatpush2.msra.mxu0 %v4799
    %5035 = vmatprep.subr.mxu0 0.0
    %5036 = vmatpush2.msra.mxu0 %v4796
    %5037 = vmatprep.subr.mxu0 0.0
    %5038 = vmatpush2.msra.mxu0 %v4793
    %5039 = vmatprep.subr.mxu0 0.0
    %5040 = vmatpush2.msra.mxu0 %v4790
    %5041 = vmatprep.subr.mxu0 0.0
    %5042 = vmatpush2.msra.mxu0 %v4787
    %5043 = vmatprep.subr.mxu0 0.0
    %5044 = vmatpush2.msra.mxu0 %v4784
    %5045 = vmatprep.subr.mxu0 0.0
    %5046 = vmatpush2.msra.mxu0 %v4781
    %5047 = vmatprep.subr.mxu0 0.0
    %5048 = vmatpush2.msra.mxu0 %v4778
    %5049 = vmatprep.subr.mxu0 0.0
    %5050 = vmatpush2.msra.mxu0 %v4775
    %5051 = vmatprep.mubr.f32.mxu0 %v4841
    %5052 = vmatmul.mubr.f32.gmra.mxu0 %v4723
    %v5053 = vpop.f32.mrf.mxu0
    %v5054 = vadd.f32 %v4837, %v5053
    %v5055 = vpop.f32.mrf.mxu0
    %5056 = vdwg.mxu0
    %5057 = vmatprep.subr.mxu0 0.0
    %5058 = vmatpush1.msra.mxu0 0.0
    %5059 = vmatprep.subr.mxu0 0.0
    %5060 = vmatpush1.msra.mxu0 0.0
    %5061 = vmatprep.subr.mxu0 0.0
    %5062 = vmatpush1.msra.mxu0 0.0
    %5063 = vmatprep.subr.mxu0 0.0
    %5064 = vmatpush1.msra.mxu0 0.0
    %5065 = vmatprep.subr.mxu0 0.0
    %5066 = vmatpush1.msra.mxu0 0.0
    %5067 = vmatprep.subr.mxu0 0.0
    %5068 = vmatpush1.msra.mxu0 0.0
    %5069 = vmatprep.subr.mxu0 0.0
    %5070 = vmatpush1.msra.mxu0 0.0
    %5071 = vmatprep.subr.mxu0 0.0
    %5072 = vmatpush1.msra.mxu0 0.0
    %5073 = vmatprep.subr.mxu0 0.0
    %5074 = vmatpush1.msra.mxu0 0.0
    %5075 = vmatprep.subr.mxu0 0.0
    %5076 = vmatpush1.msra.mxu0 0.0
    %5077 = vmatprep.subr.mxu0 0.0
    %5078 = vmatpush1.msra.mxu0 0.0
    %5079 = vmatprep.subr.mxu0 0.0
    %5080 = vmatpush1.msra.mxu0 0.0
    %5081 = vmatprep.subr.mxu0 0.0
    %5082 = vmatpush1.msra.mxu0 %v4832
    %5083 = vmatprep.subr.mxu0 0.0
    %5084 = vmatpush1.msra.mxu0 %v4829
    %5085 = vmatprep.subr.mxu0 0.0
    %5086 = vmatpush1.msra.mxu0 %v4826
    %5087 = vmatprep.subr.mxu0 0.0
    %5088 = vmatpush1.msra.mxu0 %v4823
    %5089 = vmatprep.subr.mxu0 0.0
    %5090 = vmatpush2.msra.mxu0 0.0
    %5091 = vmatprep.subr.mxu0 0.0
    %5092 = vmatpush2.msra.mxu0 0.0
    %5093 = vmatprep.subr.mxu0 0.0
    %5094 = vmatpush2.msra.mxu0 0.0
    %5095 = vmatprep.subr.mxu0 0.0
    %5096 = vmatpush2.msra.mxu0 0.0
    %5097 = vmatprep.subr.mxu0 0.0
    %5098 = vmatpush2.msra.mxu0 0.0
    %5099 = vmatprep.subr.mxu0 0.0
    %5100 = vmatpush2.msra.mxu0 0.0
    %5101 = vmatprep.subr.mxu0 0.0
    %5102 = vmatpush2.msra.mxu0 0.0
    %5103 = vmatprep.subr.mxu0 0.0
    %5104 = vmatpush2.msra.mxu0 0.0
    %5105 = vmatprep.subr.mxu0 0.0
    %5106 = vmatpush2.msra.mxu0 0.0
    %5107 = vmatprep.subr.mxu0 0.0
    %5108 = vmatpush2.msra.mxu0 0.0
    %5109 = vmatprep.subr.mxu0 0.0
    %5110 = vmatpush2.msra.mxu0 0.0
    %5111 = vmatprep.subr.mxu0 0.0
    %5112 = vmatpush2.msra.mxu0 0.0
    %5113 = vmatprep.subr.mxu0 0.0
    %5114 = vmatpush2.msra.mxu0 0.0
    %5115 = vmatprep.subr.mxu0 0.0
    %5116 = vmatpush2.msra.mxu0 0.0
    %5117 = vmatprep.subr.mxu0 0.0
    %5118 = vmatpush2.msra.mxu0 0.0
    %5119 = vmatprep.subr.mxu0 0.0
    %5120 = vmatpush2.msra.mxu0 0.0
    %5121 = vmatprep.mubr.f32.mxu0 0.0
    %5122 = vmatmul.mubr.f32.gmra.mxu0 %v4843
    %v5123 = vpop.f32.mrf.mxu0
    %v5124 = vadd.f32 %v5054, %v5123
    %v5125 = vpop.f32.mrf.mxu0
    %5126 = vdwg.mxu0
    %v5127 = vld [vmem:[%s17] sm:$0xff]
    %v5128 = vld [vmem:[%s17 + $0x8] sm:$0xff]
    %v5129 = vld [vmem:[%s17 + $0x10] sm:$0xff]
    %v5130 = vld [vmem:[%s17 + $0x18] sm:$0xff]
    %v5131 = vld [vmem:[%s17 + $0x20] sm:$0xff]
    %v5132 = vld [vmem:[%s17 + $0x28] sm:$0xff]
    %v5133 = vld [vmem:[%s17 + $0x30] sm:$0xff]
    %v5134 = vld [vmem:[%s17 + $0x38] sm:$0xff]
    %v5135 = vld [vmem:[%s17 + $0x40] sm:$0xff]
    %v5136 = vld [vmem:[%s17 + $0x48] sm:$0xff]
    %v5137 = vld [vmem:[%s17 + $0x50] sm:$0xff]
    %v5138 = vld [vmem:[%s17 + $0x58] sm:$0xff]
    %v5139 = vld [vmem:[%s17 + $0x60] sm:$0xff]
    %v5140 = vld [vmem:[%s17 + $0x68] sm:$0xff]
    %v5141 = vld [vmem:[%s17 + $0x70] sm:$0xff]
    %v5142 = vld [vmem:[%s17 + $0x78] sm:$0xff]
    %v5143 = vld [vmem:[%s17 + $0x80] sm:$0xff]
    %v5144 = vld [vmem:[%s17 + $0x88] sm:$0xff]
    %v5145 = vld [vmem:[%s17 + $0x90] sm:$0xff]
    %v5146 = vld [vmem:[%s17 + $0x98] sm:$0xff]
    %v5147 = vld [vmem:[%s17 + $0xa0] sm:$0xff]
    %v5148 = vld [vmem:[%s17 + $0xa8] sm:$0xff]
    %v5149 = vld [vmem:[%s17 + $0xb0] sm:$0xff]
    %v5150 = vld [vmem:[%s17 + $0xb8] sm:$0xff]
    %v5151 = vld [vmem:[%s17 + $0xc0] sm:$0xff]
    %v5152 = vld [vmem:[%s17 + $0xc8] sm:$0xff]
    %v5153 = vld [vmem:[%s17 + $0xd0] sm:$0xff]
    %v5154 = vld [vmem:[%s17 + $0xd8] sm:$0xff]
    %v5155 = vld [vmem:[%s17 + $0xe0] sm:$0xff]
    %v5156 = vld [vmem:[%s17 + $0xe8] sm:$0xff]
    %v5157 = vld [vmem:[%s17 + $0xf0] sm:$0xff]
    %v5158 = vld [vmem:[%s17 + $0xf8] sm:$0xff]
    %v5159 = vld [vmem:[%s17 + $0x100] sm:$0xff]
    %v5160 = vld [vmem:[%s17 + $0x108] sm:$0xff]
    %v5161 = vld [vmem:[%s17 + $0x110] sm:$0xff]
    %v5162 = vld [vmem:[%s17 + $0x118] sm:$0xff]
    %v5163 = vld [vmem:[%s17 + $0x120] sm:$0xff]
    %v5164 = vld [vmem:[%s17 + $0x128] sm:$0xff]
    %v5165 = vld [vmem:[%s17 + $0x130] sm:$0xff]
    %v5166 = vld [vmem:[%s17 + $0x138] sm:$0xff]
    %v5167 = vld [vmem:[%s17 + $0x140] sm:$0xff]
    %v5168 = vld [vmem:[%s17 + $0x148] sm:$0xff]
    %v5169 = vld [vmem:[%s17 + $0x150] sm:$0xff]
    %v5170 = vld [vmem:[%s17 + $0x158] sm:$0xff]
    %v5171 = vld [vmem:[%s17 + $0x160] sm:$0xff]
    %v5172 = vld [vmem:[%s17 + $0x168] sm:$0xff]
    %v5173 = vld [vmem:[%s17 + $0x170] sm:$0xff]
    %v5174 = vld [vmem:[%s17 + $0x178] sm:$0xff]
    %v5175 = vld [vmem:[%s17 + $0x180] sm:$0xff]
    %v5176 = vld [vmem:[%s17 + $0x188] sm:$0xff]
    %v5177 = vld [vmem:[%s17 + $0x190] sm:$0xff]
    %v5178 = vld [vmem:[%s17 + $0x198] sm:$0xff]
    %v5179 = vld [vmem:[%s17 + $0x1a0] sm:$0xff]
    %v5180 = vld [vmem:[%s17 + $0x1a8] sm:$0xff]
    %v5181 = vld [vmem:[%s17 + $0x1b0] sm:$0xff]
    %v5182 = vld [vmem:[%s17 + $0x1b8] sm:$0xff]
    %v5183 = vld [vmem:[%s17 + $0x1c0] sm:$0xff]
    %v5184 = vld [vmem:[%s17 + $0x1c8] sm:$0xff]
    %v5185 = vld [vmem:[%s17 + $0x1d0] sm:$0xff]
    %v5186 = vld [vmem:[%s17 + $0x1d8] sm:$0xff]
    %v5187 = vld [vmem:[%s17 + $0x1e0] sm:$0xff]
    %v5188 = vld [vmem:[%s17 + $0x1e8] sm:$0xff]
    %v5189 = vld [vmem:[%s17 + $0x1f0] sm:$0xff]
    %v5190 = vld [vmem:[%s17 + $0x1f8] sm:$0xff]
    %v5191 = vld [vmem:[%s17 + $0x200] sm:$0xff]
    %v5192 = vld [vmem:[%s17 + $0x208] sm:$0xff]
    %v5193 = vld [vmem:[%s17 + $0x210] sm:$0xff]
    %v5194 = vld [vmem:[%s17 + $0x218] sm:$0xff]
    %v5195 = vld [vmem:[%s17 + $0x220] sm:$0xff]
    %v5196 = vld [vmem:[%s17 + $0x228] sm:$0xff]
    %v5197 = vld [vmem:[%s17 + $0x230] sm:$0xff]
    %v5198 = vld [vmem:[%s17 + $0x238] sm:$0xff]
    %v5199 = vld [vmem:[%s17 + $0x240] sm:$0xff]
    %v5200 = vld [vmem:[%s17 + $0x248] sm:$0xff]
    %v5201 = vld [vmem:[%s17 + $0x250] sm:$0xff]
    %v5202 = vld [vmem:[%s17 + $0x258] sm:$0xff]
    %v5203 = vld [vmem:[%s17 + $0x260] sm:$0xff]
    %v5204 = vld [vmem:[%s17 + $0x268] sm:$0xff]
    %v5205 = vld [vmem:[%s17 + $0x270] sm:$0xff]
    %v5206 = vld [vmem:[%s17 + $0x278] sm:$0xff]
    %v5207 = vld [vmem:[%s17 + $0x280] sm:$0xff]
    %v5208 = vld [vmem:[%s17 + $0x288] sm:$0xff]
    %v5209 = vld [vmem:[%s17 + $0x290] sm:$0xff]
    %v5210 = vld [vmem:[%s17 + $0x298] sm:$0xff]
    %v5211 = vld [vmem:[%s17 + $0x2a0] sm:$0xff]
    %v5212 = vld [vmem:[%s17 + $0x2a8] sm:$0xff]
    %v5213 = vld [vmem:[%s17 + $0x2b0] sm:$0xff]
    %v5214 = vld [vmem:[%s17 + $0x2b8] sm:$0xff]
    %v5215 = vld [vmem:[%s17 + $0x2c0] sm:$0xff]
    %v5216 = vld [vmem:[%s17 + $0x2c8] sm:$0xff]
    %v5217 = vld [vmem:[%s17 + $0x2d0] sm:$0xff]
    %v5218 = vld [vmem:[%s17 + $0x2d8] sm:$0xff]
    %v5219 = vld [vmem:[%s17 + $0x2e0] sm:$0xff]
    %v5220 = vld [vmem:[%s17 + $0x2e8] sm:$0xff]
    %v5221 = vld [vmem:[%s17 + $0x2f0] sm:$0xff]
    %v5222 = vld [vmem:[%s17 + $0x2f8] sm:$0xff]
    %v5223 = vld [vmem:[%s17 + $0x300] sm:$0xff]
    %v5224 = vld [vmem:[%s17 + $0x308] sm:$0xff]
    %v5225 = vld [vmem:[%s17 + $0x310] sm:$0xff]
    %v5226 = vld [vmem:[%s17 + $0x318] sm:$0xff]
    %v5227 = vld [vmem:[%s17 + $0x320] sm:$0xff]
    %v5228 = vld [vmem:[%s17 + $0x328] sm:$0xff]
    %v5229 = vld [vmem:[%s17 + $0x330] sm:$0xff]
    %v5230 = vld [vmem:[%s17 + $0x338] sm:$0xff]
    %v5231 = vld [vmem:[%s17 + $0x340] sm:$0xff]
    %v5232 = vld [vmem:[%s17 + $0x348] sm:$0xff]
    %v5233 = vld [vmem:[%s17 + $0x350] sm:$0xff]
    %v5234 = vld [vmem:[%s17 + $0x358] sm:$0xff]
    %v5235 = vld [vmem:[%s17 + $0x360] sm:$0xff]
    %v5236 = vld [vmem:[%s17 + $0x368] sm:$0xff]
    %v5237 = vld [vmem:[%s17 + $0x370] sm:$0xff]
    %v5238 = vld [vmem:[%s17 + $0x378] sm:$0xff]
    %v5239 = vld [vmem:[%s17 + $0x380] sm:$0xff]
    %v5240 = vld [vmem:[%s17 + $0x388] sm:$0xff]
    %v5241 = vld [vmem:[%s17 + $0x390] sm:$0xff]
    %v5242 = vld [vmem:[%s17 + $0x398] sm:$0xff]
    %v5243 = vld [vmem:[%s17 + $0x3a0] sm:$0xff]
    %v5244 = vld [vmem:[%s17 + $0x3a8] sm:$0xff]
    %v5245 = vld [vmem:[%s17 + $0x3b0] sm:$0xff]
    %v5246 = vld [vmem:[%s17 + $0x3b8] sm:$0xff]
    %v5247 = vld [vmem:[%s17 + $0x3c0] sm:$0xff]
    %v5248 = vld [vmem:[%s17 + $0x3c8] sm:$0xff]
    %v5249 = vld [vmem:[%s17 + $0x3d0] sm:$0xff]
    %v5250 = vld [vmem:[%s17 + $0x3d8] sm:$0xff]
    %v5251 = vld [vmem:[%s17 + $0x3e0] sm:$0xff]
    %v5252 = vld [vmem:[%s17 + $0x3e8] sm:$0xff]
    %v5253 = vld [vmem:[%s17 + $0x3f0] sm:$0xff]
    %v5254 = vld [vmem:[%s17 + $0x3f8] sm:$0xff]
    %v5255 = vld [vmem:[%s17 + $0x400] sm:$0xff]
    %v5256 = vld [vmem:[%s17 + $0x408] sm:$0xff]
    %v5257 = vld [vmem:[%s17 + $0x410] sm:$0xff]
    %v5258 = vld [vmem:[%s17 + $0x418] sm:$0xff]
    %v5259 = vld [vmem:[%s17 + $0x420] sm:$0x3f]
    %v5260 = vld [vmem:[%s17 + $0x428] sm:$0x3f]
    %v5261 = vld [vmem:[%s17 + $0x430] sm:$0x3f]
    %v5263 = vsel %vm4207, %v5124, 0
    %v5266 = vsel %vm2677, %v5259, 0
    %v5269 = vsel %vm2677, %v5260, 0
    %v5272 = vsel %vm2677, %v5261, 0
    %5274 = vmatprep.subr.mxu0 %v5173
    %5275 = vmatpush1.msra.mxu0 %v5172
    %5276 = vmatprep.subr.mxu0 %v5170
    %5277 = vmatpush1.msra.mxu0 %v5169
    %5278 = vmatprep.subr.mxu0 %v5167
    %5279 = vmatpush1.msra.mxu0 %v5166
    %5280 = vmatprep.subr.mxu0 %v5164
    %5281 = vmatpush1.msra.mxu0 %v5163
    %5282 = vmatprep.subr.mxu0 %v5161
    %5283 = vmatpush1.msra.mxu0 %v5160
    %5284 = vmatprep.subr.mxu0 %v5158
    %5285 = vmatpush1.msra.mxu0 %v5157
    %5286 = vmatprep.subr.mxu0 %v5155
    %5287 = vmatpush1.msra.mxu0 %v5154
    %5288 = vmatprep.subr.mxu0 %v5152
    %5289 = vmatpush1.msra.mxu0 %v5151
    %5290 = vmatprep.subr.mxu0 %v5149
    %5291 = vmatpush1.msra.mxu0 %v5148
    %5292 = vmatprep.subr.mxu0 %v5146
    %5293 = vmatpush1.msra.mxu0 %v5145
    %5294 = vmatprep.subr.mxu0 %v5143
    %5295 = vmatpush1.msra.mxu0 %v5142
    %5296 = vmatprep.subr.mxu0 %v5140
    %5297 = vmatpush1.msra.mxu0 %v5139
    %5298 = vmatprep.subr.mxu0 %v5137
    %5299 = vmatpush1.msra.mxu0 %v5136
    %5300 = vmatprep.subr.mxu0 %v5134
    %5301 = vmatpush1.msra.mxu0 %v5133
    %5302 = vmatprep.subr.mxu0 %v5131
    %5303 = vmatpush1.msra.mxu0 %v5130
    %5304 = vmatprep.subr.mxu0 %v5128
    %5305 = vmatpush1.msra.mxu0 %v5127
    %5306 = vmatprep.subr.mxu0 %v5221
    %5307 = vmatpush2.msra.mxu0 %v5220
    %5308 = vmatprep.subr.mxu0 %v5218
    %5309 = vmatpush2.msra.mxu0 %v5217
    %5310 = vmatprep.subr.mxu0 %v5215
    %5311 = vmatpush2.msra.mxu0 %v5214
    %5312 = vmatprep.subr.mxu0 %v5212
    %5313 = vmatpush2.msra.mxu0 %v5211
    %5314 = vmatprep.subr.mxu0 %v5209
    %5315 = vmatpush2.msra.mxu0 %v5208
    %5316 = vmatprep.subr.mxu0 %v5206
    %5317 = vmatpush2.msra.mxu0 %v5205
    %5318 = vmatprep.subr.mxu0 %v5203
    %5319 = vmatpush2.msra.mxu0 %v5202
    %5320 = vmatprep.subr.mxu0 %v5200
    %5321 = vmatpush2.msra.mxu0 %v5199
    %5322 = vmatprep.subr.mxu0 %v5197
    %5323 = vmatpush2.msra.mxu0 %v5196
    %5324 = vmatprep.subr.mxu0 %v5194
    %5325 = vmatpush2.msra.mxu0 %v5193
    %5326 = vmatprep.subr.mxu0 %v5191
    %5327 = vmatpush2.msra.mxu0 %v5190
    %5328 = vmatprep.subr.mxu0 %v5188
    %5329 = vmatpush2.msra.mxu0 %v5187
    %5330 = vmatprep.subr.mxu0 %v5185
    %5331 = vmatpush2.msra.mxu0 %v5184
    %5332 = vmatprep.subr.mxu0 %v5182
    %5333 = vmatpush2.msra.mxu0 %v5181
    %5334 = vmatprep.subr.mxu0 %v5179
    %5335 = vmatpush2.msra.mxu0 %v5178
    %5336 = vmatprep.subr.mxu0 %v5176
    %5337 = vmatpush2.msra.mxu0 %v5175
    %5338 = vmatprep.mubr.f32.mxu0 %v4985
    %5339 = vmatmul.mubr.f32.gmra.mxu0 %v4983
    %v5340 = vpop.f32.mrf.mxu0
    %v5341 = vadd.f32 0.0, %v5340
    %v5342 = vpop.f32.mrf.mxu0
    %v5343 = vadd.f32 0.0, %v5342
    %5344 = vdwg.mxu0
    %5345 = vmatprep.subr.mxu0 0.0
    %5346 = vmatpush1.msra.mxu0 0.0
    %5347 = vmatprep.subr.mxu0 0.0
    %5348 = vmatpush1.msra.mxu0 0.0
    %5349 = vmatprep.subr.mxu0 0.0
    %5350 = vmatpush1.msra.mxu0 0.0
    %5351 = vmatprep.subr.mxu0 %v5269
    %5352 = vmatpush1.msra.mxu0 %v5266
    %5353 = vmatprep.subr.mxu0 %v5257
    %5354 = vmatpush1.msra.mxu0 %v5256
    %5355 = vmatprep.subr.mxu0 %v5254
    %5356 = vmatpush1.msra.mxu0 %v5253
    %5357 = vmatprep.subr.mxu0 %v5251
    %5358 = vmatpush1.msra.mxu0 %v5250
    %5359 = vmatprep.subr.mxu0 %v5248
    %5360 = vmatpush1.msra.mxu0 %v5247
    %5361 = vmatprep.subr.mxu0 %v5245
    %5362 = vmatpush1.msra.mxu0 %v5244
    %5363 = vmatprep.subr.mxu0 %v5242
    %5364 = vmatpush1.msra.mxu0 %v5241
    %5365 = vmatprep.subr.mxu0 %v5239
    %5366 = vmatpush1.msra.mxu0 %v5238
    %5367 = vmatprep.subr.mxu0 %v5236
    %5368 = vmatpush1.msra.mxu0 %v5235
    %5369 = vmatprep.subr.mxu0 %v5233
    %5370 = vmatpush1.msra.mxu0 %v5232
    %5371 = vmatprep.subr.mxu0 %v5230
    %5372 = vmatpush1.msra.mxu0 %v5229
    %5373 = vmatprep.subr.mxu0 %v5227
    %5374 = vmatpush1.msra.mxu0 %v5226
    %5375 = vmatprep.subr.mxu0 %v5224
    %5376 = vmatpush1.msra.mxu0 %v5223
    %5377 = vmatprep.subr.mxu0 0.0
    %5378 = vmatpush2.msra.mxu0 0.0
    %5379 = vmatprep.subr.mxu0 0.0
    %5380 = vmatpush2.msra.mxu0 0.0
    %5381 = vmatprep.subr.mxu0 0.0
    %5382 = vmatpush2.msra.mxu0 0.0
    %5383 = vmatprep.subr.mxu0 0.0
    %5384 = vmatpush2.msra.mxu0 0.0
    %5385 = vmatprep.subr.mxu0 0.0
    %5386 = vmatpush2.msra.mxu0 0.0
    %5387 = vmatprep.subr.mxu0 0.0
    %5388 = vmatpush2.msra.mxu0 0.0
    %5389 = vmatprep.subr.mxu0 0.0
    %5390 = vmatpush2.msra.mxu0 0.0
    %5391 = vmatprep.subr.mxu0 0.0
    %5392 = vmatpush2.msra.mxu0 0.0
    %5393 = vmatprep.subr.mxu0 0.0
    %5394 = vmatpush2.msra.mxu0 0.0
    %5395 = vmatprep.subr.mxu0 0.0
    %5396 = vmatpush2.msra.mxu0 0.0
    %5397 = vmatprep.subr.mxu0 0.0
    %5398 = vmatpush2.msra.mxu0 0.0
    %5399 = vmatprep.subr.mxu0 0.0
    %5400 = vmatpush2.msra.mxu0 0.0
    %5401 = vmatprep.subr.mxu0 0.0
    %5402 = vmatpush2.msra.mxu0 0.0
    %5403 = vmatprep.subr.mxu0 0.0
    %5404 = vmatpush2.msra.mxu0 0.0
    %5405 = vmatprep.subr.mxu0 0.0
    %5406 = vmatpush2.msra.mxu0 0.0
    %5407 = vmatprep.subr.mxu0 0.0
    %5408 = vmatpush2.msra.mxu0 0.0
    %5409 = vmatprep.mubr.f32.mxu0 0.0
    %5410 = vmatmul.mubr.f32.gmra.mxu0 %v5263
    %v5411 = vpop.f32.mrf.mxu0
    %v5412 = vadd.f32 %v5341, %v5411
    %v5413 = vpop.f32.mrf.mxu0
    %v5414 = vadd.f32 %v5343, %v5413
    %5415 = vdwg.mxu0
    %5416 = vmatprep.subr.mxu0 0.0
    %5417 = vmatpush1.msra.mxu0 %v5174
    %5418 = vmatprep.subr.mxu0 0.0
    %5419 = vmatpush1.msra.mxu0 %v5171
    %5420 = vmatprep.subr.mxu0 0.0
    %5421 = vmatpush1.msra.mxu0 %v5168
    %5422 = vmatprep.subr.mxu0 0.0
    %5423 = vmatpush1.msra.mxu0 %v5165
    %5424 = vmatprep.subr.mxu0 0.0
    %5425 = vmatpush1.msra.mxu0 %v5162
    %5426 = vmatprep.subr.mxu0 0.0
    %5427 = vmatpush1.msra.mxu0 %v5159
    %5428 = vmatprep.subr.mxu0 0.0
    %5429 = vmatpush1.msra.mxu0 %v5156
    %5430 = vmatprep.subr.mxu0 0.0
    %5431 = vmatpush1.msra.mxu0 %v5153
    %5432 = vmatprep.subr.mxu0 0.0
    %5433 = vmatpush1.msra.mxu0 %v5150
    %5434 = vmatprep.subr.mxu0 0.0
    %5435 = vmatpush1.msra.mxu0 %v5147
    %5436 = vmatprep.subr.mxu0 0.0
    %5437 = vmatpush1.msra.mxu0 %v5144
    %5438 = vmatprep.subr.mxu0 0.0
    %5439 = vmatpush1.msra.mxu0 %v5141
    %5440 = vmatprep.subr.mxu0 0.0
    %5441 = vmatpush1.msra.mxu0 %v5138
    %5442 = vmatprep.subr.mxu0 0.0
    %5443 = vmatpush1.msra.mxu0 %v5135
    %5444 = vmatprep.subr.mxu0 0.0
    %5445 = vmatpush1.msra.mxu0 %v5132
    %5446 = vmatprep.subr.mxu0 0.0
    %5447 = vmatpush1.msra.mxu0 %v5129
    %5448 = vmatprep.subr.mxu0 0.0
    %5449 = vmatpush2.msra.mxu0 %v5222
    %5450 = vmatprep.subr.mxu0 0.0
    %5451 = vmatpush2.msra.mxu0 %v5219
    %5452 = vmatprep.subr.mxu0 0.0
    %5453 = vmatpush2.msra.mxu0 %v5216
    %5454 = vmatprep.subr.mxu0 0.0
    %5455 = vmatpush2.msra.mxu0 %v5213
    %5456 = vmatprep.subr.mxu0 0.0
    %5457 = vmatpush2.msra.mxu0 %v5210
    %5458 = vmatprep.subr.mxu0 0.0
    %5459 = vmatpush2.msra.mxu0 %v5207
    %5460 = vmatprep.subr.mxu0 0.0
    %5461 = vmatpush2.msra.mxu0 %v5204
    %5462 = vmatprep.subr.mxu0 0.0
    %5463 = vmatpush2.msra.mxu0 %v5201
    %5464 = vmatprep.subr.mxu0 0.0
    %5465 = vmatpush2.msra.mxu0 %v5198
    %5466 = vmatprep.subr.mxu0 0.0
    %5467 = vmatpush2.msra.mxu0 %v5195
    %5468 = vmatprep.subr.mxu0 0.0
    %5469 = vmatpush2.msra.mxu0 %v5192
    %5470 = vmatprep.subr.mxu0 0.0
    %5471 = vmatpush2.msra.mxu0 %v5189
    %5472 = vmatprep.subr.mxu0 0.0
    %5473 = vmatpush2.msra.mxu0 %v5186
    %5474 = vmatprep.subr.mxu0 0.0
    %5475 = vmatpush2.msra.mxu0 %v5183
    %5476 = vmatprep.subr.mxu0 0.0
    %5477 = vmatpush2.msra.mxu0 %v5180
    %5478 = vmatprep.subr.mxu0 0.0
    %5479 = vmatpush2.msra.mxu0 %v5177
    %5480 = vmatprep.mubr.f32.mxu0 %v4985
    %5481 = vmatmul.mubr.f32.gmra.mxu0 %v4983
    %v5482 = vpop.f32.mrf.mxu0
    %v5483 = vadd.f32 0.0, %v5482
    %v5484 = vpop.f32.mrf.mxu0
    %5485 = vdwg.mxu0
    %5486 = vmatprep.subr.mxu0 0.0
    %5487 = vmatpush1.msra.mxu0 0.0
    %5488 = vmatprep.subr.mxu0 0.0
    %5489 = vmatpush1.msra.mxu0 0.0
    %5490 = vmatprep.subr.mxu0 0.0
    %5491 = vmatpush1.msra.mxu0 0.0
    %5492 = vmatprep.subr.mxu0 0.0
    %5493 = vmatpush1.msra.mxu0 %v5272
    %5494 = vmatprep.subr.mxu0 0.0
    %5495 = vmatpush1.msra.mxu0 %v5258
    %5496 = vmatprep.subr.mxu0 0.0
    %5497 = vmatpush1.msra.mxu0 %v5255
    %5498 = vmatprep.subr.mxu0 0.0
    %5499 = vmatpush1.msra.mxu0 %v5252
    %5500 = vmatprep.subr.mxu0 0.0
    %5501 = vmatpush1.msra.mxu0 %v5249
    %5502 = vmatprep.subr.mxu0 0.0
    %5503 = vmatpush1.msra.mxu0 %v5246
    %5504 = vmatprep.subr.mxu0 0.0
    %5505 = vmatpush1.msra.mxu0 %v5243
    %5506 = vmatprep.subr.mxu0 0.0
    %5507 = vmatpush1.msra.mxu0 %v5240
    %5508 = vmatprep.subr.mxu0 0.0
    %5509 = vmatpush1.msra.mxu0 %v5237
    %5510 = vmatprep.subr.mxu0 0.0
    %5511 = vmatpush1.msra.mxu0 %v5234
    %5512 = vmatprep.subr.mxu0 0.0
    %5513 = vmatpush1.msra.mxu0 %v5231
    %5514 = vmatprep.subr.mxu0 0.0
    %5515 = vmatpush1.msra.mxu0 %v5228
    %5516 = vmatprep.subr.mxu0 0.0
    %5517 = vmatpush1.msra.mxu0 %v5225
    %5518 = vmatprep.subr.mxu0 0.0
    %5519 = vmatpush2.msra.mxu0 0.0
    %5520 = vmatprep.subr.mxu0 0.0
    %5521 = vmatpush2.msra.mxu0 0.0
    %5522 = vmatprep.subr.mxu0 0.0
    %5523 = vmatpush2.msra.mxu0 0.0
    %5524 = vmatprep.subr.mxu0 0.0
    %5525 = vmatpush2.msra.mxu0 0.0
    %5526 = vmatprep.subr.mxu0 0.0
    %5527 = vmatpush2.msra.mxu0 0.0
    %5528 = vmatprep.subr.mxu0 0.0
    %5529 = vmatpush2.msra.mxu0 0.0
    %5530 = vmatprep.subr.mxu0 0.0
    %5531 = vmatpush2.msra.mxu0 0.0
    %5532 = vmatprep.subr.mxu0 0.0
    %5533 = vmatpush2.msra.mxu0 0.0
    %5534 = vmatprep.subr.mxu0 0.0
    %5535 = vmatpush2.msra.mxu0 0.0
    %5536 = vmatprep.subr.mxu0 0.0
    %5537 = vmatpush2.msra.mxu0 0.0
    %5538 = vmatprep.subr.mxu0 0.0
    %5539 = vmatpush2.msra.mxu0 0.0
    %5540 = vmatprep.subr.mxu0 0.0
    %5541 = vmatpush2.msra.mxu0 0.0
    %5542 = vmatprep.subr.mxu0 0.0
    %5543 = vmatpush2.msra.mxu0 0.0
    %5544 = vmatprep.subr.mxu0 0.0
    %5545 = vmatpush2.msra.mxu0 0.0
    %5546 = vmatprep.subr.mxu0 0.0
    %5547 = vmatpush2.msra.mxu0 0.0
    %5548 = vmatprep.subr.mxu0 0.0
    %5549 = vmatpush2.msra.mxu0 0.0
    %5550 = vmatprep.mubr.f32.mxu0 0.0
    %5551 = vmatmul.mubr.f32.gmra.mxu0 %v5263
    %v5552 = vpop.f32.mrf.mxu0
    %v5553 = vadd.f32 %v5483, %v5552
    %v5554 = vpop.f32.mrf.mxu0
    %5555 = vdwg.mxu0
    %v5558 = vcombine.low %v5412, %v5414
    %5560 = vst [vmem:[%s18] sm:$0xff] %v5558
    %vm5561 = vcmask 551936
    %5562 = vst.msk [vmem:[%s18 + $0x8] sm:$0xf] %vm5561, %v5553
    // Predicated region
    $region78: #{deep_autoencoder_forward.1} parent=1 // pred_check
      _
    $region79: #{deep_autoencoder_forward.1} parent=1 // pred_check_branch
      %5564 = sbr.rel (0) target = $region81
    $region80: #{deep_autoencoder_forward.1} parent=1 // pred_region
      _
    $region81: #{deep_autoencoder_forward.1} parent=1 // pred_fallthru
      _
    // Predicated region
    $region82: #{deep_autoencoder_forward.1} parent=1 // pred_check
      _
    $region83: #{deep_autoencoder_forward.1} parent=1 // pred_check_branch
      %5566 = sbr.rel (0) target = $region85
    $region84: #{deep_autoencoder_forward.1} parent=1 // pred_region
      _
    $region85: #{deep_autoencoder_forward.1} parent=1 // pred_fallthru
      _
    %5567 = vsyncpa [#allocation9], 1

</llo_original>
